<compile_context>
chip_gen: v6e
topology: v6e:2x2x1
jax: 0.10.0
libtpu: 0.0.40
codegen_flags: <defaults>
</compile_context>

<pallas_src>
import functools

import jax
import jax.numpy as jnp
from jax import lax
from jax.experimental import pallas as pl
from jax.experimental.pallas import tpu as pltpu


# ------------------------------ Pallas kernel --------------------------------

def _fused_rnn_kernel(x_ref, fixed_ref, wih_ref, whh_ref, bi_ref, bhhn_ref,
                      dwh_ref, dwx_ref, db_ref,
                      o_ref, gi_scr, out_scr, *, n_layers, T, Bp, H):
    """Whole 3-layer bi-GRU + decoder in one kernel launch.

    x_ref:     (T*Bp, Dmax)     layer-0 input; batch padded to Bp, features
                                zero-padded to Dmax = max(Din, 2H)
    fixed_ref: (Bp, F)          fixed features (batch padded)
    wih_ref:   (L*3, Dmax, 2H)  input-projection slab per (layer, gate);
                                fwd dir in cols [0:H], rev dir in cols [H:2H]
    whh_ref:   (L*3, 2H, 2H)    block-diagonal recurrent slab per (layer, gate)
    bi_ref:    (L*3, 1, 2H)     input biases (b_hh folded in for gates r, z)
    bhhn_ref:  (L, 1, 2H)       recurrent bias of the n gate (stays in-loop)
    dwh_ref:   (2H, 1)          decoder weights for cat(h_fwd, h_rev)
    dwx_ref:   (F, 1)           decoder weights for the fixed features
    db_ref:    (1, 1)           decoder bias
    o_ref:     (Bp, 1)          raw logits (rows >= real batch are padding)
    gi_scr:    (3, T*Bp, 2H)    VMEM: precomputed input projections per gate;
                                rev lanes stored time-reversed
    out_scr:   (T*Bp, 2H)       VMEM: current layer output (natural time order
                                for both directions after the post-loop fixup)
    """
    H2 = 2 * H
    # Lane mask selecting the reverse-direction half ([H:2H]) of a packed row.
    lane_rev = lax.broadcasted_iota(jnp.int32, (Bp, H2), 1) >= H

    for layer in range(n_layers):
        # ---- input projection for ALL time steps (off the serial path) ----
        # Both directions at once: fwd -> lanes [0:H], rev -> lanes [H:2H].
        # The rev half is written time-reversed so the serial loop reads one
        # contiguous (Bp, 2H) block per gate per step.
        if layer == 0:
            xin = x_ref[...]                                  # (T*Bp, Dmax)
        else:
            xin = out_scr[...]                                # (T*Bp, 2H)
        for g in range(3):
            i = layer * 3 + g
            w = wih_ref[i] if layer == 0 else wih_ref[i, pl.ds(0, H2), :]
            gi = jnp.dot(xin, w, preferred_element_type=jnp.float32) + bi_ref[i]
            for t in range(T):
                fwd_blk = gi[t * Bp:(t + 1) * Bp, :]
                rev_blk = gi[(T - 1 - t) * Bp:(T - t) * Bp, :]
                gi_scr[g, pl.ds(t * Bp, Bp), :] = jnp.where(lane_rev, rev_blk,
                                                            fwd_blk)

        # ---- hoist recurrent weights / n-gate bias out of the loop ----
        whh = [whh_ref[layer * 3 + g] for g in range(3)]      # (2H, 2H) each
        bhh_n = jnp.broadcast_to(bhhn_ref[layer], (Bp, H2))

        # ---- serial recurrence, fully unrolled (T is small and static) ----
        h = jnp.zeros((Bp, H2), jnp.float32)                  # [h_fwd | h_rev]
        for t in range(T):
            row = t * Bp                                      # multiple of 8
            gi_r = gi_scr[0, pl.ds(row, Bp), :]
            gi_z = gi_scr[1, pl.ds(row, Bp), :]
            gi_n = gi_scr[2, pl.ds(row, Bp), :]
            gh_r = jnp.dot(h, whh[0], preferred_element_type=jnp.float32)
            gh_z = jnp.dot(h, whh[1], preferred_element_type=jnp.float32)
            gh_n = jnp.dot(h, whh[2], preferred_element_type=jnp.float32) + bhh_n
            r = jax.nn.sigmoid(gi_r + gh_r)   # b_ih + b_hh already in gi_r
            z = jax.nn.sigmoid(gi_z + gh_z)   # b_ih + b_hh already in gi_z
            n = jnp.tanh(gi_n + r * gh_n)
            h = n + z * (h - n)               # == (1 - z) * n + z * h
            out_scr[pl.ds(row, Bp), :] = h

        # ---- un-reverse the rev lanes: row t currently holds G(T-1-t) ----
        for t in range(T // 2):
            ra, rb = t * Bp, (T - 1 - t) * Bp
            a = out_scr[pl.ds(ra, Bp), :]
            b = out_scr[pl.ds(rb, Bp), :]
            out_scr[pl.ds(ra, Bp), :] = jnp.where(lane_rev, b, a)
            out_scr[pl.ds(rb, Bp), :] = jnp.where(lane_rev, a, b)

    # ---- fused decoder on the last time step ----
    last = out_scr[pl.ds((T - 1) * Bp, Bp), :]                # (Bp, 2H)
    logits = (jnp.dot(last, dwh_ref[...], preferred_element_type=jnp.float32)
              + jnp.dot(fixed_ref[...], dwx_ref[...],
                        preferred_element_type=jnp.float32)
              + db_ref[...])
    o_ref[...] = logits


# ------------------------------- Wrapper --------------------------------------

def _pack_params(params, Dmax, H, n_layers):
    """Pack GRU weights into direction-packed / block-diagonal slabs."""
    n = n_layers * 3
    H2 = 2 * H
    wih = jnp.zeros((n, Dmax, H2), jnp.float32)
    whh = jnp.zeros((n, H2, H2), jnp.float32)
    bi = jnp.zeros((n, 1, H2), jnp.float32)
    bhn = jnp.zeros((n_layers, 1, H2), jnp.float32)
    for l in range(n_layers):
        pf = params["gru"][(l, 0)]   # forward direction
        pr = params["gru"][(l, 1)]   # reverse direction
        d_in = pf["wih_t"].shape[0]
        for g in range(3):
            i = l * 3 + g
            sl = slice(g * H, (g + 1) * H)
            wih = wih.at[i, :d_in, 0:H].set(pf["wih_t"][:, sl])
            wih = wih.at[i, :d_in, H:H2].set(pr["wih_t"][:, sl])
            whh = whh.at[i, 0:H, 0:H].set(pf["whh_t"][:, sl])      # block-diag
            whh = whh.at[i, H:H2, H:H2].set(pr["whh_t"][:, sl])
            if g < 2:   # r, z: fold b_hh into the hoisted input projection
                bi = bi.at[i, 0, 0:H].set(pf["bih"][0, sl] + pf["bhh"][0, sl])
                bi = bi.at[i, 0, H:H2].set(pr["bih"][0, sl] + pr["bhh"][0, sl])
            else:       # n: b_hh must stay inside r * (h @ Whh_n + b_hh_n)
                bi = bi.at[i, 0, 0:H].set(pf["bih"][0, sl])
                bi = bi.at[i, 0, H:H2].set(pr["bih"][0, sl])
        bhn = bhn.at[l, 0, 0:H].set(pf["bhh"][0, 2 * H:3 * H])
        bhn = bhn.at[l, 0, H:H2].set(pr["bhh"][0, 2 * H:3 * H])
    return wih, whh, bi, bhn


def _full_spec(a):
    zeros = (0,) * a.ndim
    return pl.BlockSpec(a.shape, lambda zeros=zeros: zeros)


def rnn_forward(params, actions, fixed):
    """Replicates RNN.forward: 3-layer bi-GRU -> cat(out[-1], fixed) -> Linear."""
    T, B, Din = actions.shape
    n_layers = params["n_layers"]
    H = params["gru"][(0, 0)]["whh_t"].shape[0]
    F = fixed.shape[1]
    Bp = 8                                  # pad batch to one full f32 sublane group
    H2 = 2 * H
    Dmax = max(Din, H2)

    wih, whh, bi, bhn = _pack_params(params, Dmax, H, n_layers)

    # Pad batch -> Bp and features -> Dmax (zero rows/cols are exact no-ops).
    xp = jnp.zeros((T, Bp, Dmax), jnp.float32).at[:, :B, :Din].set(actions)
    xflat = xp.reshape(T * Bp, Dmax)
    fixed_p = jnp.zeros((Bp, F), jnp.float32).at[:B, :].set(fixed)

    dwh = params["dec_w_t"][:H2]            # (2H, 1) -> cat(h_fwd, h_rev)
    dwx = params["dec_w_t"][H2:]            # (F, 1)  -> fixed features
    db = params["dec_b"]                    # (1, 1)

    kernel = functools.partial(_fused_rnn_kernel,
                               n_layers=n_layers, T=T, Bp=Bp, H=H)
    inputs = (xflat, fixed_p, wih, whh, bi, bhn, dwh, dwx, db)
    out = pl.pallas_call(
        kernel,
        out_shape=jax.ShapeDtypeStruct((Bp, 1), jnp.float32),
        in_specs=[_full_spec(a) for a in inputs],
        out_specs=pl.BlockSpec((Bp, 1), lambda: (0, 0)),
        scratch_shapes=[
            pltpu.VMEM((3, T * Bp, H2), jnp.float32),   # gi per gate (dirs packed)
            pltpu.VMEM((T * Bp, H2), jnp.float32),      # current layer output
        ],
    )(*inputs)
    return out[:B]                          # (B, 1), raw logits


# ---------------------- Pure-JAX reference (for checking) -------------------

def gru_layer_ref(x, wih_t, whh_t, bih, bhh):
    H = whh_t.shape[0]
    B = x.shape[1]

    def step(h, x_t):
        gi = x_t @ wih_t + bih
        gh = h @ whh_t + bhh
        r = jax.nn.sigmoid(gi[:, :H] + gh[:, :H])
        z = jax.nn.sigmoid(gi[:, H:2 * H] + gh[:, H:2 * H])
        n = jnp.tanh(gi[:, 2 * H:] + r * gh[:, 2 * H:])
        h_new = (1.0 - z) * n + z * h
        return h_new, h_new

    h0 = jnp.zeros((B, H), jnp.float32)
    _, outs = lax.scan(step, h0, x)
    return outs


def rnn_forward_ref(params, actions, fixed):
    layer_in = actions
    for l in range(params["n_layers"]):
        dir_outs = []
        for d, rev in enumerate((False, True)):
            p = params["gru"][(l, d)]
            xin = layer_in[::-1] if rev else layer_in
            out = gru_layer_ref(xin, p["wih_t"], p["whh_t"], p["bih"], p["bhh"])
            if rev:
                out = out[::-1]
            dir_outs.append(out)
        layer_in = jnp.concatenate(dir_outs, axis=-1)
    dec_in = jnp.concatenate([layer_in[-1], fixed], axis=1)
    return dec_in @ params["dec_w_t"] + params["dec_b"]


# ------------------------------ Param init -----------------------------------

def init_params(key, input_dim, hidden_dim, fixed_dim, n_layers, output_dim=1):
    params = {"n_layers": n_layers, "gru": {}}
    k = 1.0 / jnp.sqrt(hidden_dim)
    for l in range(n_layers):
        d_in = input_dim if l == 0 else 2 * hidden_dim
        for d in range(2):  # forward / reverse
            key, k1, k2, k3, k4 = jax.random.split(key, 5)
            params["gru"][(l, d)] = {
                # stored pre-transposed; gate order (r, z, n) along the 3H dim
                "wih_t": jax.random.uniform(k1, (d_in, 3 * hidden_dim),
                                            jnp.float32, -k, k),
                "whh_t": jax.random.uniform(k2, (hidden_dim, 3 * hidden_dim),
                                            jnp.float32, -k, k),
                "bih": jax.random.uniform(k3, (1, 3 * hidden_dim),
                                          jnp.float32, -k, k),
                "bhh": jax.random.uniform(k4, (1, 3 * hidden_dim),
                                          jnp.float32, -k, k),
            }
    dec_in_dim = 2 * hidden_dim + fixed_dim
    kd = 1.0 / jnp.sqrt(dec_in_dim)
    key, k1, k2 = jax.random.split(key, 3)
    params["dec_w_t"] = jax.random.uniform(k1, (dec_in_dim, output_dim),
                                           jnp.float32, -kd, kd)
    params["dec_b"] = jax.random.uniform(k2, (1, output_dim),
                                         jnp.float32, -kd, kd)
    return params


# --------------------------------- Main --------------------------------------

if __name__ == "__main__":
    # Shapes consistent with the module: dynamic_dim = 10, fixed_dim = 6,
    # hidden = 32, n_layers = 3, bidirectional, seq len T = 8, batch = 2.
    T, B = 8, 2
    INPUT_DIM, HIDDEN_DIM, FIXED_DIM, N_LAYERS = 10, 32, 6, 3

    key = jax.random.PRNGKey(0)
    key, kp, ka, kf = jax.random.split(key, 4)

    params = init_params(kp, INPUT_DIM, HIDDEN_DIM, FIXED_DIM, N_LAYERS)
    actions = jax.random.normal(ka, (T, B, INPUT_DIM), jnp.float32)  # (seq, batch, dyn)
    fixed = jax.random.normal(kf, (B, FIXED_DIM), jnp.float32)       # (batch, fixed)

    out = rnn_forward(params, actions, fixed)
    out = jax.block_until_ready(out)

    ref = jax.block_until_ready(rnn_forward_ref(params, actions, fixed))

    assert out.shape == (B, 1), out.shape
    assert jnp.allclose(out, ref, rtol=1e-4, atol=1e-4), (out, ref)

    print("KERNEL_OK")
</pallas_src>

<mosaic_0001>
module attributes {stable_mosaic.version = 11 : i64} {
  func.func @_fused_rnn_kernel(%arg0: memref<64x64xf32, #tpu.memory_space<vmem>>, %arg1: memref<8x6xf32, #tpu.memory_space<vmem>>, %arg2: memref<9x64x64xf32, #tpu.memory_space<vmem>>, %arg3: memref<9x64x64xf32, #tpu.memory_space<vmem>>, %arg4: memref<9x1x64xf32, #tpu.memory_space<vmem>>, %arg5: memref<3x1x64xf32, #tpu.memory_space<vmem>>, %arg6: memref<64x1xf32, #tpu.memory_space<vmem>>, %arg7: memref<6x1xf32, #tpu.memory_space<vmem>>, %arg8: memref<1x1xf32, #tpu.memory_space<vmem>>, %arg9: memref<8x1xf32, #tpu.memory_space<vmem>>, %arg10: memref<3x64x64xf32, #tpu.memory_space<vmem>>, %arg11: memref<64x64xf32, #tpu.memory_space<vmem>>) attributes {dimension_semantics = [], scalar_prefetch = 0 : i64, scratch_operands = 2 : i64, tpu.core_type = #tpu.core_type<tc>} {
    %0 = tpu.iota {dimensions = array<i32: 1>} : vector<8x64xi32>
    %c32_i32 = arith.constant 32 : i32
    %1 = vector.broadcast %c32_i32 : i32 to vector<8x64xi32>
    %2 = arith.cmpi sge, %0, %1 : vector<8x64xi32>
    %c0 = arith.constant 0 : index
    %c0_0 = arith.constant 0 : index
    %3 = vector.load %arg0[%c0, %c0_0] : memref<64x64xf32, #tpu.memory_space<vmem>>, vector<64x64xf32>
    %c0_1 = arith.constant 0 : index
    %c0_2 = arith.constant 0 : index
    %c0_3 = arith.constant 0 : index
    %4 = vector.load %arg2[%c0_1, %c0_2, %c0_3] : memref<9x64x64xf32, #tpu.memory_space<vmem>>, vector<1x64x64xf32>
    %5 = vector.shape_cast %4 : vector<1x64x64xf32> to vector<64x64xf32>
    %cst = arith.constant dense<0.000000e+00> : vector<64x64xf32>
    %6 = tpu.matmul %3, %5, %cst {dimension_numbers = #tpu.dot_dimension_numbers<[1], [0], [0], [1], [0, 0, 1, 1], [], []>} : vector<64x64xf32>, vector<64x64xf32>, vector<64x64xf32> -> vector<64x64xf32>
    %c0_4 = arith.constant 0 : index
    %c0_5 = arith.constant 0 : index
    %c0_6 = arith.constant 0 : index
    %7 = vector.load %arg4[%c0_4, %c0_5, %c0_6] : memref<9x1x64xf32, #tpu.memory_space<vmem>>, vector<1x1x64xf32>
    %8 = vector.shape_cast %7 : vector<1x1x64xf32> to vector<1x64xf32>
    %9 = vector.broadcast %8 : vector<1x64xf32> to vector<64x64xf32>
    %10 = arith.addf %6, %9 : vector<64x64xf32>
    %11 = vector.extract_strided_slice %10 {offsets = [0, 0], sizes = [8, 64], strides = [1, 1]} : vector<64x64xf32> to vector<8x64xf32>
    %12 = vector.extract_strided_slice %10 {offsets = [56, 0], sizes = [8, 64], strides = [1, 1]} : vector<64x64xf32> to vector<8x64xf32>
    %13 = arith.select %2, %12, %11 : vector<8x64xi1>, vector<8x64xf32>
    %c0_7 = arith.constant 0 : index
    %c0_8 = arith.constant 0 : index
    %c0_9 = arith.constant 0 : index
    %14 = vector.load %arg10[%c0_7, %c0_8, %c0_9] : memref<3x64x64xf32, #tpu.memory_space<vmem>>, vector<1x8x64xf32>
    %15 = vector.shape_cast %14 : vector<1x8x64xf32> to vector<8x64xf32>
    %16 = vector.shape_cast %13 : vector<8x64xf32> to vector<1x8x64xf32>
    tpu.vector_store %arg10[%c0_7, %c0_8, %c0_9], %16 {strides = array<i32>} : memref<3x64x64xf32, #tpu.memory_space<vmem>>, vector<1x8x64xf32>,
    %17 = vector.extract_strided_slice %10 {offsets = [8, 0], sizes = [8, 64], strides = [1, 1]} : vector<64x64xf32> to vector<8x64xf32>
    %18 = vector.extract_strided_slice %10 {offsets = [48, 0], sizes = [8, 64], strides = [1, 1]} : vector<64x64xf32> to vector<8x64xf32>
    %19 = arith.select %2, %18, %17 : vector<8x64xi1>, vector<8x64xf32>
    %c0_10 = arith.constant 0 : index
    %c8 = arith.constant 8 : index
    %c0_11 = arith.constant 0 : index
    %20 = vector.load %arg10[%c0_10, %c8, %c0_11] : memref<3x64x64xf32, #tpu.memory_space<vmem>>, vector<1x8x64xf32>
    %21 = vector.shape_cast %20 : vector<1x8x64xf32> to vector<8x64xf32>
    %22 = vector.shape_cast %19 : vector<8x64xf32> to vector<1x8x64xf32>
    tpu.vector_store %arg10[%c0_10, %c8, %c0_11], %22 {strides = array<i32>} : memref<3x64x64xf32, #tpu.memory_space<vmem>>, vector<1x8x64xf32>,
    %23 = vector.extract_strided_slice %10 {offsets = [16, 0], sizes = [8, 64], strides = [1, 1]} : vector<64x64xf32> to vector<8x64xf32>
    %24 = vector.extract_strided_slice %10 {offsets = [40, 0], sizes = [8, 64], strides = [1, 1]} : vector<64x64xf32> to vector<8x64xf32>
    %25 = arith.select %2, %24, %23 : vector<8x64xi1>, vector<8x64xf32>
    %c0_12 = arith.constant 0 : index
    %c16 = arith.constant 16 : index
    %c0_13 = arith.constant 0 : index
    %26 = vector.load %arg10[%c0_12, %c16, %c0_13] : memref<3x64x64xf32, #tpu.memory_space<vmem>>, vector<1x8x64xf32>
    %27 = vector.shape_cast %26 : vector<1x8x64xf32> to vector<8x64xf32>
    %28 = vector.shape_cast %25 : vector<8x64xf32> to vector<1x8x64xf32>
    tpu.vector_store %arg10[%c0_12, %c16, %c0_13], %28 {strides = array<i32>} : memref<3x64x64xf32, #tpu.memory_space<vmem>>, vector<1x8x64xf32>,
    %29 = vector.extract_strided_slice %10 {offsets = [24, 0], sizes = [8, 64], strides = [1, 1]} : vector<64x64xf32> to vector<8x64xf32>
    %30 = vector.extract_strided_slice %10 {offsets = [32, 0], sizes = [8, 64], strides = [1, 1]} : vector<64x64xf32> to vector<8x64xf32>
    %31 = arith.select %2, %30, %29 : vector<8x64xi1>, vector<8x64xf32>
    %c0_14 = arith.constant 0 : index
    %c24 = arith.constant 24 : index
    %c0_15 = arith.constant 0 : index
    %32 = vector.load %arg10[%c0_14, %c24, %c0_15] : memref<3x64x64xf32, #tpu.memory_space<vmem>>, vector<1x8x64xf32>
    %33 = vector.shape_cast %32 : vector<1x8x64xf32> to vector<8x64xf32>
    %34 = vector.shape_cast %31 : vector<8x64xf32> to vector<1x8x64xf32>
    tpu.vector_store %arg10[%c0_14, %c24, %c0_15], %34 {strides = array<i32>} : memref<3x64x64xf32, #tpu.memory_space<vmem>>, vector<1x8x64xf32>,
    %35 = vector.extract_strided_slice %10 {offsets = [32, 0], sizes = [8, 64], strides = [1, 1]} : vector<64x64xf32> to vector<8x64xf32>
    %36 = vector.extract_strided_slice %10 {offsets = [24, 0], sizes = [8, 64], strides = [1, 1]} : vector<64x64xf32> to vector<8x64xf32>
    %37 = arith.select %2, %36, %35 : vector<8x64xi1>, vector<8x64xf32>
    %c0_16 = arith.constant 0 : index
    %c32 = arith.constant 32 : index
    %c0_17 = arith.constant 0 : index
    %38 = vector.load %arg10[%c0_16, %c32, %c0_17] : memref<3x64x64xf32, #tpu.memory_space<vmem>>, vector<1x8x64xf32>
    %39 = vector.shape_cast %38 : vector<1x8x64xf32> to vector<8x64xf32>
    %40 = vector.shape_cast %37 : vector<8x64xf32> to vector<1x8x64xf32>
    tpu.vector_store %arg10[%c0_16, %c32, %c0_17], %40 {strides = array<i32>} : memref<3x64x64xf32, #tpu.memory_space<vmem>>, vector<1x8x64xf32>,
    %41 = vector.extract_strided_slice %10 {offsets = [40, 0], sizes = [8, 64], strides = [1, 1]} : vector<64x64xf32> to vector<8x64xf32>
    %42 = vector.extract_strided_slice %10 {offsets = [16, 0], sizes = [8, 64], strides = [1, 1]} : vector<64x64xf32> to vector<8x64xf32>
    %43 = arith.select %2, %42, %41 : vector<8x64xi1>, vector<8x64xf32>
    %c0_18 = arith.constant 0 : index
    %c40 = arith.constant 40 : index
    %c0_19 = arith.constant 0 : index
    %44 = vector.load %arg10[%c0_18, %c40, %c0_19] : memref<3x64x64xf32, #tpu.memory_space<vmem>>, vector<1x8x64xf32>
    %45 = vector.shape_cast %44 : vector<1x8x64xf32> to vector<8x64xf32>
    %46 = vector.shape_cast %43 : vector<8x64xf32> to vector<1x8x64xf32>
    tpu.vector_store %arg10[%c0_18, %c40, %c0_19], %46 {strides = array<i32>} : memref<3x64x64xf32, #tpu.memory_space<vmem>>, vector<1x8x64xf32>,
    %47 = vector.extract_strided_slice %10 {offsets = [48, 0], sizes = [8, 64], strides = [1, 1]} : vector<64x64xf32> to vector<8x64xf32>
    %48 = vector.extract_strided_slice %10 {offsets = [8, 0], sizes = [8, 64], strides = [1, 1]} : vector<64x64xf32> to vector<8x64xf32>
    %49 = arith.select %2, %48, %47 : vector<8x64xi1>, vector<8x64xf32>
    %c0_20 = arith.constant 0 : index
    %c48 = arith.constant 48 : index
    %c0_21 = arith.constant 0 : index
    %50 = vector.load %arg10[%c0_20, %c48, %c0_21] : memref<3x64x64xf32, #tpu.memory_space<vmem>>, vector<1x8x64xf32>
    %51 = vector.shape_cast %50 : vector<1x8x64xf32> to vector<8x64xf32>
    %52 = vector.shape_cast %49 : vector<8x64xf32> to vector<1x8x64xf32>
    tpu.vector_store %arg10[%c0_20, %c48, %c0_21], %52 {strides = array<i32>} : memref<3x64x64xf32, #tpu.memory_space<vmem>>, vector<1x8x64xf32>,
    %53 = vector.extract_strided_slice %10 {offsets = [56, 0], sizes = [8, 64], strides = [1, 1]} : vector<64x64xf32> to vector<8x64xf32>
    %54 = vector.extract_strided_slice %10 {offsets = [0, 0], sizes = [8, 64], strides = [1, 1]} : vector<64x64xf32> to vector<8x64xf32>
    %55 = arith.select %2, %54, %53 : vector<8x64xi1>, vector<8x64xf32>
    %c0_22 = arith.constant 0 : index
    %c56 = arith.constant 56 : index
    %c0_23 = arith.constant 0 : index
    %56 = vector.load %arg10[%c0_22, %c56, %c0_23] : memref<3x64x64xf32, #tpu.memory_space<vmem>>, vector<1x8x64xf32>
    %57 = vector.shape_cast %56 : vector<1x8x64xf32> to vector<8x64xf32>
    %58 = vector.shape_cast %55 : vector<8x64xf32> to vector<1x8x64xf32>
    tpu.vector_store %arg10[%c0_22, %c56, %c0_23], %58 {strides = array<i32>} : memref<3x64x64xf32, #tpu.memory_space<vmem>>, vector<1x8x64xf32>,
    %c1 = arith.constant 1 : index
    %c0_24 = arith.constant 0 : index
    %c0_25 = arith.constant 0 : index
    %59 = vector.load %arg2[%c1, %c0_24, %c0_25] : memref<9x64x64xf32, #tpu.memory_space<vmem>>, vector<1x64x64xf32>
    %60 = vector.shape_cast %59 : vector<1x64x64xf32> to vector<64x64xf32>
    %cst_26 = arith.constant dense<0.000000e+00> : vector<64x64xf32>
    %61 = tpu.matmul %3, %60, %cst_26 {dimension_numbers = #tpu.dot_dimension_numbers<[1], [0], [0], [1], [0, 0, 1, 1], [], []>} : vector<64x64xf32>, vector<64x64xf32>, vector<64x64xf32> -> vector<64x64xf32>
    %c1_27 = arith.constant 1 : index
    %c0_28 = arith.constant 0 : index
    %c0_29 = arith.constant 0 : index
    %62 = vector.load %arg4[%c1_27, %c0_28, %c0_29] : memref<9x1x64xf32, #tpu.memory_space<vmem>>, vector<1x1x64xf32>
    %63 = vector.shape_cast %62 : vector<1x1x64xf32> to vector<1x64xf32>
    %64 = vector.broadcast %63 : vector<1x64xf32> to vector<64x64xf32>
    %65 = arith.addf %61, %64 : vector<64x64xf32>
    %66 = vector.extract_strided_slice %65 {offsets = [0, 0], sizes = [8, 64], strides = [1, 1]} : vector<64x64xf32> to vector<8x64xf32>
    %67 = vector.extract_strided_slice %65 {offsets = [56, 0], sizes = [8, 64], strides = [1, 1]} : vector<64x64xf32> to vector<8x64xf32>
    %68 = arith.select %2, %67, %66 : vector<8x64xi1>, vector<8x64xf32>
    %c1_30 = arith.constant 1 : index
    %c0_31 = arith.constant 0 : index
    %c0_32 = arith.constant 0 : index
    %69 = vector.load %arg10[%c1_30, %c0_31, %c0_32] : memref<3x64x64xf32, #tpu.memory_space<vmem>>, vector<1x8x64xf32>
    %70 = vector.shape_cast %69 : vector<1x8x64xf32> to vector<8x64xf32>
    %71 = vector.shape_cast %68 : vector<8x64xf32> to vector<1x8x64xf32>
    tpu.vector_store %arg10[%c1_30, %c0_31, %c0_32], %71 {strides = array<i32>} : memref<3x64x64xf32, #tpu.memory_space<vmem>>, vector<1x8x64xf32>,
    %72 = vector.extract_strided_slice %65 {offsets = [8, 0], sizes = [8, 64], strides = [1, 1]} : vector<64x64xf32> to vector<8x64xf32>
    %73 = vector.extract_strided_slice %65 {offsets = [48, 0], sizes = [8, 64], strides = [1, 1]} : vector<64x64xf32> to vector<8x64xf32>
    %74 = arith.select %2, %73, %72 : vector<8x64xi1>, vector<8x64xf32>
    %c1_33 = arith.constant 1 : index
    %c8_34 = arith.constant 8 : index
    %c0_35 = arith.constant 0 : index
    %75 = vector.load %arg10[%c1_33, %c8_34, %c0_35] : memref<3x64x64xf32, #tpu.memory_space<vmem>>, vector<1x8x64xf32>
    %76 = vector.shape_cast %75 : vector<1x8x64xf32> to vector<8x64xf32>
    %77 = vector.shape_cast %74 : vector<8x64xf32> to vector<1x8x64xf32>
    tpu.vector_store %arg10[%c1_33, %c8_34, %c0_35], %77 {strides = array<i32>} : memref<3x64x64xf32, #tpu.memory_space<vmem>>, vector<1x8x64xf32>,
    %78 = vector.extract_strided_slice %65 {offsets = [16, 0], sizes = [8, 64], strides = [1, 1]} : vector<64x64xf32> to vector<8x64xf32>
    %79 = vector.extract_strided_slice %65 {offsets = [40, 0], sizes = [8, 64], strides = [1, 1]} : vector<64x64xf32> to vector<8x64xf32>
    %80 = arith.select %2, %79, %78 : vector<8x64xi1>, vector<8x64xf32>
    %c1_36 = arith.constant 1 : index
    %c16_37 = arith.constant 16 : index
    %c0_38 = arith.constant 0 : index
    %81 = vector.load %arg10[%c1_36, %c16_37, %c0_38] : memref<3x64x64xf32, #tpu.memory_space<vmem>>, vector<1x8x64xf32>
    %82 = vector.shape_cast %81 : vector<1x8x64xf32> to vector<8x64xf32>
    %83 = vector.shape_cast %80 : vector<8x64xf32> to vector<1x8x64xf32>
    tpu.vector_store %arg10[%c1_36, %c16_37, %c0_38], %83 {strides = array<i32>} : memref<3x64x64xf32, #tpu.memory_space<vmem>>, vector<1x8x64xf32>,
    %84 = vector.extract_strided_slice %65 {offsets = [24, 0], sizes = [8, 64], strides = [1, 1]} : vector<64x64xf32> to vector<8x64xf32>
    %85 = vector.extract_strided_slice %65 {offsets = [32, 0], sizes = [8, 64], strides = [1, 1]} : vector<64x64xf32> to vector<8x64xf32>
    %86 = arith.select %2, %85, %84 : vector<8x64xi1>, vector<8x64xf32>
    %c1_39 = arith.constant 1 : index
    %c24_40 = arith.constant 24 : index
    %c0_41 = arith.constant 0 : index
    %87 = vector.load %arg10[%c1_39, %c24_40, %c0_41] : memref<3x64x64xf32, #tpu.memory_space<vmem>>, vector<1x8x64xf32>
    %88 = vector.shape_cast %87 : vector<1x8x64xf32> to vector<8x64xf32>
    %89 = vector.shape_cast %86 : vector<8x64xf32> to vector<1x8x64xf32>
    tpu.vector_store %arg10[%c1_39, %c24_40, %c0_41], %89 {strides = array<i32>} : memref<3x64x64xf32, #tpu.memory_space<vmem>>, vector<1x8x64xf32>,
    %90 = vector.extract_strided_slice %65 {offsets = [32, 0], sizes = [8, 64], strides = [1, 1]} : vector<64x64xf32> to vector<8x64xf32>
    %91 = vector.extract_strided_slice %65 {offsets = [24, 0], sizes = [8, 64], strides = [1, 1]} : vector<64x64xf32> to vector<8x64xf32>
    %92 = arith.select %2, %91, %90 : vector<8x64xi1>, vector<8x64xf32>
    %c1_42 = arith.constant 1 : index
    %c32_43 = arith.constant 32 : index
    %c0_44 = arith.constant 0 : index
    %93 = vector.load %arg10[%c1_42, %c32_43, %c0_44] : memref<3x64x64xf32, #tpu.memory_space<vmem>>, vector<1x8x64xf32>
    %94 = vector.shape_cast %93 : vector<1x8x64xf32> to vector<8x64xf32>
    %95 = vector.shape_cast %92 : vector<8x64xf32> to vector<1x8x64xf32>
    tpu.vector_store %arg10[%c1_42, %c32_43, %c0_44], %95 {strides = array<i32>} : memref<3x64x64xf32, #tpu.memory_space<vmem>>, vector<1x8x64xf32>,
    %96 = vector.extract_strided_slice %65 {offsets = [40, 0], sizes = [8, 64], strides = [1, 1]} : vector<64x64xf32> to vector<8x64xf32>
    %97 = vector.extract_strided_slice %65 {offsets = [16, 0], sizes = [8, 64], strides = [1, 1]} : vector<64x64xf32> to vector<8x64xf32>
    %98 = arith.select %2, %97, %96 : vector<8x64xi1>, vector<8x64xf32>
    %c1_45 = arith.constant 1 : index
    %c40_46 = arith.constant 40 : index
    %c0_47 = arith.constant 0 : index
    %99 = vector.load %arg10[%c1_45, %c40_46, %c0_47] : memref<3x64x64xf32, #tpu.memory_space<vmem>>, vector<1x8x64xf32>
    %100 = vector.shape_cast %99 : vector<1x8x64xf32> to vector<8x64xf32>
    %101 = vector.shape_cast %98 : vector<8x64xf32> to vector<1x8x64xf32>
    tpu.vector_store %arg10[%c1_45, %c40_46, %c0_47], %101 {strides = array<i32>} : memref<3x64x64xf32, #tpu.memory_space<vmem>>, vector<1x8x64xf32>,
    %102 = vector.extract_strided_slice %65 {offsets = [48, 0], sizes = [8, 64], strides = [1, 1]} : vector<64x64xf32> to vector<8x64xf32>
    %103 = vector.extract_strided_slice %65 {offsets = [8, 0], sizes = [8, 64], strides = [1, 1]} : vector<64x64xf32> to vector<8x64xf32>
    %104 = arith.select %2, %103, %102 : vector<8x64xi1>, vector<8x64xf32>
    %c1_48 = arith.constant 1 : index
    %c48_49 = arith.constant 48 : index
    %c0_50 = arith.constant 0 : index
    %105 = vector.load %arg10[%c1_48, %c48_49, %c0_50] : memref<3x64x64xf32, #tpu.memory_space<vmem>>, vector<1x8x64xf32>
    %106 = vector.shape_cast %105 : vector<1x8x64xf32> to vector<8x64xf32>
    %107 = vector.shape_cast %104 : vector<8x64xf32> to vector<1x8x64xf32>
    tpu.vector_store %arg10[%c1_48, %c48_49, %c0_50], %107 {strides = array<i32>} : memref<3x64x64xf32, #tpu.memory_space<vmem>>, vector<1x8x64xf32>,
    %108 = vector.extract_strided_slice %65 {offsets = [56, 0], sizes = [8, 64], strides = [1, 1]} : vector<64x64xf32> to vector<8x64xf32>
    %109 = vector.extract_strided_slice %65 {offsets = [0, 0], sizes = [8, 64], strides = [1, 1]} : vector<64x64xf32> to vector<8x64xf32>
    %110 = arith.select %2, %109, %108 : vector<8x64xi1>, vector<8x64xf32>
    %c1_51 = arith.constant 1 : index
    %c56_52 = arith.constant 56 : index
    %c0_53 = arith.constant 0 : index
    %111 = vector.load %arg10[%c1_51, %c56_52, %c0_53] : memref<3x64x64xf32, #tpu.memory_space<vmem>>, vector<1x8x64xf32>
    %112 = vector.shape_cast %111 : vector<1x8x64xf32> to vector<8x64xf32>
    %113 = vector.shape_cast %110 : vector<8x64xf32> to vector<1x8x64xf32>
    tpu.vector_store %arg10[%c1_51, %c56_52, %c0_53], %113 {strides = array<i32>} : memref<3x64x64xf32, #tpu.memory_space<vmem>>, vector<1x8x64xf32>,
    %c2 = arith.constant 2 : index
    %c0_54 = arith.constant 0 : index
    %c0_55 = arith.constant 0 : index
    %114 = vector.load %arg2[%c2, %c0_54, %c0_55] : memref<9x64x64xf32, #tpu.memory_space<vmem>>, vector<1x64x64xf32>
    %115 = vector.shape_cast %114 : vector<1x64x64xf32> to vector<64x64xf32>
    %cst_56 = arith.constant dense<0.000000e+00> : vector<64x64xf32>
    %116 = tpu.matmul %3, %115, %cst_56 {dimension_numbers = #tpu.dot_dimension_numbers<[1], [0], [0], [1], [0, 0, 1, 1], [], []>} : vector<64x64xf32>, vector<64x64xf32>, vector<64x64xf32> -> vector<64x64xf32>
    %c2_57 = arith.constant 2 : index
    %c0_58 = arith.constant 0 : index
    %c0_59 = arith.constant 0 : index
    %117 = vector.load %arg4[%c2_57, %c0_58, %c0_59] : memref<9x1x64xf32, #tpu.memory_space<vmem>>, vector<1x1x64xf32>
    %118 = vector.shape_cast %117 : vector<1x1x64xf32> to vector<1x64xf32>
    %119 = vector.broadcast %118 : vector<1x64xf32> to vector<64x64xf32>
    %120 = arith.addf %116, %119 : vector<64x64xf32>
    %121 = vector.extract_strided_slice %120 {offsets = [0, 0], sizes = [8, 64], strides = [1, 1]} : vector<64x64xf32> to vector<8x64xf32>
    %122 = vector.extract_strided_slice %120 {offsets = [56, 0], sizes = [8, 64], strides = [1, 1]} : vector<64x64xf32> to vector<8x64xf32>
    %123 = arith.select %2, %122, %121 : vector<8x64xi1>, vector<8x64xf32>
    %c2_60 = arith.constant 2 : index
    %c0_61 = arith.constant 0 : index
    %c0_62 = arith.constant 0 : index
    %124 = vector.load %arg10[%c2_60, %c0_61, %c0_62] : memref<3x64x64xf32, #tpu.memory_space<vmem>>, vector<1x8x64xf32>
    %125 = vector.shape_cast %124 : vector<1x8x64xf32> to vector<8x64xf32>
    %126 = vector.shape_cast %123 : vector<8x64xf32> to vector<1x8x64xf32>
    tpu.vector_store %arg10[%c2_60, %c0_61, %c0_62], %126 {strides = array<i32>} : memref<3x64x64xf32, #tpu.memory_space<vmem>>, vector<1x8x64xf32>,
    %127 = vector.extract_strided_slice %120 {offsets = [8, 0], sizes = [8, 64], strides = [1, 1]} : vector<64x64xf32> to vector<8x64xf32>
    %128 = vector.extract_strided_slice %120 {offsets = [48, 0], sizes = [8, 64], strides = [1, 1]} : vector<64x64xf32> to vector<8x64xf32>
    %129 = arith.select %2, %128, %127 : vector<8x64xi1>, vector<8x64xf32>
    %c2_63 = arith.constant 2 : index
    %c8_64 = arith.constant 8 : index
    %c0_65 = arith.constant 0 : index
    %130 = vector.load %arg10[%c2_63, %c8_64, %c0_65] : memref<3x64x64xf32, #tpu.memory_space<vmem>>, vector<1x8x64xf32>
    %131 = vector.shape_cast %130 : vector<1x8x64xf32> to vector<8x64xf32>
    %132 = vector.shape_cast %129 : vector<8x64xf32> to vector<1x8x64xf32>
    tpu.vector_store %arg10[%c2_63, %c8_64, %c0_65], %132 {strides = array<i32>} : memref<3x64x64xf32, #tpu.memory_space<vmem>>, vector<1x8x64xf32>,
    %133 = vector.extract_strided_slice %120 {offsets = [16, 0], sizes = [8, 64], strides = [1, 1]} : vector<64x64xf32> to vector<8x64xf32>
    %134 = vector.extract_strided_slice %120 {offsets = [40, 0], sizes = [8, 64], strides = [1, 1]} : vector<64x64xf32> to vector<8x64xf32>
    %135 = arith.select %2, %134, %133 : vector<8x64xi1>, vector<8x64xf32>
    %c2_66 = arith.constant 2 : index
    %c16_67 = arith.constant 16 : index
    %c0_68 = arith.constant 0 : index
    %136 = vector.load %arg10[%c2_66, %c16_67, %c0_68] : memref<3x64x64xf32, #tpu.memory_space<vmem>>, vector<1x8x64xf32>
    %137 = vector.shape_cast %136 : vector<1x8x64xf32> to vector<8x64xf32>
    %138 = vector.shape_cast %135 : vector<8x64xf32> to vector<1x8x64xf32>
    tpu.vector_store %arg10[%c2_66, %c16_67, %c0_68], %138 {strides = array<i32>} : memref<3x64x64xf32, #tpu.memory_space<vmem>>, vector<1x8x64xf32>,
    %139 = vector.extract_strided_slice %120 {offsets = [24, 0], sizes = [8, 64], strides = [1, 1]} : vector<64x64xf32> to vector<8x64xf32>
    %140 = vector.extract_strided_slice %120 {offsets = [32, 0], sizes = [8, 64], strides = [1, 1]} : vector<64x64xf32> to vector<8x64xf32>
    %141 = arith.select %2, %140, %139 : vector<8x64xi1>, vector<8x64xf32>
    %c2_69 = arith.constant 2 : index
    %c24_70 = arith.constant 24 : index
    %c0_71 = arith.constant 0 : index
    %142 = vector.load %arg10[%c2_69, %c24_70, %c0_71] : memref<3x64x64xf32, #tpu.memory_space<vmem>>, vector<1x8x64xf32>
    %143 = vector.shape_cast %142 : vector<1x8x64xf32> to vector<8x64xf32>
    %144 = vector.shape_cast %141 : vector<8x64xf32> to vector<1x8x64xf32>
    tpu.vector_store %arg10[%c2_69, %c24_70, %c0_71], %144 {strides = array<i32>} : memref<3x64x64xf32, #tpu.memory_space<vmem>>, vector<1x8x64xf32>,
    %145 = vector.extract_strided_slice %120 {offsets = [32, 0], sizes = [8, 64], strides = [1, 1]} : vector<64x64xf32> to vector<8x64xf32>
    %146 = vector.extract_strided_slice %120 {offsets = [24, 0], sizes = [8, 64], strides = [1, 1]} : vector<64x64xf32> to vector<8x64xf32>
    %147 = arith.select %2, %146, %145 : vector<8x64xi1>, vector<8x64xf32>
    %c2_72 = arith.constant 2 : index
    %c32_73 = arith.constant 32 : index
    %c0_74 = arith.constant 0 : index
    %148 = vector.load %arg10[%c2_72, %c32_73, %c0_74] : memref<3x64x64xf32, #tpu.memory_space<vmem>>, vector<1x8x64xf32>
    %149 = vector.shape_cast %148 : vector<1x8x64xf32> to vector<8x64xf32>
    %150 = vector.shape_cast %147 : vector<8x64xf32> to vector<1x8x64xf32>
    tpu.vector_store %arg10[%c2_72, %c32_73, %c0_74], %150 {strides = array<i32>} : memref<3x64x64xf32, #tpu.memory_space<vmem>>, vector<1x8x64xf32>,
    %151 = vector.extract_strided_slice %120 {offsets = [40, 0], sizes = [8, 64], strides = [1, 1]} : vector<64x64xf32> to vector<8x64xf32>
    %152 = vector.extract_strided_slice %120 {offsets = [16, 0], sizes = [8, 64], strides = [1, 1]} : vector<64x64xf32> to vector<8x64xf32>
    %153 = arith.select %2, %152, %151 : vector<8x64xi1>, vector<8x64xf32>
    %c2_75 = arith.constant 2 : index
    %c40_76 = arith.constant 40 : index
    %c0_77 = arith.constant 0 : index
    %154 = vector.load %arg10[%c2_75, %c40_76, %c0_77] : memref<3x64x64xf32, #tpu.memory_space<vmem>>, vector<1x8x64xf32>
    %155 = vector.shape_cast %154 : vector<1x8x64xf32> to vector<8x64xf32>
    %156 = vector.shape_cast %153 : vector<8x64xf32> to vector<1x8x64xf32>
    tpu.vector_store %arg10[%c2_75, %c40_76, %c0_77], %156 {strides = array<i32>} : memref<3x64x64xf32, #tpu.memory_space<vmem>>, vector<1x8x64xf32>,
    %157 = vector.extract_strided_slice %120 {offsets = [48, 0], sizes = [8, 64], strides = [1, 1]} : vector<64x64xf32> to vector<8x64xf32>
    %158 = vector.extract_strided_slice %120 {offsets = [8, 0], sizes = [8, 64], strides = [1, 1]} : vector<64x64xf32> to vector<8x64xf32>
    %159 = arith.select %2, %158, %157 : vector<8x64xi1>, vector<8x64xf32>
    %c2_78 = arith.constant 2 : index
    %c48_79 = arith.constant 48 : index
    %c0_80 = arith.constant 0 : index
    %160 = vector.load %arg10[%c2_78, %c48_79, %c0_80] : memref<3x64x64xf32, #tpu.memory_space<vmem>>, vector<1x8x64xf32>
    %161 = vector.shape_cast %160 : vector<1x8x64xf32> to vector<8x64xf32>
    %162 = vector.shape_cast %159 : vector<8x64xf32> to vector<1x8x64xf32>
    tpu.vector_store %arg10[%c2_78, %c48_79, %c0_80], %162 {strides = array<i32>} : memref<3x64x64xf32, #tpu.memory_space<vmem>>, vector<1x8x64xf32>,
    %163 = vector.extract_strided_slice %120 {offsets = [56, 0], sizes = [8, 64], strides = [1, 1]} : vector<64x64xf32> to vector<8x64xf32>
    %164 = vector.extract_strided_slice %120 {offsets = [0, 0], sizes = [8, 64], strides = [1, 1]} : vector<64x64xf32> to vector<8x64xf32>
    %165 = arith.select %2, %164, %163 : vector<8x64xi1>, vector<8x64xf32>
    %c2_81 = arith.constant 2 : index
    %c56_82 = arith.constant 56 : index
    %c0_83 = arith.constant 0 : index
    %166 = vector.load %arg10[%c2_81, %c56_82, %c0_83] : memref<3x64x64xf32, #tpu.memory_space<vmem>>, vector<1x8x64xf32>
    %167 = vector.shape_cast %166 : vector<1x8x64xf32> to vector<8x64xf32>
    %168 = vector.shape_cast %165 : vector<8x64xf32> to vector<1x8x64xf32>
    tpu.vector_store %arg10[%c2_81, %c56_82, %c0_83], %168 {strides = array<i32>} : memref<3x64x64xf32, #tpu.memory_space<vmem>>, vector<1x8x64xf32>,
    %c0_84 = arith.constant 0 : index
    %c0_85 = arith.constant 0 : index
    %c0_86 = arith.constant 0 : index
    %169 = vector.load %arg3[%c0_84, %c0_85, %c0_86] : memref<9x64x64xf32, #tpu.memory_space<vmem>>, vector<1x64x64xf32>
    %170 = vector.shape_cast %169 : vector<1x64x64xf32> to vector<64x64xf32>
    %c1_87 = arith.constant 1 : index
    %c0_88 = arith.constant 0 : index
    %c0_89 = arith.constant 0 : index
    %171 = vector.load %arg3[%c1_87, %c0_88, %c0_89] : memref<9x64x64xf32, #tpu.memory_space<vmem>>, vector<1x64x64xf32>
    %172 = vector.shape_cast %171 : vector<1x64x64xf32> to vector<64x64xf32>
    %c2_90 = arith.constant 2 : index
    %c0_91 = arith.constant 0 : index
    %c0_92 = arith.constant 0 : index
    %173 = vector.load %arg3[%c2_90, %c0_91, %c0_92] : memref<9x64x64xf32, #tpu.memory_space<vmem>>, vector<1x64x64xf32>
    %174 = vector.shape_cast %173 : vector<1x64x64xf32> to vector<64x64xf32>
    %c0_93 = arith.constant 0 : index
    %c0_94 = arith.constant 0 : index
    %c0_95 = arith.constant 0 : index
    %175 = vector.load %arg5[%c0_93, %c0_94, %c0_95] : memref<3x1x64xf32, #tpu.memory_space<vmem>>, vector<1x1x64xf32>
    %176 = vector.shape_cast %175 : vector<1x1x64xf32> to vector<1x64xf32>
    %177 = vector.shape_cast %176 : vector<1x64xf32> to vector<1x64xf32>
    %178 = vector.broadcast %177 : vector<1x64xf32> to vector<8x64xf32>
    %cst_96 = arith.constant 0.000000e+00 : f32
    %179 = vector.broadcast %cst_96 : f32 to vector<8x64xf32>
    %c0_97 = arith.constant 0 : index
    %c0_98 = arith.constant 0 : index
    %c0_99 = arith.constant 0 : index
    %180 = vector.load %arg10[%c0_97, %c0_98, %c0_99] : memref<3x64x64xf32, #tpu.memory_space<vmem>>, vector<1x8x64xf32>
    %181 = vector.shape_cast %180 : vector<1x8x64xf32> to vector<8x64xf32>
    %c1_100 = arith.constant 1 : index
    %c0_101 = arith.constant 0 : index
    %c0_102 = arith.constant 0 : index
    %182 = vector.load %arg10[%c1_100, %c0_101, %c0_102] : memref<3x64x64xf32, #tpu.memory_space<vmem>>, vector<1x8x64xf32>
    %183 = vector.shape_cast %182 : vector<1x8x64xf32> to vector<8x64xf32>
    %c2_103 = arith.constant 2 : index
    %c0_104 = arith.constant 0 : index
    %c0_105 = arith.constant 0 : index
    %184 = vector.load %arg10[%c2_103, %c0_104, %c0_105] : memref<3x64x64xf32, #tpu.memory_space<vmem>>, vector<1x8x64xf32>
    %185 = vector.shape_cast %184 : vector<1x8x64xf32> to vector<8x64xf32>
    %cst_106 = arith.constant dense<0.000000e+00> : vector<8x64xf32>
    %186 = tpu.matmul %179, %170, %cst_106 {dimension_numbers = #tpu.dot_dimension_numbers<[1], [0], [0], [1], [0, 0, 1, 1], [], []>} : vector<8x64xf32>, vector<64x64xf32>, vector<8x64xf32> -> vector<8x64xf32>
    %cst_107 = arith.constant dense<0.000000e+00> : vector<8x64xf32>
    %187 = tpu.matmul %179, %172, %cst_107 {dimension_numbers = #tpu.dot_dimension_numbers<[1], [0], [0], [1], [0, 0, 1, 1], [], []>} : vector<8x64xf32>, vector<64x64xf32>, vector<8x64xf32> -> vector<8x64xf32>
    %cst_108 = arith.constant dense<0.000000e+00> : vector<8x64xf32>
    %188 = tpu.matmul %179, %174, %cst_108 {dimension_numbers = #tpu.dot_dimension_numbers<[1], [0], [0], [1], [0, 0, 1, 1], [], []>} : vector<8x64xf32>, vector<64x64xf32>, vector<8x64xf32> -> vector<8x64xf32>
    %189 = arith.addf %188, %178 : vector<8x64xf32>
    %190 = arith.addf %181, %186 : vector<8x64xf32>
    %191 = arith.negf %190 : vector<8x64xf32>
    %192 = math.exp %191 : vector<8x64xf32>
    %cst_109 = arith.constant 1.000000e+00 : f32
    %193 = vector.broadcast %cst_109 : f32 to vector<8x64xf32>
    %194 = arith.addf %193, %192 : vector<8x64xf32>
    %195 = arith.divf %193, %194 : vector<8x64xf32>
    %196 = arith.addf %183, %187 : vector<8x64xf32>
    %197 = arith.negf %196 : vector<8x64xf32>
    %198 = math.exp %197 : vector<8x64xf32>
    %cst_110 = arith.constant 1.000000e+00 : f32
    %199 = vector.broadcast %cst_110 : f32 to vector<8x64xf32>
    %200 = arith.addf %199, %198 : vector<8x64xf32>
    %201 = arith.divf %199, %200 : vector<8x64xf32>
    %202 = arith.mulf %195, %189 : vector<8x64xf32>
    %203 = arith.addf %185, %202 : vector<8x64xf32>
    %204 = math.tanh %203 : vector<8x64xf32>
    %205 = arith.subf %179, %204 : vector<8x64xf32>
    %206 = arith.mulf %201, %205 : vector<8x64xf32>
    %207 = arith.addf %204, %206 : vector<8x64xf32>
    %c0_111 = arith.constant 0 : index
    %c0_112 = arith.constant 0 : index
    %208 = vector.load %arg11[%c0_111, %c0_112] : memref<64x64xf32, #tpu.memory_space<vmem>>, vector<8x64xf32>
    tpu.vector_store %arg11[%c0_111, %c0_112], %207 {strides = array<i32>} : memref<64x64xf32, #tpu.memory_space<vmem>>, vector<8x64xf32>,
    %c0_113 = arith.constant 0 : index
    %c8_114 = arith.constant 8 : index
    %c0_115 = arith.constant 0 : index
    %209 = vector.load %arg10[%c0_113, %c8_114, %c0_115] : memref<3x64x64xf32, #tpu.memory_space<vmem>>, vector<1x8x64xf32>
    %210 = vector.shape_cast %209 : vector<1x8x64xf32> to vector<8x64xf32>
    %c1_116 = arith.constant 1 : index
    %c8_117 = arith.constant 8 : index
    %c0_118 = arith.constant 0 : index
    %211 = vector.load %arg10[%c1_116, %c8_117, %c0_118] : memref<3x64x64xf32, #tpu.memory_space<vmem>>, vector<1x8x64xf32>
    %212 = vector.shape_cast %211 : vector<1x8x64xf32> to vector<8x64xf32>
    %c2_119 = arith.constant 2 : index
    %c8_120 = arith.constant 8 : index
    %c0_121 = arith.constant 0 : index
    %213 = vector.load %arg10[%c2_119, %c8_120, %c0_121] : memref<3x64x64xf32, #tpu.memory_space<vmem>>, vector<1x8x64xf32>
    %214 = vector.shape_cast %213 : vector<1x8x64xf32> to vector<8x64xf32>
    %cst_122 = arith.constant dense<0.000000e+00> : vector<8x64xf32>
    %215 = tpu.matmul %207, %170, %cst_122 {dimension_numbers = #tpu.dot_dimension_numbers<[1], [0], [0], [1], [0, 0, 1, 1], [], []>} : vector<8x64xf32>, vector<64x64xf32>, vector<8x64xf32> -> vector<8x64xf32>
    %cst_123 = arith.constant dense<0.000000e+00> : vector<8x64xf32>
    %216 = tpu.matmul %207, %172, %cst_123 {dimension_numbers = #tpu.dot_dimension_numbers<[1], [0], [0], [1], [0, 0, 1, 1], [], []>} : vector<8x64xf32>, vector<64x64xf32>, vector<8x64xf32> -> vector<8x64xf32>
    %cst_124 = arith.constant dense<0.000000e+00> : vector<8x64xf32>
    %217 = tpu.matmul %207, %174, %cst_124 {dimension_numbers = #tpu.dot_dimension_numbers<[1], [0], [0], [1], [0, 0, 1, 1], [], []>} : vector<8x64xf32>, vector<64x64xf32>, vector<8x64xf32> -> vector<8x64xf32>
    %218 = arith.addf %217, %178 : vector<8x64xf32>
    %219 = arith.addf %210, %215 : vector<8x64xf32>
    %220 = arith.negf %219 : vector<8x64xf32>
    %221 = math.exp %220 : vector<8x64xf32>
    %cst_125 = arith.constant 1.000000e+00 : f32
    %222 = vector.broadcast %cst_125 : f32 to vector<8x64xf32>
    %223 = arith.addf %222, %221 : vector<8x64xf32>
    %224 = arith.divf %222, %223 : vector<8x64xf32>
    %225 = arith.addf %212, %216 : vector<8x64xf32>
    %226 = arith.negf %225 : vector<8x64xf32>
    %227 = math.exp %226 : vector<8x64xf32>
    %cst_126 = arith.constant 1.000000e+00 : f32
    %228 = vector.broadcast %cst_126 : f32 to vector<8x64xf32>
    %229 = arith.addf %228, %227 : vector<8x64xf32>
    %230 = arith.divf %228, %229 : vector<8x64xf32>
    %231 = arith.mulf %224, %218 : vector<8x64xf32>
    %232 = arith.addf %214, %231 : vector<8x64xf32>
    %233 = math.tanh %232 : vector<8x64xf32>
    %234 = arith.subf %207, %233 : vector<8x64xf32>
    %235 = arith.mulf %230, %234 : vector<8x64xf32>
    %236 = arith.addf %233, %235 : vector<8x64xf32>
    %c8_127 = arith.constant 8 : index
    %c0_128 = arith.constant 0 : index
    %237 = vector.load %arg11[%c8_127, %c0_128] : memref<64x64xf32, #tpu.memory_space<vmem>>, vector<8x64xf32>
    tpu.vector_store %arg11[%c8_127, %c0_128], %236 {strides = array<i32>} : memref<64x64xf32, #tpu.memory_space<vmem>>, vector<8x64xf32>,
    %c0_129 = arith.constant 0 : index
    %c16_130 = arith.constant 16 : index
    %c0_131 = arith.constant 0 : index
    %238 = vector.load %arg10[%c0_129, %c16_130, %c0_131] : memref<3x64x64xf32, #tpu.memory_space<vmem>>, vector<1x8x64xf32>
    %239 = vector.shape_cast %238 : vector<1x8x64xf32> to vector<8x64xf32>
    %c1_132 = arith.constant 1 : index
    %c16_133 = arith.constant 16 : index
    %c0_134 = arith.constant 0 : index
    %240 = vector.load %arg10[%c1_132, %c16_133, %c0_134] : memref<3x64x64xf32, #tpu.memory_space<vmem>>, vector<1x8x64xf32>
    %241 = vector.shape_cast %240 : vector<1x8x64xf32> to vector<8x64xf32>
    %c2_135 = arith.constant 2 : index
    %c16_136 = arith.constant 16 : index
    %c0_137 = arith.constant 0 : index
    %242 = vector.load %arg10[%c2_135, %c16_136, %c0_137] : memref<3x64x64xf32, #tpu.memory_space<vmem>>, vector<1x8x64xf32>
    %243 = vector.shape_cast %242 : vector<1x8x64xf32> to vector<8x64xf32>
    %cst_138 = arith.constant dense<0.000000e+00> : vector<8x64xf32>
    %244 = tpu.matmul %236, %170, %cst_138 {dimension_numbers = #tpu.dot_dimension_numbers<[1], [0], [0], [1], [0, 0, 1, 1], [], []>} : vector<8x64xf32>, vector<64x64xf32>, vector<8x64xf32> -> vector<8x64xf32>
    %cst_139 = arith.constant dense<0.000000e+00> : vector<8x64xf32>
    %245 = tpu.matmul %236, %172, %cst_139 {dimension_numbers = #tpu.dot_dimension_numbers<[1], [0], [0], [1], [0, 0, 1, 1], [], []>} : vector<8x64xf32>, vector<64x64xf32>, vector<8x64xf32> -> vector<8x64xf32>
    %cst_140 = arith.constant dense<0.000000e+00> : vector<8x64xf32>
    %246 = tpu.matmul %236, %174, %cst_140 {dimension_numbers = #tpu.dot_dimension_numbers<[1], [0], [0], [1], [0, 0, 1, 1], [], []>} : vector<8x64xf32>, vector<64x64xf32>, vector<8x64xf32> -> vector<8x64xf32>
    %247 = arith.addf %246, %178 : vector<8x64xf32>
    %248 = arith.addf %239, %244 : vector<8x64xf32>
    %249 = arith.negf %248 : vector<8x64xf32>
    %250 = math.exp %249 : vector<8x64xf32>
    %cst_141 = arith.constant 1.000000e+00 : f32
    %251 = vector.broadcast %cst_141 : f32 to vector<8x64xf32>
    %252 = arith.addf %251, %250 : vector<8x64xf32>
    %253 = arith.divf %251, %252 : vector<8x64xf32>
    %254 = arith.addf %241, %245 : vector<8x64xf32>
    %255 = arith.negf %254 : vector<8x64xf32>
    %256 = math.exp %255 : vector<8x64xf32>
    %cst_142 = arith.constant 1.000000e+00 : f32
    %257 = vector.broadcast %cst_142 : f32 to vector<8x64xf32>
    %258 = arith.addf %257, %256 : vector<8x64xf32>
    %259 = arith.divf %257, %258 : vector<8x64xf32>
    %260 = arith.mulf %253, %247 : vector<8x64xf32>
    %261 = arith.addf %243, %260 : vector<8x64xf32>
    %262 = math.tanh %261 : vector<8x64xf32>
    %263 = arith.subf %236, %262 : vector<8x64xf32>
    %264 = arith.mulf %259, %263 : vector<8x64xf32>
    %265 = arith.addf %262, %264 : vector<8x64xf32>
    %c16_143 = arith.constant 16 : index
    %c0_144 = arith.constant 0 : index
    %266 = vector.load %arg11[%c16_143, %c0_144] : memref<64x64xf32, #tpu.memory_space<vmem>>, vector<8x64xf32>
    tpu.vector_store %arg11[%c16_143, %c0_144], %265 {strides = array<i32>} : memref<64x64xf32, #tpu.memory_space<vmem>>, vector<8x64xf32>,
    %c0_145 = arith.constant 0 : index
    %c24_146 = arith.constant 24 : index
    %c0_147 = arith.constant 0 : index
    %267 = vector.load %arg10[%c0_145, %c24_146, %c0_147] : memref<3x64x64xf32, #tpu.memory_space<vmem>>, vector<1x8x64xf32>
    %268 = vector.shape_cast %267 : vector<1x8x64xf32> to vector<8x64xf32>
    %c1_148 = arith.constant 1 : index
    %c24_149 = arith.constant 24 : index
    %c0_150 = arith.constant 0 : index
    %269 = vector.load %arg10[%c1_148, %c24_149, %c0_150] : memref<3x64x64xf32, #tpu.memory_space<vmem>>, vector<1x8x64xf32>
    %270 = vector.shape_cast %269 : vector<1x8x64xf32> to vector<8x64xf32>
    %c2_151 = arith.constant 2 : index
    %c24_152 = arith.constant 24 : index
    %c0_153 = arith.constant 0 : index
    %271 = vector.load %arg10[%c2_151, %c24_152, %c0_153] : memref<3x64x64xf32, #tpu.memory_space<vmem>>, vector<1x8x64xf32>
    %272 = vector.shape_cast %271 : vector<1x8x64xf32> to vector<8x64xf32>
    %cst_154 = arith.constant dense<0.000000e+00> : vector<8x64xf32>
    %273 = tpu.matmul %265, %170, %cst_154 {dimension_numbers = #tpu.dot_dimension_numbers<[1], [0], [0], [1], [0, 0, 1, 1], [], []>} : vector<8x64xf32>, vector<64x64xf32>, vector<8x64xf32> -> vector<8x64xf32>
    %cst_155 = arith.constant dense<0.000000e+00> : vector<8x64xf32>
    %274 = tpu.matmul %265, %172, %cst_155 {dimension_numbers = #tpu.dot_dimension_numbers<[1], [0], [0], [1], [0, 0, 1, 1], [], []>} : vector<8x64xf32>, vector<64x64xf32>, vector<8x64xf32> -> vector<8x64xf32>
    %cst_156 = arith.constant dense<0.000000e+00> : vector<8x64xf32>
    %275 = tpu.matmul %265, %174, %cst_156 {dimension_numbers = #tpu.dot_dimension_numbers<[1], [0], [0], [1], [0, 0, 1, 1], [], []>} : vector<8x64xf32>, vector<64x64xf32>, vector<8x64xf32> -> vector<8x64xf32>
    %276 = arith.addf %275, %178 : vector<8x64xf32>
    %277 = arith.addf %268, %273 : vector<8x64xf32>
    %278 = arith.negf %277 : vector<8x64xf32>
    %279 = math.exp %278 : vector<8x64xf32>
    %cst_157 = arith.constant 1.000000e+00 : f32
    %280 = vector.broadcast %cst_157 : f32 to vector<8x64xf32>
    %281 = arith.addf %280, %279 : vector<8x64xf32>
    %282 = arith.divf %280, %281 : vector<8x64xf32>
    %283 = arith.addf %270, %274 : vector<8x64xf32>
    %284 = arith.negf %283 : vector<8x64xf32>
    %285 = math.exp %284 : vector<8x64xf32>
    %cst_158 = arith.constant 1.000000e+00 : f32
    %286 = vector.broadcast %cst_158 : f32 to vector<8x64xf32>
    %287 = arith.addf %286, %285 : vector<8x64xf32>
    %288 = arith.divf %286, %287 : vector<8x64xf32>
    %289 = arith.mulf %282, %276 : vector<8x64xf32>
    %290 = arith.addf %272, %289 : vector<8x64xf32>
    %291 = math.tanh %290 : vector<8x64xf32>
    %292 = arith.subf %265, %291 : vector<8x64xf32>
    %293 = arith.mulf %288, %292 : vector<8x64xf32>
    %294 = arith.addf %291, %293 : vector<8x64xf32>
    %c24_159 = arith.constant 24 : index
    %c0_160 = arith.constant 0 : index
    %295 = vector.load %arg11[%c24_159, %c0_160] : memref<64x64xf32, #tpu.memory_space<vmem>>, vector<8x64xf32>
    tpu.vector_store %arg11[%c24_159, %c0_160], %294 {strides = array<i32>} : memref<64x64xf32, #tpu.memory_space<vmem>>, vector<8x64xf32>,
    %c0_161 = arith.constant 0 : index
    %c32_162 = arith.constant 32 : index
    %c0_163 = arith.constant 0 : index
    %296 = vector.load %arg10[%c0_161, %c32_162, %c0_163] : memref<3x64x64xf32, #tpu.memory_space<vmem>>, vector<1x8x64xf32>
    %297 = vector.shape_cast %296 : vector<1x8x64xf32> to vector<8x64xf32>
    %c1_164 = arith.constant 1 : index
    %c32_165 = arith.constant 32 : index
    %c0_166 = arith.constant 0 : index
    %298 = vector.load %arg10[%c1_164, %c32_165, %c0_166] : memref<3x64x64xf32, #tpu.memory_space<vmem>>, vector<1x8x64xf32>
    %299 = vector.shape_cast %298 : vector<1x8x64xf32> to vector<8x64xf32>
    %c2_167 = arith.constant 2 : index
    %c32_168 = arith.constant 32 : index
    %c0_169 = arith.constant 0 : index
    %300 = vector.load %arg10[%c2_167, %c32_168, %c0_169] : memref<3x64x64xf32, #tpu.memory_space<vmem>>, vector<1x8x64xf32>
    %301 = vector.shape_cast %300 : vector<1x8x64xf32> to vector<8x64xf32>
    %cst_170 = arith.constant dense<0.000000e+00> : vector<8x64xf32>
    %302 = tpu.matmul %294, %170, %cst_170 {dimension_numbers = #tpu.dot_dimension_numbers<[1], [0], [0], [1], [0, 0, 1, 1], [], []>} : vector<8x64xf32>, vector<64x64xf32>, vector<8x64xf32> -> vector<8x64xf32>
    %cst_171 = arith.constant dense<0.000000e+00> : vector<8x64xf32>
    %303 = tpu.matmul %294, %172, %cst_171 {dimension_numbers = #tpu.dot_dimension_numbers<[1], [0], [0], [1], [0, 0, 1, 1], [], []>} : vector<8x64xf32>, vector<64x64xf32>, vector<8x64xf32> -> vector<8x64xf32>
    %cst_172 = arith.constant dense<0.000000e+00> : vector<8x64xf32>
    %304 = tpu.matmul %294, %174, %cst_172 {dimension_numbers = #tpu.dot_dimension_numbers<[1], [0], [0], [1], [0, 0, 1, 1], [], []>} : vector<8x64xf32>, vector<64x64xf32>, vector<8x64xf32> -> vector<8x64xf32>
    %305 = arith.addf %304, %178 : vector<8x64xf32>
    %306 = arith.addf %297, %302 : vector<8x64xf32>
    %307 = arith.negf %306 : vector<8x64xf32>
    %308 = math.exp %307 : vector<8x64xf32>
    %cst_173 = arith.constant 1.000000e+00 : f32
    %309 = vector.broadcast %cst_173 : f32 to vector<8x64xf32>
    %310 = arith.addf %309, %308 : vector<8x64xf32>
    %311 = arith.divf %309, %310 : vector<8x64xf32>
    %312 = arith.addf %299, %303 : vector<8x64xf32>
    %313 = arith.negf %312 : vector<8x64xf32>
    %314 = math.exp %313 : vector<8x64xf32>
    %cst_174 = arith.constant 1.000000e+00 : f32
    %315 = vector.broadcast %cst_174 : f32 to vector<8x64xf32>
    %316 = arith.addf %315, %314 : vector<8x64xf32>
    %317 = arith.divf %315, %316 : vector<8x64xf32>
    %318 = arith.mulf %311, %305 : vector<8x64xf32>
    %319 = arith.addf %301, %318 : vector<8x64xf32>
    %320 = math.tanh %319 : vector<8x64xf32>
    %321 = arith.subf %294, %320 : vector<8x64xf32>
    %322 = arith.mulf %317, %321 : vector<8x64xf32>
    %323 = arith.addf %320, %322 : vector<8x64xf32>
    %c32_175 = arith.constant 32 : index
    %c0_176 = arith.constant 0 : index
    %324 = vector.load %arg11[%c32_175, %c0_176] : memref<64x64xf32, #tpu.memory_space<vmem>>, vector<8x64xf32>
    tpu.vector_store %arg11[%c32_175, %c0_176], %323 {strides = array<i32>} : memref<64x64xf32, #tpu.memory_space<vmem>>, vector<8x64xf32>,
    %c0_177 = arith.constant 0 : index
    %c40_178 = arith.constant 40 : index
    %c0_179 = arith.constant 0 : index
    %325 = vector.load %arg10[%c0_177, %c40_178, %c0_179] : memref<3x64x64xf32, #tpu.memory_space<vmem>>, vector<1x8x64xf32>
    %326 = vector.shape_cast %325 : vector<1x8x64xf32> to vector<8x64xf32>
    %c1_180 = arith.constant 1 : index
    %c40_181 = arith.constant 40 : index
    %c0_182 = arith.constant 0 : index
    %327 = vector.load %arg10[%c1_180, %c40_181, %c0_182] : memref<3x64x64xf32, #tpu.memory_space<vmem>>, vector<1x8x64xf32>
    %328 = vector.shape_cast %327 : vector<1x8x64xf32> to vector<8x64xf32>
    %c2_183 = arith.constant 2 : index
    %c40_184 = arith.constant 40 : index
    %c0_185 = arith.constant 0 : index
    %329 = vector.load %arg10[%c2_183, %c40_184, %c0_185] : memref<3x64x64xf32, #tpu.memory_space<vmem>>, vector<1x8x64xf32>
    %330 = vector.shape_cast %329 : vector<1x8x64xf32> to vector<8x64xf32>
    %cst_186 = arith.constant dense<0.000000e+00> : vector<8x64xf32>
    %331 = tpu.matmul %323, %170, %cst_186 {dimension_numbers = #tpu.dot_dimension_numbers<[1], [0], [0], [1], [0, 0, 1, 1], [], []>} : vector<8x64xf32>, vector<64x64xf32>, vector<8x64xf32> -> vector<8x64xf32>
    %cst_187 = arith.constant dense<0.000000e+00> : vector<8x64xf32>
    %332 = tpu.matmul %323, %172, %cst_187 {dimension_numbers = #tpu.dot_dimension_numbers<[1], [0], [0], [1], [0, 0, 1, 1], [], []>} : vector<8x64xf32>, vector<64x64xf32>, vector<8x64xf32> -> vector<8x64xf32>
    %cst_188 = arith.constant dense<0.000000e+00> : vector<8x64xf32>
    %333 = tpu.matmul %323, %174, %cst_188 {dimension_numbers = #tpu.dot_dimension_numbers<[1], [0], [0], [1], [0, 0, 1, 1], [], []>} : vector<8x64xf32>, vector<64x64xf32>, vector<8x64xf32> -> vector<8x64xf32>
    %334 = arith.addf %333, %178 : vector<8x64xf32>
    %335 = arith.addf %326, %331 : vector<8x64xf32>
    %336 = arith.negf %335 : vector<8x64xf32>
    %337 = math.exp %336 : vector<8x64xf32>
    %cst_189 = arith.constant 1.000000e+00 : f32
    %338 = vector.broadcast %cst_189 : f32 to vector<8x64xf32>
    %339 = arith.addf %338, %337 : vector<8x64xf32>
    %340 = arith.divf %338, %339 : vector<8x64xf32>
    %341 = arith.addf %328, %332 : vector<8x64xf32>
    %342 = arith.negf %341 : vector<8x64xf32>
    %343 = math.exp %342 : vector<8x64xf32>
    %cst_190 = arith.constant 1.000000e+00 : f32
    %344 = vector.broadcast %cst_190 : f32 to vector<8x64xf32>
    %345 = arith.addf %344, %343 : vector<8x64xf32>
    %346 = arith.divf %344, %345 : vector<8x64xf32>
    %347 = arith.mulf %340, %334 : vector<8x64xf32>
    %348 = arith.addf %330, %347 : vector<8x64xf32>
    %349 = math.tanh %348 : vector<8x64xf32>
    %350 = arith.subf %323, %349 : vector<8x64xf32>
    %351 = arith.mulf %346, %350 : vector<8x64xf32>
    %352 = arith.addf %349, %351 : vector<8x64xf32>
    %c40_191 = arith.constant 40 : index
    %c0_192 = arith.constant 0 : index
    %353 = vector.load %arg11[%c40_191, %c0_192] : memref<64x64xf32, #tpu.memory_space<vmem>>, vector<8x64xf32>
    tpu.vector_store %arg11[%c40_191, %c0_192], %352 {strides = array<i32>} : memref<64x64xf32, #tpu.memory_space<vmem>>, vector<8x64xf32>,
    %c0_193 = arith.constant 0 : index
    %c48_194 = arith.constant 48 : index
    %c0_195 = arith.constant 0 : index
    %354 = vector.load %arg10[%c0_193, %c48_194, %c0_195] : memref<3x64x64xf32, #tpu.memory_space<vmem>>, vector<1x8x64xf32>
    %355 = vector.shape_cast %354 : vector<1x8x64xf32> to vector<8x64xf32>
    %c1_196 = arith.constant 1 : index
    %c48_197 = arith.constant 48 : index
    %c0_198 = arith.constant 0 : index
    %356 = vector.load %arg10[%c1_196, %c48_197, %c0_198] : memref<3x64x64xf32, #tpu.memory_space<vmem>>, vector<1x8x64xf32>
    %357 = vector.shape_cast %356 : vector<1x8x64xf32> to vector<8x64xf32>
    %c2_199 = arith.constant 2 : index
    %c48_200 = arith.constant 48 : index
    %c0_201 = arith.constant 0 : index
    %358 = vector.load %arg10[%c2_199, %c48_200, %c0_201] : memref<3x64x64xf32, #tpu.memory_space<vmem>>, vector<1x8x64xf32>
    %359 = vector.shape_cast %358 : vector<1x8x64xf32> to vector<8x64xf32>
    %cst_202 = arith.constant dense<0.000000e+00> : vector<8x64xf32>
    %360 = tpu.matmul %352, %170, %cst_202 {dimension_numbers = #tpu.dot_dimension_numbers<[1], [0], [0], [1], [0, 0, 1, 1], [], []>} : vector<8x64xf32>, vector<64x64xf32>, vector<8x64xf32> -> vector<8x64xf32>
    %cst_203 = arith.constant dense<0.000000e+00> : vector<8x64xf32>
    %361 = tpu.matmul %352, %172, %cst_203 {dimension_numbers = #tpu.dot_dimension_numbers<[1], [0], [0], [1], [0, 0, 1, 1], [], []>} : vector<8x64xf32>, vector<64x64xf32>, vector<8x64xf32> -> vector<8x64xf32>
    %cst_204 = arith.constant dense<0.000000e+00> : vector<8x64xf32>
    %362 = tpu.matmul %352, %174, %cst_204 {dimension_numbers = #tpu.dot_dimension_numbers<[1], [0], [0], [1], [0, 0, 1, 1], [], []>} : vector<8x64xf32>, vector<64x64xf32>, vector<8x64xf32> -> vector<8x64xf32>
    %363 = arith.addf %362, %178 : vector<8x64xf32>
    %364 = arith.addf %355, %360 : vector<8x64xf32>
    %365 = arith.negf %364 : vector<8x64xf32>
    %366 = math.exp %365 : vector<8x64xf32>
    %cst_205 = arith.constant 1.000000e+00 : f32
    %367 = vector.broadcast %cst_205 : f32 to vector<8x64xf32>
    %368 = arith.addf %367, %366 : vector<8x64xf32>
    %369 = arith.divf %367, %368 : vector<8x64xf32>
    %370 = arith.addf %357, %361 : vector<8x64xf32>
    %371 = arith.negf %370 : vector<8x64xf32>
    %372 = math.exp %371 : vector<8x64xf32>
    %cst_206 = arith.constant 1.000000e+00 : f32
    %373 = vector.broadcast %cst_206 : f32 to vector<8x64xf32>
    %374 = arith.addf %373, %372 : vector<8x64xf32>
    %375 = arith.divf %373, %374 : vector<8x64xf32>
    %376 = arith.mulf %369, %363 : vector<8x64xf32>
    %377 = arith.addf %359, %376 : vector<8x64xf32>
    %378 = math.tanh %377 : vector<8x64xf32>
    %379 = arith.subf %352, %378 : vector<8x64xf32>
    %380 = arith.mulf %375, %379 : vector<8x64xf32>
    %381 = arith.addf %378, %380 : vector<8x64xf32>
    %c48_207 = arith.constant 48 : index
    %c0_208 = arith.constant 0 : index
    %382 = vector.load %arg11[%c48_207, %c0_208] : memref<64x64xf32, #tpu.memory_space<vmem>>, vector<8x64xf32>
    tpu.vector_store %arg11[%c48_207, %c0_208], %381 {strides = array<i32>} : memref<64x64xf32, #tpu.memory_space<vmem>>, vector<8x64xf32>,
    %c0_209 = arith.constant 0 : index
    %c56_210 = arith.constant 56 : index
    %c0_211 = arith.constant 0 : index
    %383 = vector.load %arg10[%c0_209, %c56_210, %c0_211] : memref<3x64x64xf32, #tpu.memory_space<vmem>>, vector<1x8x64xf32>
    %384 = vector.shape_cast %383 : vector<1x8x64xf32> to vector<8x64xf32>
    %c1_212 = arith.constant 1 : index
    %c56_213 = arith.constant 56 : index
    %c0_214 = arith.constant 0 : index
    %385 = vector.load %arg10[%c1_212, %c56_213, %c0_214] : memref<3x64x64xf32, #tpu.memory_space<vmem>>, vector<1x8x64xf32>
    %386 = vector.shape_cast %385 : vector<1x8x64xf32> to vector<8x64xf32>
    %c2_215 = arith.constant 2 : index
    %c56_216 = arith.constant 56 : index
    %c0_217 = arith.constant 0 : index
    %387 = vector.load %arg10[%c2_215, %c56_216, %c0_217] : memref<3x64x64xf32, #tpu.memory_space<vmem>>, vector<1x8x64xf32>
    %388 = vector.shape_cast %387 : vector<1x8x64xf32> to vector<8x64xf32>
    %cst_218 = arith.constant dense<0.000000e+00> : vector<8x64xf32>
    %389 = tpu.matmul %381, %170, %cst_218 {dimension_numbers = #tpu.dot_dimension_numbers<[1], [0], [0], [1], [0, 0, 1, 1], [], []>} : vector<8x64xf32>, vector<64x64xf32>, vector<8x64xf32> -> vector<8x64xf32>
    %cst_219 = arith.constant dense<0.000000e+00> : vector<8x64xf32>
    %390 = tpu.matmul %381, %172, %cst_219 {dimension_numbers = #tpu.dot_dimension_numbers<[1], [0], [0], [1], [0, 0, 1, 1], [], []>} : vector<8x64xf32>, vector<64x64xf32>, vector<8x64xf32> -> vector<8x64xf32>
    %cst_220 = arith.constant dense<0.000000e+00> : vector<8x64xf32>
    %391 = tpu.matmul %381, %174, %cst_220 {dimension_numbers = #tpu.dot_dimension_numbers<[1], [0], [0], [1], [0, 0, 1, 1], [], []>} : vector<8x64xf32>, vector<64x64xf32>, vector<8x64xf32> -> vector<8x64xf32>
    %392 = arith.addf %391, %178 : vector<8x64xf32>
    %393 = arith.addf %384, %389 : vector<8x64xf32>
    %394 = arith.negf %393 : vector<8x64xf32>
    %395 = math.exp %394 : vector<8x64xf32>
    %cst_221 = arith.constant 1.000000e+00 : f32
    %396 = vector.broadcast %cst_221 : f32 to vector<8x64xf32>
    %397 = arith.addf %396, %395 : vector<8x64xf32>
    %398 = arith.divf %396, %397 : vector<8x64xf32>
    %399 = arith.addf %386, %390 : vector<8x64xf32>
    %400 = arith.negf %399 : vector<8x64xf32>
    %401 = math.exp %400 : vector<8x64xf32>
    %cst_222 = arith.constant 1.000000e+00 : f32
    %402 = vector.broadcast %cst_222 : f32 to vector<8x64xf32>
    %403 = arith.addf %402, %401 : vector<8x64xf32>
    %404 = arith.divf %402, %403 : vector<8x64xf32>
    %405 = arith.mulf %398, %392 : vector<8x64xf32>
    %406 = arith.addf %388, %405 : vector<8x64xf32>
    %407 = math.tanh %406 : vector<8x64xf32>
    %408 = arith.subf %381, %407 : vector<8x64xf32>
    %409 = arith.mulf %404, %408 : vector<8x64xf32>
    %410 = arith.addf %407, %409 : vector<8x64xf32>
    %c56_223 = arith.constant 56 : index
    %c0_224 = arith.constant 0 : index
    %411 = vector.load %arg11[%c56_223, %c0_224] : memref<64x64xf32, #tpu.memory_space<vmem>>, vector<8x64xf32>
    tpu.vector_store %arg11[%c56_223, %c0_224], %410 {strides = array<i32>} : memref<64x64xf32, #tpu.memory_space<vmem>>, vector<8x64xf32>,
    %c0_225 = arith.constant 0 : index
    %c0_226 = arith.constant 0 : index
    %412 = vector.load %arg11[%c0_225, %c0_226] : memref<64x64xf32, #tpu.memory_space<vmem>>, vector<8x64xf32>
    %c56_227 = arith.constant 56 : index
    %c0_228 = arith.constant 0 : index
    %413 = vector.load %arg11[%c56_227, %c0_228] : memref<64x64xf32, #tpu.memory_space<vmem>>, vector<8x64xf32>
    %414 = arith.select %2, %413, %412 : vector<8x64xi1>, vector<8x64xf32>
    %c0_229 = arith.constant 0 : index
    %c0_230 = arith.constant 0 : index
    %415 = vector.load %arg11[%c0_229, %c0_230] : memref<64x64xf32, #tpu.memory_space<vmem>>, vector<8x64xf32>
    tpu.vector_store %arg11[%c0_229, %c0_230], %414 {strides = array<i32>} : memref<64x64xf32, #tpu.memory_space<vmem>>, vector<8x64xf32>,
    %416 = arith.select %2, %412, %413 : vector<8x64xi1>, vector<8x64xf32>
    %c56_231 = arith.constant 56 : index
    %c0_232 = arith.constant 0 : index
    %417 = vector.load %arg11[%c56_231, %c0_232] : memref<64x64xf32, #tpu.memory_space<vmem>>, vector<8x64xf32>
    tpu.vector_store %arg11[%c56_231, %c0_232], %416 {strides = array<i32>} : memref<64x64xf32, #tpu.memory_space<vmem>>, vector<8x64xf32>,
    %c8_233 = arith.constant 8 : index
    %c0_234 = arith.constant 0 : index
    %418 = vector.load %arg11[%c8_233, %c0_234] : memref<64x64xf32, #tpu.memory_space<vmem>>, vector<8x64xf32>
    %c48_235 = arith.constant 48 : index
    %c0_236 = arith.constant 0 : index
    %419 = vector.load %arg11[%c48_235, %c0_236] : memref<64x64xf32, #tpu.memory_space<vmem>>, vector<8x64xf32>
    %420 = arith.select %2, %419, %418 : vector<8x64xi1>, vector<8x64xf32>
    %c8_237 = arith.constant 8 : index
    %c0_238 = arith.constant 0 : index
    %421 = vector.load %arg11[%c8_237, %c0_238] : memref<64x64xf32, #tpu.memory_space<vmem>>, vector<8x64xf32>
    tpu.vector_store %arg11[%c8_237, %c0_238], %420 {strides = array<i32>} : memref<64x64xf32, #tpu.memory_space<vmem>>, vector<8x64xf32>,
    %422 = arith.select %2, %418, %419 : vector<8x64xi1>, vector<8x64xf32>
    %c48_239 = arith.constant 48 : index
    %c0_240 = arith.constant 0 : index
    %423 = vector.load %arg11[%c48_239, %c0_240] : memref<64x64xf32, #tpu.memory_space<vmem>>, vector<8x64xf32>
    tpu.vector_store %arg11[%c48_239, %c0_240], %422 {strides = array<i32>} : memref<64x64xf32, #tpu.memory_space<vmem>>, vector<8x64xf32>,
    %c16_241 = arith.constant 16 : index
    %c0_242 = arith.constant 0 : index
    %424 = vector.load %arg11[%c16_241, %c0_242] : memref<64x64xf32, #tpu.memory_space<vmem>>, vector<8x64xf32>
    %c40_243 = arith.constant 40 : index
    %c0_244 = arith.constant 0 : index
    %425 = vector.load %arg11[%c40_243, %c0_244] : memref<64x64xf32, #tpu.memory_space<vmem>>, vector<8x64xf32>
    %426 = arith.select %2, %425, %424 : vector<8x64xi1>, vector<8x64xf32>
    %c16_245 = arith.constant 16 : index
    %c0_246 = arith.constant 0 : index
    %427 = vector.load %arg11[%c16_245, %c0_246] : memref<64x64xf32, #tpu.memory_space<vmem>>, vector<8x64xf32>
    tpu.vector_store %arg11[%c16_245, %c0_246], %426 {strides = array<i32>} : memref<64x64xf32, #tpu.memory_space<vmem>>, vector<8x64xf32>,
    %428 = arith.select %2, %424, %425 : vector<8x64xi1>, vector<8x64xf32>
    %c40_247 = arith.constant 40 : index
    %c0_248 = arith.constant 0 : index
    %429 = vector.load %arg11[%c40_247, %c0_248] : memref<64x64xf32, #tpu.memory_space<vmem>>, vector<8x64xf32>
    tpu.vector_store %arg11[%c40_247, %c0_248], %428 {strides = array<i32>} : memref<64x64xf32, #tpu.memory_space<vmem>>, vector<8x64xf32>,
    %c24_249 = arith.constant 24 : index
    %c0_250 = arith.constant 0 : index
    %430 = vector.load %arg11[%c24_249, %c0_250] : memref<64x64xf32, #tpu.memory_space<vmem>>, vector<8x64xf32>
    %c32_251 = arith.constant 32 : index
    %c0_252 = arith.constant 0 : index
    %431 = vector.load %arg11[%c32_251, %c0_252] : memref<64x64xf32, #tpu.memory_space<vmem>>, vector<8x64xf32>
    %432 = arith.select %2, %431, %430 : vector<8x64xi1>, vector<8x64xf32>
    %c24_253 = arith.constant 24 : index
    %c0_254 = arith.constant 0 : index
    %433 = vector.load %arg11[%c24_253, %c0_254] : memref<64x64xf32, #tpu.memory_space<vmem>>, vector<8x64xf32>
    tpu.vector_store %arg11[%c24_253, %c0_254], %432 {strides = array<i32>} : memref<64x64xf32, #tpu.memory_space<vmem>>, vector<8x64xf32>,
    %434 = arith.select %2, %430, %431 : vector<8x64xi1>, vector<8x64xf32>
    %c32_255 = arith.constant 32 : index
    %c0_256 = arith.constant 0 : index
    %435 = vector.load %arg11[%c32_255, %c0_256] : memref<64x64xf32, #tpu.memory_space<vmem>>, vector<8x64xf32>
    tpu.vector_store %arg11[%c32_255, %c0_256], %434 {strides = array<i32>} : memref<64x64xf32, #tpu.memory_space<vmem>>, vector<8x64xf32>,
    %c0_257 = arith.constant 0 : index
    %c0_258 = arith.constant 0 : index
    %436 = vector.load %arg11[%c0_257, %c0_258] : memref<64x64xf32, #tpu.memory_space<vmem>>, vector<64x64xf32>
    %c3 = arith.constant 3 : index
    %c0_259 = arith.constant 0 : index
    %c0_260 = arith.constant 0 : index
    %437 = vector.load %arg2[%c3, %c0_259, %c0_260] : memref<9x64x64xf32, #tpu.memory_space<vmem>>, vector<1x64x64xf32>
    %438 = vector.shape_cast %437 : vector<1x64x64xf32> to vector<64x64xf32>
    %cst_261 = arith.constant dense<0.000000e+00> : vector<64x64xf32>
    %439 = tpu.matmul %436, %438, %cst_261 {dimension_numbers = #tpu.dot_dimension_numbers<[1], [0], [0], [1], [0, 0, 1, 1], [], []>} : vector<64x64xf32>, vector<64x64xf32>, vector<64x64xf32> -> vector<64x64xf32>
    %c3_262 = arith.constant 3 : index
    %c0_263 = arith.constant 0 : index
    %c0_264 = arith.constant 0 : index
    %440 = vector.load %arg4[%c3_262, %c0_263, %c0_264] : memref<9x1x64xf32, #tpu.memory_space<vmem>>, vector<1x1x64xf32>
    %441 = vector.shape_cast %440 : vector<1x1x64xf32> to vector<1x64xf32>
    %442 = vector.broadcast %441 : vector<1x64xf32> to vector<64x64xf32>
    %443 = arith.addf %439, %442 : vector<64x64xf32>
    %444 = vector.extract_strided_slice %443 {offsets = [0, 0], sizes = [8, 64], strides = [1, 1]} : vector<64x64xf32> to vector<8x64xf32>
    %445 = vector.extract_strided_slice %443 {offsets = [56, 0], sizes = [8, 64], strides = [1, 1]} : vector<64x64xf32> to vector<8x64xf32>
    %446 = arith.select %2, %445, %444 : vector<8x64xi1>, vector<8x64xf32>
    %c0_265 = arith.constant 0 : index
    %c0_266 = arith.constant 0 : index
    %c0_267 = arith.constant 0 : index
    %447 = vector.load %arg10[%c0_265, %c0_266, %c0_267] : memref<3x64x64xf32, #tpu.memory_space<vmem>>, vector<1x8x64xf32>
    %448 = vector.shape_cast %447 : vector<1x8x64xf32> to vector<8x64xf32>
    %449 = vector.shape_cast %446 : vector<8x64xf32> to vector<1x8x64xf32>
    tpu.vector_store %arg10[%c0_265, %c0_266, %c0_267], %449 {strides = array<i32>} : memref<3x64x64xf32, #tpu.memory_space<vmem>>, vector<1x8x64xf32>,
    %450 = vector.extract_strided_slice %443 {offsets = [8, 0], sizes = [8, 64], strides = [1, 1]} : vector<64x64xf32> to vector<8x64xf32>
    %451 = vector.extract_strided_slice %443 {offsets = [48, 0], sizes = [8, 64], strides = [1, 1]} : vector<64x64xf32> to vector<8x64xf32>
    %452 = arith.select %2, %451, %450 : vector<8x64xi1>, vector<8x64xf32>
    %c0_268 = arith.constant 0 : index
    %c8_269 = arith.constant 8 : index
    %c0_270 = arith.constant 0 : index
    %453 = vector.load %arg10[%c0_268, %c8_269, %c0_270] : memref<3x64x64xf32, #tpu.memory_space<vmem>>, vector<1x8x64xf32>
    %454 = vector.shape_cast %453 : vector<1x8x64xf32> to vector<8x64xf32>
    %455 = vector.shape_cast %452 : vector<8x64xf32> to vector<1x8x64xf32>
    tpu.vector_store %arg10[%c0_268, %c8_269, %c0_270], %455 {strides = array<i32>} : memref<3x64x64xf32, #tpu.memory_space<vmem>>, vector<1x8x64xf32>,
    %456 = vector.extract_strided_slice %443 {offsets = [16, 0], sizes = [8, 64], strides = [1, 1]} : vector<64x64xf32> to vector<8x64xf32>
    %457 = vector.extract_strided_slice %443 {offsets = [40, 0], sizes = [8, 64], strides = [1, 1]} : vector<64x64xf32> to vector<8x64xf32>
    %458 = arith.select %2, %457, %456 : vector<8x64xi1>, vector<8x64xf32>
    %c0_271 = arith.constant 0 : index
    %c16_272 = arith.constant 16 : index
    %c0_273 = arith.constant 0 : index
    %459 = vector.load %arg10[%c0_271, %c16_272, %c0_273] : memref<3x64x64xf32, #tpu.memory_space<vmem>>, vector<1x8x64xf32>
    %460 = vector.shape_cast %459 : vector<1x8x64xf32> to vector<8x64xf32>
    %461 = vector.shape_cast %458 : vector<8x64xf32> to vector<1x8x64xf32>
    tpu.vector_store %arg10[%c0_271, %c16_272, %c0_273], %461 {strides = array<i32>} : memref<3x64x64xf32, #tpu.memory_space<vmem>>, vector<1x8x64xf32>,
    %462 = vector.extract_strided_slice %443 {offsets = [24, 0], sizes = [8, 64], strides = [1, 1]} : vector<64x64xf32> to vector<8x64xf32>
    %463 = vector.extract_strided_slice %443 {offsets = [32, 0], sizes = [8, 64], strides = [1, 1]} : vector<64x64xf32> to vector<8x64xf32>
    %464 = arith.select %2, %463, %462 : vector<8x64xi1>, vector<8x64xf32>
    %c0_274 = arith.constant 0 : index
    %c24_275 = arith.constant 24 : index
    %c0_276 = arith.constant 0 : index
    %465 = vector.load %arg10[%c0_274, %c24_275, %c0_276] : memref<3x64x64xf32, #tpu.memory_space<vmem>>, vector<1x8x64xf32>
    %466 = vector.shape_cast %465 : vector<1x8x64xf32> to vector<8x64xf32>
    %467 = vector.shape_cast %464 : vector<8x64xf32> to vector<1x8x64xf32>
    tpu.vector_store %arg10[%c0_274, %c24_275, %c0_276], %467 {strides = array<i32>} : memref<3x64x64xf32, #tpu.memory_space<vmem>>, vector<1x8x64xf32>,
    %468 = vector.extract_strided_slice %443 {offsets = [32, 0], sizes = [8, 64], strides = [1, 1]} : vector<64x64xf32> to vector<8x64xf32>
    %469 = vector.extract_strided_slice %443 {offsets = [24, 0], sizes = [8, 64], strides = [1, 1]} : vector<64x64xf32> to vector<8x64xf32>
    %470 = arith.select %2, %469, %468 : vector<8x64xi1>, vector<8x64xf32>
    %c0_277 = arith.constant 0 : index
    %c32_278 = arith.constant 32 : index
    %c0_279 = arith.constant 0 : index
    %471 = vector.load %arg10[%c0_277, %c32_278, %c0_279] : memref<3x64x64xf32, #tpu.memory_space<vmem>>, vector<1x8x64xf32>
    %472 = vector.shape_cast %471 : vector<1x8x64xf32> to vector<8x64xf32>
    %473 = vector.shape_cast %470 : vector<8x64xf32> to vector<1x8x64xf32>
    tpu.vector_store %arg10[%c0_277, %c32_278, %c0_279], %473 {strides = array<i32>} : memref<3x64x64xf32, #tpu.memory_space<vmem>>, vector<1x8x64xf32>,
    %474 = vector.extract_strided_slice %443 {offsets = [40, 0], sizes = [8, 64], strides = [1, 1]} : vector<64x64xf32> to vector<8x64xf32>
    %475 = vector.extract_strided_slice %443 {offsets = [16, 0], sizes = [8, 64], strides = [1, 1]} : vector<64x64xf32> to vector<8x64xf32>
    %476 = arith.select %2, %475, %474 : vector<8x64xi1>, vector<8x64xf32>
    %c0_280 = arith.constant 0 : index
    %c40_281 = arith.constant 40 : index
    %c0_282 = arith.constant 0 : index
    %477 = vector.load %arg10[%c0_280, %c40_281, %c0_282] : memref<3x64x64xf32, #tpu.memory_space<vmem>>, vector<1x8x64xf32>
    %478 = vector.shape_cast %477 : vector<1x8x64xf32> to vector<8x64xf32>
    %479 = vector.shape_cast %476 : vector<8x64xf32> to vector<1x8x64xf32>
    tpu.vector_store %arg10[%c0_280, %c40_281, %c0_282], %479 {strides = array<i32>} : memref<3x64x64xf32, #tpu.memory_space<vmem>>, vector<1x8x64xf32>,
    %480 = vector.extract_strided_slice %443 {offsets = [48, 0], sizes = [8, 64], strides = [1, 1]} : vector<64x64xf32> to vector<8x64xf32>
    %481 = vector.extract_strided_slice %443 {offsets = [8, 0], sizes = [8, 64], strides = [1, 1]} : vector<64x64xf32> to vector<8x64xf32>
    %482 = arith.select %2, %481, %480 : vector<8x64xi1>, vector<8x64xf32>
    %c0_283 = arith.constant 0 : index
    %c48_284 = arith.constant 48 : index
    %c0_285 = arith.constant 0 : index
    %483 = vector.load %arg10[%c0_283, %c48_284, %c0_285] : memref<3x64x64xf32, #tpu.memory_space<vmem>>, vector<1x8x64xf32>
    %484 = vector.shape_cast %483 : vector<1x8x64xf32> to vector<8x64xf32>
    %485 = vector.shape_cast %482 : vector<8x64xf32> to vector<1x8x64xf32>
    tpu.vector_store %arg10[%c0_283, %c48_284, %c0_285], %485 {strides = array<i32>} : memref<3x64x64xf32, #tpu.memory_space<vmem>>, vector<1x8x64xf32>,
    %486 = vector.extract_strided_slice %443 {offsets = [56, 0], sizes = [8, 64], strides = [1, 1]} : vector<64x64xf32> to vector<8x64xf32>
    %487 = vector.extract_strided_slice %443 {offsets = [0, 0], sizes = [8, 64], strides = [1, 1]} : vector<64x64xf32> to vector<8x64xf32>
    %488 = arith.select %2, %487, %486 : vector<8x64xi1>, vector<8x64xf32>
    %c0_286 = arith.constant 0 : index
    %c56_287 = arith.constant 56 : index
    %c0_288 = arith.constant 0 : index
    %489 = vector.load %arg10[%c0_286, %c56_287, %c0_288] : memref<3x64x64xf32, #tpu.memory_space<vmem>>, vector<1x8x64xf32>
    %490 = vector.shape_cast %489 : vector<1x8x64xf32> to vector<8x64xf32>
    %491 = vector.shape_cast %488 : vector<8x64xf32> to vector<1x8x64xf32>
    tpu.vector_store %arg10[%c0_286, %c56_287, %c0_288], %491 {strides = array<i32>} : memref<3x64x64xf32, #tpu.memory_space<vmem>>, vector<1x8x64xf32>,
    %c4 = arith.constant 4 : index
    %c0_289 = arith.constant 0 : index
    %c0_290 = arith.constant 0 : index
    %492 = vector.load %arg2[%c4, %c0_289, %c0_290] : memref<9x64x64xf32, #tpu.memory_space<vmem>>, vector<1x64x64xf32>
    %493 = vector.shape_cast %492 : vector<1x64x64xf32> to vector<64x64xf32>
    %cst_291 = arith.constant dense<0.000000e+00> : vector<64x64xf32>
    %494 = tpu.matmul %436, %493, %cst_291 {dimension_numbers = #tpu.dot_dimension_numbers<[1], [0], [0], [1], [0, 0, 1, 1], [], []>} : vector<64x64xf32>, vector<64x64xf32>, vector<64x64xf32> -> vector<64x64xf32>
    %c4_292 = arith.constant 4 : index
    %c0_293 = arith.constant 0 : index
    %c0_294 = arith.constant 0 : index
    %495 = vector.load %arg4[%c4_292, %c0_293, %c0_294] : memref<9x1x64xf32, #tpu.memory_space<vmem>>, vector<1x1x64xf32>
    %496 = vector.shape_cast %495 : vector<1x1x64xf32> to vector<1x64xf32>
    %497 = vector.broadcast %496 : vector<1x64xf32> to vector<64x64xf32>
    %498 = arith.addf %494, %497 : vector<64x64xf32>
    %499 = vector.extract_strided_slice %498 {offsets = [0, 0], sizes = [8, 64], strides = [1, 1]} : vector<64x64xf32> to vector<8x64xf32>
    %500 = vector.extract_strided_slice %498 {offsets = [56, 0], sizes = [8, 64], strides = [1, 1]} : vector<64x64xf32> to vector<8x64xf32>
    %501 = arith.select %2, %500, %499 : vector<8x64xi1>, vector<8x64xf32>
    %c1_295 = arith.constant 1 : index
    %c0_296 = arith.constant 0 : index
    %c0_297 = arith.constant 0 : index
    %502 = vector.load %arg10[%c1_295, %c0_296, %c0_297] : memref<3x64x64xf32, #tpu.memory_space<vmem>>, vector<1x8x64xf32>
    %503 = vector.shape_cast %502 : vector<1x8x64xf32> to vector<8x64xf32>
    %504 = vector.shape_cast %501 : vector<8x64xf32> to vector<1x8x64xf32>
    tpu.vector_store %arg10[%c1_295, %c0_296, %c0_297], %504 {strides = array<i32>} : memref<3x64x64xf32, #tpu.memory_space<vmem>>, vector<1x8x64xf32>,
    %505 = vector.extract_strided_slice %498 {offsets = [8, 0], sizes = [8, 64], strides = [1, 1]} : vector<64x64xf32> to vector<8x64xf32>
    %506 = vector.extract_strided_slice %498 {offsets = [48, 0], sizes = [8, 64], strides = [1, 1]} : vector<64x64xf32> to vector<8x64xf32>
    %507 = arith.select %2, %506, %505 : vector<8x64xi1>, vector<8x64xf32>
    %c1_298 = arith.constant 1 : index
    %c8_299 = arith.constant 8 : index
    %c0_300 = arith.constant 0 : index
    %508 = vector.load %arg10[%c1_298, %c8_299, %c0_300] : memref<3x64x64xf32, #tpu.memory_space<vmem>>, vector<1x8x64xf32>
    %509 = vector.shape_cast %508 : vector<1x8x64xf32> to vector<8x64xf32>
    %510 = vector.shape_cast %507 : vector<8x64xf32> to vector<1x8x64xf32>
    tpu.vector_store %arg10[%c1_298, %c8_299, %c0_300], %510 {strides = array<i32>} : memref<3x64x64xf32, #tpu.memory_space<vmem>>, vector<1x8x64xf32>,
    %511 = vector.extract_strided_slice %498 {offsets = [16, 0], sizes = [8, 64], strides = [1, 1]} : vector<64x64xf32> to vector<8x64xf32>
    %512 = vector.extract_strided_slice %498 {offsets = [40, 0], sizes = [8, 64], strides = [1, 1]} : vector<64x64xf32> to vector<8x64xf32>
    %513 = arith.select %2, %512, %511 : vector<8x64xi1>, vector<8x64xf32>
    %c1_301 = arith.constant 1 : index
    %c16_302 = arith.constant 16 : index
    %c0_303 = arith.constant 0 : index
    %514 = vector.load %arg10[%c1_301, %c16_302, %c0_303] : memref<3x64x64xf32, #tpu.memory_space<vmem>>, vector<1x8x64xf32>
    %515 = vector.shape_cast %514 : vector<1x8x64xf32> to vector<8x64xf32>
    %516 = vector.shape_cast %513 : vector<8x64xf32> to vector<1x8x64xf32>
    tpu.vector_store %arg10[%c1_301, %c16_302, %c0_303], %516 {strides = array<i32>} : memref<3x64x64xf32, #tpu.memory_space<vmem>>, vector<1x8x64xf32>,
    %517 = vector.extract_strided_slice %498 {offsets = [24, 0], sizes = [8, 64], strides = [1, 1]} : vector<64x64xf32> to vector<8x64xf32>
    %518 = vector.extract_strided_slice %498 {offsets = [32, 0], sizes = [8, 64], strides = [1, 1]} : vector<64x64xf32> to vector<8x64xf32>
    %519 = arith.select %2, %518, %517 : vector<8x64xi1>, vector<8x64xf32>
    %c1_304 = arith.constant 1 : index
    %c24_305 = arith.constant 24 : index
    %c0_306 = arith.constant 0 : index
    %520 = vector.load %arg10[%c1_304, %c24_305, %c0_306] : memref<3x64x64xf32, #tpu.memory_space<vmem>>, vector<1x8x64xf32>
    %521 = vector.shape_cast %520 : vector<1x8x64xf32> to vector<8x64xf32>
    %522 = vector.shape_cast %519 : vector<8x64xf32> to vector<1x8x64xf32>
    tpu.vector_store %arg10[%c1_304, %c24_305, %c0_306], %522 {strides = array<i32>} : memref<3x64x64xf32, #tpu.memory_space<vmem>>, vector<1x8x64xf32>,
    %523 = vector.extract_strided_slice %498 {offsets = [32, 0], sizes = [8, 64], strides = [1, 1]} : vector<64x64xf32> to vector<8x64xf32>
    %524 = vector.extract_strided_slice %498 {offsets = [24, 0], sizes = [8, 64], strides = [1, 1]} : vector<64x64xf32> to vector<8x64xf32>
    %525 = arith.select %2, %524, %523 : vector<8x64xi1>, vector<8x64xf32>
    %c1_307 = arith.constant 1 : index
    %c32_308 = arith.constant 32 : index
    %c0_309 = arith.constant 0 : index
    %526 = vector.load %arg10[%c1_307, %c32_308, %c0_309] : memref<3x64x64xf32, #tpu.memory_space<vmem>>, vector<1x8x64xf32>
    %527 = vector.shape_cast %526 : vector<1x8x64xf32> to vector<8x64xf32>
    %528 = vector.shape_cast %525 : vector<8x64xf32> to vector<1x8x64xf32>
    tpu.vector_store %arg10[%c1_307, %c32_308, %c0_309], %528 {strides = array<i32>} : memref<3x64x64xf32, #tpu.memory_space<vmem>>, vector<1x8x64xf32>,
    %529 = vector.extract_strided_slice %498 {offsets = [40, 0], sizes = [8, 64], strides = [1, 1]} : vector<64x64xf32> to vector<8x64xf32>
    %530 = vector.extract_strided_slice %498 {offsets = [16, 0], sizes = [8, 64], strides = [1, 1]} : vector<64x64xf32> to vector<8x64xf32>
    %531 = arith.select %2, %530, %529 : vector<8x64xi1>, vector<8x64xf32>
    %c1_310 = arith.constant 1 : index
    %c40_311 = arith.constant 40 : index
    %c0_312 = arith.constant 0 : index
    %532 = vector.load %arg10[%c1_310, %c40_311, %c0_312] : memref<3x64x64xf32, #tpu.memory_space<vmem>>, vector<1x8x64xf32>
    %533 = vector.shape_cast %532 : vector<1x8x64xf32> to vector<8x64xf32>
    %534 = vector.shape_cast %531 : vector<8x64xf32> to vector<1x8x64xf32>
    tpu.vector_store %arg10[%c1_310, %c40_311, %c0_312], %534 {strides = array<i32>} : memref<3x64x64xf32, #tpu.memory_space<vmem>>, vector<1x8x64xf32>,
    %535 = vector.extract_strided_slice %498 {offsets = [48, 0], sizes = [8, 64], strides = [1, 1]} : vector<64x64xf32> to vector<8x64xf32>
    %536 = vector.extract_strided_slice %498 {offsets = [8, 0], sizes = [8, 64], strides = [1, 1]} : vector<64x64xf32> to vector<8x64xf32>
    %537 = arith.select %2, %536, %535 : vector<8x64xi1>, vector<8x64xf32>
    %c1_313 = arith.constant 1 : index
    %c48_314 = arith.constant 48 : index
    %c0_315 = arith.constant 0 : index
    %538 = vector.load %arg10[%c1_313, %c48_314, %c0_315] : memref<3x64x64xf32, #tpu.memory_space<vmem>>, vector<1x8x64xf32>
    %539 = vector.shape_cast %538 : vector<1x8x64xf32> to vector<8x64xf32>
    %540 = vector.shape_cast %537 : vector<8x64xf32> to vector<1x8x64xf32>
    tpu.vector_store %arg10[%c1_313, %c48_314, %c0_315], %540 {strides = array<i32>} : memref<3x64x64xf32, #tpu.memory_space<vmem>>, vector<1x8x64xf32>,
    %541 = vector.extract_strided_slice %498 {offsets = [56, 0], sizes = [8, 64], strides = [1, 1]} : vector<64x64xf32> to vector<8x64xf32>
    %542 = vector.extract_strided_slice %498 {offsets = [0, 0], sizes = [8, 64], strides = [1, 1]} : vector<64x64xf32> to vector<8x64xf32>
    %543 = arith.select %2, %542, %541 : vector<8x64xi1>, vector<8x64xf32>
    %c1_316 = arith.constant 1 : index
    %c56_317 = arith.constant 56 : index
    %c0_318 = arith.constant 0 : index
    %544 = vector.load %arg10[%c1_316, %c56_317, %c0_318] : memref<3x64x64xf32, #tpu.memory_space<vmem>>, vector<1x8x64xf32>
    %545 = vector.shape_cast %544 : vector<1x8x64xf32> to vector<8x64xf32>
    %546 = vector.shape_cast %543 : vector<8x64xf32> to vector<1x8x64xf32>
    tpu.vector_store %arg10[%c1_316, %c56_317, %c0_318], %546 {strides = array<i32>} : memref<3x64x64xf32, #tpu.memory_space<vmem>>, vector<1x8x64xf32>,
    %c5 = arith.constant 5 : index
    %c0_319 = arith.constant 0 : index
    %c0_320 = arith.constant 0 : index
    %547 = vector.load %arg2[%c5, %c0_319, %c0_320] : memref<9x64x64xf32, #tpu.memory_space<vmem>>, vector<1x64x64xf32>
    %548 = vector.shape_cast %547 : vector<1x64x64xf32> to vector<64x64xf32>
    %cst_321 = arith.constant dense<0.000000e+00> : vector<64x64xf32>
    %549 = tpu.matmul %436, %548, %cst_321 {dimension_numbers = #tpu.dot_dimension_numbers<[1], [0], [0], [1], [0, 0, 1, 1], [], []>} : vector<64x64xf32>, vector<64x64xf32>, vector<64x64xf32> -> vector<64x64xf32>
    %c5_322 = arith.constant 5 : index
    %c0_323 = arith.constant 0 : index
    %c0_324 = arith.constant 0 : index
    %550 = vector.load %arg4[%c5_322, %c0_323, %c0_324] : memref<9x1x64xf32, #tpu.memory_space<vmem>>, vector<1x1x64xf32>
    %551 = vector.shape_cast %550 : vector<1x1x64xf32> to vector<1x64xf32>
    %552 = vector.broadcast %551 : vector<1x64xf32> to vector<64x64xf32>
    %553 = arith.addf %549, %552 : vector<64x64xf32>
    %554 = vector.extract_strided_slice %553 {offsets = [0, 0], sizes = [8, 64], strides = [1, 1]} : vector<64x64xf32> to vector<8x64xf32>
    %555 = vector.extract_strided_slice %553 {offsets = [56, 0], sizes = [8, 64], strides = [1, 1]} : vector<64x64xf32> to vector<8x64xf32>
    %556 = arith.select %2, %555, %554 : vector<8x64xi1>, vector<8x64xf32>
    %c2_325 = arith.constant 2 : index
    %c0_326 = arith.constant 0 : index
    %c0_327 = arith.constant 0 : index
    %557 = vector.load %arg10[%c2_325, %c0_326, %c0_327] : memref<3x64x64xf32, #tpu.memory_space<vmem>>, vector<1x8x64xf32>
    %558 = vector.shape_cast %557 : vector<1x8x64xf32> to vector<8x64xf32>
    %559 = vector.shape_cast %556 : vector<8x64xf32> to vector<1x8x64xf32>
    tpu.vector_store %arg10[%c2_325, %c0_326, %c0_327], %559 {strides = array<i32>} : memref<3x64x64xf32, #tpu.memory_space<vmem>>, vector<1x8x64xf32>,
    %560 = vector.extract_strided_slice %553 {offsets = [8, 0], sizes = [8, 64], strides = [1, 1]} : vector<64x64xf32> to vector<8x64xf32>
    %561 = vector.extract_strided_slice %553 {offsets = [48, 0], sizes = [8, 64], strides = [1, 1]} : vector<64x64xf32> to vector<8x64xf32>
    %562 = arith.select %2, %561, %560 : vector<8x64xi1>, vector<8x64xf32>
    %c2_328 = arith.constant 2 : index
    %c8_329 = arith.constant 8 : index
    %c0_330 = arith.constant 0 : index
    %563 = vector.load %arg10[%c2_328, %c8_329, %c0_330] : memref<3x64x64xf32, #tpu.memory_space<vmem>>, vector<1x8x64xf32>
    %564 = vector.shape_cast %563 : vector<1x8x64xf32> to vector<8x64xf32>
    %565 = vector.shape_cast %562 : vector<8x64xf32> to vector<1x8x64xf32>
    tpu.vector_store %arg10[%c2_328, %c8_329, %c0_330], %565 {strides = array<i32>} : memref<3x64x64xf32, #tpu.memory_space<vmem>>, vector<1x8x64xf32>,
    %566 = vector.extract_strided_slice %553 {offsets = [16, 0], sizes = [8, 64], strides = [1, 1]} : vector<64x64xf32> to vector<8x64xf32>
    %567 = vector.extract_strided_slice %553 {offsets = [40, 0], sizes = [8, 64], strides = [1, 1]} : vector<64x64xf32> to vector<8x64xf32>
    %568 = arith.select %2, %567, %566 : vector<8x64xi1>, vector<8x64xf32>
    %c2_331 = arith.constant 2 : index
    %c16_332 = arith.constant 16 : index
    %c0_333 = arith.constant 0 : index
    %569 = vector.load %arg10[%c2_331, %c16_332, %c0_333] : memref<3x64x64xf32, #tpu.memory_space<vmem>>, vector<1x8x64xf32>
    %570 = vector.shape_cast %569 : vector<1x8x64xf32> to vector<8x64xf32>
    %571 = vector.shape_cast %568 : vector<8x64xf32> to vector<1x8x64xf32>
    tpu.vector_store %arg10[%c2_331, %c16_332, %c0_333], %571 {strides = array<i32>} : memref<3x64x64xf32, #tpu.memory_space<vmem>>, vector<1x8x64xf32>,
    %572 = vector.extract_strided_slice %553 {offsets = [24, 0], sizes = [8, 64], strides = [1, 1]} : vector<64x64xf32> to vector<8x64xf32>
    %573 = vector.extract_strided_slice %553 {offsets = [32, 0], sizes = [8, 64], strides = [1, 1]} : vector<64x64xf32> to vector<8x64xf32>
    %574 = arith.select %2, %573, %572 : vector<8x64xi1>, vector<8x64xf32>
    %c2_334 = arith.constant 2 : index
    %c24_335 = arith.constant 24 : index
    %c0_336 = arith.constant 0 : index
    %575 = vector.load %arg10[%c2_334, %c24_335, %c0_336] : memref<3x64x64xf32, #tpu.memory_space<vmem>>, vector<1x8x64xf32>
    %576 = vector.shape_cast %575 : vector<1x8x64xf32> to vector<8x64xf32>
    %577 = vector.shape_cast %574 : vector<8x64xf32> to vector<1x8x64xf32>
    tpu.vector_store %arg10[%c2_334, %c24_335, %c0_336], %577 {strides = array<i32>} : memref<3x64x64xf32, #tpu.memory_space<vmem>>, vector<1x8x64xf32>,
    %578 = vector.extract_strided_slice %553 {offsets = [32, 0], sizes = [8, 64], strides = [1, 1]} : vector<64x64xf32> to vector<8x64xf32>
    %579 = vector.extract_strided_slice %553 {offsets = [24, 0], sizes = [8, 64], strides = [1, 1]} : vector<64x64xf32> to vector<8x64xf32>
    %580 = arith.select %2, %579, %578 : vector<8x64xi1>, vector<8x64xf32>
    %c2_337 = arith.constant 2 : index
    %c32_338 = arith.constant 32 : index
    %c0_339 = arith.constant 0 : index
    %581 = vector.load %arg10[%c2_337, %c32_338, %c0_339] : memref<3x64x64xf32, #tpu.memory_space<vmem>>, vector<1x8x64xf32>
    %582 = vector.shape_cast %581 : vector<1x8x64xf32> to vector<8x64xf32>
    %583 = vector.shape_cast %580 : vector<8x64xf32> to vector<1x8x64xf32>
    tpu.vector_store %arg10[%c2_337, %c32_338, %c0_339], %583 {strides = array<i32>} : memref<3x64x64xf32, #tpu.memory_space<vmem>>, vector<1x8x64xf32>,
    %584 = vector.extract_strided_slice %553 {offsets = [40, 0], sizes = [8, 64], strides = [1, 1]} : vector<64x64xf32> to vector<8x64xf32>
    %585 = vector.extract_strided_slice %553 {offsets = [16, 0], sizes = [8, 64], strides = [1, 1]} : vector<64x64xf32> to vector<8x64xf32>
    %586 = arith.select %2, %585, %584 : vector<8x64xi1>, vector<8x64xf32>
    %c2_340 = arith.constant 2 : index
    %c40_341 = arith.constant 40 : index
    %c0_342 = arith.constant 0 : index
    %587 = vector.load %arg10[%c2_340, %c40_341, %c0_342] : memref<3x64x64xf32, #tpu.memory_space<vmem>>, vector<1x8x64xf32>
    %588 = vector.shape_cast %587 : vector<1x8x64xf32> to vector<8x64xf32>
    %589 = vector.shape_cast %586 : vector<8x64xf32> to vector<1x8x64xf32>
    tpu.vector_store %arg10[%c2_340, %c40_341, %c0_342], %589 {strides = array<i32>} : memref<3x64x64xf32, #tpu.memory_space<vmem>>, vector<1x8x64xf32>,
    %590 = vector.extract_strided_slice %553 {offsets = [48, 0], sizes = [8, 64], strides = [1, 1]} : vector<64x64xf32> to vector<8x64xf32>
    %591 = vector.extract_strided_slice %553 {offsets = [8, 0], sizes = [8, 64], strides = [1, 1]} : vector<64x64xf32> to vector<8x64xf32>
    %592 = arith.select %2, %591, %590 : vector<8x64xi1>, vector<8x64xf32>
    %c2_343 = arith.constant 2 : index
    %c48_344 = arith.constant 48 : index
    %c0_345 = arith.constant 0 : index
    %593 = vector.load %arg10[%c2_343, %c48_344, %c0_345] : memref<3x64x64xf32, #tpu.memory_space<vmem>>, vector<1x8x64xf32>
    %594 = vector.shape_cast %593 : vector<1x8x64xf32> to vector<8x64xf32>
    %595 = vector.shape_cast %592 : vector<8x64xf32> to vector<1x8x64xf32>
    tpu.vector_store %arg10[%c2_343, %c48_344, %c0_345], %595 {strides = array<i32>} : memref<3x64x64xf32, #tpu.memory_space<vmem>>, vector<1x8x64xf32>,
    %596 = vector.extract_strided_slice %553 {offsets = [56, 0], sizes = [8, 64], strides = [1, 1]} : vector<64x64xf32> to vector<8x64xf32>
    %597 = vector.extract_strided_slice %553 {offsets = [0, 0], sizes = [8, 64], strides = [1, 1]} : vector<64x64xf32> to vector<8x64xf32>
    %598 = arith.select %2, %597, %596 : vector<8x64xi1>, vector<8x64xf32>
    %c2_346 = arith.constant 2 : index
    %c56_347 = arith.constant 56 : index
    %c0_348 = arith.constant 0 : index
    %599 = vector.load %arg10[%c2_346, %c56_347, %c0_348] : memref<3x64x64xf32, #tpu.memory_space<vmem>>, vector<1x8x64xf32>
    %600 = vector.shape_cast %599 : vector<1x8x64xf32> to vector<8x64xf32>
    %601 = vector.shape_cast %598 : vector<8x64xf32> to vector<1x8x64xf32>
    tpu.vector_store %arg10[%c2_346, %c56_347, %c0_348], %601 {strides = array<i32>} : memref<3x64x64xf32, #tpu.memory_space<vmem>>, vector<1x8x64xf32>,
    %c3_349 = arith.constant 3 : index
    %c0_350 = arith.constant 0 : index
    %c0_351 = arith.constant 0 : index
    %602 = vector.load %arg3[%c3_349, %c0_350, %c0_351] : memref<9x64x64xf32, #tpu.memory_space<vmem>>, vector<1x64x64xf32>
    %603 = vector.shape_cast %602 : vector<1x64x64xf32> to vector<64x64xf32>
    %c4_352 = arith.constant 4 : index
    %c0_353 = arith.constant 0 : index
    %c0_354 = arith.constant 0 : index
    %604 = vector.load %arg3[%c4_352, %c0_353, %c0_354] : memref<9x64x64xf32, #tpu.memory_space<vmem>>, vector<1x64x64xf32>
    %605 = vector.shape_cast %604 : vector<1x64x64xf32> to vector<64x64xf32>
    %c5_355 = arith.constant 5 : index
    %c0_356 = arith.constant 0 : index
    %c0_357 = arith.constant 0 : index
    %606 = vector.load %arg3[%c5_355, %c0_356, %c0_357] : memref<9x64x64xf32, #tpu.memory_space<vmem>>, vector<1x64x64xf32>
    %607 = vector.shape_cast %606 : vector<1x64x64xf32> to vector<64x64xf32>
    %c1_358 = arith.constant 1 : index
    %c0_359 = arith.constant 0 : index
    %c0_360 = arith.constant 0 : index
    %608 = vector.load %arg5[%c1_358, %c0_359, %c0_360] : memref<3x1x64xf32, #tpu.memory_space<vmem>>, vector<1x1x64xf32>
    %609 = vector.shape_cast %608 : vector<1x1x64xf32> to vector<1x64xf32>
    %610 = vector.shape_cast %609 : vector<1x64xf32> to vector<1x64xf32>
    %611 = vector.broadcast %610 : vector<1x64xf32> to vector<8x64xf32>
    %cst_361 = arith.constant 0.000000e+00 : f32
    %612 = vector.broadcast %cst_361 : f32 to vector<8x64xf32>
    %c0_362 = arith.constant 0 : index
    %c0_363 = arith.constant 0 : index
    %c0_364 = arith.constant 0 : index
    %613 = vector.load %arg10[%c0_362, %c0_363, %c0_364] : memref<3x64x64xf32, #tpu.memory_space<vmem>>, vector<1x8x64xf32>
    %614 = vector.shape_cast %613 : vector<1x8x64xf32> to vector<8x64xf32>
    %c1_365 = arith.constant 1 : index
    %c0_366 = arith.constant 0 : index
    %c0_367 = arith.constant 0 : index
    %615 = vector.load %arg10[%c1_365, %c0_366, %c0_367] : memref<3x64x64xf32, #tpu.memory_space<vmem>>, vector<1x8x64xf32>
    %616 = vector.shape_cast %615 : vector<1x8x64xf32> to vector<8x64xf32>
    %c2_368 = arith.constant 2 : index
    %c0_369 = arith.constant 0 : index
    %c0_370 = arith.constant 0 : index
    %617 = vector.load %arg10[%c2_368, %c0_369, %c0_370] : memref<3x64x64xf32, #tpu.memory_space<vmem>>, vector<1x8x64xf32>
    %618 = vector.shape_cast %617 : vector<1x8x64xf32> to vector<8x64xf32>
    %cst_371 = arith.constant dense<0.000000e+00> : vector<8x64xf32>
    %619 = tpu.matmul %612, %603, %cst_371 {dimension_numbers = #tpu.dot_dimension_numbers<[1], [0], [0], [1], [0, 0, 1, 1], [], []>} : vector<8x64xf32>, vector<64x64xf32>, vector<8x64xf32> -> vector<8x64xf32>
    %cst_372 = arith.constant dense<0.000000e+00> : vector<8x64xf32>
    %620 = tpu.matmul %612, %605, %cst_372 {dimension_numbers = #tpu.dot_dimension_numbers<[1], [0], [0], [1], [0, 0, 1, 1], [], []>} : vector<8x64xf32>, vector<64x64xf32>, vector<8x64xf32> -> vector<8x64xf32>
    %cst_373 = arith.constant dense<0.000000e+00> : vector<8x64xf32>
    %621 = tpu.matmul %612, %607, %cst_373 {dimension_numbers = #tpu.dot_dimension_numbers<[1], [0], [0], [1], [0, 0, 1, 1], [], []>} : vector<8x64xf32>, vector<64x64xf32>, vector<8x64xf32> -> vector<8x64xf32>
    %622 = arith.addf %621, %611 : vector<8x64xf32>
    %623 = arith.addf %614, %619 : vector<8x64xf32>
    %624 = arith.negf %623 : vector<8x64xf32>
    %625 = math.exp %624 : vector<8x64xf32>
    %cst_374 = arith.constant 1.000000e+00 : f32
    %626 = vector.broadcast %cst_374 : f32 to vector<8x64xf32>
    %627 = arith.addf %626, %625 : vector<8x64xf32>
    %628 = arith.divf %626, %627 : vector<8x64xf32>
    %629 = arith.addf %616, %620 : vector<8x64xf32>
    %630 = arith.negf %629 : vector<8x64xf32>
    %631 = math.exp %630 : vector<8x64xf32>
    %cst_375 = arith.constant 1.000000e+00 : f32
    %632 = vector.broadcast %cst_375 : f32 to vector<8x64xf32>
    %633 = arith.addf %632, %631 : vector<8x64xf32>
    %634 = arith.divf %632, %633 : vector<8x64xf32>
    %635 = arith.mulf %628, %622 : vector<8x64xf32>
    %636 = arith.addf %618, %635 : vector<8x64xf32>
    %637 = math.tanh %636 : vector<8x64xf32>
    %638 = arith.subf %612, %637 : vector<8x64xf32>
    %639 = arith.mulf %634, %638 : vector<8x64xf32>
    %640 = arith.addf %637, %639 : vector<8x64xf32>
    %c0_376 = arith.constant 0 : index
    %c0_377 = arith.constant 0 : index
    %641 = vector.load %arg11[%c0_376, %c0_377] : memref<64x64xf32, #tpu.memory_space<vmem>>, vector<8x64xf32>
    tpu.vector_store %arg11[%c0_376, %c0_377], %640 {strides = array<i32>} : memref<64x64xf32, #tpu.memory_space<vmem>>, vector<8x64xf32>,
    %c0_378 = arith.constant 0 : index
    %c8_379 = arith.constant 8 : index
    %c0_380 = arith.constant 0 : index
    %642 = vector.load %arg10[%c0_378, %c8_379, %c0_380] : memref<3x64x64xf32, #tpu.memory_space<vmem>>, vector<1x8x64xf32>
    %643 = vector.shape_cast %642 : vector<1x8x64xf32> to vector<8x64xf32>
    %c1_381 = arith.constant 1 : index
    %c8_382 = arith.constant 8 : index
    %c0_383 = arith.constant 0 : index
    %644 = vector.load %arg10[%c1_381, %c8_382, %c0_383] : memref<3x64x64xf32, #tpu.memory_space<vmem>>, vector<1x8x64xf32>
    %645 = vector.shape_cast %644 : vector<1x8x64xf32> to vector<8x64xf32>
    %c2_384 = arith.constant 2 : index
    %c8_385 = arith.constant 8 : index
    %c0_386 = arith.constant 0 : index
    %646 = vector.load %arg10[%c2_384, %c8_385, %c0_386] : memref<3x64x64xf32, #tpu.memory_space<vmem>>, vector<1x8x64xf32>
    %647 = vector.shape_cast %646 : vector<1x8x64xf32> to vector<8x64xf32>
    %cst_387 = arith.constant dense<0.000000e+00> : vector<8x64xf32>
    %648 = tpu.matmul %640, %603, %cst_387 {dimension_numbers = #tpu.dot_dimension_numbers<[1], [0], [0], [1], [0, 0, 1, 1], [], []>} : vector<8x64xf32>, vector<64x64xf32>, vector<8x64xf32> -> vector<8x64xf32>
    %cst_388 = arith.constant dense<0.000000e+00> : vector<8x64xf32>
    %649 = tpu.matmul %640, %605, %cst_388 {dimension_numbers = #tpu.dot_dimension_numbers<[1], [0], [0], [1], [0, 0, 1, 1], [], []>} : vector<8x64xf32>, vector<64x64xf32>, vector<8x64xf32> -> vector<8x64xf32>
    %cst_389 = arith.constant dense<0.000000e+00> : vector<8x64xf32>
    %650 = tpu.matmul %640, %607, %cst_389 {dimension_numbers = #tpu.dot_dimension_numbers<[1], [0], [0], [1], [0, 0, 1, 1], [], []>} : vector<8x64xf32>, vector<64x64xf32>, vector<8x64xf32> -> vector<8x64xf32>
    %651 = arith.addf %650, %611 : vector<8x64xf32>
    %652 = arith.addf %643, %648 : vector<8x64xf32>
    %653 = arith.negf %652 : vector<8x64xf32>
    %654 = math.exp %653 : vector<8x64xf32>
    %cst_390 = arith.constant 1.000000e+00 : f32
    %655 = vector.broadcast %cst_390 : f32 to vector<8x64xf32>
    %656 = arith.addf %655, %654 : vector<8x64xf32>
    %657 = arith.divf %655, %656 : vector<8x64xf32>
    %658 = arith.addf %645, %649 : vector<8x64xf32>
    %659 = arith.negf %658 : vector<8x64xf32>
    %660 = math.exp %659 : vector<8x64xf32>
    %cst_391 = arith.constant 1.000000e+00 : f32
    %661 = vector.broadcast %cst_391 : f32 to vector<8x64xf32>
    %662 = arith.addf %661, %660 : vector<8x64xf32>
    %663 = arith.divf %661, %662 : vector<8x64xf32>
    %664 = arith.mulf %657, %651 : vector<8x64xf32>
    %665 = arith.addf %647, %664 : vector<8x64xf32>
    %666 = math.tanh %665 : vector<8x64xf32>
    %667 = arith.subf %640, %666 : vector<8x64xf32>
    %668 = arith.mulf %663, %667 : vector<8x64xf32>
    %669 = arith.addf %666, %668 : vector<8x64xf32>
    %c8_392 = arith.constant 8 : index
    %c0_393 = arith.constant 0 : index
    %670 = vector.load %arg11[%c8_392, %c0_393] : memref<64x64xf32, #tpu.memory_space<vmem>>, vector<8x64xf32>
    tpu.vector_store %arg11[%c8_392, %c0_393], %669 {strides = array<i32>} : memref<64x64xf32, #tpu.memory_space<vmem>>, vector<8x64xf32>,
    %c0_394 = arith.constant 0 : index
    %c16_395 = arith.constant 16 : index
    %c0_396 = arith.constant 0 : index
    %671 = vector.load %arg10[%c0_394, %c16_395, %c0_396] : memref<3x64x64xf32, #tpu.memory_space<vmem>>, vector<1x8x64xf32>
    %672 = vector.shape_cast %671 : vector<1x8x64xf32> to vector<8x64xf32>
    %c1_397 = arith.constant 1 : index
    %c16_398 = arith.constant 16 : index
    %c0_399 = arith.constant 0 : index
    %673 = vector.load %arg10[%c1_397, %c16_398, %c0_399] : memref<3x64x64xf32, #tpu.memory_space<vmem>>, vector<1x8x64xf32>
    %674 = vector.shape_cast %673 : vector<1x8x64xf32> to vector<8x64xf32>
    %c2_400 = arith.constant 2 : index
    %c16_401 = arith.constant 16 : index
    %c0_402 = arith.constant 0 : index
    %675 = vector.load %arg10[%c2_400, %c16_401, %c0_402] : memref<3x64x64xf32, #tpu.memory_space<vmem>>, vector<1x8x64xf32>
    %676 = vector.shape_cast %675 : vector<1x8x64xf32> to vector<8x64xf32>
    %cst_403 = arith.constant dense<0.000000e+00> : vector<8x64xf32>
    %677 = tpu.matmul %669, %603, %cst_403 {dimension_numbers = #tpu.dot_dimension_numbers<[1], [0], [0], [1], [0, 0, 1, 1], [], []>} : vector<8x64xf32>, vector<64x64xf32>, vector<8x64xf32> -> vector<8x64xf32>
    %cst_404 = arith.constant dense<0.000000e+00> : vector<8x64xf32>
    %678 = tpu.matmul %669, %605, %cst_404 {dimension_numbers = #tpu.dot_dimension_numbers<[1], [0], [0], [1], [0, 0, 1, 1], [], []>} : vector<8x64xf32>, vector<64x64xf32>, vector<8x64xf32> -> vector<8x64xf32>
    %cst_405 = arith.constant dense<0.000000e+00> : vector<8x64xf32>
    %679 = tpu.matmul %669, %607, %cst_405 {dimension_numbers = #tpu.dot_dimension_numbers<[1], [0], [0], [1], [0, 0, 1, 1], [], []>} : vector<8x64xf32>, vector<64x64xf32>, vector<8x64xf32> -> vector<8x64xf32>
    %680 = arith.addf %679, %611 : vector<8x64xf32>
    %681 = arith.addf %672, %677 : vector<8x64xf32>
    %682 = arith.negf %681 : vector<8x64xf32>
    %683 = math.exp %682 : vector<8x64xf32>
    %cst_406 = arith.constant 1.000000e+00 : f32
    %684 = vector.broadcast %cst_406 : f32 to vector<8x64xf32>
    %685 = arith.addf %684, %683 : vector<8x64xf32>
    %686 = arith.divf %684, %685 : vector<8x64xf32>
    %687 = arith.addf %674, %678 : vector<8x64xf32>
    %688 = arith.negf %687 : vector<8x64xf32>
    %689 = math.exp %688 : vector<8x64xf32>
    %cst_407 = arith.constant 1.000000e+00 : f32
    %690 = vector.broadcast %cst_407 : f32 to vector<8x64xf32>
    %691 = arith.addf %690, %689 : vector<8x64xf32>
    %692 = arith.divf %690, %691 : vector<8x64xf32>
    %693 = arith.mulf %686, %680 : vector<8x64xf32>
    %694 = arith.addf %676, %693 : vector<8x64xf32>
    %695 = math.tanh %694 : vector<8x64xf32>
    %696 = arith.subf %669, %695 : vector<8x64xf32>
    %697 = arith.mulf %692, %696 : vector<8x64xf32>
    %698 = arith.addf %695, %697 : vector<8x64xf32>
    %c16_408 = arith.constant 16 : index
    %c0_409 = arith.constant 0 : index
    %699 = vector.load %arg11[%c16_408, %c0_409] : memref<64x64xf32, #tpu.memory_space<vmem>>, vector<8x64xf32>
    tpu.vector_store %arg11[%c16_408, %c0_409], %698 {strides = array<i32>} : memref<64x64xf32, #tpu.memory_space<vmem>>, vector<8x64xf32>,
    %c0_410 = arith.constant 0 : index
    %c24_411 = arith.constant 24 : index
    %c0_412 = arith.constant 0 : index
    %700 = vector.load %arg10[%c0_410, %c24_411, %c0_412] : memref<3x64x64xf32, #tpu.memory_space<vmem>>, vector<1x8x64xf32>
    %701 = vector.shape_cast %700 : vector<1x8x64xf32> to vector<8x64xf32>
    %c1_413 = arith.constant 1 : index
    %c24_414 = arith.constant 24 : index
    %c0_415 = arith.constant 0 : index
    %702 = vector.load %arg10[%c1_413, %c24_414, %c0_415] : memref<3x64x64xf32, #tpu.memory_space<vmem>>, vector<1x8x64xf32>
    %703 = vector.shape_cast %702 : vector<1x8x64xf32> to vector<8x64xf32>
    %c2_416 = arith.constant 2 : index
    %c24_417 = arith.constant 24 : index
    %c0_418 = arith.constant 0 : index
    %704 = vector.load %arg10[%c2_416, %c24_417, %c0_418] : memref<3x64x64xf32, #tpu.memory_space<vmem>>, vector<1x8x64xf32>
    %705 = vector.shape_cast %704 : vector<1x8x64xf32> to vector<8x64xf32>
    %cst_419 = arith.constant dense<0.000000e+00> : vector<8x64xf32>
    %706 = tpu.matmul %698, %603, %cst_419 {dimension_numbers = #tpu.dot_dimension_numbers<[1], [0], [0], [1], [0, 0, 1, 1], [], []>} : vector<8x64xf32>, vector<64x64xf32>, vector<8x64xf32> -> vector<8x64xf32>
    %cst_420 = arith.constant dense<0.000000e+00> : vector<8x64xf32>
    %707 = tpu.matmul %698, %605, %cst_420 {dimension_numbers = #tpu.dot_dimension_numbers<[1], [0], [0], [1], [0, 0, 1, 1], [], []>} : vector<8x64xf32>, vector<64x64xf32>, vector<8x64xf32> -> vector<8x64xf32>
    %cst_421 = arith.constant dense<0.000000e+00> : vector<8x64xf32>
    %708 = tpu.matmul %698, %607, %cst_421 {dimension_numbers = #tpu.dot_dimension_numbers<[1], [0], [0], [1], [0, 0, 1, 1], [], []>} : vector<8x64xf32>, vector<64x64xf32>, vector<8x64xf32> -> vector<8x64xf32>
    %709 = arith.addf %708, %611 : vector<8x64xf32>
    %710 = arith.addf %701, %706 : vector<8x64xf32>
    %711 = arith.negf %710 : vector<8x64xf32>
    %712 = math.exp %711 : vector<8x64xf32>
    %cst_422 = arith.constant 1.000000e+00 : f32
    %713 = vector.broadcast %cst_422 : f32 to vector<8x64xf32>
    %714 = arith.addf %713, %712 : vector<8x64xf32>
    %715 = arith.divf %713, %714 : vector<8x64xf32>
    %716 = arith.addf %703, %707 : vector<8x64xf32>
    %717 = arith.negf %716 : vector<8x64xf32>
    %718 = math.exp %717 : vector<8x64xf32>
    %cst_423 = arith.constant 1.000000e+00 : f32
    %719 = vector.broadcast %cst_423 : f32 to vector<8x64xf32>
    %720 = arith.addf %719, %718 : vector<8x64xf32>
    %721 = arith.divf %719, %720 : vector<8x64xf32>
    %722 = arith.mulf %715, %709 : vector<8x64xf32>
    %723 = arith.addf %705, %722 : vector<8x64xf32>
    %724 = math.tanh %723 : vector<8x64xf32>
    %725 = arith.subf %698, %724 : vector<8x64xf32>
    %726 = arith.mulf %721, %725 : vector<8x64xf32>
    %727 = arith.addf %724, %726 : vector<8x64xf32>
    %c24_424 = arith.constant 24 : index
    %c0_425 = arith.constant 0 : index
    %728 = vector.load %arg11[%c24_424, %c0_425] : memref<64x64xf32, #tpu.memory_space<vmem>>, vector<8x64xf32>
    tpu.vector_store %arg11[%c24_424, %c0_425], %727 {strides = array<i32>} : memref<64x64xf32, #tpu.memory_space<vmem>>, vector<8x64xf32>,
    %c0_426 = arith.constant 0 : index
    %c32_427 = arith.constant 32 : index
    %c0_428 = arith.constant 0 : index
    %729 = vector.load %arg10[%c0_426, %c32_427, %c0_428] : memref<3x64x64xf32, #tpu.memory_space<vmem>>, vector<1x8x64xf32>
    %730 = vector.shape_cast %729 : vector<1x8x64xf32> to vector<8x64xf32>
    %c1_429 = arith.constant 1 : index
    %c32_430 = arith.constant 32 : index
    %c0_431 = arith.constant 0 : index
    %731 = vector.load %arg10[%c1_429, %c32_430, %c0_431] : memref<3x64x64xf32, #tpu.memory_space<vmem>>, vector<1x8x64xf32>
    %732 = vector.shape_cast %731 : vector<1x8x64xf32> to vector<8x64xf32>
    %c2_432 = arith.constant 2 : index
    %c32_433 = arith.constant 32 : index
    %c0_434 = arith.constant 0 : index
    %733 = vector.load %arg10[%c2_432, %c32_433, %c0_434] : memref<3x64x64xf32, #tpu.memory_space<vmem>>, vector<1x8x64xf32>
    %734 = vector.shape_cast %733 : vector<1x8x64xf32> to vector<8x64xf32>
    %cst_435 = arith.constant dense<0.000000e+00> : vector<8x64xf32>
    %735 = tpu.matmul %727, %603, %cst_435 {dimension_numbers = #tpu.dot_dimension_numbers<[1], [0], [0], [1], [0, 0, 1, 1], [], []>} : vector<8x64xf32>, vector<64x64xf32>, vector<8x64xf32> -> vector<8x64xf32>
    %cst_436 = arith.constant dense<0.000000e+00> : vector<8x64xf32>
    %736 = tpu.matmul %727, %605, %cst_436 {dimension_numbers = #tpu.dot_dimension_numbers<[1], [0], [0], [1], [0, 0, 1, 1], [], []>} : vector<8x64xf32>, vector<64x64xf32>, vector<8x64xf32> -> vector<8x64xf32>
    %cst_437 = arith.constant dense<0.000000e+00> : vector<8x64xf32>
    %737 = tpu.matmul %727, %607, %cst_437 {dimension_numbers = #tpu.dot_dimension_numbers<[1], [0], [0], [1], [0, 0, 1, 1], [], []>} : vector<8x64xf32>, vector<64x64xf32>, vector<8x64xf32> -> vector<8x64xf32>
    %738 = arith.addf %737, %611 : vector<8x64xf32>
    %739 = arith.addf %730, %735 : vector<8x64xf32>
    %740 = arith.negf %739 : vector<8x64xf32>
    %741 = math.exp %740 : vector<8x64xf32>
    %cst_438 = arith.constant 1.000000e+00 : f32
    %742 = vector.broadcast %cst_438 : f32 to vector<8x64xf32>
    %743 = arith.addf %742, %741 : vector<8x64xf32>
    %744 = arith.divf %742, %743 : vector<8x64xf32>
    %745 = arith.addf %732, %736 : vector<8x64xf32>
    %746 = arith.negf %745 : vector<8x64xf32>
    %747 = math.exp %746 : vector<8x64xf32>
    %cst_439 = arith.constant 1.000000e+00 : f32
    %748 = vector.broadcast %cst_439 : f32 to vector<8x64xf32>
    %749 = arith.addf %748, %747 : vector<8x64xf32>
    %750 = arith.divf %748, %749 : vector<8x64xf32>
    %751 = arith.mulf %744, %738 : vector<8x64xf32>
    %752 = arith.addf %734, %751 : vector<8x64xf32>
    %753 = math.tanh %752 : vector<8x64xf32>
    %754 = arith.subf %727, %753 : vector<8x64xf32>
    %755 = arith.mulf %750, %754 : vector<8x64xf32>
    %756 = arith.addf %753, %755 : vector<8x64xf32>
    %c32_440 = arith.constant 32 : index
    %c0_441 = arith.constant 0 : index
    %757 = vector.load %arg11[%c32_440, %c0_441] : memref<64x64xf32, #tpu.memory_space<vmem>>, vector<8x64xf32>
    tpu.vector_store %arg11[%c32_440, %c0_441], %756 {strides = array<i32>} : memref<64x64xf32, #tpu.memory_space<vmem>>, vector<8x64xf32>,
    %c0_442 = arith.constant 0 : index
    %c40_443 = arith.constant 40 : index
    %c0_444 = arith.constant 0 : index
    %758 = vector.load %arg10[%c0_442, %c40_443, %c0_444] : memref<3x64x64xf32, #tpu.memory_space<vmem>>, vector<1x8x64xf32>
    %759 = vector.shape_cast %758 : vector<1x8x64xf32> to vector<8x64xf32>
    %c1_445 = arith.constant 1 : index
    %c40_446 = arith.constant 40 : index
    %c0_447 = arith.constant 0 : index
    %760 = vector.load %arg10[%c1_445, %c40_446, %c0_447] : memref<3x64x64xf32, #tpu.memory_space<vmem>>, vector<1x8x64xf32>
    %761 = vector.shape_cast %760 : vector<1x8x64xf32> to vector<8x64xf32>
    %c2_448 = arith.constant 2 : index
    %c40_449 = arith.constant 40 : index
    %c0_450 = arith.constant 0 : index
    %762 = vector.load %arg10[%c2_448, %c40_449, %c0_450] : memref<3x64x64xf32, #tpu.memory_space<vmem>>, vector<1x8x64xf32>
    %763 = vector.shape_cast %762 : vector<1x8x64xf32> to vector<8x64xf32>
    %cst_451 = arith.constant dense<0.000000e+00> : vector<8x64xf32>
    %764 = tpu.matmul %756, %603, %cst_451 {dimension_numbers = #tpu.dot_dimension_numbers<[1], [0], [0], [1], [0, 0, 1, 1], [], []>} : vector<8x64xf32>, vector<64x64xf32>, vector<8x64xf32> -> vector<8x64xf32>
    %cst_452 = arith.constant dense<0.000000e+00> : vector<8x64xf32>
    %765 = tpu.matmul %756, %605, %cst_452 {dimension_numbers = #tpu.dot_dimension_numbers<[1], [0], [0], [1], [0, 0, 1, 1], [], []>} : vector<8x64xf32>, vector<64x64xf32>, vector<8x64xf32> -> vector<8x64xf32>
    %cst_453 = arith.constant dense<0.000000e+00> : vector<8x64xf32>
    %766 = tpu.matmul %756, %607, %cst_453 {dimension_numbers = #tpu.dot_dimension_numbers<[1], [0], [0], [1], [0, 0, 1, 1], [], []>} : vector<8x64xf32>, vector<64x64xf32>, vector<8x64xf32> -> vector<8x64xf32>
    %767 = arith.addf %766, %611 : vector<8x64xf32>
    %768 = arith.addf %759, %764 : vector<8x64xf32>
    %769 = arith.negf %768 : vector<8x64xf32>
    %770 = math.exp %769 : vector<8x64xf32>
    %cst_454 = arith.constant 1.000000e+00 : f32
    %771 = vector.broadcast %cst_454 : f32 to vector<8x64xf32>
    %772 = arith.addf %771, %770 : vector<8x64xf32>
    %773 = arith.divf %771, %772 : vector<8x64xf32>
    %774 = arith.addf %761, %765 : vector<8x64xf32>
    %775 = arith.negf %774 : vector<8x64xf32>
    %776 = math.exp %775 : vector<8x64xf32>
    %cst_455 = arith.constant 1.000000e+00 : f32
    %777 = vector.broadcast %cst_455 : f32 to vector<8x64xf32>
    %778 = arith.addf %777, %776 : vector<8x64xf32>
    %779 = arith.divf %777, %778 : vector<8x64xf32>
    %780 = arith.mulf %773, %767 : vector<8x64xf32>
    %781 = arith.addf %763, %780 : vector<8x64xf32>
    %782 = math.tanh %781 : vector<8x64xf32>
    %783 = arith.subf %756, %782 : vector<8x64xf32>
    %784 = arith.mulf %779, %783 : vector<8x64xf32>
    %785 = arith.addf %782, %784 : vector<8x64xf32>
    %c40_456 = arith.constant 40 : index
    %c0_457 = arith.constant 0 : index
    %786 = vector.load %arg11[%c40_456, %c0_457] : memref<64x64xf32, #tpu.memory_space<vmem>>, vector<8x64xf32>
    tpu.vector_store %arg11[%c40_456, %c0_457], %785 {strides = array<i32>} : memref<64x64xf32, #tpu.memory_space<vmem>>, vector<8x64xf32>,
    %c0_458 = arith.constant 0 : index
    %c48_459 = arith.constant 48 : index
    %c0_460 = arith.constant 0 : index
    %787 = vector.load %arg10[%c0_458, %c48_459, %c0_460] : memref<3x64x64xf32, #tpu.memory_space<vmem>>, vector<1x8x64xf32>
    %788 = vector.shape_cast %787 : vector<1x8x64xf32> to vector<8x64xf32>
    %c1_461 = arith.constant 1 : index
    %c48_462 = arith.constant 48 : index
    %c0_463 = arith.constant 0 : index
    %789 = vector.load %arg10[%c1_461, %c48_462, %c0_463] : memref<3x64x64xf32, #tpu.memory_space<vmem>>, vector<1x8x64xf32>
    %790 = vector.shape_cast %789 : vector<1x8x64xf32> to vector<8x64xf32>
    %c2_464 = arith.constant 2 : index
    %c48_465 = arith.constant 48 : index
    %c0_466 = arith.constant 0 : index
    %791 = vector.load %arg10[%c2_464, %c48_465, %c0_466] : memref<3x64x64xf32, #tpu.memory_space<vmem>>, vector<1x8x64xf32>
    %792 = vector.shape_cast %791 : vector<1x8x64xf32> to vector<8x64xf32>
    %cst_467 = arith.constant dense<0.000000e+00> : vector<8x64xf32>
    %793 = tpu.matmul %785, %603, %cst_467 {dimension_numbers = #tpu.dot_dimension_numbers<[1], [0], [0], [1], [0, 0, 1, 1], [], []>} : vector<8x64xf32>, vector<64x64xf32>, vector<8x64xf32> -> vector<8x64xf32>
    %cst_468 = arith.constant dense<0.000000e+00> : vector<8x64xf32>
    %794 = tpu.matmul %785, %605, %cst_468 {dimension_numbers = #tpu.dot_dimension_numbers<[1], [0], [0], [1], [0, 0, 1, 1], [], []>} : vector<8x64xf32>, vector<64x64xf32>, vector<8x64xf32> -> vector<8x64xf32>
    %cst_469 = arith.constant dense<0.000000e+00> : vector<8x64xf32>
    %795 = tpu.matmul %785, %607, %cst_469 {dimension_numbers = #tpu.dot_dimension_numbers<[1], [0], [0], [1], [0, 0, 1, 1], [], []>} : vector<8x64xf32>, vector<64x64xf32>, vector<8x64xf32> -> vector<8x64xf32>
    %796 = arith.addf %795, %611 : vector<8x64xf32>
    %797 = arith.addf %788, %793 : vector<8x64xf32>
    %798 = arith.negf %797 : vector<8x64xf32>
    %799 = math.exp %798 : vector<8x64xf32>
    %cst_470 = arith.constant 1.000000e+00 : f32
    %800 = vector.broadcast %cst_470 : f32 to vector<8x64xf32>
    %801 = arith.addf %800, %799 : vector<8x64xf32>
    %802 = arith.divf %800, %801 : vector<8x64xf32>
    %803 = arith.addf %790, %794 : vector<8x64xf32>
    %804 = arith.negf %803 : vector<8x64xf32>
    %805 = math.exp %804 : vector<8x64xf32>
    %cst_471 = arith.constant 1.000000e+00 : f32
    %806 = vector.broadcast %cst_471 : f32 to vector<8x64xf32>
    %807 = arith.addf %806, %805 : vector<8x64xf32>
    %808 = arith.divf %806, %807 : vector<8x64xf32>
    %809 = arith.mulf %802, %796 : vector<8x64xf32>
    %810 = arith.addf %792, %809 : vector<8x64xf32>
    %811 = math.tanh %810 : vector<8x64xf32>
    %812 = arith.subf %785, %811 : vector<8x64xf32>
    %813 = arith.mulf %808, %812 : vector<8x64xf32>
    %814 = arith.addf %811, %813 : vector<8x64xf32>
    %c48_472 = arith.constant 48 : index
    %c0_473 = arith.constant 0 : index
    %815 = vector.load %arg11[%c48_472, %c0_473] : memref<64x64xf32, #tpu.memory_space<vmem>>, vector<8x64xf32>
    tpu.vector_store %arg11[%c48_472, %c0_473], %814 {strides = array<i32>} : memref<64x64xf32, #tpu.memory_space<vmem>>, vector<8x64xf32>,
    %c0_474 = arith.constant 0 : index
    %c56_475 = arith.constant 56 : index
    %c0_476 = arith.constant 0 : index
    %816 = vector.load %arg10[%c0_474, %c56_475, %c0_476] : memref<3x64x64xf32, #tpu.memory_space<vmem>>, vector<1x8x64xf32>
    %817 = vector.shape_cast %816 : vector<1x8x64xf32> to vector<8x64xf32>
    %c1_477 = arith.constant 1 : index
    %c56_478 = arith.constant 56 : index
    %c0_479 = arith.constant 0 : index
    %818 = vector.load %arg10[%c1_477, %c56_478, %c0_479] : memref<3x64x64xf32, #tpu.memory_space<vmem>>, vector<1x8x64xf32>
    %819 = vector.shape_cast %818 : vector<1x8x64xf32> to vector<8x64xf32>
    %c2_480 = arith.constant 2 : index
    %c56_481 = arith.constant 56 : index
    %c0_482 = arith.constant 0 : index
    %820 = vector.load %arg10[%c2_480, %c56_481, %c0_482] : memref<3x64x64xf32, #tpu.memory_space<vmem>>, vector<1x8x64xf32>
    %821 = vector.shape_cast %820 : vector<1x8x64xf32> to vector<8x64xf32>
    %cst_483 = arith.constant dense<0.000000e+00> : vector<8x64xf32>
    %822 = tpu.matmul %814, %603, %cst_483 {dimension_numbers = #tpu.dot_dimension_numbers<[1], [0], [0], [1], [0, 0, 1, 1], [], []>} : vector<8x64xf32>, vector<64x64xf32>, vector<8x64xf32> -> vector<8x64xf32>
    %cst_484 = arith.constant dense<0.000000e+00> : vector<8x64xf32>
    %823 = tpu.matmul %814, %605, %cst_484 {dimension_numbers = #tpu.dot_dimension_numbers<[1], [0], [0], [1], [0, 0, 1, 1], [], []>} : vector<8x64xf32>, vector<64x64xf32>, vector<8x64xf32> -> vector<8x64xf32>
    %cst_485 = arith.constant dense<0.000000e+00> : vector<8x64xf32>
    %824 = tpu.matmul %814, %607, %cst_485 {dimension_numbers = #tpu.dot_dimension_numbers<[1], [0], [0], [1], [0, 0, 1, 1], [], []>} : vector<8x64xf32>, vector<64x64xf32>, vector<8x64xf32> -> vector<8x64xf32>
    %825 = arith.addf %824, %611 : vector<8x64xf32>
    %826 = arith.addf %817, %822 : vector<8x64xf32>
    %827 = arith.negf %826 : vector<8x64xf32>
    %828 = math.exp %827 : vector<8x64xf32>
    %cst_486 = arith.constant 1.000000e+00 : f32
    %829 = vector.broadcast %cst_486 : f32 to vector<8x64xf32>
    %830 = arith.addf %829, %828 : vector<8x64xf32>
    %831 = arith.divf %829, %830 : vector<8x64xf32>
    %832 = arith.addf %819, %823 : vector<8x64xf32>
    %833 = arith.negf %832 : vector<8x64xf32>
    %834 = math.exp %833 : vector<8x64xf32>
    %cst_487 = arith.constant 1.000000e+00 : f32
    %835 = vector.broadcast %cst_487 : f32 to vector<8x64xf32>
    %836 = arith.addf %835, %834 : vector<8x64xf32>
    %837 = arith.divf %835, %836 : vector<8x64xf32>
    %838 = arith.mulf %831, %825 : vector<8x64xf32>
    %839 = arith.addf %821, %838 : vector<8x64xf32>
    %840 = math.tanh %839 : vector<8x64xf32>
    %841 = arith.subf %814, %840 : vector<8x64xf32>
    %842 = arith.mulf %837, %841 : vector<8x64xf32>
    %843 = arith.addf %840, %842 : vector<8x64xf32>
    %c56_488 = arith.constant 56 : index
    %c0_489 = arith.constant 0 : index
    %844 = vector.load %arg11[%c56_488, %c0_489] : memref<64x64xf32, #tpu.memory_space<vmem>>, vector<8x64xf32>
    tpu.vector_store %arg11[%c56_488, %c0_489], %843 {strides = array<i32>} : memref<64x64xf32, #tpu.memory_space<vmem>>, vector<8x64xf32>,
    %c0_490 = arith.constant 0 : index
    %c0_491 = arith.constant 0 : index
    %845 = vector.load %arg11[%c0_490, %c0_491] : memref<64x64xf32, #tpu.memory_space<vmem>>, vector<8x64xf32>
    %c56_492 = arith.constant 56 : index
    %c0_493 = arith.constant 0 : index
    %846 = vector.load %arg11[%c56_492, %c0_493] : memref<64x64xf32, #tpu.memory_space<vmem>>, vector<8x64xf32>
    %847 = arith.select %2, %846, %845 : vector<8x64xi1>, vector<8x64xf32>
    %c0_494 = arith.constant 0 : index
    %c0_495 = arith.constant 0 : index
    %848 = vector.load %arg11[%c0_494, %c0_495] : memref<64x64xf32, #tpu.memory_space<vmem>>, vector<8x64xf32>
    tpu.vector_store %arg11[%c0_494, %c0_495], %847 {strides = array<i32>} : memref<64x64xf32, #tpu.memory_space<vmem>>, vector<8x64xf32>,
    %849 = arith.select %2, %845, %846 : vector<8x64xi1>, vector<8x64xf32>
    %c56_496 = arith.constant 56 : index
    %c0_497 = arith.constant 0 : index
    %850 = vector.load %arg11[%c56_496, %c0_497] : memref<64x64xf32, #tpu.memory_space<vmem>>, vector<8x64xf32>
    tpu.vector_store %arg11[%c56_496, %c0_497], %849 {strides = array<i32>} : memref<64x64xf32, #tpu.memory_space<vmem>>, vector<8x64xf32>,
    %c8_498 = arith.constant 8 : index
    %c0_499 = arith.constant 0 : index
    %851 = vector.load %arg11[%c8_498, %c0_499] : memref<64x64xf32, #tpu.memory_space<vmem>>, vector<8x64xf32>
    %c48_500 = arith.constant 48 : index
    %c0_501 = arith.constant 0 : index
    %852 = vector.load %arg11[%c48_500, %c0_501] : memref<64x64xf32, #tpu.memory_space<vmem>>, vector<8x64xf32>
    %853 = arith.select %2, %852, %851 : vector<8x64xi1>, vector<8x64xf32>
    %c8_502 = arith.constant 8 : index
    %c0_503 = arith.constant 0 : index
    %854 = vector.load %arg11[%c8_502, %c0_503] : memref<64x64xf32, #tpu.memory_space<vmem>>, vector<8x64xf32>
    tpu.vector_store %arg11[%c8_502, %c0_503], %853 {strides = array<i32>} : memref<64x64xf32, #tpu.memory_space<vmem>>, vector<8x64xf32>,
    %855 = arith.select %2, %851, %852 : vector<8x64xi1>, vector<8x64xf32>
    %c48_504 = arith.constant 48 : index
    %c0_505 = arith.constant 0 : index
    %856 = vector.load %arg11[%c48_504, %c0_505] : memref<64x64xf32, #tpu.memory_space<vmem>>, vector<8x64xf32>
    tpu.vector_store %arg11[%c48_504, %c0_505], %855 {strides = array<i32>} : memref<64x64xf32, #tpu.memory_space<vmem>>, vector<8x64xf32>,
    %c16_506 = arith.constant 16 : index
    %c0_507 = arith.constant 0 : index
    %857 = vector.load %arg11[%c16_506, %c0_507] : memref<64x64xf32, #tpu.memory_space<vmem>>, vector<8x64xf32>
    %c40_508 = arith.constant 40 : index
    %c0_509 = arith.constant 0 : index
    %858 = vector.load %arg11[%c40_508, %c0_509] : memref<64x64xf32, #tpu.memory_space<vmem>>, vector<8x64xf32>
    %859 = arith.select %2, %858, %857 : vector<8x64xi1>, vector<8x64xf32>
    %c16_510 = arith.constant 16 : index
    %c0_511 = arith.constant 0 : index
    %860 = vector.load %arg11[%c16_510, %c0_511] : memref<64x64xf32, #tpu.memory_space<vmem>>, vector<8x64xf32>
    tpu.vector_store %arg11[%c16_510, %c0_511], %859 {strides = array<i32>} : memref<64x64xf32, #tpu.memory_space<vmem>>, vector<8x64xf32>,
    %861 = arith.select %2, %857, %858 : vector<8x64xi1>, vector<8x64xf32>
    %c40_512 = arith.constant 40 : index
    %c0_513 = arith.constant 0 : index
    %862 = vector.load %arg11[%c40_512, %c0_513] : memref<64x64xf32, #tpu.memory_space<vmem>>, vector<8x64xf32>
    tpu.vector_store %arg11[%c40_512, %c0_513], %861 {strides = array<i32>} : memref<64x64xf32, #tpu.memory_space<vmem>>, vector<8x64xf32>,
    %c24_514 = arith.constant 24 : index
    %c0_515 = arith.constant 0 : index
    %863 = vector.load %arg11[%c24_514, %c0_515] : memref<64x64xf32, #tpu.memory_space<vmem>>, vector<8x64xf32>
    %c32_516 = arith.constant 32 : index
    %c0_517 = arith.constant 0 : index
    %864 = vector.load %arg11[%c32_516, %c0_517] : memref<64x64xf32, #tpu.memory_space<vmem>>, vector<8x64xf32>
    %865 = arith.select %2, %864, %863 : vector<8x64xi1>, vector<8x64xf32>
    %c24_518 = arith.constant 24 : index
    %c0_519 = arith.constant 0 : index
    %866 = vector.load %arg11[%c24_518, %c0_519] : memref<64x64xf32, #tpu.memory_space<vmem>>, vector<8x64xf32>
    tpu.vector_store %arg11[%c24_518, %c0_519], %865 {strides = array<i32>} : memref<64x64xf32, #tpu.memory_space<vmem>>, vector<8x64xf32>,
    %867 = arith.select %2, %863, %864 : vector<8x64xi1>, vector<8x64xf32>
    %c32_520 = arith.constant 32 : index
    %c0_521 = arith.constant 0 : index
    %868 = vector.load %arg11[%c32_520, %c0_521] : memref<64x64xf32, #tpu.memory_space<vmem>>, vector<8x64xf32>
    tpu.vector_store %arg11[%c32_520, %c0_521], %867 {strides = array<i32>} : memref<64x64xf32, #tpu.memory_space<vmem>>, vector<8x64xf32>,
    %c0_522 = arith.constant 0 : index
    %c0_523 = arith.constant 0 : index
    %869 = vector.load %arg11[%c0_522, %c0_523] : memref<64x64xf32, #tpu.memory_space<vmem>>, vector<64x64xf32>
    %c6 = arith.constant 6 : index
    %c0_524 = arith.constant 0 : index
    %c0_525 = arith.constant 0 : index
    %870 = vector.load %arg2[%c6, %c0_524, %c0_525] : memref<9x64x64xf32, #tpu.memory_space<vmem>>, vector<1x64x64xf32>
    %871 = vector.shape_cast %870 : vector<1x64x64xf32> to vector<64x64xf32>
    %cst_526 = arith.constant dense<0.000000e+00> : vector<64x64xf32>
    %872 = tpu.matmul %869, %871, %cst_526 {dimension_numbers = #tpu.dot_dimension_numbers<[1], [0], [0], [1], [0, 0, 1, 1], [], []>} : vector<64x64xf32>, vector<64x64xf32>, vector<64x64xf32> -> vector<64x64xf32>
    %c6_527 = arith.constant 6 : index
    %c0_528 = arith.constant 0 : index
    %c0_529 = arith.constant 0 : index
    %873 = vector.load %arg4[%c6_527, %c0_528, %c0_529] : memref<9x1x64xf32, #tpu.memory_space<vmem>>, vector<1x1x64xf32>
    %874 = vector.shape_cast %873 : vector<1x1x64xf32> to vector<1x64xf32>
    %875 = vector.broadcast %874 : vector<1x64xf32> to vector<64x64xf32>
    %876 = arith.addf %872, %875 : vector<64x64xf32>
    %877 = vector.extract_strided_slice %876 {offsets = [0, 0], sizes = [8, 64], strides = [1, 1]} : vector<64x64xf32> to vector<8x64xf32>
    %878 = vector.extract_strided_slice %876 {offsets = [56, 0], sizes = [8, 64], strides = [1, 1]} : vector<64x64xf32> to vector<8x64xf32>
    %879 = arith.select %2, %878, %877 : vector<8x64xi1>, vector<8x64xf32>
    %c0_530 = arith.constant 0 : index
    %c0_531 = arith.constant 0 : index
    %c0_532 = arith.constant 0 : index
    %880 = vector.load %arg10[%c0_530, %c0_531, %c0_532] : memref<3x64x64xf32, #tpu.memory_space<vmem>>, vector<1x8x64xf32>
    %881 = vector.shape_cast %880 : vector<1x8x64xf32> to vector<8x64xf32>
    %882 = vector.shape_cast %879 : vector<8x64xf32> to vector<1x8x64xf32>
    tpu.vector_store %arg10[%c0_530, %c0_531, %c0_532], %882 {strides = array<i32>} : memref<3x64x64xf32, #tpu.memory_space<vmem>>, vector<1x8x64xf32>,
    %883 = vector.extract_strided_slice %876 {offsets = [8, 0], sizes = [8, 64], strides = [1, 1]} : vector<64x64xf32> to vector<8x64xf32>
    %884 = vector.extract_strided_slice %876 {offsets = [48, 0], sizes = [8, 64], strides = [1, 1]} : vector<64x64xf32> to vector<8x64xf32>
    %885 = arith.select %2, %884, %883 : vector<8x64xi1>, vector<8x64xf32>
    %c0_533 = arith.constant 0 : index
    %c8_534 = arith.constant 8 : index
    %c0_535 = arith.constant 0 : index
    %886 = vector.load %arg10[%c0_533, %c8_534, %c0_535] : memref<3x64x64xf32, #tpu.memory_space<vmem>>, vector<1x8x64xf32>
    %887 = vector.shape_cast %886 : vector<1x8x64xf32> to vector<8x64xf32>
    %888 = vector.shape_cast %885 : vector<8x64xf32> to vector<1x8x64xf32>
    tpu.vector_store %arg10[%c0_533, %c8_534, %c0_535], %888 {strides = array<i32>} : memref<3x64x64xf32, #tpu.memory_space<vmem>>, vector<1x8x64xf32>,
    %889 = vector.extract_strided_slice %876 {offsets = [16, 0], sizes = [8, 64], strides = [1, 1]} : vector<64x64xf32> to vector<8x64xf32>
    %890 = vector.extract_strided_slice %876 {offsets = [40, 0], sizes = [8, 64], strides = [1, 1]} : vector<64x64xf32> to vector<8x64xf32>
    %891 = arith.select %2, %890, %889 : vector<8x64xi1>, vector<8x64xf32>
    %c0_536 = arith.constant 0 : index
    %c16_537 = arith.constant 16 : index
    %c0_538 = arith.constant 0 : index
    %892 = vector.load %arg10[%c0_536, %c16_537, %c0_538] : memref<3x64x64xf32, #tpu.memory_space<vmem>>, vector<1x8x64xf32>
    %893 = vector.shape_cast %892 : vector<1x8x64xf32> to vector<8x64xf32>
    %894 = vector.shape_cast %891 : vector<8x64xf32> to vector<1x8x64xf32>
    tpu.vector_store %arg10[%c0_536, %c16_537, %c0_538], %894 {strides = array<i32>} : memref<3x64x64xf32, #tpu.memory_space<vmem>>, vector<1x8x64xf32>,
    %895 = vector.extract_strided_slice %876 {offsets = [24, 0], sizes = [8, 64], strides = [1, 1]} : vector<64x64xf32> to vector<8x64xf32>
    %896 = vector.extract_strided_slice %876 {offsets = [32, 0], sizes = [8, 64], strides = [1, 1]} : vector<64x64xf32> to vector<8x64xf32>
    %897 = arith.select %2, %896, %895 : vector<8x64xi1>, vector<8x64xf32>
    %c0_539 = arith.constant 0 : index
    %c24_540 = arith.constant 24 : index
    %c0_541 = arith.constant 0 : index
    %898 = vector.load %arg10[%c0_539, %c24_540, %c0_541] : memref<3x64x64xf32, #tpu.memory_space<vmem>>, vector<1x8x64xf32>
    %899 = vector.shape_cast %898 : vector<1x8x64xf32> to vector<8x64xf32>
    %900 = vector.shape_cast %897 : vector<8x64xf32> to vector<1x8x64xf32>
    tpu.vector_store %arg10[%c0_539, %c24_540, %c0_541], %900 {strides = array<i32>} : memref<3x64x64xf32, #tpu.memory_space<vmem>>, vector<1x8x64xf32>,
    %901 = vector.extract_strided_slice %876 {offsets = [32, 0], sizes = [8, 64], strides = [1, 1]} : vector<64x64xf32> to vector<8x64xf32>
    %902 = vector.extract_strided_slice %876 {offsets = [24, 0], sizes = [8, 64], strides = [1, 1]} : vector<64x64xf32> to vector<8x64xf32>
    %903 = arith.select %2, %902, %901 : vector<8x64xi1>, vector<8x64xf32>
    %c0_542 = arith.constant 0 : index
    %c32_543 = arith.constant 32 : index
    %c0_544 = arith.constant 0 : index
    %904 = vector.load %arg10[%c0_542, %c32_543, %c0_544] : memref<3x64x64xf32, #tpu.memory_space<vmem>>, vector<1x8x64xf32>
    %905 = vector.shape_cast %904 : vector<1x8x64xf32> to vector<8x64xf32>
    %906 = vector.shape_cast %903 : vector<8x64xf32> to vector<1x8x64xf32>
    tpu.vector_store %arg10[%c0_542, %c32_543, %c0_544], %906 {strides = array<i32>} : memref<3x64x64xf32, #tpu.memory_space<vmem>>, vector<1x8x64xf32>,
    %907 = vector.extract_strided_slice %876 {offsets = [40, 0], sizes = [8, 64], strides = [1, 1]} : vector<64x64xf32> to vector<8x64xf32>
    %908 = vector.extract_strided_slice %876 {offsets = [16, 0], sizes = [8, 64], strides = [1, 1]} : vector<64x64xf32> to vector<8x64xf32>
    %909 = arith.select %2, %908, %907 : vector<8x64xi1>, vector<8x64xf32>
    %c0_545 = arith.constant 0 : index
    %c40_546 = arith.constant 40 : index
    %c0_547 = arith.constant 0 : index
    %910 = vector.load %arg10[%c0_545, %c40_546, %c0_547] : memref<3x64x64xf32, #tpu.memory_space<vmem>>, vector<1x8x64xf32>
    %911 = vector.shape_cast %910 : vector<1x8x64xf32> to vector<8x64xf32>
    %912 = vector.shape_cast %909 : vector<8x64xf32> to vector<1x8x64xf32>
    tpu.vector_store %arg10[%c0_545, %c40_546, %c0_547], %912 {strides = array<i32>} : memref<3x64x64xf32, #tpu.memory_space<vmem>>, vector<1x8x64xf32>,
    %913 = vector.extract_strided_slice %876 {offsets = [48, 0], sizes = [8, 64], strides = [1, 1]} : vector<64x64xf32> to vector<8x64xf32>
    %914 = vector.extract_strided_slice %876 {offsets = [8, 0], sizes = [8, 64], strides = [1, 1]} : vector<64x64xf32> to vector<8x64xf32>
    %915 = arith.select %2, %914, %913 : vector<8x64xi1>, vector<8x64xf32>
    %c0_548 = arith.constant 0 : index
    %c48_549 = arith.constant 48 : index
    %c0_550 = arith.constant 0 : index
    %916 = vector.load %arg10[%c0_548, %c48_549, %c0_550] : memref<3x64x64xf32, #tpu.memory_space<vmem>>, vector<1x8x64xf32>
    %917 = vector.shape_cast %916 : vector<1x8x64xf32> to vector<8x64xf32>
    %918 = vector.shape_cast %915 : vector<8x64xf32> to vector<1x8x64xf32>
    tpu.vector_store %arg10[%c0_548, %c48_549, %c0_550], %918 {strides = array<i32>} : memref<3x64x64xf32, #tpu.memory_space<vmem>>, vector<1x8x64xf32>,
    %919 = vector.extract_strided_slice %876 {offsets = [56, 0], sizes = [8, 64], strides = [1, 1]} : vector<64x64xf32> to vector<8x64xf32>
    %920 = vector.extract_strided_slice %876 {offsets = [0, 0], sizes = [8, 64], strides = [1, 1]} : vector<64x64xf32> to vector<8x64xf32>
    %921 = arith.select %2, %920, %919 : vector<8x64xi1>, vector<8x64xf32>
    %c0_551 = arith.constant 0 : index
    %c56_552 = arith.constant 56 : index
    %c0_553 = arith.constant 0 : index
    %922 = vector.load %arg10[%c0_551, %c56_552, %c0_553] : memref<3x64x64xf32, #tpu.memory_space<vmem>>, vector<1x8x64xf32>
    %923 = vector.shape_cast %922 : vector<1x8x64xf32> to vector<8x64xf32>
    %924 = vector.shape_cast %921 : vector<8x64xf32> to vector<1x8x64xf32>
    tpu.vector_store %arg10[%c0_551, %c56_552, %c0_553], %924 {strides = array<i32>} : memref<3x64x64xf32, #tpu.memory_space<vmem>>, vector<1x8x64xf32>,
    %c7 = arith.constant 7 : index
    %c0_554 = arith.constant 0 : index
    %c0_555 = arith.constant 0 : index
    %925 = vector.load %arg2[%c7, %c0_554, %c0_555] : memref<9x64x64xf32, #tpu.memory_space<vmem>>, vector<1x64x64xf32>
    %926 = vector.shape_cast %925 : vector<1x64x64xf32> to vector<64x64xf32>
    %cst_556 = arith.constant dense<0.000000e+00> : vector<64x64xf32>
    %927 = tpu.matmul %869, %926, %cst_556 {dimension_numbers = #tpu.dot_dimension_numbers<[1], [0], [0], [1], [0, 0, 1, 1], [], []>} : vector<64x64xf32>, vector<64x64xf32>, vector<64x64xf32> -> vector<64x64xf32>
    %c7_557 = arith.constant 7 : index
    %c0_558 = arith.constant 0 : index
    %c0_559 = arith.constant 0 : index
    %928 = vector.load %arg4[%c7_557, %c0_558, %c0_559] : memref<9x1x64xf32, #tpu.memory_space<vmem>>, vector<1x1x64xf32>
    %929 = vector.shape_cast %928 : vector<1x1x64xf32> to vector<1x64xf32>
    %930 = vector.broadcast %929 : vector<1x64xf32> to vector<64x64xf32>
    %931 = arith.addf %927, %930 : vector<64x64xf32>
    %932 = vector.extract_strided_slice %931 {offsets = [0, 0], sizes = [8, 64], strides = [1, 1]} : vector<64x64xf32> to vector<8x64xf32>
    %933 = vector.extract_strided_slice %931 {offsets = [56, 0], sizes = [8, 64], strides = [1, 1]} : vector<64x64xf32> to vector<8x64xf32>
    %934 = arith.select %2, %933, %932 : vector<8x64xi1>, vector<8x64xf32>
    %c1_560 = arith.constant 1 : index
    %c0_561 = arith.constant 0 : index
    %c0_562 = arith.constant 0 : index
    %935 = vector.load %arg10[%c1_560, %c0_561, %c0_562] : memref<3x64x64xf32, #tpu.memory_space<vmem>>, vector<1x8x64xf32>
    %936 = vector.shape_cast %935 : vector<1x8x64xf32> to vector<8x64xf32>
    %937 = vector.shape_cast %934 : vector<8x64xf32> to vector<1x8x64xf32>
    tpu.vector_store %arg10[%c1_560, %c0_561, %c0_562], %937 {strides = array<i32>} : memref<3x64x64xf32, #tpu.memory_space<vmem>>, vector<1x8x64xf32>,
    %938 = vector.extract_strided_slice %931 {offsets = [8, 0], sizes = [8, 64], strides = [1, 1]} : vector<64x64xf32> to vector<8x64xf32>
    %939 = vector.extract_strided_slice %931 {offsets = [48, 0], sizes = [8, 64], strides = [1, 1]} : vector<64x64xf32> to vector<8x64xf32>
    %940 = arith.select %2, %939, %938 : vector<8x64xi1>, vector<8x64xf32>
    %c1_563 = arith.constant 1 : index
    %c8_564 = arith.constant 8 : index
    %c0_565 = arith.constant 0 : index
    %941 = vector.load %arg10[%c1_563, %c8_564, %c0_565] : memref<3x64x64xf32, #tpu.memory_space<vmem>>, vector<1x8x64xf32>
    %942 = vector.shape_cast %941 : vector<1x8x64xf32> to vector<8x64xf32>
    %943 = vector.shape_cast %940 : vector<8x64xf32> to vector<1x8x64xf32>
    tpu.vector_store %arg10[%c1_563, %c8_564, %c0_565], %943 {strides = array<i32>} : memref<3x64x64xf32, #tpu.memory_space<vmem>>, vector<1x8x64xf32>,
    %944 = vector.extract_strided_slice %931 {offsets = [16, 0], sizes = [8, 64], strides = [1, 1]} : vector<64x64xf32> to vector<8x64xf32>
    %945 = vector.extract_strided_slice %931 {offsets = [40, 0], sizes = [8, 64], strides = [1, 1]} : vector<64x64xf32> to vector<8x64xf32>
    %946 = arith.select %2, %945, %944 : vector<8x64xi1>, vector<8x64xf32>
    %c1_566 = arith.constant 1 : index
    %c16_567 = arith.constant 16 : index
    %c0_568 = arith.constant 0 : index
    %947 = vector.load %arg10[%c1_566, %c16_567, %c0_568] : memref<3x64x64xf32, #tpu.memory_space<vmem>>, vector<1x8x64xf32>
    %948 = vector.shape_cast %947 : vector<1x8x64xf32> to vector<8x64xf32>
    %949 = vector.shape_cast %946 : vector<8x64xf32> to vector<1x8x64xf32>
    tpu.vector_store %arg10[%c1_566, %c16_567, %c0_568], %949 {strides = array<i32>} : memref<3x64x64xf32, #tpu.memory_space<vmem>>, vector<1x8x64xf32>,
    %950 = vector.extract_strided_slice %931 {offsets = [24, 0], sizes = [8, 64], strides = [1, 1]} : vector<64x64xf32> to vector<8x64xf32>
    %951 = vector.extract_strided_slice %931 {offsets = [32, 0], sizes = [8, 64], strides = [1, 1]} : vector<64x64xf32> to vector<8x64xf32>
    %952 = arith.select %2, %951, %950 : vector<8x64xi1>, vector<8x64xf32>
    %c1_569 = arith.constant 1 : index
    %c24_570 = arith.constant 24 : index
    %c0_571 = arith.constant 0 : index
    %953 = vector.load %arg10[%c1_569, %c24_570, %c0_571] : memref<3x64x64xf32, #tpu.memory_space<vmem>>, vector<1x8x64xf32>
    %954 = vector.shape_cast %953 : vector<1x8x64xf32> to vector<8x64xf32>
    %955 = vector.shape_cast %952 : vector<8x64xf32> to vector<1x8x64xf32>
    tpu.vector_store %arg10[%c1_569, %c24_570, %c0_571], %955 {strides = array<i32>} : memref<3x64x64xf32, #tpu.memory_space<vmem>>, vector<1x8x64xf32>,
    %956 = vector.extract_strided_slice %931 {offsets = [32, 0], sizes = [8, 64], strides = [1, 1]} : vector<64x64xf32> to vector<8x64xf32>
    %957 = vector.extract_strided_slice %931 {offsets = [24, 0], sizes = [8, 64], strides = [1, 1]} : vector<64x64xf32> to vector<8x64xf32>
    %958 = arith.select %2, %957, %956 : vector<8x64xi1>, vector<8x64xf32>
    %c1_572 = arith.constant 1 : index
    %c32_573 = arith.constant 32 : index
    %c0_574 = arith.constant 0 : index
    %959 = vector.load %arg10[%c1_572, %c32_573, %c0_574] : memref<3x64x64xf32, #tpu.memory_space<vmem>>, vector<1x8x64xf32>
    %960 = vector.shape_cast %959 : vector<1x8x64xf32> to vector<8x64xf32>
    %961 = vector.shape_cast %958 : vector<8x64xf32> to vector<1x8x64xf32>
    tpu.vector_store %arg10[%c1_572, %c32_573, %c0_574], %961 {strides = array<i32>} : memref<3x64x64xf32, #tpu.memory_space<vmem>>, vector<1x8x64xf32>,
    %962 = vector.extract_strided_slice %931 {offsets = [40, 0], sizes = [8, 64], strides = [1, 1]} : vector<64x64xf32> to vector<8x64xf32>
    %963 = vector.extract_strided_slice %931 {offsets = [16, 0], sizes = [8, 64], strides = [1, 1]} : vector<64x64xf32> to vector<8x64xf32>
    %964 = arith.select %2, %963, %962 : vector<8x64xi1>, vector<8x64xf32>
    %c1_575 = arith.constant 1 : index
    %c40_576 = arith.constant 40 : index
    %c0_577 = arith.constant 0 : index
    %965 = vector.load %arg10[%c1_575, %c40_576, %c0_577] : memref<3x64x64xf32, #tpu.memory_space<vmem>>, vector<1x8x64xf32>
    %966 = vector.shape_cast %965 : vector<1x8x64xf32> to vector<8x64xf32>
    %967 = vector.shape_cast %964 : vector<8x64xf32> to vector<1x8x64xf32>
    tpu.vector_store %arg10[%c1_575, %c40_576, %c0_577], %967 {strides = array<i32>} : memref<3x64x64xf32, #tpu.memory_space<vmem>>, vector<1x8x64xf32>,
    %968 = vector.extract_strided_slice %931 {offsets = [48, 0], sizes = [8, 64], strides = [1, 1]} : vector<64x64xf32> to vector<8x64xf32>
    %969 = vector.extract_strided_slice %931 {offsets = [8, 0], sizes = [8, 64], strides = [1, 1]} : vector<64x64xf32> to vector<8x64xf32>
    %970 = arith.select %2, %969, %968 : vector<8x64xi1>, vector<8x64xf32>
    %c1_578 = arith.constant 1 : index
    %c48_579 = arith.constant 48 : index
    %c0_580 = arith.constant 0 : index
    %971 = vector.load %arg10[%c1_578, %c48_579, %c0_580] : memref<3x64x64xf32, #tpu.memory_space<vmem>>, vector<1x8x64xf32>
    %972 = vector.shape_cast %971 : vector<1x8x64xf32> to vector<8x64xf32>
    %973 = vector.shape_cast %970 : vector<8x64xf32> to vector<1x8x64xf32>
    tpu.vector_store %arg10[%c1_578, %c48_579, %c0_580], %973 {strides = array<i32>} : memref<3x64x64xf32, #tpu.memory_space<vmem>>, vector<1x8x64xf32>,
    %974 = vector.extract_strided_slice %931 {offsets = [56, 0], sizes = [8, 64], strides = [1, 1]} : vector<64x64xf32> to vector<8x64xf32>
    %975 = vector.extract_strided_slice %931 {offsets = [0, 0], sizes = [8, 64], strides = [1, 1]} : vector<64x64xf32> to vector<8x64xf32>
    %976 = arith.select %2, %975, %974 : vector<8x64xi1>, vector<8x64xf32>
    %c1_581 = arith.constant 1 : index
    %c56_582 = arith.constant 56 : index
    %c0_583 = arith.constant 0 : index
    %977 = vector.load %arg10[%c1_581, %c56_582, %c0_583] : memref<3x64x64xf32, #tpu.memory_space<vmem>>, vector<1x8x64xf32>
    %978 = vector.shape_cast %977 : vector<1x8x64xf32> to vector<8x64xf32>
    %979 = vector.shape_cast %976 : vector<8x64xf32> to vector<1x8x64xf32>
    tpu.vector_store %arg10[%c1_581, %c56_582, %c0_583], %979 {strides = array<i32>} : memref<3x64x64xf32, #tpu.memory_space<vmem>>, vector<1x8x64xf32>,
    %c8_584 = arith.constant 8 : index
    %c0_585 = arith.constant 0 : index
    %c0_586 = arith.constant 0 : index
    %980 = vector.load %arg2[%c8_584, %c0_585, %c0_586] : memref<9x64x64xf32, #tpu.memory_space<vmem>>, vector<1x64x64xf32>
    %981 = vector.shape_cast %980 : vector<1x64x64xf32> to vector<64x64xf32>
    %cst_587 = arith.constant dense<0.000000e+00> : vector<64x64xf32>
    %982 = tpu.matmul %869, %981, %cst_587 {dimension_numbers = #tpu.dot_dimension_numbers<[1], [0], [0], [1], [0, 0, 1, 1], [], []>} : vector<64x64xf32>, vector<64x64xf32>, vector<64x64xf32> -> vector<64x64xf32>
    %c8_588 = arith.constant 8 : index
    %c0_589 = arith.constant 0 : index
    %c0_590 = arith.constant 0 : index
    %983 = vector.load %arg4[%c8_588, %c0_589, %c0_590] : memref<9x1x64xf32, #tpu.memory_space<vmem>>, vector<1x1x64xf32>
    %984 = vector.shape_cast %983 : vector<1x1x64xf32> to vector<1x64xf32>
    %985 = vector.broadcast %984 : vector<1x64xf32> to vector<64x64xf32>
    %986 = arith.addf %982, %985 : vector<64x64xf32>
    %987 = vector.extract_strided_slice %986 {offsets = [0, 0], sizes = [8, 64], strides = [1, 1]} : vector<64x64xf32> to vector<8x64xf32>
    %988 = vector.extract_strided_slice %986 {offsets = [56, 0], sizes = [8, 64], strides = [1, 1]} : vector<64x64xf32> to vector<8x64xf32>
    %989 = arith.select %2, %988, %987 : vector<8x64xi1>, vector<8x64xf32>
    %c2_591 = arith.constant 2 : index
    %c0_592 = arith.constant 0 : index
    %c0_593 = arith.constant 0 : index
    %990 = vector.load %arg10[%c2_591, %c0_592, %c0_593] : memref<3x64x64xf32, #tpu.memory_space<vmem>>, vector<1x8x64xf32>
    %991 = vector.shape_cast %990 : vector<1x8x64xf32> to vector<8x64xf32>
    %992 = vector.shape_cast %989 : vector<8x64xf32> to vector<1x8x64xf32>
    tpu.vector_store %arg10[%c2_591, %c0_592, %c0_593], %992 {strides = array<i32>} : memref<3x64x64xf32, #tpu.memory_space<vmem>>, vector<1x8x64xf32>,
    %993 = vector.extract_strided_slice %986 {offsets = [8, 0], sizes = [8, 64], strides = [1, 1]} : vector<64x64xf32> to vector<8x64xf32>
    %994 = vector.extract_strided_slice %986 {offsets = [48, 0], sizes = [8, 64], strides = [1, 1]} : vector<64x64xf32> to vector<8x64xf32>
    %995 = arith.select %2, %994, %993 : vector<8x64xi1>, vector<8x64xf32>
    %c2_594 = arith.constant 2 : index
    %c8_595 = arith.constant 8 : index
    %c0_596 = arith.constant 0 : index
    %996 = vector.load %arg10[%c2_594, %c8_595, %c0_596] : memref<3x64x64xf32, #tpu.memory_space<vmem>>, vector<1x8x64xf32>
    %997 = vector.shape_cast %996 : vector<1x8x64xf32> to vector<8x64xf32>
    %998 = vector.shape_cast %995 : vector<8x64xf32> to vector<1x8x64xf32>
    tpu.vector_store %arg10[%c2_594, %c8_595, %c0_596], %998 {strides = array<i32>} : memref<3x64x64xf32, #tpu.memory_space<vmem>>, vector<1x8x64xf32>,
    %999 = vector.extract_strided_slice %986 {offsets = [16, 0], sizes = [8, 64], strides = [1, 1]} : vector<64x64xf32> to vector<8x64xf32>
    %1000 = vector.extract_strided_slice %986 {offsets = [40, 0], sizes = [8, 64], strides = [1, 1]} : vector<64x64xf32> to vector<8x64xf32>
    %1001 = arith.select %2, %1000, %999 : vector<8x64xi1>, vector<8x64xf32>
    %c2_597 = arith.constant 2 : index
    %c16_598 = arith.constant 16 : index
    %c0_599 = arith.constant 0 : index
    %1002 = vector.load %arg10[%c2_597, %c16_598, %c0_599] : memref<3x64x64xf32, #tpu.memory_space<vmem>>, vector<1x8x64xf32>
    %1003 = vector.shape_cast %1002 : vector<1x8x64xf32> to vector<8x64xf32>
    %1004 = vector.shape_cast %1001 : vector<8x64xf32> to vector<1x8x64xf32>
    tpu.vector_store %arg10[%c2_597, %c16_598, %c0_599], %1004 {strides = array<i32>} : memref<3x64x64xf32, #tpu.memory_space<vmem>>, vector<1x8x64xf32>,
    %1005 = vector.extract_strided_slice %986 {offsets = [24, 0], sizes = [8, 64], strides = [1, 1]} : vector<64x64xf32> to vector<8x64xf32>
    %1006 = vector.extract_strided_slice %986 {offsets = [32, 0], sizes = [8, 64], strides = [1, 1]} : vector<64x64xf32> to vector<8x64xf32>
    %1007 = arith.select %2, %1006, %1005 : vector<8x64xi1>, vector<8x64xf32>
    %c2_600 = arith.constant 2 : index
    %c24_601 = arith.constant 24 : index
    %c0_602 = arith.constant 0 : index
    %1008 = vector.load %arg10[%c2_600, %c24_601, %c0_602] : memref<3x64x64xf32, #tpu.memory_space<vmem>>, vector<1x8x64xf32>
    %1009 = vector.shape_cast %1008 : vector<1x8x64xf32> to vector<8x64xf32>
    %1010 = vector.shape_cast %1007 : vector<8x64xf32> to vector<1x8x64xf32>
    tpu.vector_store %arg10[%c2_600, %c24_601, %c0_602], %1010 {strides = array<i32>} : memref<3x64x64xf32, #tpu.memory_space<vmem>>, vector<1x8x64xf32>,
    %1011 = vector.extract_strided_slice %986 {offsets = [32, 0], sizes = [8, 64], strides = [1, 1]} : vector<64x64xf32> to vector<8x64xf32>
    %1012 = vector.extract_strided_slice %986 {offsets = [24, 0], sizes = [8, 64], strides = [1, 1]} : vector<64x64xf32> to vector<8x64xf32>
    %1013 = arith.select %2, %1012, %1011 : vector<8x64xi1>, vector<8x64xf32>
    %c2_603 = arith.constant 2 : index
    %c32_604 = arith.constant 32 : index
    %c0_605 = arith.constant 0 : index
    %1014 = vector.load %arg10[%c2_603, %c32_604, %c0_605] : memref<3x64x64xf32, #tpu.memory_space<vmem>>, vector<1x8x64xf32>
    %1015 = vector.shape_cast %1014 : vector<1x8x64xf32> to vector<8x64xf32>
    %1016 = vector.shape_cast %1013 : vector<8x64xf32> to vector<1x8x64xf32>
    tpu.vector_store %arg10[%c2_603, %c32_604, %c0_605], %1016 {strides = array<i32>} : memref<3x64x64xf32, #tpu.memory_space<vmem>>, vector<1x8x64xf32>,
    %1017 = vector.extract_strided_slice %986 {offsets = [40, 0], sizes = [8, 64], strides = [1, 1]} : vector<64x64xf32> to vector<8x64xf32>
    %1018 = vector.extract_strided_slice %986 {offsets = [16, 0], sizes = [8, 64], strides = [1, 1]} : vector<64x64xf32> to vector<8x64xf32>
    %1019 = arith.select %2, %1018, %1017 : vector<8x64xi1>, vector<8x64xf32>
    %c2_606 = arith.constant 2 : index
    %c40_607 = arith.constant 40 : index
    %c0_608 = arith.constant 0 : index
    %1020 = vector.load %arg10[%c2_606, %c40_607, %c0_608] : memref<3x64x64xf32, #tpu.memory_space<vmem>>, vector<1x8x64xf32>
    %1021 = vector.shape_cast %1020 : vector<1x8x64xf32> to vector<8x64xf32>
    %1022 = vector.shape_cast %1019 : vector<8x64xf32> to vector<1x8x64xf32>
    tpu.vector_store %arg10[%c2_606, %c40_607, %c0_608], %1022 {strides = array<i32>} : memref<3x64x64xf32, #tpu.memory_space<vmem>>, vector<1x8x64xf32>,
    %1023 = vector.extract_strided_slice %986 {offsets = [48, 0], sizes = [8, 64], strides = [1, 1]} : vector<64x64xf32> to vector<8x64xf32>
    %1024 = vector.extract_strided_slice %986 {offsets = [8, 0], sizes = [8, 64], strides = [1, 1]} : vector<64x64xf32> to vector<8x64xf32>
    %1025 = arith.select %2, %1024, %1023 : vector<8x64xi1>, vector<8x64xf32>
    %c2_609 = arith.constant 2 : index
    %c48_610 = arith.constant 48 : index
    %c0_611 = arith.constant 0 : index
    %1026 = vector.load %arg10[%c2_609, %c48_610, %c0_611] : memref<3x64x64xf32, #tpu.memory_space<vmem>>, vector<1x8x64xf32>
    %1027 = vector.shape_cast %1026 : vector<1x8x64xf32> to vector<8x64xf32>
    %1028 = vector.shape_cast %1025 : vector<8x64xf32> to vector<1x8x64xf32>
    tpu.vector_store %arg10[%c2_609, %c48_610, %c0_611], %1028 {strides = array<i32>} : memref<3x64x64xf32, #tpu.memory_space<vmem>>, vector<1x8x64xf32>,
    %1029 = vector.extract_strided_slice %986 {offsets = [56, 0], sizes = [8, 64], strides = [1, 1]} : vector<64x64xf32> to vector<8x64xf32>
    %1030 = vector.extract_strided_slice %986 {offsets = [0, 0], sizes = [8, 64], strides = [1, 1]} : vector<64x64xf32> to vector<8x64xf32>
    %1031 = arith.select %2, %1030, %1029 : vector<8x64xi1>, vector<8x64xf32>
    %c2_612 = arith.constant 2 : index
    %c56_613 = arith.constant 56 : index
    %c0_614 = arith.constant 0 : index
    %1032 = vector.load %arg10[%c2_612, %c56_613, %c0_614] : memref<3x64x64xf32, #tpu.memory_space<vmem>>, vector<1x8x64xf32>
    %1033 = vector.shape_cast %1032 : vector<1x8x64xf32> to vector<8x64xf32>
    %1034 = vector.shape_cast %1031 : vector<8x64xf32> to vector<1x8x64xf32>
    tpu.vector_store %arg10[%c2_612, %c56_613, %c0_614], %1034 {strides = array<i32>} : memref<3x64x64xf32, #tpu.memory_space<vmem>>, vector<1x8x64xf32>,
    %c6_615 = arith.constant 6 : index
    %c0_616 = arith.constant 0 : index
    %c0_617 = arith.constant 0 : index
    %1035 = vector.load %arg3[%c6_615, %c0_616, %c0_617] : memref<9x64x64xf32, #tpu.memory_space<vmem>>, vector<1x64x64xf32>
    %1036 = vector.shape_cast %1035 : vector<1x64x64xf32> to vector<64x64xf32>
    %c7_618 = arith.constant 7 : index
    %c0_619 = arith.constant 0 : index
    %c0_620 = arith.constant 0 : index
    %1037 = vector.load %arg3[%c7_618, %c0_619, %c0_620] : memref<9x64x64xf32, #tpu.memory_space<vmem>>, vector<1x64x64xf32>
    %1038 = vector.shape_cast %1037 : vector<1x64x64xf32> to vector<64x64xf32>
    %c8_621 = arith.constant 8 : index
    %c0_622 = arith.constant 0 : index
    %c0_623 = arith.constant 0 : index
    %1039 = vector.load %arg3[%c8_621, %c0_622, %c0_623] : memref<9x64x64xf32, #tpu.memory_space<vmem>>, vector<1x64x64xf32>
    %1040 = vector.shape_cast %1039 : vector<1x64x64xf32> to vector<64x64xf32>
    %c2_624 = arith.constant 2 : index
    %c0_625 = arith.constant 0 : index
    %c0_626 = arith.constant 0 : index
    %1041 = vector.load %arg5[%c2_624, %c0_625, %c0_626] : memref<3x1x64xf32, #tpu.memory_space<vmem>>, vector<1x1x64xf32>
    %1042 = vector.shape_cast %1041 : vector<1x1x64xf32> to vector<1x64xf32>
    %1043 = vector.shape_cast %1042 : vector<1x64xf32> to vector<1x64xf32>
    %1044 = vector.broadcast %1043 : vector<1x64xf32> to vector<8x64xf32>
    %cst_627 = arith.constant 0.000000e+00 : f32
    %1045 = vector.broadcast %cst_627 : f32 to vector<8x64xf32>
    %c0_628 = arith.constant 0 : index
    %c0_629 = arith.constant 0 : index
    %c0_630 = arith.constant 0 : index
    %1046 = vector.load %arg10[%c0_628, %c0_629, %c0_630] : memref<3x64x64xf32, #tpu.memory_space<vmem>>, vector<1x8x64xf32>
    %1047 = vector.shape_cast %1046 : vector<1x8x64xf32> to vector<8x64xf32>
    %c1_631 = arith.constant 1 : index
    %c0_632 = arith.constant 0 : index
    %c0_633 = arith.constant 0 : index
    %1048 = vector.load %arg10[%c1_631, %c0_632, %c0_633] : memref<3x64x64xf32, #tpu.memory_space<vmem>>, vector<1x8x64xf32>
    %1049 = vector.shape_cast %1048 : vector<1x8x64xf32> to vector<8x64xf32>
    %c2_634 = arith.constant 2 : index
    %c0_635 = arith.constant 0 : index
    %c0_636 = arith.constant 0 : index
    %1050 = vector.load %arg10[%c2_634, %c0_635, %c0_636] : memref<3x64x64xf32, #tpu.memory_space<vmem>>, vector<1x8x64xf32>
    %1051 = vector.shape_cast %1050 : vector<1x8x64xf32> to vector<8x64xf32>
    %cst_637 = arith.constant dense<0.000000e+00> : vector<8x64xf32>
    %1052 = tpu.matmul %1045, %1036, %cst_637 {dimension_numbers = #tpu.dot_dimension_numbers<[1], [0], [0], [1], [0, 0, 1, 1], [], []>} : vector<8x64xf32>, vector<64x64xf32>, vector<8x64xf32> -> vector<8x64xf32>
    %cst_638 = arith.constant dense<0.000000e+00> : vector<8x64xf32>
    %1053 = tpu.matmul %1045, %1038, %cst_638 {dimension_numbers = #tpu.dot_dimension_numbers<[1], [0], [0], [1], [0, 0, 1, 1], [], []>} : vector<8x64xf32>, vector<64x64xf32>, vector<8x64xf32> -> vector<8x64xf32>
    %cst_639 = arith.constant dense<0.000000e+00> : vector<8x64xf32>
    %1054 = tpu.matmul %1045, %1040, %cst_639 {dimension_numbers = #tpu.dot_dimension_numbers<[1], [0], [0], [1], [0, 0, 1, 1], [], []>} : vector<8x64xf32>, vector<64x64xf32>, vector<8x64xf32> -> vector<8x64xf32>
    %1055 = arith.addf %1054, %1044 : vector<8x64xf32>
    %1056 = arith.addf %1047, %1052 : vector<8x64xf32>
    %1057 = arith.negf %1056 : vector<8x64xf32>
    %1058 = math.exp %1057 : vector<8x64xf32>
    %cst_640 = arith.constant 1.000000e+00 : f32
    %1059 = vector.broadcast %cst_640 : f32 to vector<8x64xf32>
    %1060 = arith.addf %1059, %1058 : vector<8x64xf32>
    %1061 = arith.divf %1059, %1060 : vector<8x64xf32>
    %1062 = arith.addf %1049, %1053 : vector<8x64xf32>
    %1063 = arith.negf %1062 : vector<8x64xf32>
    %1064 = math.exp %1063 : vector<8x64xf32>
    %cst_641 = arith.constant 1.000000e+00 : f32
    %1065 = vector.broadcast %cst_641 : f32 to vector<8x64xf32>
    %1066 = arith.addf %1065, %1064 : vector<8x64xf32>
    %1067 = arith.divf %1065, %1066 : vector<8x64xf32>
    %1068 = arith.mulf %1061, %1055 : vector<8x64xf32>
    %1069 = arith.addf %1051, %1068 : vector<8x64xf32>
    %1070 = math.tanh %1069 : vector<8x64xf32>
    %1071 = arith.subf %1045, %1070 : vector<8x64xf32>
    %1072 = arith.mulf %1067, %1071 : vector<8x64xf32>
    %1073 = arith.addf %1070, %1072 : vector<8x64xf32>
    %c0_642 = arith.constant 0 : index
    %c0_643 = arith.constant 0 : index
    %1074 = vector.load %arg11[%c0_642, %c0_643] : memref<64x64xf32, #tpu.memory_space<vmem>>, vector<8x64xf32>
    tpu.vector_store %arg11[%c0_642, %c0_643], %1073 {strides = array<i32>} : memref<64x64xf32, #tpu.memory_space<vmem>>, vector<8x64xf32>,
    %c0_644 = arith.constant 0 : index
    %c8_645 = arith.constant 8 : index
    %c0_646 = arith.constant 0 : index
    %1075 = vector.load %arg10[%c0_644, %c8_645, %c0_646] : memref<3x64x64xf32, #tpu.memory_space<vmem>>, vector<1x8x64xf32>
    %1076 = vector.shape_cast %1075 : vector<1x8x64xf32> to vector<8x64xf32>
    %c1_647 = arith.constant 1 : index
    %c8_648 = arith.constant 8 : index
    %c0_649 = arith.constant 0 : index
    %1077 = vector.load %arg10[%c1_647, %c8_648, %c0_649] : memref<3x64x64xf32, #tpu.memory_space<vmem>>, vector<1x8x64xf32>
    %1078 = vector.shape_cast %1077 : vector<1x8x64xf32> to vector<8x64xf32>
    %c2_650 = arith.constant 2 : index
    %c8_651 = arith.constant 8 : index
    %c0_652 = arith.constant 0 : index
    %1079 = vector.load %arg10[%c2_650, %c8_651, %c0_652] : memref<3x64x64xf32, #tpu.memory_space<vmem>>, vector<1x8x64xf32>
    %1080 = vector.shape_cast %1079 : vector<1x8x64xf32> to vector<8x64xf32>
    %cst_653 = arith.constant dense<0.000000e+00> : vector<8x64xf32>
    %1081 = tpu.matmul %1073, %1036, %cst_653 {dimension_numbers = #tpu.dot_dimension_numbers<[1], [0], [0], [1], [0, 0, 1, 1], [], []>} : vector<8x64xf32>, vector<64x64xf32>, vector<8x64xf32> -> vector<8x64xf32>
    %cst_654 = arith.constant dense<0.000000e+00> : vector<8x64xf32>
    %1082 = tpu.matmul %1073, %1038, %cst_654 {dimension_numbers = #tpu.dot_dimension_numbers<[1], [0], [0], [1], [0, 0, 1, 1], [], []>} : vector<8x64xf32>, vector<64x64xf32>, vector<8x64xf32> -> vector<8x64xf32>
    %cst_655 = arith.constant dense<0.000000e+00> : vector<8x64xf32>
    %1083 = tpu.matmul %1073, %1040, %cst_655 {dimension_numbers = #tpu.dot_dimension_numbers<[1], [0], [0], [1], [0, 0, 1, 1], [], []>} : vector<8x64xf32>, vector<64x64xf32>, vector<8x64xf32> -> vector<8x64xf32>
    %1084 = arith.addf %1083, %1044 : vector<8x64xf32>
    %1085 = arith.addf %1076, %1081 : vector<8x64xf32>
    %1086 = arith.negf %1085 : vector<8x64xf32>
    %1087 = math.exp %1086 : vector<8x64xf32>
    %cst_656 = arith.constant 1.000000e+00 : f32
    %1088 = vector.broadcast %cst_656 : f32 to vector<8x64xf32>
    %1089 = arith.addf %1088, %1087 : vector<8x64xf32>
    %1090 = arith.divf %1088, %1089 : vector<8x64xf32>
    %1091 = arith.addf %1078, %1082 : vector<8x64xf32>
    %1092 = arith.negf %1091 : vector<8x64xf32>
    %1093 = math.exp %1092 : vector<8x64xf32>
    %cst_657 = arith.constant 1.000000e+00 : f32
    %1094 = vector.broadcast %cst_657 : f32 to vector<8x64xf32>
    %1095 = arith.addf %1094, %1093 : vector<8x64xf32>
    %1096 = arith.divf %1094, %1095 : vector<8x64xf32>
    %1097 = arith.mulf %1090, %1084 : vector<8x64xf32>
    %1098 = arith.addf %1080, %1097 : vector<8x64xf32>
    %1099 = math.tanh %1098 : vector<8x64xf32>
    %1100 = arith.subf %1073, %1099 : vector<8x64xf32>
    %1101 = arith.mulf %1096, %1100 : vector<8x64xf32>
    %1102 = arith.addf %1099, %1101 : vector<8x64xf32>
    %c8_658 = arith.constant 8 : index
    %c0_659 = arith.constant 0 : index
    %1103 = vector.load %arg11[%c8_658, %c0_659] : memref<64x64xf32, #tpu.memory_space<vmem>>, vector<8x64xf32>
    tpu.vector_store %arg11[%c8_658, %c0_659], %1102 {strides = array<i32>} : memref<64x64xf32, #tpu.memory_space<vmem>>, vector<8x64xf32>,
    %c0_660 = arith.constant 0 : index
    %c16_661 = arith.constant 16 : index
    %c0_662 = arith.constant 0 : index
    %1104 = vector.load %arg10[%c0_660, %c16_661, %c0_662] : memref<3x64x64xf32, #tpu.memory_space<vmem>>, vector<1x8x64xf32>
    %1105 = vector.shape_cast %1104 : vector<1x8x64xf32> to vector<8x64xf32>
    %c1_663 = arith.constant 1 : index
    %c16_664 = arith.constant 16 : index
    %c0_665 = arith.constant 0 : index
    %1106 = vector.load %arg10[%c1_663, %c16_664, %c0_665] : memref<3x64x64xf32, #tpu.memory_space<vmem>>, vector<1x8x64xf32>
    %1107 = vector.shape_cast %1106 : vector<1x8x64xf32> to vector<8x64xf32>
    %c2_666 = arith.constant 2 : index
    %c16_667 = arith.constant 16 : index
    %c0_668 = arith.constant 0 : index
    %1108 = vector.load %arg10[%c2_666, %c16_667, %c0_668] : memref<3x64x64xf32, #tpu.memory_space<vmem>>, vector<1x8x64xf32>
    %1109 = vector.shape_cast %1108 : vector<1x8x64xf32> to vector<8x64xf32>
    %cst_669 = arith.constant dense<0.000000e+00> : vector<8x64xf32>
    %1110 = tpu.matmul %1102, %1036, %cst_669 {dimension_numbers = #tpu.dot_dimension_numbers<[1], [0], [0], [1], [0, 0, 1, 1], [], []>} : vector<8x64xf32>, vector<64x64xf32>, vector<8x64xf32> -> vector<8x64xf32>
    %cst_670 = arith.constant dense<0.000000e+00> : vector<8x64xf32>
    %1111 = tpu.matmul %1102, %1038, %cst_670 {dimension_numbers = #tpu.dot_dimension_numbers<[1], [0], [0], [1], [0, 0, 1, 1], [], []>} : vector<8x64xf32>, vector<64x64xf32>, vector<8x64xf32> -> vector<8x64xf32>
    %cst_671 = arith.constant dense<0.000000e+00> : vector<8x64xf32>
    %1112 = tpu.matmul %1102, %1040, %cst_671 {dimension_numbers = #tpu.dot_dimension_numbers<[1], [0], [0], [1], [0, 0, 1, 1], [], []>} : vector<8x64xf32>, vector<64x64xf32>, vector<8x64xf32> -> vector<8x64xf32>
    %1113 = arith.addf %1112, %1044 : vector<8x64xf32>
    %1114 = arith.addf %1105, %1110 : vector<8x64xf32>
    %1115 = arith.negf %1114 : vector<8x64xf32>
    %1116 = math.exp %1115 : vector<8x64xf32>
    %cst_672 = arith.constant 1.000000e+00 : f32
    %1117 = vector.broadcast %cst_672 : f32 to vector<8x64xf32>
    %1118 = arith.addf %1117, %1116 : vector<8x64xf32>
    %1119 = arith.divf %1117, %1118 : vector<8x64xf32>
    %1120 = arith.addf %1107, %1111 : vector<8x64xf32>
    %1121 = arith.negf %1120 : vector<8x64xf32>
    %1122 = math.exp %1121 : vector<8x64xf32>
    %cst_673 = arith.constant 1.000000e+00 : f32
    %1123 = vector.broadcast %cst_673 : f32 to vector<8x64xf32>
    %1124 = arith.addf %1123, %1122 : vector<8x64xf32>
    %1125 = arith.divf %1123, %1124 : vector<8x64xf32>
    %1126 = arith.mulf %1119, %1113 : vector<8x64xf32>
    %1127 = arith.addf %1109, %1126 : vector<8x64xf32>
    %1128 = math.tanh %1127 : vector<8x64xf32>
    %1129 = arith.subf %1102, %1128 : vector<8x64xf32>
    %1130 = arith.mulf %1125, %1129 : vector<8x64xf32>
    %1131 = arith.addf %1128, %1130 : vector<8x64xf32>
    %c16_674 = arith.constant 16 : index
    %c0_675 = arith.constant 0 : index
    %1132 = vector.load %arg11[%c16_674, %c0_675] : memref<64x64xf32, #tpu.memory_space<vmem>>, vector<8x64xf32>
    tpu.vector_store %arg11[%c16_674, %c0_675], %1131 {strides = array<i32>} : memref<64x64xf32, #tpu.memory_space<vmem>>, vector<8x64xf32>,
    %c0_676 = arith.constant 0 : index
    %c24_677 = arith.constant 24 : index
    %c0_678 = arith.constant 0 : index
    %1133 = vector.load %arg10[%c0_676, %c24_677, %c0_678] : memref<3x64x64xf32, #tpu.memory_space<vmem>>, vector<1x8x64xf32>
    %1134 = vector.shape_cast %1133 : vector<1x8x64xf32> to vector<8x64xf32>
    %c1_679 = arith.constant 1 : index
    %c24_680 = arith.constant 24 : index
    %c0_681 = arith.constant 0 : index
    %1135 = vector.load %arg10[%c1_679, %c24_680, %c0_681] : memref<3x64x64xf32, #tpu.memory_space<vmem>>, vector<1x8x64xf32>
    %1136 = vector.shape_cast %1135 : vector<1x8x64xf32> to vector<8x64xf32>
    %c2_682 = arith.constant 2 : index
    %c24_683 = arith.constant 24 : index
    %c0_684 = arith.constant 0 : index
    %1137 = vector.load %arg10[%c2_682, %c24_683, %c0_684] : memref<3x64x64xf32, #tpu.memory_space<vmem>>, vector<1x8x64xf32>
    %1138 = vector.shape_cast %1137 : vector<1x8x64xf32> to vector<8x64xf32>
    %cst_685 = arith.constant dense<0.000000e+00> : vector<8x64xf32>
    %1139 = tpu.matmul %1131, %1036, %cst_685 {dimension_numbers = #tpu.dot_dimension_numbers<[1], [0], [0], [1], [0, 0, 1, 1], [], []>} : vector<8x64xf32>, vector<64x64xf32>, vector<8x64xf32> -> vector<8x64xf32>
    %cst_686 = arith.constant dense<0.000000e+00> : vector<8x64xf32>
    %1140 = tpu.matmul %1131, %1038, %cst_686 {dimension_numbers = #tpu.dot_dimension_numbers<[1], [0], [0], [1], [0, 0, 1, 1], [], []>} : vector<8x64xf32>, vector<64x64xf32>, vector<8x64xf32> -> vector<8x64xf32>
    %cst_687 = arith.constant dense<0.000000e+00> : vector<8x64xf32>
    %1141 = tpu.matmul %1131, %1040, %cst_687 {dimension_numbers = #tpu.dot_dimension_numbers<[1], [0], [0], [1], [0, 0, 1, 1], [], []>} : vector<8x64xf32>, vector<64x64xf32>, vector<8x64xf32> -> vector<8x64xf32>
    %1142 = arith.addf %1141, %1044 : vector<8x64xf32>
    %1143 = arith.addf %1134, %1139 : vector<8x64xf32>
    %1144 = arith.negf %1143 : vector<8x64xf32>
    %1145 = math.exp %1144 : vector<8x64xf32>
    %cst_688 = arith.constant 1.000000e+00 : f32
    %1146 = vector.broadcast %cst_688 : f32 to vector<8x64xf32>
    %1147 = arith.addf %1146, %1145 : vector<8x64xf32>
    %1148 = arith.divf %1146, %1147 : vector<8x64xf32>
    %1149 = arith.addf %1136, %1140 : vector<8x64xf32>
    %1150 = arith.negf %1149 : vector<8x64xf32>
    %1151 = math.exp %1150 : vector<8x64xf32>
    %cst_689 = arith.constant 1.000000e+00 : f32
    %1152 = vector.broadcast %cst_689 : f32 to vector<8x64xf32>
    %1153 = arith.addf %1152, %1151 : vector<8x64xf32>
    %1154 = arith.divf %1152, %1153 : vector<8x64xf32>
    %1155 = arith.mulf %1148, %1142 : vector<8x64xf32>
    %1156 = arith.addf %1138, %1155 : vector<8x64xf32>
    %1157 = math.tanh %1156 : vector<8x64xf32>
    %1158 = arith.subf %1131, %1157 : vector<8x64xf32>
    %1159 = arith.mulf %1154, %1158 : vector<8x64xf32>
    %1160 = arith.addf %1157, %1159 : vector<8x64xf32>
    %c24_690 = arith.constant 24 : index
    %c0_691 = arith.constant 0 : index
    %1161 = vector.load %arg11[%c24_690, %c0_691] : memref<64x64xf32, #tpu.memory_space<vmem>>, vector<8x64xf32>
    tpu.vector_store %arg11[%c24_690, %c0_691], %1160 {strides = array<i32>} : memref<64x64xf32, #tpu.memory_space<vmem>>, vector<8x64xf32>,
    %c0_692 = arith.constant 0 : index
    %c32_693 = arith.constant 32 : index
    %c0_694 = arith.constant 0 : index
    %1162 = vector.load %arg10[%c0_692, %c32_693, %c0_694] : memref<3x64x64xf32, #tpu.memory_space<vmem>>, vector<1x8x64xf32>
    %1163 = vector.shape_cast %1162 : vector<1x8x64xf32> to vector<8x64xf32>
    %c1_695 = arith.constant 1 : index
    %c32_696 = arith.constant 32 : index
    %c0_697 = arith.constant 0 : index
    %1164 = vector.load %arg10[%c1_695, %c32_696, %c0_697] : memref<3x64x64xf32, #tpu.memory_space<vmem>>, vector<1x8x64xf32>
    %1165 = vector.shape_cast %1164 : vector<1x8x64xf32> to vector<8x64xf32>
    %c2_698 = arith.constant 2 : index
    %c32_699 = arith.constant 32 : index
    %c0_700 = arith.constant 0 : index
    %1166 = vector.load %arg10[%c2_698, %c32_699, %c0_700] : memref<3x64x64xf32, #tpu.memory_space<vmem>>, vector<1x8x64xf32>
    %1167 = vector.shape_cast %1166 : vector<1x8x64xf32> to vector<8x64xf32>
    %cst_701 = arith.constant dense<0.000000e+00> : vector<8x64xf32>
    %1168 = tpu.matmul %1160, %1036, %cst_701 {dimension_numbers = #tpu.dot_dimension_numbers<[1], [0], [0], [1], [0, 0, 1, 1], [], []>} : vector<8x64xf32>, vector<64x64xf32>, vector<8x64xf32> -> vector<8x64xf32>
    %cst_702 = arith.constant dense<0.000000e+00> : vector<8x64xf32>
    %1169 = tpu.matmul %1160, %1038, %cst_702 {dimension_numbers = #tpu.dot_dimension_numbers<[1], [0], [0], [1], [0, 0, 1, 1], [], []>} : vector<8x64xf32>, vector<64x64xf32>, vector<8x64xf32> -> vector<8x64xf32>
    %cst_703 = arith.constant dense<0.000000e+00> : vector<8x64xf32>
    %1170 = tpu.matmul %1160, %1040, %cst_703 {dimension_numbers = #tpu.dot_dimension_numbers<[1], [0], [0], [1], [0, 0, 1, 1], [], []>} : vector<8x64xf32>, vector<64x64xf32>, vector<8x64xf32> -> vector<8x64xf32>
    %1171 = arith.addf %1170, %1044 : vector<8x64xf32>
    %1172 = arith.addf %1163, %1168 : vector<8x64xf32>
    %1173 = arith.negf %1172 : vector<8x64xf32>
    %1174 = math.exp %1173 : vector<8x64xf32>
    %cst_704 = arith.constant 1.000000e+00 : f32
    %1175 = vector.broadcast %cst_704 : f32 to vector<8x64xf32>
    %1176 = arith.addf %1175, %1174 : vector<8x64xf32>
    %1177 = arith.divf %1175, %1176 : vector<8x64xf32>
    %1178 = arith.addf %1165, %1169 : vector<8x64xf32>
    %1179 = arith.negf %1178 : vector<8x64xf32>
    %1180 = math.exp %1179 : vector<8x64xf32>
    %cst_705 = arith.constant 1.000000e+00 : f32
    %1181 = vector.broadcast %cst_705 : f32 to vector<8x64xf32>
    %1182 = arith.addf %1181, %1180 : vector<8x64xf32>
    %1183 = arith.divf %1181, %1182 : vector<8x64xf32>
    %1184 = arith.mulf %1177, %1171 : vector<8x64xf32>
    %1185 = arith.addf %1167, %1184 : vector<8x64xf32>
    %1186 = math.tanh %1185 : vector<8x64xf32>
    %1187 = arith.subf %1160, %1186 : vector<8x64xf32>
    %1188 = arith.mulf %1183, %1187 : vector<8x64xf32>
    %1189 = arith.addf %1186, %1188 : vector<8x64xf32>
    %c32_706 = arith.constant 32 : index
    %c0_707 = arith.constant 0 : index
    %1190 = vector.load %arg11[%c32_706, %c0_707] : memref<64x64xf32, #tpu.memory_space<vmem>>, vector<8x64xf32>
    tpu.vector_store %arg11[%c32_706, %c0_707], %1189 {strides = array<i32>} : memref<64x64xf32, #tpu.memory_space<vmem>>, vector<8x64xf32>,
    %c0_708 = arith.constant 0 : index
    %c40_709 = arith.constant 40 : index
    %c0_710 = arith.constant 0 : index
    %1191 = vector.load %arg10[%c0_708, %c40_709, %c0_710] : memref<3x64x64xf32, #tpu.memory_space<vmem>>, vector<1x8x64xf32>
    %1192 = vector.shape_cast %1191 : vector<1x8x64xf32> to vector<8x64xf32>
    %c1_711 = arith.constant 1 : index
    %c40_712 = arith.constant 40 : index
    %c0_713 = arith.constant 0 : index
    %1193 = vector.load %arg10[%c1_711, %c40_712, %c0_713] : memref<3x64x64xf32, #tpu.memory_space<vmem>>, vector<1x8x64xf32>
    %1194 = vector.shape_cast %1193 : vector<1x8x64xf32> to vector<8x64xf32>
    %c2_714 = arith.constant 2 : index
    %c40_715 = arith.constant 40 : index
    %c0_716 = arith.constant 0 : index
    %1195 = vector.load %arg10[%c2_714, %c40_715, %c0_716] : memref<3x64x64xf32, #tpu.memory_space<vmem>>, vector<1x8x64xf32>
    %1196 = vector.shape_cast %1195 : vector<1x8x64xf32> to vector<8x64xf32>
    %cst_717 = arith.constant dense<0.000000e+00> : vector<8x64xf32>
    %1197 = tpu.matmul %1189, %1036, %cst_717 {dimension_numbers = #tpu.dot_dimension_numbers<[1], [0], [0], [1], [0, 0, 1, 1], [], []>} : vector<8x64xf32>, vector<64x64xf32>, vector<8x64xf32> -> vector<8x64xf32>
    %cst_718 = arith.constant dense<0.000000e+00> : vector<8x64xf32>
    %1198 = tpu.matmul %1189, %1038, %cst_718 {dimension_numbers = #tpu.dot_dimension_numbers<[1], [0], [0], [1], [0, 0, 1, 1], [], []>} : vector<8x64xf32>, vector<64x64xf32>, vector<8x64xf32> -> vector<8x64xf32>
    %cst_719 = arith.constant dense<0.000000e+00> : vector<8x64xf32>
    %1199 = tpu.matmul %1189, %1040, %cst_719 {dimension_numbers = #tpu.dot_dimension_numbers<[1], [0], [0], [1], [0, 0, 1, 1], [], []>} : vector<8x64xf32>, vector<64x64xf32>, vector<8x64xf32> -> vector<8x64xf32>
    %1200 = arith.addf %1199, %1044 : vector<8x64xf32>
    %1201 = arith.addf %1192, %1197 : vector<8x64xf32>
    %1202 = arith.negf %1201 : vector<8x64xf32>
    %1203 = math.exp %1202 : vector<8x64xf32>
    %cst_720 = arith.constant 1.000000e+00 : f32
    %1204 = vector.broadcast %cst_720 : f32 to vector<8x64xf32>
    %1205 = arith.addf %1204, %1203 : vector<8x64xf32>
    %1206 = arith.divf %1204, %1205 : vector<8x64xf32>
    %1207 = arith.addf %1194, %1198 : vector<8x64xf32>
    %1208 = arith.negf %1207 : vector<8x64xf32>
    %1209 = math.exp %1208 : vector<8x64xf32>
    %cst_721 = arith.constant 1.000000e+00 : f32
    %1210 = vector.broadcast %cst_721 : f32 to vector<8x64xf32>
    %1211 = arith.addf %1210, %1209 : vector<8x64xf32>
    %1212 = arith.divf %1210, %1211 : vector<8x64xf32>
    %1213 = arith.mulf %1206, %1200 : vector<8x64xf32>
    %1214 = arith.addf %1196, %1213 : vector<8x64xf32>
    %1215 = math.tanh %1214 : vector<8x64xf32>
    %1216 = arith.subf %1189, %1215 : vector<8x64xf32>
    %1217 = arith.mulf %1212, %1216 : vector<8x64xf32>
    %1218 = arith.addf %1215, %1217 : vector<8x64xf32>
    %c40_722 = arith.constant 40 : index
    %c0_723 = arith.constant 0 : index
    %1219 = vector.load %arg11[%c40_722, %c0_723] : memref<64x64xf32, #tpu.memory_space<vmem>>, vector<8x64xf32>
    tpu.vector_store %arg11[%c40_722, %c0_723], %1218 {strides = array<i32>} : memref<64x64xf32, #tpu.memory_space<vmem>>, vector<8x64xf32>,
    %c0_724 = arith.constant 0 : index
    %c48_725 = arith.constant 48 : index
    %c0_726 = arith.constant 0 : index
    %1220 = vector.load %arg10[%c0_724, %c48_725, %c0_726] : memref<3x64x64xf32, #tpu.memory_space<vmem>>, vector<1x8x64xf32>
    %1221 = vector.shape_cast %1220 : vector<1x8x64xf32> to vector<8x64xf32>
    %c1_727 = arith.constant 1 : index
    %c48_728 = arith.constant 48 : index
    %c0_729 = arith.constant 0 : index
    %1222 = vector.load %arg10[%c1_727, %c48_728, %c0_729] : memref<3x64x64xf32, #tpu.memory_space<vmem>>, vector<1x8x64xf32>
    %1223 = vector.shape_cast %1222 : vector<1x8x64xf32> to vector<8x64xf32>
    %c2_730 = arith.constant 2 : index
    %c48_731 = arith.constant 48 : index
    %c0_732 = arith.constant 0 : index
    %1224 = vector.load %arg10[%c2_730, %c48_731, %c0_732] : memref<3x64x64xf32, #tpu.memory_space<vmem>>, vector<1x8x64xf32>
    %1225 = vector.shape_cast %1224 : vector<1x8x64xf32> to vector<8x64xf32>
    %cst_733 = arith.constant dense<0.000000e+00> : vector<8x64xf32>
    %1226 = tpu.matmul %1218, %1036, %cst_733 {dimension_numbers = #tpu.dot_dimension_numbers<[1], [0], [0], [1], [0, 0, 1, 1], [], []>} : vector<8x64xf32>, vector<64x64xf32>, vector<8x64xf32> -> vector<8x64xf32>
    %cst_734 = arith.constant dense<0.000000e+00> : vector<8x64xf32>
    %1227 = tpu.matmul %1218, %1038, %cst_734 {dimension_numbers = #tpu.dot_dimension_numbers<[1], [0], [0], [1], [0, 0, 1, 1], [], []>} : vector<8x64xf32>, vector<64x64xf32>, vector<8x64xf32> -> vector<8x64xf32>
    %cst_735 = arith.constant dense<0.000000e+00> : vector<8x64xf32>
    %1228 = tpu.matmul %1218, %1040, %cst_735 {dimension_numbers = #tpu.dot_dimension_numbers<[1], [0], [0], [1], [0, 0, 1, 1], [], []>} : vector<8x64xf32>, vector<64x64xf32>, vector<8x64xf32> -> vector<8x64xf32>
    %1229 = arith.addf %1228, %1044 : vector<8x64xf32>
    %1230 = arith.addf %1221, %1226 : vector<8x64xf32>
    %1231 = arith.negf %1230 : vector<8x64xf32>
    %1232 = math.exp %1231 : vector<8x64xf32>
    %cst_736 = arith.constant 1.000000e+00 : f32
    %1233 = vector.broadcast %cst_736 : f32 to vector<8x64xf32>
    %1234 = arith.addf %1233, %1232 : vector<8x64xf32>
    %1235 = arith.divf %1233, %1234 : vector<8x64xf32>
    %1236 = arith.addf %1223, %1227 : vector<8x64xf32>
    %1237 = arith.negf %1236 : vector<8x64xf32>
    %1238 = math.exp %1237 : vector<8x64xf32>
    %cst_737 = arith.constant 1.000000e+00 : f32
    %1239 = vector.broadcast %cst_737 : f32 to vector<8x64xf32>
    %1240 = arith.addf %1239, %1238 : vector<8x64xf32>
    %1241 = arith.divf %1239, %1240 : vector<8x64xf32>
    %1242 = arith.mulf %1235, %1229 : vector<8x64xf32>
    %1243 = arith.addf %1225, %1242 : vector<8x64xf32>
    %1244 = math.tanh %1243 : vector<8x64xf32>
    %1245 = arith.subf %1218, %1244 : vector<8x64xf32>
    %1246 = arith.mulf %1241, %1245 : vector<8x64xf32>
    %1247 = arith.addf %1244, %1246 : vector<8x64xf32>
    %c48_738 = arith.constant 48 : index
    %c0_739 = arith.constant 0 : index
    %1248 = vector.load %arg11[%c48_738, %c0_739] : memref<64x64xf32, #tpu.memory_space<vmem>>, vector<8x64xf32>
    tpu.vector_store %arg11[%c48_738, %c0_739], %1247 {strides = array<i32>} : memref<64x64xf32, #tpu.memory_space<vmem>>, vector<8x64xf32>,
    %c0_740 = arith.constant 0 : index
    %c56_741 = arith.constant 56 : index
    %c0_742 = arith.constant 0 : index
    %1249 = vector.load %arg10[%c0_740, %c56_741, %c0_742] : memref<3x64x64xf32, #tpu.memory_space<vmem>>, vector<1x8x64xf32>
    %1250 = vector.shape_cast %1249 : vector<1x8x64xf32> to vector<8x64xf32>
    %c1_743 = arith.constant 1 : index
    %c56_744 = arith.constant 56 : index
    %c0_745 = arith.constant 0 : index
    %1251 = vector.load %arg10[%c1_743, %c56_744, %c0_745] : memref<3x64x64xf32, #tpu.memory_space<vmem>>, vector<1x8x64xf32>
    %1252 = vector.shape_cast %1251 : vector<1x8x64xf32> to vector<8x64xf32>
    %c2_746 = arith.constant 2 : index
    %c56_747 = arith.constant 56 : index
    %c0_748 = arith.constant 0 : index
    %1253 = vector.load %arg10[%c2_746, %c56_747, %c0_748] : memref<3x64x64xf32, #tpu.memory_space<vmem>>, vector<1x8x64xf32>
    %1254 = vector.shape_cast %1253 : vector<1x8x64xf32> to vector<8x64xf32>
    %cst_749 = arith.constant dense<0.000000e+00> : vector<8x64xf32>
    %1255 = tpu.matmul %1247, %1036, %cst_749 {dimension_numbers = #tpu.dot_dimension_numbers<[1], [0], [0], [1], [0, 0, 1, 1], [], []>} : vector<8x64xf32>, vector<64x64xf32>, vector<8x64xf32> -> vector<8x64xf32>
    %cst_750 = arith.constant dense<0.000000e+00> : vector<8x64xf32>
    %1256 = tpu.matmul %1247, %1038, %cst_750 {dimension_numbers = #tpu.dot_dimension_numbers<[1], [0], [0], [1], [0, 0, 1, 1], [], []>} : vector<8x64xf32>, vector<64x64xf32>, vector<8x64xf32> -> vector<8x64xf32>
    %cst_751 = arith.constant dense<0.000000e+00> : vector<8x64xf32>
    %1257 = tpu.matmul %1247, %1040, %cst_751 {dimension_numbers = #tpu.dot_dimension_numbers<[1], [0], [0], [1], [0, 0, 1, 1], [], []>} : vector<8x64xf32>, vector<64x64xf32>, vector<8x64xf32> -> vector<8x64xf32>
    %1258 = arith.addf %1257, %1044 : vector<8x64xf32>
    %1259 = arith.addf %1250, %1255 : vector<8x64xf32>
    %1260 = arith.negf %1259 : vector<8x64xf32>
    %1261 = math.exp %1260 : vector<8x64xf32>
    %cst_752 = arith.constant 1.000000e+00 : f32
    %1262 = vector.broadcast %cst_752 : f32 to vector<8x64xf32>
    %1263 = arith.addf %1262, %1261 : vector<8x64xf32>
    %1264 = arith.divf %1262, %1263 : vector<8x64xf32>
    %1265 = arith.addf %1252, %1256 : vector<8x64xf32>
    %1266 = arith.negf %1265 : vector<8x64xf32>
    %1267 = math.exp %1266 : vector<8x64xf32>
    %cst_753 = arith.constant 1.000000e+00 : f32
    %1268 = vector.broadcast %cst_753 : f32 to vector<8x64xf32>
    %1269 = arith.addf %1268, %1267 : vector<8x64xf32>
    %1270 = arith.divf %1268, %1269 : vector<8x64xf32>
    %1271 = arith.mulf %1264, %1258 : vector<8x64xf32>
    %1272 = arith.addf %1254, %1271 : vector<8x64xf32>
    %1273 = math.tanh %1272 : vector<8x64xf32>
    %1274 = arith.subf %1247, %1273 : vector<8x64xf32>
    %1275 = arith.mulf %1270, %1274 : vector<8x64xf32>
    %1276 = arith.addf %1273, %1275 : vector<8x64xf32>
    %c56_754 = arith.constant 56 : index
    %c0_755 = arith.constant 0 : index
    %1277 = vector.load %arg11[%c56_754, %c0_755] : memref<64x64xf32, #tpu.memory_space<vmem>>, vector<8x64xf32>
    tpu.vector_store %arg11[%c56_754, %c0_755], %1276 {strides = array<i32>} : memref<64x64xf32, #tpu.memory_space<vmem>>, vector<8x64xf32>,
    %c0_756 = arith.constant 0 : index
    %c0_757 = arith.constant 0 : index
    %1278 = vector.load %arg11[%c0_756, %c0_757] : memref<64x64xf32, #tpu.memory_space<vmem>>, vector<8x64xf32>
    %c56_758 = arith.constant 56 : index
    %c0_759 = arith.constant 0 : index
    %1279 = vector.load %arg11[%c56_758, %c0_759] : memref<64x64xf32, #tpu.memory_space<vmem>>, vector<8x64xf32>
    %1280 = arith.select %2, %1279, %1278 : vector<8x64xi1>, vector<8x64xf32>
    %c0_760 = arith.constant 0 : index
    %c0_761 = arith.constant 0 : index
    %1281 = vector.load %arg11[%c0_760, %c0_761] : memref<64x64xf32, #tpu.memory_space<vmem>>, vector<8x64xf32>
    tpu.vector_store %arg11[%c0_760, %c0_761], %1280 {strides = array<i32>} : memref<64x64xf32, #tpu.memory_space<vmem>>, vector<8x64xf32>,
    %1282 = arith.select %2, %1278, %1279 : vector<8x64xi1>, vector<8x64xf32>
    %c56_762 = arith.constant 56 : index
    %c0_763 = arith.constant 0 : index
    %1283 = vector.load %arg11[%c56_762, %c0_763] : memref<64x64xf32, #tpu.memory_space<vmem>>, vector<8x64xf32>
    tpu.vector_store %arg11[%c56_762, %c0_763], %1282 {strides = array<i32>} : memref<64x64xf32, #tpu.memory_space<vmem>>, vector<8x64xf32>,
    %c8_764 = arith.constant 8 : index
    %c0_765 = arith.constant 0 : index
    %1284 = vector.load %arg11[%c8_764, %c0_765] : memref<64x64xf32, #tpu.memory_space<vmem>>, vector<8x64xf32>
    %c48_766 = arith.constant 48 : index
    %c0_767 = arith.constant 0 : index
    %1285 = vector.load %arg11[%c48_766, %c0_767] : memref<64x64xf32, #tpu.memory_space<vmem>>, vector<8x64xf32>
    %1286 = arith.select %2, %1285, %1284 : vector<8x64xi1>, vector<8x64xf32>
    %c8_768 = arith.constant 8 : index
    %c0_769 = arith.constant 0 : index
    %1287 = vector.load %arg11[%c8_768, %c0_769] : memref<64x64xf32, #tpu.memory_space<vmem>>, vector<8x64xf32>
    tpu.vector_store %arg11[%c8_768, %c0_769], %1286 {strides = array<i32>} : memref<64x64xf32, #tpu.memory_space<vmem>>, vector<8x64xf32>,
    %1288 = arith.select %2, %1284, %1285 : vector<8x64xi1>, vector<8x64xf32>
    %c48_770 = arith.constant 48 : index
    %c0_771 = arith.constant 0 : index
    %1289 = vector.load %arg11[%c48_770, %c0_771] : memref<64x64xf32, #tpu.memory_space<vmem>>, vector<8x64xf32>
    tpu.vector_store %arg11[%c48_770, %c0_771], %1288 {strides = array<i32>} : memref<64x64xf32, #tpu.memory_space<vmem>>, vector<8x64xf32>,
    %c16_772 = arith.constant 16 : index
    %c0_773 = arith.constant 0 : index
    %1290 = vector.load %arg11[%c16_772, %c0_773] : memref<64x64xf32, #tpu.memory_space<vmem>>, vector<8x64xf32>
    %c40_774 = arith.constant 40 : index
    %c0_775 = arith.constant 0 : index
    %1291 = vector.load %arg11[%c40_774, %c0_775] : memref<64x64xf32, #tpu.memory_space<vmem>>, vector<8x64xf32>
    %1292 = arith.select %2, %1291, %1290 : vector<8x64xi1>, vector<8x64xf32>
    %c16_776 = arith.constant 16 : index
    %c0_777 = arith.constant 0 : index
    %1293 = vector.load %arg11[%c16_776, %c0_777] : memref<64x64xf32, #tpu.memory_space<vmem>>, vector<8x64xf32>
    tpu.vector_store %arg11[%c16_776, %c0_777], %1292 {strides = array<i32>} : memref<64x64xf32, #tpu.memory_space<vmem>>, vector<8x64xf32>,
    %1294 = arith.select %2, %1290, %1291 : vector<8x64xi1>, vector<8x64xf32>
    %c40_778 = arith.constant 40 : index
    %c0_779 = arith.constant 0 : index
    %1295 = vector.load %arg11[%c40_778, %c0_779] : memref<64x64xf32, #tpu.memory_space<vmem>>, vector<8x64xf32>
    tpu.vector_store %arg11[%c40_778, %c0_779], %1294 {strides = array<i32>} : memref<64x64xf32, #tpu.memory_space<vmem>>, vector<8x64xf32>,
    %c24_780 = arith.constant 24 : index
    %c0_781 = arith.constant 0 : index
    %1296 = vector.load %arg11[%c24_780, %c0_781] : memref<64x64xf32, #tpu.memory_space<vmem>>, vector<8x64xf32>
    %c32_782 = arith.constant 32 : index
    %c0_783 = arith.constant 0 : index
    %1297 = vector.load %arg11[%c32_782, %c0_783] : memref<64x64xf32, #tpu.memory_space<vmem>>, vector<8x64xf32>
    %1298 = arith.select %2, %1297, %1296 : vector<8x64xi1>, vector<8x64xf32>
    %c24_784 = arith.constant 24 : index
    %c0_785 = arith.constant 0 : index
    %1299 = vector.load %arg11[%c24_784, %c0_785] : memref<64x64xf32, #tpu.memory_space<vmem>>, vector<8x64xf32>
    tpu.vector_store %arg11[%c24_784, %c0_785], %1298 {strides = array<i32>} : memref<64x64xf32, #tpu.memory_space<vmem>>, vector<8x64xf32>,
    %1300 = arith.select %2, %1296, %1297 : vector<8x64xi1>, vector<8x64xf32>
    %c32_786 = arith.constant 32 : index
    %c0_787 = arith.constant 0 : index
    %1301 = vector.load %arg11[%c32_786, %c0_787] : memref<64x64xf32, #tpu.memory_space<vmem>>, vector<8x64xf32>
    tpu.vector_store %arg11[%c32_786, %c0_787], %1300 {strides = array<i32>} : memref<64x64xf32, #tpu.memory_space<vmem>>, vector<8x64xf32>,
    %c56_788 = arith.constant 56 : index
    %c0_789 = arith.constant 0 : index
    %1302 = vector.load %arg11[%c56_788, %c0_789] : memref<64x64xf32, #tpu.memory_space<vmem>>, vector<8x64xf32>
    %c0_790 = arith.constant 0 : index
    %c0_791 = arith.constant 0 : index
    %1303 = vector.load %arg6[%c0_790, %c0_791] : memref<64x1xf32, #tpu.memory_space<vmem>>, vector<64x1xf32>
    %cst_792 = arith.constant dense<0.000000e+00> : vector<8x1xf32>
    %1304 = tpu.matmul %1302, %1303, %cst_792 {dimension_numbers = #tpu.dot_dimension_numbers<[1], [0], [0], [1], [0, 0, 1, 1], [], []>} : vector<8x64xf32>, vector<64x1xf32>, vector<8x1xf32> -> vector<8x1xf32>
    %c0_793 = arith.constant 0 : index
    %c0_794 = arith.constant 0 : index
    %1305 = vector.load %arg1[%c0_793, %c0_794] : memref<8x6xf32, #tpu.memory_space<vmem>>, vector<8x6xf32>
    %c0_795 = arith.constant 0 : index
    %c0_796 = arith.constant 0 : index
    %1306 = vector.load %arg7[%c0_795, %c0_796] : memref<6x1xf32, #tpu.memory_space<vmem>>, vector<6x1xf32>
    %cst_797 = arith.constant dense<0.000000e+00> : vector<8x1xf32>
    %1307 = tpu.matmul %1305, %1306, %cst_797 {dimension_numbers = #tpu.dot_dimension_numbers<[1], [0], [0], [1], [0, 0, 1, 1], [], []>} : vector<8x6xf32>, vector<6x1xf32>, vector<8x1xf32> -> vector<8x1xf32>
    %1308 = arith.addf %1304, %1307 : vector<8x1xf32>
    %c0_798 = arith.constant 0 : index
    %c0_799 = arith.constant 0 : index
    %1309 = vector.load %arg8[%c0_798, %c0_799] : memref<1x1xf32, #tpu.memory_space<vmem>>, vector<1x1xf32>
    %1310 = vector.broadcast %1309 : vector<1x1xf32> to vector<8x1xf32>
    %1311 = arith.addf %1308, %1310 : vector<8x1xf32>
    %c0_800 = arith.constant 0 : index
    %c0_801 = arith.constant 0 : index
    %1312 = vector.load %arg9[%c0_800, %c0_801] : memref<8x1xf32, #tpu.memory_space<vmem>>, vector<8x1xf32>
    tpu.vector_store %arg9[%c0_800, %c0_801], %1311 {strides = array<i32>} : memref<8x1xf32, #tpu.memory_space<vmem>>, vector<8x1xf32>,
    return
  }
}

</mosaic_0001>

<llo_original>
// kernel: tpu_custom_call.1
$region0: #{tpu_custom_call.1}
  #allocation0 [shape = 'u32[]', space=smem, size = 0x4, offset = 0x4, fixed_abs, tag = 'smem constant byte address 0x4 - core index']
  #allocation1 [shape = 'u32[144,128]{1,0:T(1,128)}', space=vmem, size = 0x12000, scoped, tag = 'internal scratch']
  #allocation2 [shape = 'f32[3,64,64]{2,1,0:T(8,128)}', space=vmem, size = 0x18000, scoped, tag = 'scratch operand']
  #allocation3 [shape = 'f32[64,64]{1,0:T(8,128)}', space=vmem, size = 0x8000, scoped, tag = 'scratch operand']
  #allocation4 [shape = 'f32[1,1]{1,0:T(1,128)S(1)}', space=vmem, size = 0x200, scoped, tag = 'scoped memory for tpu_custom_call.1']
  %s0 = inlined_call_operand.vmem [shape: f32[64,64], index: 0, kind: input, shape index: {}]
  %s1 = inlined_call_operand.hbm [shape: f32[8,6], index: 1, kind: input, shape index: {}]
  %s2 = inlined_call_operand.hbm [shape: f32[9,64,64], index: 2, kind: input, shape index: {}]
  %s3 = inlined_call_operand.hbm [shape: f32[9,64,64], index: 3, kind: input, shape index: {}]
  %s4 = inlined_call_operand.vmem [shape: f32[9,1,64], index: 4, kind: input, shape index: {}]
  %s5 = inlined_call_operand.vmem [shape: f32[3,1,64], index: 5, kind: input, shape index: {}]
  %s6 = inlined_call_operand.vmem [shape: f32[64,1], index: 6, kind: input, shape index: {}]
  %s7 = inlined_call_operand.vmem [shape: f32[6,1], index: 7, kind: input, shape index: {}]
  %s8 = inlined_call_operand.<no memory space> [shape: f32[1,1], index: 8, kind: input, shape index: {}]
  %s9 = inlined_call_operand.vmem [shape: f32[8,1], index: 9, kind: output, shape index: {}]
  %s10 = sld [smem:[#allocation0]]
  $region58: #{tpu_custom_call.1} parent=0
    _
  %s12 = ssub.s32 1, %s10
  %s13 = scalar_select 0, %s12, %s10
  %v14 = vstv %s8
  %15 = vst [vmem:[#allocation4] sm:$0x1] %v14
  $region1: #{tpu_custom_call.1} parent=0
    #allocation5 [shape = 'u8[4096]{0}', space=vmem, size = 0x1000, scoped, tag = 'input window, operand 1, single buffered']
    #allocation6 [shape = 's32[1]{0}', space=sflag, size = 0x4, scoped, tag = 'scoped memory for tpu_custom_call.1']
    #allocation7 [shape = 'u8[294912]{0}', space=vmem, size = 0x48000, scoped, tag = 'input window, operand 2, single buffered']
    #allocation8 [shape = 's32[1]{0}', space=sflag, size = 0x4, scoped, tag = 'scoped memory for tpu_custom_call.1']
    #allocation9 [shape = 'u8[294912]{0}', space=vmem, size = 0x48000, scoped, tag = 'input window, operand 3, single buffered']
    %16 = vsyncpa [#allocation6], 0
    %17 = vsyncpa [#allocation8], 0
    // Predicated region
    $region2: #{tpu_custom_call.1} parent=1 // pred_check
      _
    $region3: #{tpu_custom_call.1} parent=1 // pred_check_branch
      %19 = sbr.rel (0) target = $region5
    $region4: #{tpu_custom_call.1} parent=1 // pred_region
      _
    $region5: #{tpu_custom_call.1} parent=1 // pred_fallthru
      _
    // Predicated region
    $region6: #{tpu_custom_call.1} parent=1 // pred_check
      _
    $region7: #{tpu_custom_call.1} parent=1 // pred_check_branch
      %21 = sbr.rel (0) target = $region9
    $region8: #{tpu_custom_call.1} parent=1 // pred_region
      %s23 = ssub.s32 128, 128
      %24 = vsyncadd [#allocation6], %s23
      %s26 = sshll.u32 [#allocation5], 4
      %s27 = int_to_ptr.vmem [resolvable:$true] %s26
      %29 = dma.hbm_to_vmem [thread:$0]  %s1, 128, %s27, [#allocation6]
    $region9: #{tpu_custom_call.1} parent=1 // pred_fallthru
      _
    // Predicated region
    $region10: #{tpu_custom_call.1} parent=1 // pred_check
      _
    $region11: #{tpu_custom_call.1} parent=1 // pred_check_branch
      %31 = sbr.rel (0) target = $region13
    $region12: #{tpu_custom_call.1} parent=1 // pred_region
      %s33 = ssub.s32 9216, 9216
      %34 = vsyncadd [#allocation8], %s33
      %s35 = sshll.u32 [#allocation7], 4
      %s36 = int_to_ptr.vmem [resolvable:$true] %s35
      %41 = dma.hbm_to_vmem [thread:$0]  %s2, 9216, %s36, [#allocation8], 128, 128, 8
    $region13: #{tpu_custom_call.1} parent=1 // pred_fallthru
      _
    // Predicated region
    $region14: #{tpu_custom_call.1} parent=1 // pred_check
      _
    $region15: #{tpu_custom_call.1} parent=1 // pred_check_branch
      %43 = sbr.rel (0) target = $region17
    $region16: #{tpu_custom_call.1} parent=1 // pred_region
      %s45 = ssub.s32 9216, 9216
      %46 = vsyncadd [#allocation8], %s45
      %s47 = sshll.u32 [#allocation9], 4
      %s48 = int_to_ptr.vmem [resolvable:$true] %s47
      %53 = dma.hbm_to_vmem [thread:$0]  %s3, 9216, %s48, [#allocation8], 128, 128, 8
    $region17: #{tpu_custom_call.1} parent=1 // pred_fallthru
      _
    // Predicated region
    $region18: #{tpu_custom_call.1} parent=1 // pred_check
      _
    $region19: #{tpu_custom_call.1} parent=1 // pred_check_branch
      %55 = sbr.rel (0) target = $region21
    $region20: #{tpu_custom_call.1} parent=1 // pred_region
      _
    $region21: #{tpu_custom_call.1} parent=1 // pred_fallthru
      _
    // Predicated region
    $region22: #{tpu_custom_call.1} parent=1 // pred_check
      _
    $region23: #{tpu_custom_call.1} parent=1 // pred_check_branch
      %57 = sbr.rel (0) target = $region25
    $region24: #{tpu_custom_call.1} parent=1 // pred_region
      _
    $region25: #{tpu_custom_call.1} parent=1 // pred_fallthru
      _
    // Predicated region
    $region26: #{tpu_custom_call.1} parent=1 // pred_check
      _
    $region27: #{tpu_custom_call.1} parent=1 // pred_check_branch
      %59 = sbr.rel (0) target = $region29
    $region28: #{tpu_custom_call.1} parent=1 // pred_region
      _
    $region29: #{tpu_custom_call.1} parent=1 // pred_fallthru
      _
    // Predicated region
    $region30: #{tpu_custom_call.1} parent=1 // pred_check
      _
    $region31: #{tpu_custom_call.1} parent=1 // pred_check_branch
      %61 = sbr.rel (0) target = $region33
    $region32: #{tpu_custom_call.1} parent=1 // pred_region
      _
    $region33: #{tpu_custom_call.1} parent=1 // pred_fallthru
      _
    // Predicated region
    $region34: #{tpu_custom_call.1} parent=1 // pred_check
      _
    $region35: #{tpu_custom_call.1} parent=1 // pred_check_branch
      %63 = sbr.rel (0) target = $region37
    $region36: #{tpu_custom_call.1} parent=1 // pred_region
      _
    $region37: #{tpu_custom_call.1} parent=1 // pred_fallthru
      _
    // Predicated region
    $region38: #{tpu_custom_call.1} parent=1 // pred_check
      _
    $region39: #{tpu_custom_call.1} parent=1 // pred_check_branch
      %65 = sbr.rel (0) target = $region41
    $region40: #{tpu_custom_call.1} parent=1 // pred_region
      %66 = dma.done [#allocation6], 128
    $region41: #{tpu_custom_call.1} parent=1 // pred_fallthru
      _
    // Predicated region
    $region42: #{tpu_custom_call.1} parent=1 // pred_check
      _
    $region43: #{tpu_custom_call.1} parent=1 // pred_check_branch
      %68 = sbr.rel (0) target = $region45
    $region44: #{tpu_custom_call.1} parent=1 // pred_region
      %69 = dma.done [#allocation8], 9216
    $region45: #{tpu_custom_call.1} parent=1 // pred_fallthru
      _
    // Predicated region
    $region46: #{tpu_custom_call.1} parent=1 // pred_check
      _
    $region47: #{tpu_custom_call.1} parent=1 // pred_check_branch
      %71 = sbr.rel (0) target = $region49
    $region48: #{tpu_custom_call.1} parent=1 // pred_region
      %72 = dma.done [#allocation8], 9216
    $region49: #{tpu_custom_call.1} parent=1 // pred_fallthru
      _
    %v73 = vlaneseq
    %v74 = vand.u32 %v73, 127
    %vm75 = vcmp.ge.s32.totalorder %v74, 32
    %v76 = vld [vmem:[%s0] sm:$0xff]
    %v77 = vld [vmem:[%s0 + $0x8] sm:$0xff]
    %v78 = vld [vmem:[%s0 + $0x10] sm:$0xff]
    %v79 = vld [vmem:[%s0 + $0x18] sm:$0xff]
    %v80 = vld [vmem:[%s0 + $0x20] sm:$0xff]
    %v81 = vld [vmem:[%s0 + $0x28] sm:$0xff]
    %v82 = vld [vmem:[%s0 + $0x30] sm:$0xff]
    %v83 = vld [vmem:[%s0 + $0x38] sm:$0xff]
    %v84 = vld [vmem:[#allocation7] sm:$0xff]
    %v85 = vld [vmem:[#allocation7 + $0x8] sm:$0xff]
    %v86 = vld [vmem:[#allocation7 + $0x10] sm:$0xff]
    %v87 = vld [vmem:[#allocation7 + $0x18] sm:$0xff]
    %v88 = vld [vmem:[#allocation7 + $0x20] sm:$0xff]
    %v89 = vld [vmem:[#allocation7 + $0x28] sm:$0xff]
    %v90 = vld [vmem:[#allocation7 + $0x30] sm:$0xff]
    %v91 = vld [vmem:[#allocation7 + $0x38] sm:$0xff]
    %v92 = vld [vmem:[%s4] sm:$0x1]
    %v94 = vlaneseq
    %v95 = vshrl.u32 %v94, 7
    %v96 = vsub.s32 0, %v95
    %v97 = vrot.slane %v92, %v96
    %vm99 = vcmask 523264
    %v101 = vsel %vm99, %v76, 0
    %v104 = vsel %vm99, %v77, 0
    %v107 = vsel %vm99, %v78, 0
    %v110 = vsel %vm99, %v79, 0
    %v113 = vsel %vm99, %v80, 0
    %v116 = vsel %vm99, %v81, 0
    %v119 = vsel %vm99, %v82, 0
    %v122 = vsel %vm99, %v83, 0
    %124 = vmatprep.subr.mxu0 0.0
    %125 = vmatpush1.msra.mxu0 0.0
    %126 = vmatprep.subr.mxu0 0.0
    %127 = vmatpush1.msra.mxu0 0.0
    %128 = vmatprep.subr.mxu0 0.0
    %129 = vmatpush1.msra.mxu0 0.0
    %130 = vmatprep.subr.mxu0 0.0
    %131 = vmatpush1.msra.mxu0 0.0
    %132 = vmatprep.subr.mxu0 0.0
    %133 = vmatpush1.msra.mxu0 0.0
    %134 = vmatprep.subr.mxu0 0.0
    %135 = vmatpush1.msra.mxu0 0.0
    %136 = vmatprep.subr.mxu0 0.0
    %137 = vmatpush1.msra.mxu0 0.0
    %138 = vmatprep.subr.mxu0 0.0
    %139 = vmatpush1.msra.mxu0 0.0
    %140 = vmatprep.subr.mxu0 0.0
    %141 = vmatpush1.msra.mxu0 %v91
    %142 = vmatprep.subr.mxu0 0.0
    %143 = vmatpush1.msra.mxu0 %v90
    %144 = vmatprep.subr.mxu0 0.0
    %145 = vmatpush1.msra.mxu0 %v89
    %146 = vmatprep.subr.mxu0 0.0
    %147 = vmatpush1.msra.mxu0 %v88
    %148 = vmatprep.subr.mxu0 0.0
    %149 = vmatpush1.msra.mxu0 %v87
    %150 = vmatprep.subr.mxu0 0.0
    %151 = vmatpush1.msra.mxu0 %v86
    %152 = vmatprep.subr.mxu0 0.0
    %153 = vmatpush1.msra.mxu0 %v85
    %154 = vmatprep.subr.mxu0 0.0
    %155 = vmatpush1.msra.mxu0 %v84
    %156 = vmatprep.subr.mxu0 0.0
    %157 = vmatpush2.msra.mxu0 0.0
    %158 = vmatprep.subr.mxu0 0.0
    %159 = vmatpush2.msra.mxu0 0.0
    %160 = vmatprep.subr.mxu0 0.0
    %161 = vmatpush2.msra.mxu0 0.0
    %162 = vmatprep.subr.mxu0 0.0
    %163 = vmatpush2.msra.mxu0 0.0
    %164 = vmatprep.subr.mxu0 0.0
    %165 = vmatpush2.msra.mxu0 0.0
    %166 = vmatprep.subr.mxu0 0.0
    %167 = vmatpush2.msra.mxu0 0.0
    %168 = vmatprep.subr.mxu0 0.0
    %169 = vmatpush2.msra.mxu0 0.0
    %170 = vmatprep.subr.mxu0 0.0
    %171 = vmatpush2.msra.mxu0 0.0
    %172 = vmatprep.subr.mxu0 0.0
    %173 = vmatpush2.msra.mxu0 0.0
    %174 = vmatprep.subr.mxu0 0.0
    %175 = vmatpush2.msra.mxu0 0.0
    %176 = vmatprep.subr.mxu0 0.0
    %177 = vmatpush2.msra.mxu0 0.0
    %178 = vmatprep.subr.mxu0 0.0
    %179 = vmatpush2.msra.mxu0 0.0
    %180 = vmatprep.subr.mxu0 0.0
    %181 = vmatpush2.msra.mxu0 0.0
    %182 = vmatprep.subr.mxu0 0.0
    %183 = vmatpush2.msra.mxu0 0.0
    %184 = vmatprep.subr.mxu0 0.0
    %185 = vmatpush2.msra.mxu0 0.0
    %186 = vmatprep.subr.mxu0 0.0
    %187 = vmatpush2.msra.mxu0 0.0
    %188 = vmatprep.mubr.f32.mxu0 0.0
    %189 = vmatmul.mubr.f32.gmra.mxu0 %v101
    %v190 = vpop.f32.mrf.mxu0
    %v191 = vadd.f32 %v97, %v190
    %v192 = vpop.f32.mrf.mxu0
    %193 = vmatprep.mubr.f32.mxu0 0.0
    %194 = vmatmul.mubr.f32.gmra.mxu0 %v104
    %v195 = vpop.f32.mrf.mxu0
    %v196 = vadd.f32 %v97, %v195
    %v197 = vpop.f32.mrf.mxu0
    %198 = vmatprep.mubr.f32.mxu0 0.0
    %199 = vmatmul.mubr.f32.gmra.mxu0 %v107
    %v200 = vpop.f32.mrf.mxu0
    %v201 = vadd.f32 %v97, %v200
    %v202 = vpop.f32.mrf.mxu0
    %203 = vmatprep.mubr.f32.mxu0 0.0
    %204 = vmatmul.mubr.f32.gmra.mxu0 %v110
    %v205 = vpop.f32.mrf.mxu0
    %v206 = vadd.f32 %v97, %v205
    %v207 = vpop.f32.mrf.mxu0
    %208 = vmatprep.mubr.f32.mxu0 0.0
    %209 = vmatmul.mubr.f32.gmra.mxu0 %v113
    %v210 = vpop.f32.mrf.mxu0
    %v211 = vadd.f32 %v97, %v210
    %v212 = vpop.f32.mrf.mxu0
    %213 = vmatprep.mubr.f32.mxu0 0.0
    %214 = vmatmul.mubr.f32.gmra.mxu0 %v116
    %v215 = vpop.f32.mrf.mxu0
    %v216 = vadd.f32 %v97, %v215
    %v217 = vpop.f32.mrf.mxu0
    %218 = vmatprep.mubr.f32.mxu0 0.0
    %219 = vmatmul.mubr.f32.gmra.mxu0 %v119
    %v220 = vpop.f32.mrf.mxu0
    %v221 = vadd.f32 %v97, %v220
    %v222 = vpop.f32.mrf.mxu0
    %223 = vmatprep.mubr.f32.mxu0 0.0
    %224 = vmatmul.mubr.f32.gmra.mxu0 %v122
    %v225 = vpop.f32.mrf.mxu0
    %v226 = vadd.f32 %v97, %v225
    %v227 = vpop.f32.mrf.mxu0
    %228 = vdwg.mxu0
    %v229 = vsel %vm75, %v226, %v191
    %230 = vst.msk [vmem:[#allocation2] sm:$0xff] %vm99, %v229
    %v231 = vsel %vm75, %v221, %v196
    %232 = vst.msk [vmem:[#allocation2 + $0x8] sm:$0xff] %vm99, %v231
    %v233 = vsel %vm75, %v216, %v201
    %234 = vst.msk [vmem:[#allocation2 + $0x10] sm:$0xff] %vm99, %v233
    %v235 = vsel %vm75, %v211, %v206
    %236 = vst.msk [vmem:[#allocation2 + $0x18] sm:$0xff] %vm99, %v235
    %v237 = vsel %vm75, %v206, %v211
    %238 = vst.msk [vmem:[#allocation2 + $0x20] sm:$0xff] %vm99, %v237
    %v239 = vsel %vm75, %v201, %v216
    %240 = vst.msk [vmem:[#allocation2 + $0x28] sm:$0xff] %vm99, %v239
    %v241 = vsel %vm75, %v196, %v221
    %242 = vst.msk [vmem:[#allocation2 + $0x30] sm:$0xff] %vm99, %v241
    %v243 = vsel %vm75, %v191, %v226
    %244 = vst.msk [vmem:[#allocation2 + $0x38] sm:$0xff] %vm99, %v243
    %s245 = scalar_lea.vmem [#allocation7], 64
    %v246 = vld [vmem:[%s245] sm:$0xff]
    %v247 = vld [vmem:[%s245 + $0x8] sm:$0xff]
    %v248 = vld [vmem:[%s245 + $0x10] sm:$0xff]
    %v249 = vld [vmem:[%s245 + $0x18] sm:$0xff]
    %v250 = vld [vmem:[%s245 + $0x20] sm:$0xff]
    %v251 = vld [vmem:[%s245 + $0x28] sm:$0xff]
    %v252 = vld [vmem:[%s245 + $0x30] sm:$0xff]
    %v253 = vld [vmem:[%s245 + $0x38] sm:$0xff]
    %s254 = scalar_lea.vmem %s4, 1
    %v255 = vld [vmem:[%s254] sm:$0x1]
    %v257 = vlaneseq
    %v258 = vshrl.u32 %v257, 7
    %v259 = vsub.s32 0, %v258
    %v260 = vrot.slane %v255, %v259
    %262 = vmatprep.subr.mxu0 0.0
    %263 = vmatpush1.msra.mxu0 0.0
    %264 = vmatprep.subr.mxu0 0.0
    %265 = vmatpush1.msra.mxu0 0.0
    %266 = vmatprep.subr.mxu0 0.0
    %267 = vmatpush1.msra.mxu0 0.0
    %268 = vmatprep.subr.mxu0 0.0
    %269 = vmatpush1.msra.mxu0 0.0
    %270 = vmatprep.subr.mxu0 0.0
    %271 = vmatpush1.msra.mxu0 0.0
    %272 = vmatprep.subr.mxu0 0.0
    %273 = vmatpush1.msra.mxu0 0.0
    %274 = vmatprep.subr.mxu0 0.0
    %275 = vmatpush1.msra.mxu0 0.0
    %276 = vmatprep.subr.mxu0 0.0
    %277 = vmatpush1.msra.mxu0 0.0
    %278 = vmatprep.subr.mxu0 0.0
    %279 = vmatpush1.msra.mxu0 %v253
    %280 = vmatprep.subr.mxu0 0.0
    %281 = vmatpush1.msra.mxu0 %v252
    %282 = vmatprep.subr.mxu0 0.0
    %283 = vmatpush1.msra.mxu0 %v251
    %284 = vmatprep.subr.mxu0 0.0
    %285 = vmatpush1.msra.mxu0 %v250
    %286 = vmatprep.subr.mxu0 0.0
    %287 = vmatpush1.msra.mxu0 %v249
    %288 = vmatprep.subr.mxu0 0.0
    %289 = vmatpush1.msra.mxu0 %v248
    %290 = vmatprep.subr.mxu0 0.0
    %291 = vmatpush1.msra.mxu0 %v247
    %292 = vmatprep.subr.mxu0 0.0
    %293 = vmatpush1.msra.mxu0 %v246
    %294 = vmatprep.subr.mxu0 0.0
    %295 = vmatpush2.msra.mxu0 0.0
    %296 = vmatprep.subr.mxu0 0.0
    %297 = vmatpush2.msra.mxu0 0.0
    %298 = vmatprep.subr.mxu0 0.0
    %299 = vmatpush2.msra.mxu0 0.0
    %300 = vmatprep.subr.mxu0 0.0
    %301 = vmatpush2.msra.mxu0 0.0
    %302 = vmatprep.subr.mxu0 0.0
    %303 = vmatpush2.msra.mxu0 0.0
    %304 = vmatprep.subr.mxu0 0.0
    %305 = vmatpush2.msra.mxu0 0.0
    %306 = vmatprep.subr.mxu0 0.0
    %307 = vmatpush2.msra.mxu0 0.0
    %308 = vmatprep.subr.mxu0 0.0
    %309 = vmatpush2.msra.mxu0 0.0
    %310 = vmatprep.subr.mxu0 0.0
    %311 = vmatpush2.msra.mxu0 0.0
    %312 = vmatprep.subr.mxu0 0.0
    %313 = vmatpush2.msra.mxu0 0.0
    %314 = vmatprep.subr.mxu0 0.0
    %315 = vmatpush2.msra.mxu0 0.0
    %316 = vmatprep.subr.mxu0 0.0
    %317 = vmatpush2.msra.mxu0 0.0
    %318 = vmatprep.subr.mxu0 0.0
    %319 = vmatpush2.msra.mxu0 0.0
    %320 = vmatprep.subr.mxu0 0.0
    %321 = vmatpush2.msra.mxu0 0.0
    %322 = vmatprep.subr.mxu0 0.0
    %323 = vmatpush2.msra.mxu0 0.0
    %324 = vmatprep.subr.mxu0 0.0
    %325 = vmatpush2.msra.mxu0 0.0
    %326 = vmatprep.mubr.f32.mxu0 0.0
    %327 = vmatmul.mubr.f32.gmra.mxu0 %v101
    %v328 = vpop.f32.mrf.mxu0
    %v329 = vadd.f32 %v260, %v328
    %v330 = vpop.f32.mrf.mxu0
    %331 = vmatprep.mubr.f32.mxu0 0.0
    %332 = vmatmul.mubr.f32.gmra.mxu0 %v104
    %v333 = vpop.f32.mrf.mxu0
    %v334 = vadd.f32 %v260, %v333
    %v335 = vpop.f32.mrf.mxu0
    %336 = vmatprep.mubr.f32.mxu0 0.0
    %337 = vmatmul.mubr.f32.gmra.mxu0 %v107
    %v338 = vpop.f32.mrf.mxu0
    %v339 = vadd.f32 %v260, %v338
    %v340 = vpop.f32.mrf.mxu0
    %341 = vmatprep.mubr.f32.mxu0 0.0
    %342 = vmatmul.mubr.f32.gmra.mxu0 %v110
    %v343 = vpop.f32.mrf.mxu0
    %v344 = vadd.f32 %v260, %v343
    %v345 = vpop.f32.mrf.mxu0
    %346 = vmatprep.mubr.f32.mxu0 0.0
    %347 = vmatmul.mubr.f32.gmra.mxu0 %v113
    %v348 = vpop.f32.mrf.mxu0
    %v349 = vadd.f32 %v260, %v348
    %v350 = vpop.f32.mrf.mxu0
    %351 = vmatprep.mubr.f32.mxu0 0.0
    %352 = vmatmul.mubr.f32.gmra.mxu0 %v116
    %v353 = vpop.f32.mrf.mxu0
    %v354 = vadd.f32 %v260, %v353
    %v355 = vpop.f32.mrf.mxu0
    %356 = vmatprep.mubr.f32.mxu0 0.0
    %357 = vmatmul.mubr.f32.gmra.mxu0 %v119
    %v358 = vpop.f32.mrf.mxu0
    %v359 = vadd.f32 %v260, %v358
    %v360 = vpop.f32.mrf.mxu0
    %361 = vmatprep.mubr.f32.mxu0 0.0
    %362 = vmatmul.mubr.f32.gmra.mxu0 %v122
    %v363 = vpop.f32.mrf.mxu0
    %v364 = vadd.f32 %v260, %v363
    %v365 = vpop.f32.mrf.mxu0
    %366 = vdwg.mxu0
    %v367 = vsel %vm75, %v364, %v329
    %s368 = scalar_lea.vmem [#allocation2], 64
    %369 = vst.msk [vmem:[%s368] sm:$0xff] %vm99, %v367
    %v370 = vsel %vm75, %v359, %v334
    %371 = vst.msk [vmem:[%s368 + $0x8] sm:$0xff] %vm99, %v370
    %v372 = vsel %vm75, %v354, %v339
    %373 = vst.msk [vmem:[%s368 + $0x10] sm:$0xff] %vm99, %v372
    %v374 = vsel %vm75, %v349, %v344
    %375 = vst.msk [vmem:[%s368 + $0x18] sm:$0xff] %vm99, %v374
    %v376 = vsel %vm75, %v344, %v349
    %377 = vst.msk [vmem:[%s368 + $0x20] sm:$0xff] %vm99, %v376
    %v378 = vsel %vm75, %v339, %v354
    %379 = vst.msk [vmem:[%s368 + $0x28] sm:$0xff] %vm99, %v378
    %v380 = vsel %vm75, %v334, %v359
    %381 = vst.msk [vmem:[%s368 + $0x30] sm:$0xff] %vm99, %v380
    %v382 = vsel %vm75, %v329, %v364
    %383 = vst.msk [vmem:[%s368 + $0x38] sm:$0xff] %vm99, %v382
    %s384 = scalar_lea.vmem [#allocation7], 128
    %v385 = vld [vmem:[%s384] sm:$0xff]
    %v386 = vld [vmem:[%s384 + $0x8] sm:$0xff]
    %v387 = vld [vmem:[%s384 + $0x10] sm:$0xff]
    %v388 = vld [vmem:[%s384 + $0x18] sm:$0xff]
    %v389 = vld [vmem:[%s384 + $0x20] sm:$0xff]
    %v390 = vld [vmem:[%s384 + $0x28] sm:$0xff]
    %v391 = vld [vmem:[%s384 + $0x30] sm:$0xff]
    %v392 = vld [vmem:[%s384 + $0x38] sm:$0xff]
    %s393 = scalar_lea.vmem %s4, 2
    %v394 = vld [vmem:[%s393] sm:$0x1]
    %v396 = vlaneseq
    %v397 = vshrl.u32 %v396, 7
    %v398 = vsub.s32 0, %v397
    %v399 = vrot.slane %v394, %v398
    %401 = vmatprep.subr.mxu0 0.0
    %402 = vmatpush1.msra.mxu0 0.0
    %403 = vmatprep.subr.mxu0 0.0
    %404 = vmatpush1.msra.mxu0 0.0
    %405 = vmatprep.subr.mxu0 0.0
    %406 = vmatpush1.msra.mxu0 0.0
    %407 = vmatprep.subr.mxu0 0.0
    %408 = vmatpush1.msra.mxu0 0.0
    %409 = vmatprep.subr.mxu0 0.0
    %410 = vmatpush1.msra.mxu0 0.0
    %411 = vmatprep.subr.mxu0 0.0
    %412 = vmatpush1.msra.mxu0 0.0
    %413 = vmatprep.subr.mxu0 0.0
    %414 = vmatpush1.msra.mxu0 0.0
    %415 = vmatprep.subr.mxu0 0.0
    %416 = vmatpush1.msra.mxu0 0.0
    %417 = vmatprep.subr.mxu0 0.0
    %418 = vmatpush1.msra.mxu0 %v392
    %419 = vmatprep.subr.mxu0 0.0
    %420 = vmatpush1.msra.mxu0 %v391
    %421 = vmatprep.subr.mxu0 0.0
    %422 = vmatpush1.msra.mxu0 %v390
    %423 = vmatprep.subr.mxu0 0.0
    %424 = vmatpush1.msra.mxu0 %v389
    %425 = vmatprep.subr.mxu0 0.0
    %426 = vmatpush1.msra.mxu0 %v388
    %427 = vmatprep.subr.mxu0 0.0
    %428 = vmatpush1.msra.mxu0 %v387
    %429 = vmatprep.subr.mxu0 0.0
    %430 = vmatpush1.msra.mxu0 %v386
    %431 = vmatprep.subr.mxu0 0.0
    %432 = vmatpush1.msra.mxu0 %v385
    %433 = vmatprep.subr.mxu0 0.0
    %434 = vmatpush2.msra.mxu0 0.0
    %435 = vmatprep.subr.mxu0 0.0
    %436 = vmatpush2.msra.mxu0 0.0
    %437 = vmatprep.subr.mxu0 0.0
    %438 = vmatpush2.msra.mxu0 0.0
    %439 = vmatprep.subr.mxu0 0.0
    %440 = vmatpush2.msra.mxu0 0.0
    %441 = vmatprep.subr.mxu0 0.0
    %442 = vmatpush2.msra.mxu0 0.0
    %443 = vmatprep.subr.mxu0 0.0
    %444 = vmatpush2.msra.mxu0 0.0
    %445 = vmatprep.subr.mxu0 0.0
    %446 = vmatpush2.msra.mxu0 0.0
    %447 = vmatprep.subr.mxu0 0.0
    %448 = vmatpush2.msra.mxu0 0.0
    %449 = vmatprep.subr.mxu0 0.0
    %450 = vmatpush2.msra.mxu0 0.0
    %451 = vmatprep.subr.mxu0 0.0
    %452 = vmatpush2.msra.mxu0 0.0
    %453 = vmatprep.subr.mxu0 0.0
    %454 = vmatpush2.msra.mxu0 0.0
    %455 = vmatprep.subr.mxu0 0.0
    %456 = vmatpush2.msra.mxu0 0.0
    %457 = vmatprep.subr.mxu0 0.0
    %458 = vmatpush2.msra.mxu0 0.0
    %459 = vmatprep.subr.mxu0 0.0
    %460 = vmatpush2.msra.mxu0 0.0
    %461 = vmatprep.subr.mxu0 0.0
    %462 = vmatpush2.msra.mxu0 0.0
    %463 = vmatprep.subr.mxu0 0.0
    %464 = vmatpush2.msra.mxu0 0.0
    %465 = vmatprep.mubr.f32.mxu0 0.0
    %466 = vmatmul.mubr.f32.gmra.mxu0 %v101
    %v467 = vpop.f32.mrf.mxu0
    %v468 = vadd.f32 %v399, %v467
    %v469 = vpop.f32.mrf.mxu0
    %470 = vmatprep.mubr.f32.mxu0 0.0
    %471 = vmatmul.mubr.f32.gmra.mxu0 %v104
    %v472 = vpop.f32.mrf.mxu0
    %v473 = vadd.f32 %v399, %v472
    %v474 = vpop.f32.mrf.mxu0
    %475 = vmatprep.mubr.f32.mxu0 0.0
    %476 = vmatmul.mubr.f32.gmra.mxu0 %v107
    %v477 = vpop.f32.mrf.mxu0
    %v478 = vadd.f32 %v399, %v477
    %v479 = vpop.f32.mrf.mxu0
    %480 = vmatprep.mubr.f32.mxu0 0.0
    %481 = vmatmul.mubr.f32.gmra.mxu0 %v110
    %v482 = vpop.f32.mrf.mxu0
    %v483 = vadd.f32 %v399, %v482
    %v484 = vpop.f32.mrf.mxu0
    %485 = vmatprep.mubr.f32.mxu0 0.0
    %486 = vmatmul.mubr.f32.gmra.mxu0 %v113
    %v487 = vpop.f32.mrf.mxu0
    %v488 = vadd.f32 %v399, %v487
    %v489 = vpop.f32.mrf.mxu0
    %490 = vmatprep.mubr.f32.mxu0 0.0
    %491 = vmatmul.mubr.f32.gmra.mxu0 %v116
    %v492 = vpop.f32.mrf.mxu0
    %v493 = vadd.f32 %v399, %v492
    %v494 = vpop.f32.mrf.mxu0
    %495 = vmatprep.mubr.f32.mxu0 0.0
    %496 = vmatmul.mubr.f32.gmra.mxu0 %v119
    %v497 = vpop.f32.mrf.mxu0
    %v498 = vadd.f32 %v399, %v497
    %v499 = vpop.f32.mrf.mxu0
    %500 = vmatprep.mubr.f32.mxu0 0.0
    %501 = vmatmul.mubr.f32.gmra.mxu0 %v122
    %v502 = vpop.f32.mrf.mxu0
    %v503 = vadd.f32 %v399, %v502
    %v504 = vpop.f32.mrf.mxu0
    %505 = vdwg.mxu0
    %v506 = vsel %vm75, %v503, %v468
    %s507 = scalar_lea.vmem [#allocation2], 128
    %508 = vst.msk [vmem:[%s507] sm:$0xff] %vm99, %v506
    %v509 = vsel %vm75, %v498, %v473
    %510 = vst.msk [vmem:[%s507 + $0x8] sm:$0xff] %vm99, %v509
    %v511 = vsel %vm75, %v493, %v478
    %512 = vst.msk [vmem:[%s507 + $0x10] sm:$0xff] %vm99, %v511
    %v513 = vsel %vm75, %v488, %v483
    %514 = vst.msk [vmem:[%s507 + $0x18] sm:$0xff] %vm99, %v513
    %v515 = vsel %vm75, %v483, %v488
    %516 = vst.msk [vmem:[%s507 + $0x20] sm:$0xff] %vm99, %v515
    %v517 = vsel %vm75, %v478, %v493
    %518 = vst.msk [vmem:[%s507 + $0x28] sm:$0xff] %vm99, %v517
    %v519 = vsel %vm75, %v473, %v498
    %520 = vst.msk [vmem:[%s507 + $0x30] sm:$0xff] %vm99, %v519
    %v521 = vsel %vm75, %v468, %v503
    %522 = vst.msk [vmem:[%s507 + $0x38] sm:$0xff] %vm99, %v521
    %v523 = vld [vmem:[#allocation9] sm:$0xff]
    %v524 = vld [vmem:[#allocation9 + $0x8] sm:$0xff]
    %v525 = vld [vmem:[#allocation9 + $0x10] sm:$0xff]
    %v526 = vld [vmem:[#allocation9 + $0x18] sm:$0xff]
    %v527 = vld [vmem:[#allocation9 + $0x20] sm:$0xff]
    %v528 = vld [vmem:[#allocation9 + $0x28] sm:$0xff]
    %v529 = vld [vmem:[#allocation9 + $0x30] sm:$0xff]
    %v530 = vld [vmem:[#allocation9 + $0x38] sm:$0xff]
    %s531 = scalar_lea.vmem [#allocation9], 64
    %v532 = vld [vmem:[%s531] sm:$0xff]
    %v533 = vld [vmem:[%s531 + $0x8] sm:$0xff]
    %v534 = vld [vmem:[%s531 + $0x10] sm:$0xff]
    %v535 = vld [vmem:[%s531 + $0x18] sm:$0xff]
    %v536 = vld [vmem:[%s531 + $0x20] sm:$0xff]
    %v537 = vld [vmem:[%s531 + $0x28] sm:$0xff]
    %v538 = vld [vmem:[%s531 + $0x30] sm:$0xff]
    %v539 = vld [vmem:[%s531 + $0x38] sm:$0xff]
    %s540 = scalar_lea.vmem [#allocation9], 128
    %v541 = vld [vmem:[%s540] sm:$0xff]
    %v542 = vld [vmem:[%s540 + $0x8] sm:$0xff]
    %v543 = vld [vmem:[%s540 + $0x10] sm:$0xff]
    %v544 = vld [vmem:[%s540 + $0x18] sm:$0xff]
    %v545 = vld [vmem:[%s540 + $0x20] sm:$0xff]
    %v546 = vld [vmem:[%s540 + $0x28] sm:$0xff]
    %v547 = vld [vmem:[%s540 + $0x30] sm:$0xff]
    %v548 = vld [vmem:[%s540 + $0x38] sm:$0xff]
    %v549 = vld [vmem:[%s5] sm:$0x1]
    %v551 = vlaneseq
    %v552 = vshrl.u32 %v551, 7
    %v553 = vsub.s32 0, %v552
    %v554 = vrot.slane %v549, %v553
    %v556 = vld [vmem:[#allocation2] sm:$0xff]
    %v557 = vld [vmem:[%s368] sm:$0xff]
    %v558 = vld [vmem:[%s507] sm:$0xff]
    %v560 = vsel %vm99, 0.0, 0
    %562 = vmatprep.subr.mxu0 0.0
    %563 = vmatpush1.msra.mxu0 0.0
    %564 = vmatprep.subr.mxu0 0.0
    %565 = vmatpush1.msra.mxu0 0.0
    %566 = vmatprep.subr.mxu0 0.0
    %567 = vmatpush1.msra.mxu0 0.0
    %568 = vmatprep.subr.mxu0 0.0
    %569 = vmatpush1.msra.mxu0 0.0
    %570 = vmatprep.subr.mxu0 0.0
    %571 = vmatpush1.msra.mxu0 0.0
    %572 = vmatprep.subr.mxu0 0.0
    %573 = vmatpush1.msra.mxu0 0.0
    %574 = vmatprep.subr.mxu0 0.0
    %575 = vmatpush1.msra.mxu0 0.0
    %576 = vmatprep.subr.mxu0 0.0
    %577 = vmatpush1.msra.mxu0 0.0
    %578 = vmatprep.subr.mxu0 0.0
    %579 = vmatpush1.msra.mxu0 %v530
    %580 = vmatprep.subr.mxu0 0.0
    %581 = vmatpush1.msra.mxu0 %v529
    %582 = vmatprep.subr.mxu0 0.0
    %583 = vmatpush1.msra.mxu0 %v528
    %584 = vmatprep.subr.mxu0 0.0
    %585 = vmatpush1.msra.mxu0 %v527
    %586 = vmatprep.subr.mxu0 0.0
    %587 = vmatpush1.msra.mxu0 %v526
    %588 = vmatprep.subr.mxu0 0.0
    %589 = vmatpush1.msra.mxu0 %v525
    %590 = vmatprep.subr.mxu0 0.0
    %591 = vmatpush1.msra.mxu0 %v524
    %592 = vmatprep.subr.mxu0 0.0
    %593 = vmatpush1.msra.mxu0 %v523
    %594 = vmatprep.subr.mxu0 0.0
    %595 = vmatpush2.msra.mxu0 0.0
    %596 = vmatprep.subr.mxu0 0.0
    %597 = vmatpush2.msra.mxu0 0.0
    %598 = vmatprep.subr.mxu0 0.0
    %599 = vmatpush2.msra.mxu0 0.0
    %600 = vmatprep.subr.mxu0 0.0
    %601 = vmatpush2.msra.mxu0 0.0
    %602 = vmatprep.subr.mxu0 0.0
    %603 = vmatpush2.msra.mxu0 0.0
    %604 = vmatprep.subr.mxu0 0.0
    %605 = vmatpush2.msra.mxu0 0.0
    %606 = vmatprep.subr.mxu0 0.0
    %607 = vmatpush2.msra.mxu0 0.0
    %608 = vmatprep.subr.mxu0 0.0
    %609 = vmatpush2.msra.mxu0 0.0
    %610 = vmatprep.subr.mxu0 0.0
    %611 = vmatpush2.msra.mxu0 0.0
    %612 = vmatprep.subr.mxu0 0.0
    %613 = vmatpush2.msra.mxu0 0.0
    %614 = vmatprep.subr.mxu0 0.0
    %615 = vmatpush2.msra.mxu0 0.0
    %616 = vmatprep.subr.mxu0 0.0
    %617 = vmatpush2.msra.mxu0 0.0
    %618 = vmatprep.subr.mxu0 0.0
    %619 = vmatpush2.msra.mxu0 0.0
    %620 = vmatprep.subr.mxu0 0.0
    %621 = vmatpush2.msra.mxu0 0.0
    %622 = vmatprep.subr.mxu0 0.0
    %623 = vmatpush2.msra.mxu0 0.0
    %624 = vmatprep.subr.mxu0 0.0
    %625 = vmatpush2.msra.mxu0 0.0
    %626 = vmatprep.mubr.f32.mxu0 0.0
    %627 = vmatmul.mubr.f32.gmra.mxu0 %v560
    %v628 = vpop.f32.mrf.mxu0
    %v629 = vadd.f32 0.0, %v628
    %v630 = vpop.f32.mrf.mxu0
    %631 = vdwg.mxu0
    %632 = vmatprep.subr.mxu0 0.0
    %633 = vmatpush1.msra.mxu0 0.0
    %634 = vmatprep.subr.mxu0 0.0
    %635 = vmatpush1.msra.mxu0 0.0
    %636 = vmatprep.subr.mxu0 0.0
    %637 = vmatpush1.msra.mxu0 0.0
    %638 = vmatprep.subr.mxu0 0.0
    %639 = vmatpush1.msra.mxu0 0.0
    %640 = vmatprep.subr.mxu0 0.0
    %641 = vmatpush1.msra.mxu0 0.0
    %642 = vmatprep.subr.mxu0 0.0
    %643 = vmatpush1.msra.mxu0 0.0
    %644 = vmatprep.subr.mxu0 0.0
    %645 = vmatpush1.msra.mxu0 0.0
    %646 = vmatprep.subr.mxu0 0.0
    %647 = vmatpush1.msra.mxu0 0.0
    %648 = vmatprep.subr.mxu0 0.0
    %649 = vmatpush1.msra.mxu0 %v539
    %650 = vmatprep.subr.mxu0 0.0
    %651 = vmatpush1.msra.mxu0 %v538
    %652 = vmatprep.subr.mxu0 0.0
    %653 = vmatpush1.msra.mxu0 %v537
    %654 = vmatprep.subr.mxu0 0.0
    %655 = vmatpush1.msra.mxu0 %v536
    %656 = vmatprep.subr.mxu0 0.0
    %657 = vmatpush1.msra.mxu0 %v535
    %658 = vmatprep.subr.mxu0 0.0
    %659 = vmatpush1.msra.mxu0 %v534
    %660 = vmatprep.subr.mxu0 0.0
    %661 = vmatpush1.msra.mxu0 %v533
    %662 = vmatprep.subr.mxu0 0.0
    %663 = vmatpush1.msra.mxu0 %v532
    %664 = vmatprep.subr.mxu0 0.0
    %665 = vmatpush2.msra.mxu0 0.0
    %666 = vmatprep.subr.mxu0 0.0
    %667 = vmatpush2.msra.mxu0 0.0
    %668 = vmatprep.subr.mxu0 0.0
    %669 = vmatpush2.msra.mxu0 0.0
    %670 = vmatprep.subr.mxu0 0.0
    %671 = vmatpush2.msra.mxu0 0.0
    %672 = vmatprep.subr.mxu0 0.0
    %673 = vmatpush2.msra.mxu0 0.0
    %674 = vmatprep.subr.mxu0 0.0
    %675 = vmatpush2.msra.mxu0 0.0
    %676 = vmatprep.subr.mxu0 0.0
    %677 = vmatpush2.msra.mxu0 0.0
    %678 = vmatprep.subr.mxu0 0.0
    %679 = vmatpush2.msra.mxu0 0.0
    %680 = vmatprep.subr.mxu0 0.0
    %681 = vmatpush2.msra.mxu0 0.0
    %682 = vmatprep.subr.mxu0 0.0
    %683 = vmatpush2.msra.mxu0 0.0
    %684 = vmatprep.subr.mxu0 0.0
    %685 = vmatpush2.msra.mxu0 0.0
    %686 = vmatprep.subr.mxu0 0.0
    %687 = vmatpush2.msra.mxu0 0.0
    %688 = vmatprep.subr.mxu0 0.0
    %689 = vmatpush2.msra.mxu0 0.0
    %690 = vmatprep.subr.mxu0 0.0
    %691 = vmatpush2.msra.mxu0 0.0
    %692 = vmatprep.subr.mxu0 0.0
    %693 = vmatpush2.msra.mxu0 0.0
    %694 = vmatprep.subr.mxu0 0.0
    %695 = vmatpush2.msra.mxu0 0.0
    %696 = vmatprep.mubr.f32.mxu0 0.0
    %697 = vmatmul.mubr.f32.gmra.mxu0 %v560
    %v698 = vpop.f32.mrf.mxu0
    %v699 = vadd.f32 0.0, %v698
    %v700 = vpop.f32.mrf.mxu0
    %701 = vdwg.mxu0
    %702 = vmatprep.subr.mxu0 0.0
    %703 = vmatpush1.msra.mxu0 0.0
    %704 = vmatprep.subr.mxu0 0.0
    %705 = vmatpush1.msra.mxu0 0.0
    %706 = vmatprep.subr.mxu0 0.0
    %707 = vmatpush1.msra.mxu0 0.0
    %708 = vmatprep.subr.mxu0 0.0
    %709 = vmatpush1.msra.mxu0 0.0
    %710 = vmatprep.subr.mxu0 0.0
    %711 = vmatpush1.msra.mxu0 0.0
    %712 = vmatprep.subr.mxu0 0.0
    %713 = vmatpush1.msra.mxu0 0.0
    %714 = vmatprep.subr.mxu0 0.0
    %715 = vmatpush1.msra.mxu0 0.0
    %716 = vmatprep.subr.mxu0 0.0
    %717 = vmatpush1.msra.mxu0 0.0
    %718 = vmatprep.subr.mxu0 0.0
    %719 = vmatpush1.msra.mxu0 %v548
    %720 = vmatprep.subr.mxu0 0.0
    %721 = vmatpush1.msra.mxu0 %v547
    %722 = vmatprep.subr.mxu0 0.0
    %723 = vmatpush1.msra.mxu0 %v546
    %724 = vmatprep.subr.mxu0 0.0
    %725 = vmatpush1.msra.mxu0 %v545
    %726 = vmatprep.subr.mxu0 0.0
    %727 = vmatpush1.msra.mxu0 %v544
    %728 = vmatprep.subr.mxu0 0.0
    %729 = vmatpush1.msra.mxu0 %v543
    %730 = vmatprep.subr.mxu0 0.0
    %731 = vmatpush1.msra.mxu0 %v542
    %732 = vmatprep.subr.mxu0 0.0
    %733 = vmatpush1.msra.mxu0 %v541
    %734 = vmatprep.subr.mxu0 0.0
    %735 = vmatpush2.msra.mxu0 0.0
    %736 = vmatprep.subr.mxu0 0.0
    %737 = vmatpush2.msra.mxu0 0.0
    %738 = vmatprep.subr.mxu0 0.0
    %739 = vmatpush2.msra.mxu0 0.0
    %740 = vmatprep.subr.mxu0 0.0
    %741 = vmatpush2.msra.mxu0 0.0
    %742 = vmatprep.subr.mxu0 0.0
    %743 = vmatpush2.msra.mxu0 0.0
    %744 = vmatprep.subr.mxu0 0.0
    %745 = vmatpush2.msra.mxu0 0.0
    %746 = vmatprep.subr.mxu0 0.0
    %747 = vmatpush2.msra.mxu0 0.0
    %748 = vmatprep.subr.mxu0 0.0
    %749 = vmatpush2.msra.mxu0 0.0
    %750 = vmatprep.subr.mxu0 0.0
    %751 = vmatpush2.msra.mxu0 0.0
    %752 = vmatprep.subr.mxu0 0.0
    %753 = vmatpush2.msra.mxu0 0.0
    %754 = vmatprep.subr.mxu0 0.0
    %755 = vmatpush2.msra.mxu0 0.0
    %756 = vmatprep.subr.mxu0 0.0
    %757 = vmatpush2.msra.mxu0 0.0
    %758 = vmatprep.subr.mxu0 0.0
    %759 = vmatpush2.msra.mxu0 0.0
    %760 = vmatprep.subr.mxu0 0.0
    %761 = vmatpush2.msra.mxu0 0.0
    %762 = vmatprep.subr.mxu0 0.0
    %763 = vmatpush2.msra.mxu0 0.0
    %764 = vmatprep.subr.mxu0 0.0
    %765 = vmatpush2.msra.mxu0 0.0
    %766 = vmatprep.mubr.f32.mxu0 0.0
    %767 = vmatmul.mubr.f32.gmra.mxu0 %v560
    %v768 = vpop.f32.mrf.mxu0
    %v769 = vadd.f32 %v554, %v768
    %v770 = vpop.f32.mrf.mxu0
    %771 = vdwg.mxu0
    %v772 = vadd.f32 %v556, %v629
    %v773 = vxor.u32 %v772, 2147483648
    %v774 = vmul.f32 %v773, 1.442695
    %v775 = vpow.pop %v774
    %v776 = vadd.f32 %v775, 1.0
    %v777 = vrcp.pop %v776
    %v778 = vmul.f32 1.0, %v777
    %v779 = vadd.f32 %v557, %v699
    %v780 = vxor.u32 %v779, 2147483648
    %v781 = vmul.f32 %v780, 1.442695
    %v782 = vpow.pop %v781
    %v783 = vadd.f32 %v782, 1.0
    %v784 = vrcp.pop %v783
    %v785 = vmul.f32 1.0, %v784
    %v786 = vmul.f32 %v778, %v769
    %v787 = vadd.f32 %v558, %v786
    %v788 = vtanh.pop %v787
    %v789 = vsub.f32 0.0, %v788
    %v790 = vmul.f32 %v785, %v789
    %v791 = vadd.f32 %v788, %v790
    %792 = vst.msk [vmem:[#allocation3] sm:$0xff] %vm99, %v791
    %v793 = vld [vmem:[#allocation2 + $0x8] sm:$0xff]
    %v794 = vld [vmem:[%s368 + $0x8] sm:$0xff]
    %v795 = vld [vmem:[%s507 + $0x8] sm:$0xff]
    %v797 = vsel %vm99, %v791, 0
    %799 = vmatprep.subr.mxu0 0.0
    %800 = vmatpush1.msra.mxu0 0.0
    %801 = vmatprep.subr.mxu0 0.0
    %802 = vmatpush1.msra.mxu0 0.0
    %803 = vmatprep.subr.mxu0 0.0
    %804 = vmatpush1.msra.mxu0 0.0
    %805 = vmatprep.subr.mxu0 0.0
    %806 = vmatpush1.msra.mxu0 0.0
    %807 = vmatprep.subr.mxu0 0.0
    %808 = vmatpush1.msra.mxu0 0.0
    %809 = vmatprep.subr.mxu0 0.0
    %810 = vmatpush1.msra.mxu0 0.0
    %811 = vmatprep.subr.mxu0 0.0
    %812 = vmatpush1.msra.mxu0 0.0
    %813 = vmatprep.subr.mxu0 0.0
    %814 = vmatpush1.msra.mxu0 0.0
    %815 = vmatprep.subr.mxu0 0.0
    %816 = vmatpush1.msra.mxu0 %v530
    %817 = vmatprep.subr.mxu0 0.0
    %818 = vmatpush1.msra.mxu0 %v529
    %819 = vmatprep.subr.mxu0 0.0
    %820 = vmatpush1.msra.mxu0 %v528
    %821 = vmatprep.subr.mxu0 0.0
    %822 = vmatpush1.msra.mxu0 %v527
    %823 = vmatprep.subr.mxu0 0.0
    %824 = vmatpush1.msra.mxu0 %v526
    %825 = vmatprep.subr.mxu0 0.0
    %826 = vmatpush1.msra.mxu0 %v525
    %827 = vmatprep.subr.mxu0 0.0
    %828 = vmatpush1.msra.mxu0 %v524
    %829 = vmatprep.subr.mxu0 0.0
    %830 = vmatpush1.msra.mxu0 %v523
    %831 = vmatprep.subr.mxu0 0.0
    %832 = vmatpush2.msra.mxu0 0.0
    %833 = vmatprep.subr.mxu0 0.0
    %834 = vmatpush2.msra.mxu0 0.0
    %835 = vmatprep.subr.mxu0 0.0
    %836 = vmatpush2.msra.mxu0 0.0
    %837 = vmatprep.subr.mxu0 0.0
    %838 = vmatpush2.msra.mxu0 0.0
    %839 = vmatprep.subr.mxu0 0.0
    %840 = vmatpush2.msra.mxu0 0.0
    %841 = vmatprep.subr.mxu0 0.0
    %842 = vmatpush2.msra.mxu0 0.0
    %843 = vmatprep.subr.mxu0 0.0
    %844 = vmatpush2.msra.mxu0 0.0
    %845 = vmatprep.subr.mxu0 0.0
    %846 = vmatpush2.msra.mxu0 0.0
    %847 = vmatprep.subr.mxu0 0.0
    %848 = vmatpush2.msra.mxu0 0.0
    %849 = vmatprep.subr.mxu0 0.0
    %850 = vmatpush2.msra.mxu0 0.0
    %851 = vmatprep.subr.mxu0 0.0
    %852 = vmatpush2.msra.mxu0 0.0
    %853 = vmatprep.subr.mxu0 0.0
    %854 = vmatpush2.msra.mxu0 0.0
    %855 = vmatprep.subr.mxu0 0.0
    %856 = vmatpush2.msra.mxu0 0.0
    %857 = vmatprep.subr.mxu0 0.0
    %858 = vmatpush2.msra.mxu0 0.0
    %859 = vmatprep.subr.mxu0 0.0
    %860 = vmatpush2.msra.mxu0 0.0
    %861 = vmatprep.subr.mxu0 0.0
    %862 = vmatpush2.msra.mxu0 0.0
    %863 = vmatprep.mubr.f32.mxu0 0.0
    %864 = vmatmul.mubr.f32.gmra.mxu0 %v797
    %v865 = vpop.f32.mrf.mxu0
    %v866 = vadd.f32 0.0, %v865
    %v867 = vpop.f32.mrf.mxu0
    %868 = vdwg.mxu0
    %869 = vmatprep.subr.mxu0 0.0
    %870 = vmatpush1.msra.mxu0 0.0
    %871 = vmatprep.subr.mxu0 0.0
    %872 = vmatpush1.msra.mxu0 0.0
    %873 = vmatprep.subr.mxu0 0.0
    %874 = vmatpush1.msra.mxu0 0.0
    %875 = vmatprep.subr.mxu0 0.0
    %876 = vmatpush1.msra.mxu0 0.0
    %877 = vmatprep.subr.mxu0 0.0
    %878 = vmatpush1.msra.mxu0 0.0
    %879 = vmatprep.subr.mxu0 0.0
    %880 = vmatpush1.msra.mxu0 0.0
    %881 = vmatprep.subr.mxu0 0.0
    %882 = vmatpush1.msra.mxu0 0.0
    %883 = vmatprep.subr.mxu0 0.0
    %884 = vmatpush1.msra.mxu0 0.0
    %885 = vmatprep.subr.mxu0 0.0
    %886 = vmatpush1.msra.mxu0 %v539
    %887 = vmatprep.subr.mxu0 0.0
    %888 = vmatpush1.msra.mxu0 %v538
    %889 = vmatprep.subr.mxu0 0.0
    %890 = vmatpush1.msra.mxu0 %v537
    %891 = vmatprep.subr.mxu0 0.0
    %892 = vmatpush1.msra.mxu0 %v536
    %893 = vmatprep.subr.mxu0 0.0
    %894 = vmatpush1.msra.mxu0 %v535
    %895 = vmatprep.subr.mxu0 0.0
    %896 = vmatpush1.msra.mxu0 %v534
    %897 = vmatprep.subr.mxu0 0.0
    %898 = vmatpush1.msra.mxu0 %v533
    %899 = vmatprep.subr.mxu0 0.0
    %900 = vmatpush1.msra.mxu0 %v532
    %901 = vmatprep.subr.mxu0 0.0
    %902 = vmatpush2.msra.mxu0 0.0
    %903 = vmatprep.subr.mxu0 0.0
    %904 = vmatpush2.msra.mxu0 0.0
    %905 = vmatprep.subr.mxu0 0.0
    %906 = vmatpush2.msra.mxu0 0.0
    %907 = vmatprep.subr.mxu0 0.0
    %908 = vmatpush2.msra.mxu0 0.0
    %909 = vmatprep.subr.mxu0 0.0
    %910 = vmatpush2.msra.mxu0 0.0
    %911 = vmatprep.subr.mxu0 0.0
    %912 = vmatpush2.msra.mxu0 0.0
    %913 = vmatprep.subr.mxu0 0.0
    %914 = vmatpush2.msra.mxu0 0.0
    %915 = vmatprep.subr.mxu0 0.0
    %916 = vmatpush2.msra.mxu0 0.0
    %917 = vmatprep.subr.mxu0 0.0
    %918 = vmatpush2.msra.mxu0 0.0
    %919 = vmatprep.subr.mxu0 0.0
    %920 = vmatpush2.msra.mxu0 0.0
    %921 = vmatprep.subr.mxu0 0.0
    %922 = vmatpush2.msra.mxu0 0.0
    %923 = vmatprep.subr.mxu0 0.0
    %924 = vmatpush2.msra.mxu0 0.0
    %925 = vmatprep.subr.mxu0 0.0
    %926 = vmatpush2.msra.mxu0 0.0
    %927 = vmatprep.subr.mxu0 0.0
    %928 = vmatpush2.msra.mxu0 0.0
    %929 = vmatprep.subr.mxu0 0.0
    %930 = vmatpush2.msra.mxu0 0.0
    %931 = vmatprep.subr.mxu0 0.0
    %932 = vmatpush2.msra.mxu0 0.0
    %933 = vmatprep.mubr.f32.mxu0 0.0
    %934 = vmatmul.mubr.f32.gmra.mxu0 %v797
    %v935 = vpop.f32.mrf.mxu0
    %v936 = vadd.f32 0.0, %v935
    %v937 = vpop.f32.mrf.mxu0
    %938 = vdwg.mxu0
    %939 = vmatprep.subr.mxu0 0.0
    %940 = vmatpush1.msra.mxu0 0.0
    %941 = vmatprep.subr.mxu0 0.0
    %942 = vmatpush1.msra.mxu0 0.0
    %943 = vmatprep.subr.mxu0 0.0
    %944 = vmatpush1.msra.mxu0 0.0
    %945 = vmatprep.subr.mxu0 0.0
    %946 = vmatpush1.msra.mxu0 0.0
    %947 = vmatprep.subr.mxu0 0.0
    %948 = vmatpush1.msra.mxu0 0.0
    %949 = vmatprep.subr.mxu0 0.0
    %950 = vmatpush1.msra.mxu0 0.0
    %951 = vmatprep.subr.mxu0 0.0
    %952 = vmatpush1.msra.mxu0 0.0
    %953 = vmatprep.subr.mxu0 0.0
    %954 = vmatpush1.msra.mxu0 0.0
    %955 = vmatprep.subr.mxu0 0.0
    %956 = vmatpush1.msra.mxu0 %v548
    %957 = vmatprep.subr.mxu0 0.0
    %958 = vmatpush1.msra.mxu0 %v547
    %959 = vmatprep.subr.mxu0 0.0
    %960 = vmatpush1.msra.mxu0 %v546
    %961 = vmatprep.subr.mxu0 0.0
    %962 = vmatpush1.msra.mxu0 %v545
    %963 = vmatprep.subr.mxu0 0.0
    %964 = vmatpush1.msra.mxu0 %v544
    %965 = vmatprep.subr.mxu0 0.0
    %966 = vmatpush1.msra.mxu0 %v543
    %967 = vmatprep.subr.mxu0 0.0
    %968 = vmatpush1.msra.mxu0 %v542
    %969 = vmatprep.subr.mxu0 0.0
    %970 = vmatpush1.msra.mxu0 %v541
    %971 = vmatprep.subr.mxu0 0.0
    %972 = vmatpush2.msra.mxu0 0.0
    %973 = vmatprep.subr.mxu0 0.0
    %974 = vmatpush2.msra.mxu0 0.0
    %975 = vmatprep.subr.mxu0 0.0
    %976 = vmatpush2.msra.mxu0 0.0
    %977 = vmatprep.subr.mxu0 0.0
    %978 = vmatpush2.msra.mxu0 0.0
    %979 = vmatprep.subr.mxu0 0.0
    %980 = vmatpush2.msra.mxu0 0.0
    %981 = vmatprep.subr.mxu0 0.0
    %982 = vmatpush2.msra.mxu0 0.0
    %983 = vmatprep.subr.mxu0 0.0
    %984 = vmatpush2.msra.mxu0 0.0
    %985 = vmatprep.subr.mxu0 0.0
    %986 = vmatpush2.msra.mxu0 0.0
    %987 = vmatprep.subr.mxu0 0.0
    %988 = vmatpush2.msra.mxu0 0.0
    %989 = vmatprep.subr.mxu0 0.0
    %990 = vmatpush2.msra.mxu0 0.0
    %991 = vmatprep.subr.mxu0 0.0
    %992 = vmatpush2.msra.mxu0 0.0
    %993 = vmatprep.subr.mxu0 0.0
    %994 = vmatpush2.msra.mxu0 0.0
    %995 = vmatprep.subr.mxu0 0.0
    %996 = vmatpush2.msra.mxu0 0.0
    %997 = vmatprep.subr.mxu0 0.0
    %998 = vmatpush2.msra.mxu0 0.0
    %999 = vmatprep.subr.mxu0 0.0
    %1000 = vmatpush2.msra.mxu0 0.0
    %1001 = vmatprep.subr.mxu0 0.0
    %1002 = vmatpush2.msra.mxu0 0.0
    %1003 = vmatprep.mubr.f32.mxu0 0.0
    %1004 = vmatmul.mubr.f32.gmra.mxu0 %v797
    %v1005 = vpop.f32.mrf.mxu0
    %v1006 = vadd.f32 %v554, %v1005
    %v1007 = vpop.f32.mrf.mxu0
    %1008 = vdwg.mxu0
    %v1009 = vadd.f32 %v793, %v866
    %v1010 = vxor.u32 %v1009, 2147483648
    %v1011 = vmul.f32 %v1010, 1.442695
    %v1012 = vpow.pop %v1011
    %v1013 = vadd.f32 %v1012, 1.0
    %v1014 = vrcp.pop %v1013
    %v1015 = vmul.f32 1.0, %v1014
    %v1016 = vadd.f32 %v794, %v936
    %v1017 = vxor.u32 %v1016, 2147483648
    %v1018 = vmul.f32 %v1017, 1.442695
    %v1019 = vpow.pop %v1018
    %v1020 = vadd.f32 %v1019, 1.0
    %v1021 = vrcp.pop %v1020
    %v1022 = vmul.f32 1.0, %v1021
    %v1023 = vmul.f32 %v1015, %v1006
    %v1024 = vadd.f32 %v795, %v1023
    %v1025 = vtanh.pop %v1024
    %v1026 = vsub.f32 %v791, %v1025
    %v1027 = vmul.f32 %v1022, %v1026
    %v1028 = vadd.f32 %v1025, %v1027
    %1029 = vst.msk [vmem:[#allocation3 + $0x8] sm:$0xff] %vm99, %v1028
    %v1030 = vld [vmem:[#allocation2 + $0x10] sm:$0xff]
    %v1031 = vld [vmem:[%s368 + $0x10] sm:$0xff]
    %v1032 = vld [vmem:[%s507 + $0x10] sm:$0xff]
    %v1034 = vsel %vm99, %v1028, 0
    %1036 = vmatprep.subr.mxu0 0.0
    %1037 = vmatpush1.msra.mxu0 0.0
    %1038 = vmatprep.subr.mxu0 0.0
    %1039 = vmatpush1.msra.mxu0 0.0
    %1040 = vmatprep.subr.mxu0 0.0
    %1041 = vmatpush1.msra.mxu0 0.0
    %1042 = vmatprep.subr.mxu0 0.0
    %1043 = vmatpush1.msra.mxu0 0.0
    %1044 = vmatprep.subr.mxu0 0.0
    %1045 = vmatpush1.msra.mxu0 0.0
    %1046 = vmatprep.subr.mxu0 0.0
    %1047 = vmatpush1.msra.mxu0 0.0
    %1048 = vmatprep.subr.mxu0 0.0
    %1049 = vmatpush1.msra.mxu0 0.0
    %1050 = vmatprep.subr.mxu0 0.0
    %1051 = vmatpush1.msra.mxu0 0.0
    %1052 = vmatprep.subr.mxu0 0.0
    %1053 = vmatpush1.msra.mxu0 %v530
    %1054 = vmatprep.subr.mxu0 0.0
    %1055 = vmatpush1.msra.mxu0 %v529
    %1056 = vmatprep.subr.mxu0 0.0
    %1057 = vmatpush1.msra.mxu0 %v528
    %1058 = vmatprep.subr.mxu0 0.0
    %1059 = vmatpush1.msra.mxu0 %v527
    %1060 = vmatprep.subr.mxu0 0.0
    %1061 = vmatpush1.msra.mxu0 %v526
    %1062 = vmatprep.subr.mxu0 0.0
    %1063 = vmatpush1.msra.mxu0 %v525
    %1064 = vmatprep.subr.mxu0 0.0
    %1065 = vmatpush1.msra.mxu0 %v524
    %1066 = vmatprep.subr.mxu0 0.0
    %1067 = vmatpush1.msra.mxu0 %v523
    %1068 = vmatprep.subr.mxu0 0.0
    %1069 = vmatpush2.msra.mxu0 0.0
    %1070 = vmatprep.subr.mxu0 0.0
    %1071 = vmatpush2.msra.mxu0 0.0
    %1072 = vmatprep.subr.mxu0 0.0
    %1073 = vmatpush2.msra.mxu0 0.0
    %1074 = vmatprep.subr.mxu0 0.0
    %1075 = vmatpush2.msra.mxu0 0.0
    %1076 = vmatprep.subr.mxu0 0.0
    %1077 = vmatpush2.msra.mxu0 0.0
    %1078 = vmatprep.subr.mxu0 0.0
    %1079 = vmatpush2.msra.mxu0 0.0
    %1080 = vmatprep.subr.mxu0 0.0
    %1081 = vmatpush2.msra.mxu0 0.0
    %1082 = vmatprep.subr.mxu0 0.0
    %1083 = vmatpush2.msra.mxu0 0.0
    %1084 = vmatprep.subr.mxu0 0.0
    %1085 = vmatpush2.msra.mxu0 0.0
    %1086 = vmatprep.subr.mxu0 0.0
    %1087 = vmatpush2.msra.mxu0 0.0
    %1088 = vmatprep.subr.mxu0 0.0
    %1089 = vmatpush2.msra.mxu0 0.0
    %1090 = vmatprep.subr.mxu0 0.0
    %1091 = vmatpush2.msra.mxu0 0.0
    %1092 = vmatprep.subr.mxu0 0.0
    %1093 = vmatpush2.msra.mxu0 0.0
    %1094 = vmatprep.subr.mxu0 0.0
    %1095 = vmatpush2.msra.mxu0 0.0
    %1096 = vmatprep.subr.mxu0 0.0
    %1097 = vmatpush2.msra.mxu0 0.0
    %1098 = vmatprep.subr.mxu0 0.0
    %1099 = vmatpush2.msra.mxu0 0.0
    %1100 = vmatprep.mubr.f32.mxu0 0.0
    %1101 = vmatmul.mubr.f32.gmra.mxu0 %v1034
    %v1102 = vpop.f32.mrf.mxu0
    %v1103 = vadd.f32 0.0, %v1102
    %v1104 = vpop.f32.mrf.mxu0
    %1105 = vdwg.mxu0
    %1106 = vmatprep.subr.mxu0 0.0
    %1107 = vmatpush1.msra.mxu0 0.0
    %1108 = vmatprep.subr.mxu0 0.0
    %1109 = vmatpush1.msra.mxu0 0.0
    %1110 = vmatprep.subr.mxu0 0.0
    %1111 = vmatpush1.msra.mxu0 0.0
    %1112 = vmatprep.subr.mxu0 0.0
    %1113 = vmatpush1.msra.mxu0 0.0
    %1114 = vmatprep.subr.mxu0 0.0
    %1115 = vmatpush1.msra.mxu0 0.0
    %1116 = vmatprep.subr.mxu0 0.0
    %1117 = vmatpush1.msra.mxu0 0.0
    %1118 = vmatprep.subr.mxu0 0.0
    %1119 = vmatpush1.msra.mxu0 0.0
    %1120 = vmatprep.subr.mxu0 0.0
    %1121 = vmatpush1.msra.mxu0 0.0
    %1122 = vmatprep.subr.mxu0 0.0
    %1123 = vmatpush1.msra.mxu0 %v539
    %1124 = vmatprep.subr.mxu0 0.0
    %1125 = vmatpush1.msra.mxu0 %v538
    %1126 = vmatprep.subr.mxu0 0.0
    %1127 = vmatpush1.msra.mxu0 %v537
    %1128 = vmatprep.subr.mxu0 0.0
    %1129 = vmatpush1.msra.mxu0 %v536
    %1130 = vmatprep.subr.mxu0 0.0
    %1131 = vmatpush1.msra.mxu0 %v535
    %1132 = vmatprep.subr.mxu0 0.0
    %1133 = vmatpush1.msra.mxu0 %v534
    %1134 = vmatprep.subr.mxu0 0.0
    %1135 = vmatpush1.msra.mxu0 %v533
    %1136 = vmatprep.subr.mxu0 0.0
    %1137 = vmatpush1.msra.mxu0 %v532
    %1138 = vmatprep.subr.mxu0 0.0
    %1139 = vmatpush2.msra.mxu0 0.0
    %1140 = vmatprep.subr.mxu0 0.0
    %1141 = vmatpush2.msra.mxu0 0.0
    %1142 = vmatprep.subr.mxu0 0.0
    %1143 = vmatpush2.msra.mxu0 0.0
    %1144 = vmatprep.subr.mxu0 0.0
    %1145 = vmatpush2.msra.mxu0 0.0
    %1146 = vmatprep.subr.mxu0 0.0
    %1147 = vmatpush2.msra.mxu0 0.0
    %1148 = vmatprep.subr.mxu0 0.0
    %1149 = vmatpush2.msra.mxu0 0.0
    %1150 = vmatprep.subr.mxu0 0.0
    %1151 = vmatpush2.msra.mxu0 0.0
    %1152 = vmatprep.subr.mxu0 0.0
    %1153 = vmatpush2.msra.mxu0 0.0
    %1154 = vmatprep.subr.mxu0 0.0
    %1155 = vmatpush2.msra.mxu0 0.0
    %1156 = vmatprep.subr.mxu0 0.0
    %1157 = vmatpush2.msra.mxu0 0.0
    %1158 = vmatprep.subr.mxu0 0.0
    %1159 = vmatpush2.msra.mxu0 0.0
    %1160 = vmatprep.subr.mxu0 0.0
    %1161 = vmatpush2.msra.mxu0 0.0
    %1162 = vmatprep.subr.mxu0 0.0
    %1163 = vmatpush2.msra.mxu0 0.0
    %1164 = vmatprep.subr.mxu0 0.0
    %1165 = vmatpush2.msra.mxu0 0.0
    %1166 = vmatprep.subr.mxu0 0.0
    %1167 = vmatpush2.msra.mxu0 0.0
    %1168 = vmatprep.subr.mxu0 0.0
    %1169 = vmatpush2.msra.mxu0 0.0
    %1170 = vmatprep.mubr.f32.mxu0 0.0
    %1171 = vmatmul.mubr.f32.gmra.mxu0 %v1034
    %v1172 = vpop.f32.mrf.mxu0
    %v1173 = vadd.f32 0.0, %v1172
    %v1174 = vpop.f32.mrf.mxu0
    %1175 = vdwg.mxu0
    %1176 = vmatprep.subr.mxu0 0.0
    %1177 = vmatpush1.msra.mxu0 0.0
    %1178 = vmatprep.subr.mxu0 0.0
    %1179 = vmatpush1.msra.mxu0 0.0
    %1180 = vmatprep.subr.mxu0 0.0
    %1181 = vmatpush1.msra.mxu0 0.0
    %1182 = vmatprep.subr.mxu0 0.0
    %1183 = vmatpush1.msra.mxu0 0.0
    %1184 = vmatprep.subr.mxu0 0.0
    %1185 = vmatpush1.msra.mxu0 0.0
    %1186 = vmatprep.subr.mxu0 0.0
    %1187 = vmatpush1.msra.mxu0 0.0
    %1188 = vmatprep.subr.mxu0 0.0
    %1189 = vmatpush1.msra.mxu0 0.0
    %1190 = vmatprep.subr.mxu0 0.0
    %1191 = vmatpush1.msra.mxu0 0.0
    %1192 = vmatprep.subr.mxu0 0.0
    %1193 = vmatpush1.msra.mxu0 %v548
    %1194 = vmatprep.subr.mxu0 0.0
    %1195 = vmatpush1.msra.mxu0 %v547
    %1196 = vmatprep.subr.mxu0 0.0
    %1197 = vmatpush1.msra.mxu0 %v546
    %1198 = vmatprep.subr.mxu0 0.0
    %1199 = vmatpush1.msra.mxu0 %v545
    %1200 = vmatprep.subr.mxu0 0.0
    %1201 = vmatpush1.msra.mxu0 %v544
    %1202 = vmatprep.subr.mxu0 0.0
    %1203 = vmatpush1.msra.mxu0 %v543
    %1204 = vmatprep.subr.mxu0 0.0
    %1205 = vmatpush1.msra.mxu0 %v542
    %1206 = vmatprep.subr.mxu0 0.0
    %1207 = vmatpush1.msra.mxu0 %v541
    %1208 = vmatprep.subr.mxu0 0.0
    %1209 = vmatpush2.msra.mxu0 0.0
    %1210 = vmatprep.subr.mxu0 0.0
    %1211 = vmatpush2.msra.mxu0 0.0
    %1212 = vmatprep.subr.mxu0 0.0
    %1213 = vmatpush2.msra.mxu0 0.0
    %1214 = vmatprep.subr.mxu0 0.0
    %1215 = vmatpush2.msra.mxu0 0.0
    %1216 = vmatprep.subr.mxu0 0.0
    %1217 = vmatpush2.msra.mxu0 0.0
    %1218 = vmatprep.subr.mxu0 0.0
    %1219 = vmatpush2.msra.mxu0 0.0
    %1220 = vmatprep.subr.mxu0 0.0
    %1221 = vmatpush2.msra.mxu0 0.0
    %1222 = vmatprep.subr.mxu0 0.0
    %1223 = vmatpush2.msra.mxu0 0.0
    %1224 = vmatprep.subr.mxu0 0.0
    %1225 = vmatpush2.msra.mxu0 0.0
    %1226 = vmatprep.subr.mxu0 0.0
    %1227 = vmatpush2.msra.mxu0 0.0
    %1228 = vmatprep.subr.mxu0 0.0
    %1229 = vmatpush2.msra.mxu0 0.0
    %1230 = vmatprep.subr.mxu0 0.0
    %1231 = vmatpush2.msra.mxu0 0.0
    %1232 = vmatprep.subr.mxu0 0.0
    %1233 = vmatpush2.msra.mxu0 0.0
    %1234 = vmatprep.subr.mxu0 0.0
    %1235 = vmatpush2.msra.mxu0 0.0
    %1236 = vmatprep.subr.mxu0 0.0
    %1237 = vmatpush2.msra.mxu0 0.0
    %1238 = vmatprep.subr.mxu0 0.0
    %1239 = vmatpush2.msra.mxu0 0.0
    %1240 = vmatprep.mubr.f32.mxu0 0.0
    %1241 = vmatmul.mubr.f32.gmra.mxu0 %v1034
    %v1242 = vpop.f32.mrf.mxu0
    %v1243 = vadd.f32 %v554, %v1242
    %v1244 = vpop.f32.mrf.mxu0
    %1245 = vdwg.mxu0
    %v1246 = vadd.f32 %v1030, %v1103
    %v1247 = vxor.u32 %v1246, 2147483648
    %v1248 = vmul.f32 %v1247, 1.442695
    %v1249 = vpow.pop %v1248
    %v1250 = vadd.f32 %v1249, 1.0
    %v1251 = vrcp.pop %v1250
    %v1252 = vmul.f32 1.0, %v1251
    %v1253 = vadd.f32 %v1031, %v1173
    %v1254 = vxor.u32 %v1253, 2147483648
    %v1255 = vmul.f32 %v1254, 1.442695
    %v1256 = vpow.pop %v1255
    %v1257 = vadd.f32 %v1256, 1.0
    %v1258 = vrcp.pop %v1257
    %v1259 = vmul.f32 1.0, %v1258
    %v1260 = vmul.f32 %v1252, %v1243
    %v1261 = vadd.f32 %v1032, %v1260
    %v1262 = vtanh.pop %v1261
    %v1263 = vsub.f32 %v1028, %v1262
    %v1264 = vmul.f32 %v1259, %v1263
    %v1265 = vadd.f32 %v1262, %v1264
    %1266 = vst.msk [vmem:[#allocation3 + $0x10] sm:$0xff] %vm99, %v1265
    %v1267 = vld [vmem:[#allocation2 + $0x18] sm:$0xff]
    %v1268 = vld [vmem:[%s368 + $0x18] sm:$0xff]
    %v1269 = vld [vmem:[%s507 + $0x18] sm:$0xff]
    %v1271 = vsel %vm99, %v1265, 0
    %1273 = vmatprep.subr.mxu0 0.0
    %1274 = vmatpush1.msra.mxu0 0.0
    %1275 = vmatprep.subr.mxu0 0.0
    %1276 = vmatpush1.msra.mxu0 0.0
    %1277 = vmatprep.subr.mxu0 0.0
    %1278 = vmatpush1.msra.mxu0 0.0
    %1279 = vmatprep.subr.mxu0 0.0
    %1280 = vmatpush1.msra.mxu0 0.0
    %1281 = vmatprep.subr.mxu0 0.0
    %1282 = vmatpush1.msra.mxu0 0.0
    %1283 = vmatprep.subr.mxu0 0.0
    %1284 = vmatpush1.msra.mxu0 0.0
    %1285 = vmatprep.subr.mxu0 0.0
    %1286 = vmatpush1.msra.mxu0 0.0
    %1287 = vmatprep.subr.mxu0 0.0
    %1288 = vmatpush1.msra.mxu0 0.0
    %1289 = vmatprep.subr.mxu0 0.0
    %1290 = vmatpush1.msra.mxu0 %v530
    %1291 = vmatprep.subr.mxu0 0.0
    %1292 = vmatpush1.msra.mxu0 %v529
    %1293 = vmatprep.subr.mxu0 0.0
    %1294 = vmatpush1.msra.mxu0 %v528
    %1295 = vmatprep.subr.mxu0 0.0
    %1296 = vmatpush1.msra.mxu0 %v527
    %1297 = vmatprep.subr.mxu0 0.0
    %1298 = vmatpush1.msra.mxu0 %v526
    %1299 = vmatprep.subr.mxu0 0.0
    %1300 = vmatpush1.msra.mxu0 %v525
    %1301 = vmatprep.subr.mxu0 0.0
    %1302 = vmatpush1.msra.mxu0 %v524
    %1303 = vmatprep.subr.mxu0 0.0
    %1304 = vmatpush1.msra.mxu0 %v523
    %1305 = vmatprep.subr.mxu0 0.0
    %1306 = vmatpush2.msra.mxu0 0.0
    %1307 = vmatprep.subr.mxu0 0.0
    %1308 = vmatpush2.msra.mxu0 0.0
    %1309 = vmatprep.subr.mxu0 0.0
    %1310 = vmatpush2.msra.mxu0 0.0
    %1311 = vmatprep.subr.mxu0 0.0
    %1312 = vmatpush2.msra.mxu0 0.0
    %1313 = vmatprep.subr.mxu0 0.0
    %1314 = vmatpush2.msra.mxu0 0.0
    %1315 = vmatprep.subr.mxu0 0.0
    %1316 = vmatpush2.msra.mxu0 0.0
    %1317 = vmatprep.subr.mxu0 0.0
    %1318 = vmatpush2.msra.mxu0 0.0
    %1319 = vmatprep.subr.mxu0 0.0
    %1320 = vmatpush2.msra.mxu0 0.0
    %1321 = vmatprep.subr.mxu0 0.0
    %1322 = vmatpush2.msra.mxu0 0.0
    %1323 = vmatprep.subr.mxu0 0.0
    %1324 = vmatpush2.msra.mxu0 0.0
    %1325 = vmatprep.subr.mxu0 0.0
    %1326 = vmatpush2.msra.mxu0 0.0
    %1327 = vmatprep.subr.mxu0 0.0
    %1328 = vmatpush2.msra.mxu0 0.0
    %1329 = vmatprep.subr.mxu0 0.0
    %1330 = vmatpush2.msra.mxu0 0.0
    %1331 = vmatprep.subr.mxu0 0.0
    %1332 = vmatpush2.msra.mxu0 0.0
    %1333 = vmatprep.subr.mxu0 0.0
    %1334 = vmatpush2.msra.mxu0 0.0
    %1335 = vmatprep.subr.mxu0 0.0
    %1336 = vmatpush2.msra.mxu0 0.0
    %1337 = vmatprep.mubr.f32.mxu0 0.0
    %1338 = vmatmul.mubr.f32.gmra.mxu0 %v1271
    %v1339 = vpop.f32.mrf.mxu0
    %v1340 = vadd.f32 0.0, %v1339
    %v1341 = vpop.f32.mrf.mxu0
    %1342 = vdwg.mxu0
    %1343 = vmatprep.subr.mxu0 0.0
    %1344 = vmatpush1.msra.mxu0 0.0
    %1345 = vmatprep.subr.mxu0 0.0
    %1346 = vmatpush1.msra.mxu0 0.0
    %1347 = vmatprep.subr.mxu0 0.0
    %1348 = vmatpush1.msra.mxu0 0.0
    %1349 = vmatprep.subr.mxu0 0.0
    %1350 = vmatpush1.msra.mxu0 0.0
    %1351 = vmatprep.subr.mxu0 0.0
    %1352 = vmatpush1.msra.mxu0 0.0
    %1353 = vmatprep.subr.mxu0 0.0
    %1354 = vmatpush1.msra.mxu0 0.0
    %1355 = vmatprep.subr.mxu0 0.0
    %1356 = vmatpush1.msra.mxu0 0.0
    %1357 = vmatprep.subr.mxu0 0.0
    %1358 = vmatpush1.msra.mxu0 0.0
    %1359 = vmatprep.subr.mxu0 0.0
    %1360 = vmatpush1.msra.mxu0 %v539
    %1361 = vmatprep.subr.mxu0 0.0
    %1362 = vmatpush1.msra.mxu0 %v538
    %1363 = vmatprep.subr.mxu0 0.0
    %1364 = vmatpush1.msra.mxu0 %v537
    %1365 = vmatprep.subr.mxu0 0.0
    %1366 = vmatpush1.msra.mxu0 %v536
    %1367 = vmatprep.subr.mxu0 0.0
    %1368 = vmatpush1.msra.mxu0 %v535
    %1369 = vmatprep.subr.mxu0 0.0
    %1370 = vmatpush1.msra.mxu0 %v534
    %1371 = vmatprep.subr.mxu0 0.0
    %1372 = vmatpush1.msra.mxu0 %v533
    %1373 = vmatprep.subr.mxu0 0.0
    %1374 = vmatpush1.msra.mxu0 %v532
    %1375 = vmatprep.subr.mxu0 0.0
    %1376 = vmatpush2.msra.mxu0 0.0
    %1377 = vmatprep.subr.mxu0 0.0
    %1378 = vmatpush2.msra.mxu0 0.0
    %1379 = vmatprep.subr.mxu0 0.0
    %1380 = vmatpush2.msra.mxu0 0.0
    %1381 = vmatprep.subr.mxu0 0.0
    %1382 = vmatpush2.msra.mxu0 0.0
    %1383 = vmatprep.subr.mxu0 0.0
    %1384 = vmatpush2.msra.mxu0 0.0
    %1385 = vmatprep.subr.mxu0 0.0
    %1386 = vmatpush2.msra.mxu0 0.0
    %1387 = vmatprep.subr.mxu0 0.0
    %1388 = vmatpush2.msra.mxu0 0.0
    %1389 = vmatprep.subr.mxu0 0.0
    %1390 = vmatpush2.msra.mxu0 0.0
    %1391 = vmatprep.subr.mxu0 0.0
    %1392 = vmatpush2.msra.mxu0 0.0
    %1393 = vmatprep.subr.mxu0 0.0
    %1394 = vmatpush2.msra.mxu0 0.0
    %1395 = vmatprep.subr.mxu0 0.0
    %1396 = vmatpush2.msra.mxu0 0.0
    %1397 = vmatprep.subr.mxu0 0.0
    %1398 = vmatpush2.msra.mxu0 0.0
    %1399 = vmatprep.subr.mxu0 0.0
    %1400 = vmatpush2.msra.mxu0 0.0
    %1401 = vmatprep.subr.mxu0 0.0
    %1402 = vmatpush2.msra.mxu0 0.0
    %1403 = vmatprep.subr.mxu0 0.0
    %1404 = vmatpush2.msra.mxu0 0.0
    %1405 = vmatprep.subr.mxu0 0.0
    %1406 = vmatpush2.msra.mxu0 0.0
    %1407 = vmatprep.mubr.f32.mxu0 0.0
    %1408 = vmatmul.mubr.f32.gmra.mxu0 %v1271
    %v1409 = vpop.f32.mrf.mxu0
    %v1410 = vadd.f32 0.0, %v1409
    %v1411 = vpop.f32.mrf.mxu0
    %1412 = vdwg.mxu0
    %1413 = vmatprep.subr.mxu0 0.0
    %1414 = vmatpush1.msra.mxu0 0.0
    %1415 = vmatprep.subr.mxu0 0.0
    %1416 = vmatpush1.msra.mxu0 0.0
    %1417 = vmatprep.subr.mxu0 0.0
    %1418 = vmatpush1.msra.mxu0 0.0
    %1419 = vmatprep.subr.mxu0 0.0
    %1420 = vmatpush1.msra.mxu0 0.0
    %1421 = vmatprep.subr.mxu0 0.0
    %1422 = vmatpush1.msra.mxu0 0.0
    %1423 = vmatprep.subr.mxu0 0.0
    %1424 = vmatpush1.msra.mxu0 0.0
    %1425 = vmatprep.subr.mxu0 0.0
    %1426 = vmatpush1.msra.mxu0 0.0
    %1427 = vmatprep.subr.mxu0 0.0
    %1428 = vmatpush1.msra.mxu0 0.0
    %1429 = vmatprep.subr.mxu0 0.0
    %1430 = vmatpush1.msra.mxu0 %v548
    %1431 = vmatprep.subr.mxu0 0.0
    %1432 = vmatpush1.msra.mxu0 %v547
    %1433 = vmatprep.subr.mxu0 0.0
    %1434 = vmatpush1.msra.mxu0 %v546
    %1435 = vmatprep.subr.mxu0 0.0
    %1436 = vmatpush1.msra.mxu0 %v545
    %1437 = vmatprep.subr.mxu0 0.0
    %1438 = vmatpush1.msra.mxu0 %v544
    %1439 = vmatprep.subr.mxu0 0.0
    %1440 = vmatpush1.msra.mxu0 %v543
    %1441 = vmatprep.subr.mxu0 0.0
    %1442 = vmatpush1.msra.mxu0 %v542
    %1443 = vmatprep.subr.mxu0 0.0
    %1444 = vmatpush1.msra.mxu0 %v541
    %1445 = vmatprep.subr.mxu0 0.0
    %1446 = vmatpush2.msra.mxu0 0.0
    %1447 = vmatprep.subr.mxu0 0.0
    %1448 = vmatpush2.msra.mxu0 0.0
    %1449 = vmatprep.subr.mxu0 0.0
    %1450 = vmatpush2.msra.mxu0 0.0
    %1451 = vmatprep.subr.mxu0 0.0
    %1452 = vmatpush2.msra.mxu0 0.0
    %1453 = vmatprep.subr.mxu0 0.0
    %1454 = vmatpush2.msra.mxu0 0.0
    %1455 = vmatprep.subr.mxu0 0.0
    %1456 = vmatpush2.msra.mxu0 0.0
    %1457 = vmatprep.subr.mxu0 0.0
    %1458 = vmatpush2.msra.mxu0 0.0
    %1459 = vmatprep.subr.mxu0 0.0
    %1460 = vmatpush2.msra.mxu0 0.0
    %1461 = vmatprep.subr.mxu0 0.0
    %1462 = vmatpush2.msra.mxu0 0.0
    %1463 = vmatprep.subr.mxu0 0.0
    %1464 = vmatpush2.msra.mxu0 0.0
    %1465 = vmatprep.subr.mxu0 0.0
    %1466 = vmatpush2.msra.mxu0 0.0
    %1467 = vmatprep.subr.mxu0 0.0
    %1468 = vmatpush2.msra.mxu0 0.0
    %1469 = vmatprep.subr.mxu0 0.0
    %1470 = vmatpush2.msra.mxu0 0.0
    %1471 = vmatprep.subr.mxu0 0.0
    %1472 = vmatpush2.msra.mxu0 0.0
    %1473 = vmatprep.subr.mxu0 0.0
    %1474 = vmatpush2.msra.mxu0 0.0
    %1475 = vmatprep.subr.mxu0 0.0
    %1476 = vmatpush2.msra.mxu0 0.0
    %1477 = vmatprep.mubr.f32.mxu0 0.0
    %1478 = vmatmul.mubr.f32.gmra.mxu0 %v1271
    %v1479 = vpop.f32.mrf.mxu0
    %v1480 = vadd.f32 %v554, %v1479
    %v1481 = vpop.f32.mrf.mxu0
    %1482 = vdwg.mxu0
    %v1483 = vadd.f32 %v1267, %v1340
    %v1484 = vxor.u32 %v1483, 2147483648
    %v1485 = vmul.f32 %v1484, 1.442695
    %v1486 = vpow.pop %v1485
    %v1487 = vadd.f32 %v1486, 1.0
    %v1488 = vrcp.pop %v1487
    %v1489 = vmul.f32 1.0, %v1488
    %v1490 = vadd.f32 %v1268, %v1410
    %v1491 = vxor.u32 %v1490, 2147483648
    %v1492 = vmul.f32 %v1491, 1.442695
    %v1493 = vpow.pop %v1492
    %v1494 = vadd.f32 %v1493, 1.0
    %v1495 = vrcp.pop %v1494
    %v1496 = vmul.f32 1.0, %v1495
    %v1497 = vmul.f32 %v1489, %v1480
    %v1498 = vadd.f32 %v1269, %v1497
    %v1499 = vtanh.pop %v1498
    %v1500 = vsub.f32 %v1265, %v1499
    %v1501 = vmul.f32 %v1496, %v1500
    %v1502 = vadd.f32 %v1499, %v1501
    %1503 = vst.msk [vmem:[#allocation3 + $0x18] sm:$0xff] %vm99, %v1502
    %v1504 = vld [vmem:[#allocation2 + $0x20] sm:$0xff]
    %v1505 = vld [vmem:[%s368 + $0x20] sm:$0xff]
    %v1506 = vld [vmem:[%s507 + $0x20] sm:$0xff]
    %v1508 = vsel %vm99, %v1502, 0
    %1510 = vmatprep.subr.mxu0 0.0
    %1511 = vmatpush1.msra.mxu0 0.0
    %1512 = vmatprep.subr.mxu0 0.0
    %1513 = vmatpush1.msra.mxu0 0.0
    %1514 = vmatprep.subr.mxu0 0.0
    %1515 = vmatpush1.msra.mxu0 0.0
    %1516 = vmatprep.subr.mxu0 0.0
    %1517 = vmatpush1.msra.mxu0 0.0
    %1518 = vmatprep.subr.mxu0 0.0
    %1519 = vmatpush1.msra.mxu0 0.0
    %1520 = vmatprep.subr.mxu0 0.0
    %1521 = vmatpush1.msra.mxu0 0.0
    %1522 = vmatprep.subr.mxu0 0.0
    %1523 = vmatpush1.msra.mxu0 0.0
    %1524 = vmatprep.subr.mxu0 0.0
    %1525 = vmatpush1.msra.mxu0 0.0
    %1526 = vmatprep.subr.mxu0 0.0
    %1527 = vmatpush1.msra.mxu0 %v530
    %1528 = vmatprep.subr.mxu0 0.0
    %1529 = vmatpush1.msra.mxu0 %v529
    %1530 = vmatprep.subr.mxu0 0.0
    %1531 = vmatpush1.msra.mxu0 %v528
    %1532 = vmatprep.subr.mxu0 0.0
    %1533 = vmatpush1.msra.mxu0 %v527
    %1534 = vmatprep.subr.mxu0 0.0
    %1535 = vmatpush1.msra.mxu0 %v526
    %1536 = vmatprep.subr.mxu0 0.0
    %1537 = vmatpush1.msra.mxu0 %v525
    %1538 = vmatprep.subr.mxu0 0.0
    %1539 = vmatpush1.msra.mxu0 %v524
    %1540 = vmatprep.subr.mxu0 0.0
    %1541 = vmatpush1.msra.mxu0 %v523
    %1542 = vmatprep.subr.mxu0 0.0
    %1543 = vmatpush2.msra.mxu0 0.0
    %1544 = vmatprep.subr.mxu0 0.0
    %1545 = vmatpush2.msra.mxu0 0.0
    %1546 = vmatprep.subr.mxu0 0.0
    %1547 = vmatpush2.msra.mxu0 0.0
    %1548 = vmatprep.subr.mxu0 0.0
    %1549 = vmatpush2.msra.mxu0 0.0
    %1550 = vmatprep.subr.mxu0 0.0
    %1551 = vmatpush2.msra.mxu0 0.0
    %1552 = vmatprep.subr.mxu0 0.0
    %1553 = vmatpush2.msra.mxu0 0.0
    %1554 = vmatprep.subr.mxu0 0.0
    %1555 = vmatpush2.msra.mxu0 0.0
    %1556 = vmatprep.subr.mxu0 0.0
    %1557 = vmatpush2.msra.mxu0 0.0
    %1558 = vmatprep.subr.mxu0 0.0
    %1559 = vmatpush2.msra.mxu0 0.0
    %1560 = vmatprep.subr.mxu0 0.0
    %1561 = vmatpush2.msra.mxu0 0.0
    %1562 = vmatprep.subr.mxu0 0.0
    %1563 = vmatpush2.msra.mxu0 0.0
    %1564 = vmatprep.subr.mxu0 0.0
    %1565 = vmatpush2.msra.mxu0 0.0
    %1566 = vmatprep.subr.mxu0 0.0
    %1567 = vmatpush2.msra.mxu0 0.0
    %1568 = vmatprep.subr.mxu0 0.0
    %1569 = vmatpush2.msra.mxu0 0.0
    %1570 = vmatprep.subr.mxu0 0.0
    %1571 = vmatpush2.msra.mxu0 0.0
    %1572 = vmatprep.subr.mxu0 0.0
    %1573 = vmatpush2.msra.mxu0 0.0
    %1574 = vmatprep.mubr.f32.mxu0 0.0
    %1575 = vmatmul.mubr.f32.gmra.mxu0 %v1508
    %v1576 = vpop.f32.mrf.mxu0
    %v1577 = vadd.f32 0.0, %v1576
    %v1578 = vpop.f32.mrf.mxu0
    %1579 = vdwg.mxu0
    %1580 = vmatprep.subr.mxu0 0.0
    %1581 = vmatpush1.msra.mxu0 0.0
    %1582 = vmatprep.subr.mxu0 0.0
    %1583 = vmatpush1.msra.mxu0 0.0
    %1584 = vmatprep.subr.mxu0 0.0
    %1585 = vmatpush1.msra.mxu0 0.0
    %1586 = vmatprep.subr.mxu0 0.0
    %1587 = vmatpush1.msra.mxu0 0.0
    %1588 = vmatprep.subr.mxu0 0.0
    %1589 = vmatpush1.msra.mxu0 0.0
    %1590 = vmatprep.subr.mxu0 0.0
    %1591 = vmatpush1.msra.mxu0 0.0
    %1592 = vmatprep.subr.mxu0 0.0
    %1593 = vmatpush1.msra.mxu0 0.0
    %1594 = vmatprep.subr.mxu0 0.0
    %1595 = vmatpush1.msra.mxu0 0.0
    %1596 = vmatprep.subr.mxu0 0.0
    %1597 = vmatpush1.msra.mxu0 %v539
    %1598 = vmatprep.subr.mxu0 0.0
    %1599 = vmatpush1.msra.mxu0 %v538
    %1600 = vmatprep.subr.mxu0 0.0
    %1601 = vmatpush1.msra.mxu0 %v537
    %1602 = vmatprep.subr.mxu0 0.0
    %1603 = vmatpush1.msra.mxu0 %v536
    %1604 = vmatprep.subr.mxu0 0.0
    %1605 = vmatpush1.msra.mxu0 %v535
    %1606 = vmatprep.subr.mxu0 0.0
    %1607 = vmatpush1.msra.mxu0 %v534
    %1608 = vmatprep.subr.mxu0 0.0
    %1609 = vmatpush1.msra.mxu0 %v533
    %1610 = vmatprep.subr.mxu0 0.0
    %1611 = vmatpush1.msra.mxu0 %v532
    %1612 = vmatprep.subr.mxu0 0.0
    %1613 = vmatpush2.msra.mxu0 0.0
    %1614 = vmatprep.subr.mxu0 0.0
    %1615 = vmatpush2.msra.mxu0 0.0
    %1616 = vmatprep.subr.mxu0 0.0
    %1617 = vmatpush2.msra.mxu0 0.0
    %1618 = vmatprep.subr.mxu0 0.0
    %1619 = vmatpush2.msra.mxu0 0.0
    %1620 = vmatprep.subr.mxu0 0.0
    %1621 = vmatpush2.msra.mxu0 0.0
    %1622 = vmatprep.subr.mxu0 0.0
    %1623 = vmatpush2.msra.mxu0 0.0
    %1624 = vmatprep.subr.mxu0 0.0
    %1625 = vmatpush2.msra.mxu0 0.0
    %1626 = vmatprep.subr.mxu0 0.0
    %1627 = vmatpush2.msra.mxu0 0.0
    %1628 = vmatprep.subr.mxu0 0.0
    %1629 = vmatpush2.msra.mxu0 0.0
    %1630 = vmatprep.subr.mxu0 0.0
    %1631 = vmatpush2.msra.mxu0 0.0
    %1632 = vmatprep.subr.mxu0 0.0
    %1633 = vmatpush2.msra.mxu0 0.0
    %1634 = vmatprep.subr.mxu0 0.0
    %1635 = vmatpush2.msra.mxu0 0.0
    %1636 = vmatprep.subr.mxu0 0.0
    %1637 = vmatpush2.msra.mxu0 0.0
    %1638 = vmatprep.subr.mxu0 0.0
    %1639 = vmatpush2.msra.mxu0 0.0
    %1640 = vmatprep.subr.mxu0 0.0
    %1641 = vmatpush2.msra.mxu0 0.0
    %1642 = vmatprep.subr.mxu0 0.0
    %1643 = vmatpush2.msra.mxu0 0.0
    %1644 = vmatprep.mubr.f32.mxu0 0.0
    %1645 = vmatmul.mubr.f32.gmra.mxu0 %v1508
    %v1646 = vpop.f32.mrf.mxu0
    %v1647 = vadd.f32 0.0, %v1646
    %v1648 = vpop.f32.mrf.mxu0
    %1649 = vdwg.mxu0
    %1650 = vmatprep.subr.mxu0 0.0
    %1651 = vmatpush1.msra.mxu0 0.0
    %1652 = vmatprep.subr.mxu0 0.0
    %1653 = vmatpush1.msra.mxu0 0.0
    %1654 = vmatprep.subr.mxu0 0.0
    %1655 = vmatpush1.msra.mxu0 0.0
    %1656 = vmatprep.subr.mxu0 0.0
    %1657 = vmatpush1.msra.mxu0 0.0
    %1658 = vmatprep.subr.mxu0 0.0
    %1659 = vmatpush1.msra.mxu0 0.0
    %1660 = vmatprep.subr.mxu0 0.0
    %1661 = vmatpush1.msra.mxu0 0.0
    %1662 = vmatprep.subr.mxu0 0.0
    %1663 = vmatpush1.msra.mxu0 0.0
    %1664 = vmatprep.subr.mxu0 0.0
    %1665 = vmatpush1.msra.mxu0 0.0
    %1666 = vmatprep.subr.mxu0 0.0
    %1667 = vmatpush1.msra.mxu0 %v548
    %1668 = vmatprep.subr.mxu0 0.0
    %1669 = vmatpush1.msra.mxu0 %v547
    %1670 = vmatprep.subr.mxu0 0.0
    %1671 = vmatpush1.msra.mxu0 %v546
    %1672 = vmatprep.subr.mxu0 0.0
    %1673 = vmatpush1.msra.mxu0 %v545
    %1674 = vmatprep.subr.mxu0 0.0
    %1675 = vmatpush1.msra.mxu0 %v544
    %1676 = vmatprep.subr.mxu0 0.0
    %1677 = vmatpush1.msra.mxu0 %v543
    %1678 = vmatprep.subr.mxu0 0.0
    %1679 = vmatpush1.msra.mxu0 %v542
    %1680 = vmatprep.subr.mxu0 0.0
    %1681 = vmatpush1.msra.mxu0 %v541
    %1682 = vmatprep.subr.mxu0 0.0
    %1683 = vmatpush2.msra.mxu0 0.0
    %1684 = vmatprep.subr.mxu0 0.0
    %1685 = vmatpush2.msra.mxu0 0.0
    %1686 = vmatprep.subr.mxu0 0.0
    %1687 = vmatpush2.msra.mxu0 0.0
    %1688 = vmatprep.subr.mxu0 0.0
    %1689 = vmatpush2.msra.mxu0 0.0
    %1690 = vmatprep.subr.mxu0 0.0
    %1691 = vmatpush2.msra.mxu0 0.0
    %1692 = vmatprep.subr.mxu0 0.0
    %1693 = vmatpush2.msra.mxu0 0.0
    %1694 = vmatprep.subr.mxu0 0.0
    %1695 = vmatpush2.msra.mxu0 0.0
    %1696 = vmatprep.subr.mxu0 0.0
    %1697 = vmatpush2.msra.mxu0 0.0
    %1698 = vmatprep.subr.mxu0 0.0
    %1699 = vmatpush2.msra.mxu0 0.0
    %1700 = vmatprep.subr.mxu0 0.0
    %1701 = vmatpush2.msra.mxu0 0.0
    %1702 = vmatprep.subr.mxu0 0.0
    %1703 = vmatpush2.msra.mxu0 0.0
    %1704 = vmatprep.subr.mxu0 0.0
    %1705 = vmatpush2.msra.mxu0 0.0
    %1706 = vmatprep.subr.mxu0 0.0
    %1707 = vmatpush2.msra.mxu0 0.0
    %1708 = vmatprep.subr.mxu0 0.0
    %1709 = vmatpush2.msra.mxu0 0.0
    %1710 = vmatprep.subr.mxu0 0.0
    %1711 = vmatpush2.msra.mxu0 0.0
    %1712 = vmatprep.subr.mxu0 0.0
    %1713 = vmatpush2.msra.mxu0 0.0
    %1714 = vmatprep.mubr.f32.mxu0 0.0
    %1715 = vmatmul.mubr.f32.gmra.mxu0 %v1508
    %v1716 = vpop.f32.mrf.mxu0
    %v1717 = vadd.f32 %v554, %v1716
    %v1718 = vpop.f32.mrf.mxu0
    %1719 = vdwg.mxu0
    %v1720 = vadd.f32 %v1504, %v1577
    %v1721 = vxor.u32 %v1720, 2147483648
    %v1722 = vmul.f32 %v1721, 1.442695
    %v1723 = vpow.pop %v1722
    %v1724 = vadd.f32 %v1723, 1.0
    %v1725 = vrcp.pop %v1724
    %v1726 = vmul.f32 1.0, %v1725
    %v1727 = vadd.f32 %v1505, %v1647
    %v1728 = vxor.u32 %v1727, 2147483648
    %v1729 = vmul.f32 %v1728, 1.442695
    %v1730 = vpow.pop %v1729
    %v1731 = vadd.f32 %v1730, 1.0
    %v1732 = vrcp.pop %v1731
    %v1733 = vmul.f32 1.0, %v1732
    %v1734 = vmul.f32 %v1726, %v1717
    %v1735 = vadd.f32 %v1506, %v1734
    %v1736 = vtanh.pop %v1735
    %v1737 = vsub.f32 %v1502, %v1736
    %v1738 = vmul.f32 %v1733, %v1737
    %v1739 = vadd.f32 %v1736, %v1738
    %1740 = vst.msk [vmem:[#allocation3 + $0x20] sm:$0xff] %vm99, %v1739
    %v1741 = vld [vmem:[#allocation2 + $0x28] sm:$0xff]
    %v1742 = vld [vmem:[%s368 + $0x28] sm:$0xff]
    %v1743 = vld [vmem:[%s507 + $0x28] sm:$0xff]
    %v1745 = vsel %vm99, %v1739, 0
    %1747 = vmatprep.subr.mxu0 0.0
    %1748 = vmatpush1.msra.mxu0 0.0
    %1749 = vmatprep.subr.mxu0 0.0
    %1750 = vmatpush1.msra.mxu0 0.0
    %1751 = vmatprep.subr.mxu0 0.0
    %1752 = vmatpush1.msra.mxu0 0.0
    %1753 = vmatprep.subr.mxu0 0.0
    %1754 = vmatpush1.msra.mxu0 0.0
    %1755 = vmatprep.subr.mxu0 0.0
    %1756 = vmatpush1.msra.mxu0 0.0
    %1757 = vmatprep.subr.mxu0 0.0
    %1758 = vmatpush1.msra.mxu0 0.0
    %1759 = vmatprep.subr.mxu0 0.0
    %1760 = vmatpush1.msra.mxu0 0.0
    %1761 = vmatprep.subr.mxu0 0.0
    %1762 = vmatpush1.msra.mxu0 0.0
    %1763 = vmatprep.subr.mxu0 0.0
    %1764 = vmatpush1.msra.mxu0 %v530
    %1765 = vmatprep.subr.mxu0 0.0
    %1766 = vmatpush1.msra.mxu0 %v529
    %1767 = vmatprep.subr.mxu0 0.0
    %1768 = vmatpush1.msra.mxu0 %v528
    %1769 = vmatprep.subr.mxu0 0.0
    %1770 = vmatpush1.msra.mxu0 %v527
    %1771 = vmatprep.subr.mxu0 0.0
    %1772 = vmatpush1.msra.mxu0 %v526
    %1773 = vmatprep.subr.mxu0 0.0
    %1774 = vmatpush1.msra.mxu0 %v525
    %1775 = vmatprep.subr.mxu0 0.0
    %1776 = vmatpush1.msra.mxu0 %v524
    %1777 = vmatprep.subr.mxu0 0.0
    %1778 = vmatpush1.msra.mxu0 %v523
    %1779 = vmatprep.subr.mxu0 0.0
    %1780 = vmatpush2.msra.mxu0 0.0
    %1781 = vmatprep.subr.mxu0 0.0
    %1782 = vmatpush2.msra.mxu0 0.0
    %1783 = vmatprep.subr.mxu0 0.0
    %1784 = vmatpush2.msra.mxu0 0.0
    %1785 = vmatprep.subr.mxu0 0.0
    %1786 = vmatpush2.msra.mxu0 0.0
    %1787 = vmatprep.subr.mxu0 0.0
    %1788 = vmatpush2.msra.mxu0 0.0
    %1789 = vmatprep.subr.mxu0 0.0
    %1790 = vmatpush2.msra.mxu0 0.0
    %1791 = vmatprep.subr.mxu0 0.0
    %1792 = vmatpush2.msra.mxu0 0.0
    %1793 = vmatprep.subr.mxu0 0.0
    %1794 = vmatpush2.msra.mxu0 0.0
    %1795 = vmatprep.subr.mxu0 0.0
    %1796 = vmatpush2.msra.mxu0 0.0
    %1797 = vmatprep.subr.mxu0 0.0
    %1798 = vmatpush2.msra.mxu0 0.0
    %1799 = vmatprep.subr.mxu0 0.0
    %1800 = vmatpush2.msra.mxu0 0.0
    %1801 = vmatprep.subr.mxu0 0.0
    %1802 = vmatpush2.msra.mxu0 0.0
    %1803 = vmatprep.subr.mxu0 0.0
    %1804 = vmatpush2.msra.mxu0 0.0
    %1805 = vmatprep.subr.mxu0 0.0
    %1806 = vmatpush2.msra.mxu0 0.0
    %1807 = vmatprep.subr.mxu0 0.0
    %1808 = vmatpush2.msra.mxu0 0.0
    %1809 = vmatprep.subr.mxu0 0.0
    %1810 = vmatpush2.msra.mxu0 0.0
    %1811 = vmatprep.mubr.f32.mxu0 0.0
    %1812 = vmatmul.mubr.f32.gmra.mxu0 %v1745
    %v1813 = vpop.f32.mrf.mxu0
    %v1814 = vadd.f32 0.0, %v1813
    %v1815 = vpop.f32.mrf.mxu0
    %1816 = vdwg.mxu0
    %1817 = vmatprep.subr.mxu0 0.0
    %1818 = vmatpush1.msra.mxu0 0.0
    %1819 = vmatprep.subr.mxu0 0.0
    %1820 = vmatpush1.msra.mxu0 0.0
    %1821 = vmatprep.subr.mxu0 0.0
    %1822 = vmatpush1.msra.mxu0 0.0
    %1823 = vmatprep.subr.mxu0 0.0
    %1824 = vmatpush1.msra.mxu0 0.0
    %1825 = vmatprep.subr.mxu0 0.0
    %1826 = vmatpush1.msra.mxu0 0.0
    %1827 = vmatprep.subr.mxu0 0.0
    %1828 = vmatpush1.msra.mxu0 0.0
    %1829 = vmatprep.subr.mxu0 0.0
    %1830 = vmatpush1.msra.mxu0 0.0
    %1831 = vmatprep.subr.mxu0 0.0
    %1832 = vmatpush1.msra.mxu0 0.0
    %1833 = vmatprep.subr.mxu0 0.0
    %1834 = vmatpush1.msra.mxu0 %v539
    %1835 = vmatprep.subr.mxu0 0.0
    %1836 = vmatpush1.msra.mxu0 %v538
    %1837 = vmatprep.subr.mxu0 0.0
    %1838 = vmatpush1.msra.mxu0 %v537
    %1839 = vmatprep.subr.mxu0 0.0
    %1840 = vmatpush1.msra.mxu0 %v536
    %1841 = vmatprep.subr.mxu0 0.0
    %1842 = vmatpush1.msra.mxu0 %v535
    %1843 = vmatprep.subr.mxu0 0.0
    %1844 = vmatpush1.msra.mxu0 %v534
    %1845 = vmatprep.subr.mxu0 0.0
    %1846 = vmatpush1.msra.mxu0 %v533
    %1847 = vmatprep.subr.mxu0 0.0
    %1848 = vmatpush1.msra.mxu0 %v532
    %1849 = vmatprep.subr.mxu0 0.0
    %1850 = vmatpush2.msra.mxu0 0.0
    %1851 = vmatprep.subr.mxu0 0.0
    %1852 = vmatpush2.msra.mxu0 0.0
    %1853 = vmatprep.subr.mxu0 0.0
    %1854 = vmatpush2.msra.mxu0 0.0
    %1855 = vmatprep.subr.mxu0 0.0
    %1856 = vmatpush2.msra.mxu0 0.0
    %1857 = vmatprep.subr.mxu0 0.0
    %1858 = vmatpush2.msra.mxu0 0.0
    %1859 = vmatprep.subr.mxu0 0.0
    %1860 = vmatpush2.msra.mxu0 0.0
    %1861 = vmatprep.subr.mxu0 0.0
    %1862 = vmatpush2.msra.mxu0 0.0
    %1863 = vmatprep.subr.mxu0 0.0
    %1864 = vmatpush2.msra.mxu0 0.0
    %1865 = vmatprep.subr.mxu0 0.0
    %1866 = vmatpush2.msra.mxu0 0.0
    %1867 = vmatprep.subr.mxu0 0.0
    %1868 = vmatpush2.msra.mxu0 0.0
    %1869 = vmatprep.subr.mxu0 0.0
    %1870 = vmatpush2.msra.mxu0 0.0
    %1871 = vmatprep.subr.mxu0 0.0
    %1872 = vmatpush2.msra.mxu0 0.0
    %1873 = vmatprep.subr.mxu0 0.0
    %1874 = vmatpush2.msra.mxu0 0.0
    %1875 = vmatprep.subr.mxu0 0.0
    %1876 = vmatpush2.msra.mxu0 0.0
    %1877 = vmatprep.subr.mxu0 0.0
    %1878 = vmatpush2.msra.mxu0 0.0
    %1879 = vmatprep.subr.mxu0 0.0
    %1880 = vmatpush2.msra.mxu0 0.0
    %1881 = vmatprep.mubr.f32.mxu0 0.0
    %1882 = vmatmul.mubr.f32.gmra.mxu0 %v1745
    %v1883 = vpop.f32.mrf.mxu0
    %v1884 = vadd.f32 0.0, %v1883
    %v1885 = vpop.f32.mrf.mxu0
    %1886 = vdwg.mxu0
    %1887 = vmatprep.subr.mxu0 0.0
    %1888 = vmatpush1.msra.mxu0 0.0
    %1889 = vmatprep.subr.mxu0 0.0
    %1890 = vmatpush1.msra.mxu0 0.0
    %1891 = vmatprep.subr.mxu0 0.0
    %1892 = vmatpush1.msra.mxu0 0.0
    %1893 = vmatprep.subr.mxu0 0.0
    %1894 = vmatpush1.msra.mxu0 0.0
    %1895 = vmatprep.subr.mxu0 0.0
    %1896 = vmatpush1.msra.mxu0 0.0
    %1897 = vmatprep.subr.mxu0 0.0
    %1898 = vmatpush1.msra.mxu0 0.0
    %1899 = vmatprep.subr.mxu0 0.0
    %1900 = vmatpush1.msra.mxu0 0.0
    %1901 = vmatprep.subr.mxu0 0.0
    %1902 = vmatpush1.msra.mxu0 0.0
    %1903 = vmatprep.subr.mxu0 0.0
    %1904 = vmatpush1.msra.mxu0 %v548
    %1905 = vmatprep.subr.mxu0 0.0
    %1906 = vmatpush1.msra.mxu0 %v547
    %1907 = vmatprep.subr.mxu0 0.0
    %1908 = vmatpush1.msra.mxu0 %v546
    %1909 = vmatprep.subr.mxu0 0.0
    %1910 = vmatpush1.msra.mxu0 %v545
    %1911 = vmatprep.subr.mxu0 0.0
    %1912 = vmatpush1.msra.mxu0 %v544
    %1913 = vmatprep.subr.mxu0 0.0
    %1914 = vmatpush1.msra.mxu0 %v543
    %1915 = vmatprep.subr.mxu0 0.0
    %1916 = vmatpush1.msra.mxu0 %v542
    %1917 = vmatprep.subr.mxu0 0.0
    %1918 = vmatpush1.msra.mxu0 %v541
    %1919 = vmatprep.subr.mxu0 0.0
    %1920 = vmatpush2.msra.mxu0 0.0
    %1921 = vmatprep.subr.mxu0 0.0
    %1922 = vmatpush2.msra.mxu0 0.0
    %1923 = vmatprep.subr.mxu0 0.0
    %1924 = vmatpush2.msra.mxu0 0.0
    %1925 = vmatprep.subr.mxu0 0.0
    %1926 = vmatpush2.msra.mxu0 0.0
    %1927 = vmatprep.subr.mxu0 0.0
    %1928 = vmatpush2.msra.mxu0 0.0
    %1929 = vmatprep.subr.mxu0 0.0
    %1930 = vmatpush2.msra.mxu0 0.0
    %1931 = vmatprep.subr.mxu0 0.0
    %1932 = vmatpush2.msra.mxu0 0.0
    %1933 = vmatprep.subr.mxu0 0.0
    %1934 = vmatpush2.msra.mxu0 0.0
    %1935 = vmatprep.subr.mxu0 0.0
    %1936 = vmatpush2.msra.mxu0 0.0
    %1937 = vmatprep.subr.mxu0 0.0
    %1938 = vmatpush2.msra.mxu0 0.0
    %1939 = vmatprep.subr.mxu0 0.0
    %1940 = vmatpush2.msra.mxu0 0.0
    %1941 = vmatprep.subr.mxu0 0.0
    %1942 = vmatpush2.msra.mxu0 0.0
    %1943 = vmatprep.subr.mxu0 0.0
    %1944 = vmatpush2.msra.mxu0 0.0
    %1945 = vmatprep.subr.mxu0 0.0
    %1946 = vmatpush2.msra.mxu0 0.0
    %1947 = vmatprep.subr.mxu0 0.0
    %1948 = vmatpush2.msra.mxu0 0.0
    %1949 = vmatprep.subr.mxu0 0.0
    %1950 = vmatpush2.msra.mxu0 0.0
    %1951 = vmatprep.mubr.f32.mxu0 0.0
    %1952 = vmatmul.mubr.f32.gmra.mxu0 %v1745
    %v1953 = vpop.f32.mrf.mxu0
    %v1954 = vadd.f32 %v554, %v1953
    %v1955 = vpop.f32.mrf.mxu0
    %1956 = vdwg.mxu0
    %v1957 = vadd.f32 %v1741, %v1814
    %v1958 = vxor.u32 %v1957, 2147483648
    %v1959 = vmul.f32 %v1958, 1.442695
    %v1960 = vpow.pop %v1959
    %v1961 = vadd.f32 %v1960, 1.0
    %v1962 = vrcp.pop %v1961
    %v1963 = vmul.f32 1.0, %v1962
    %v1964 = vadd.f32 %v1742, %v1884
    %v1965 = vxor.u32 %v1964, 2147483648
    %v1966 = vmul.f32 %v1965, 1.442695
    %v1967 = vpow.pop %v1966
    %v1968 = vadd.f32 %v1967, 1.0
    %v1969 = vrcp.pop %v1968
    %v1970 = vmul.f32 1.0, %v1969
    %v1971 = vmul.f32 %v1963, %v1954
    %v1972 = vadd.f32 %v1743, %v1971
    %v1973 = vtanh.pop %v1972
    %v1974 = vsub.f32 %v1739, %v1973
    %v1975 = vmul.f32 %v1970, %v1974
    %v1976 = vadd.f32 %v1973, %v1975
    %1977 = vst.msk [vmem:[#allocation3 + $0x28] sm:$0xff] %vm99, %v1976
    %v1978 = vld [vmem:[#allocation2 + $0x30] sm:$0xff]
    %v1979 = vld [vmem:[%s368 + $0x30] sm:$0xff]
    %v1980 = vld [vmem:[%s507 + $0x30] sm:$0xff]
    %v1982 = vsel %vm99, %v1976, 0
    %1984 = vmatprep.subr.mxu0 0.0
    %1985 = vmatpush1.msra.mxu0 0.0
    %1986 = vmatprep.subr.mxu0 0.0
    %1987 = vmatpush1.msra.mxu0 0.0
    %1988 = vmatprep.subr.mxu0 0.0
    %1989 = vmatpush1.msra.mxu0 0.0
    %1990 = vmatprep.subr.mxu0 0.0
    %1991 = vmatpush1.msra.mxu0 0.0
    %1992 = vmatprep.subr.mxu0 0.0
    %1993 = vmatpush1.msra.mxu0 0.0
    %1994 = vmatprep.subr.mxu0 0.0
    %1995 = vmatpush1.msra.mxu0 0.0
    %1996 = vmatprep.subr.mxu0 0.0
    %1997 = vmatpush1.msra.mxu0 0.0
    %1998 = vmatprep.subr.mxu0 0.0
    %1999 = vmatpush1.msra.mxu0 0.0
    %2000 = vmatprep.subr.mxu0 0.0
    %2001 = vmatpush1.msra.mxu0 %v530
    %2002 = vmatprep.subr.mxu0 0.0
    %2003 = vmatpush1.msra.mxu0 %v529
    %2004 = vmatprep.subr.mxu0 0.0
    %2005 = vmatpush1.msra.mxu0 %v528
    %2006 = vmatprep.subr.mxu0 0.0
    %2007 = vmatpush1.msra.mxu0 %v527
    %2008 = vmatprep.subr.mxu0 0.0
    %2009 = vmatpush1.msra.mxu0 %v526
    %2010 = vmatprep.subr.mxu0 0.0
    %2011 = vmatpush1.msra.mxu0 %v525
    %2012 = vmatprep.subr.mxu0 0.0
    %2013 = vmatpush1.msra.mxu0 %v524
    %2014 = vmatprep.subr.mxu0 0.0
    %2015 = vmatpush1.msra.mxu0 %v523
    %2016 = vmatprep.subr.mxu0 0.0
    %2017 = vmatpush2.msra.mxu0 0.0
    %2018 = vmatprep.subr.mxu0 0.0
    %2019 = vmatpush2.msra.mxu0 0.0
    %2020 = vmatprep.subr.mxu0 0.0
    %2021 = vmatpush2.msra.mxu0 0.0
    %2022 = vmatprep.subr.mxu0 0.0
    %2023 = vmatpush2.msra.mxu0 0.0
    %2024 = vmatprep.subr.mxu0 0.0
    %2025 = vmatpush2.msra.mxu0 0.0
    %2026 = vmatprep.subr.mxu0 0.0
    %2027 = vmatpush2.msra.mxu0 0.0
    %2028 = vmatprep.subr.mxu0 0.0
    %2029 = vmatpush2.msra.mxu0 0.0
    %2030 = vmatprep.subr.mxu0 0.0
    %2031 = vmatpush2.msra.mxu0 0.0
    %2032 = vmatprep.subr.mxu0 0.0
    %2033 = vmatpush2.msra.mxu0 0.0
    %2034 = vmatprep.subr.mxu0 0.0
    %2035 = vmatpush2.msra.mxu0 0.0
    %2036 = vmatprep.subr.mxu0 0.0
    %2037 = vmatpush2.msra.mxu0 0.0
    %2038 = vmatprep.subr.mxu0 0.0
    %2039 = vmatpush2.msra.mxu0 0.0
    %2040 = vmatprep.subr.mxu0 0.0
    %2041 = vmatpush2.msra.mxu0 0.0
    %2042 = vmatprep.subr.mxu0 0.0
    %2043 = vmatpush2.msra.mxu0 0.0
    %2044 = vmatprep.subr.mxu0 0.0
    %2045 = vmatpush2.msra.mxu0 0.0
    %2046 = vmatprep.subr.mxu0 0.0
    %2047 = vmatpush2.msra.mxu0 0.0
    %2048 = vmatprep.mubr.f32.mxu0 0.0
    %2049 = vmatmul.mubr.f32.gmra.mxu0 %v1982
    %v2050 = vpop.f32.mrf.mxu0
    %v2051 = vadd.f32 0.0, %v2050
    %v2052 = vpop.f32.mrf.mxu0
    %2053 = vdwg.mxu0
    %2054 = vmatprep.subr.mxu0 0.0
    %2055 = vmatpush1.msra.mxu0 0.0
    %2056 = vmatprep.subr.mxu0 0.0
    %2057 = vmatpush1.msra.mxu0 0.0
    %2058 = vmatprep.subr.mxu0 0.0
    %2059 = vmatpush1.msra.mxu0 0.0
    %2060 = vmatprep.subr.mxu0 0.0
    %2061 = vmatpush1.msra.mxu0 0.0
    %2062 = vmatprep.subr.mxu0 0.0
    %2063 = vmatpush1.msra.mxu0 0.0
    %2064 = vmatprep.subr.mxu0 0.0
    %2065 = vmatpush1.msra.mxu0 0.0
    %2066 = vmatprep.subr.mxu0 0.0
    %2067 = vmatpush1.msra.mxu0 0.0
    %2068 = vmatprep.subr.mxu0 0.0
    %2069 = vmatpush1.msra.mxu0 0.0
    %2070 = vmatprep.subr.mxu0 0.0
    %2071 = vmatpush1.msra.mxu0 %v539
    %2072 = vmatprep.subr.mxu0 0.0
    %2073 = vmatpush1.msra.mxu0 %v538
    %2074 = vmatprep.subr.mxu0 0.0
    %2075 = vmatpush1.msra.mxu0 %v537
    %2076 = vmatprep.subr.mxu0 0.0
    %2077 = vmatpush1.msra.mxu0 %v536
    %2078 = vmatprep.subr.mxu0 0.0
    %2079 = vmatpush1.msra.mxu0 %v535
    %2080 = vmatprep.subr.mxu0 0.0
    %2081 = vmatpush1.msra.mxu0 %v534
    %2082 = vmatprep.subr.mxu0 0.0
    %2083 = vmatpush1.msra.mxu0 %v533
    %2084 = vmatprep.subr.mxu0 0.0
    %2085 = vmatpush1.msra.mxu0 %v532
    %2086 = vmatprep.subr.mxu0 0.0
    %2087 = vmatpush2.msra.mxu0 0.0
    %2088 = vmatprep.subr.mxu0 0.0
    %2089 = vmatpush2.msra.mxu0 0.0
    %2090 = vmatprep.subr.mxu0 0.0
    %2091 = vmatpush2.msra.mxu0 0.0
    %2092 = vmatprep.subr.mxu0 0.0
    %2093 = vmatpush2.msra.mxu0 0.0
    %2094 = vmatprep.subr.mxu0 0.0
    %2095 = vmatpush2.msra.mxu0 0.0
    %2096 = vmatprep.subr.mxu0 0.0
    %2097 = vmatpush2.msra.mxu0 0.0
    %2098 = vmatprep.subr.mxu0 0.0
    %2099 = vmatpush2.msra.mxu0 0.0
    %2100 = vmatprep.subr.mxu0 0.0
    %2101 = vmatpush2.msra.mxu0 0.0
    %2102 = vmatprep.subr.mxu0 0.0
    %2103 = vmatpush2.msra.mxu0 0.0
    %2104 = vmatprep.subr.mxu0 0.0
    %2105 = vmatpush2.msra.mxu0 0.0
    %2106 = vmatprep.subr.mxu0 0.0
    %2107 = vmatpush2.msra.mxu0 0.0
    %2108 = vmatprep.subr.mxu0 0.0
    %2109 = vmatpush2.msra.mxu0 0.0
    %2110 = vmatprep.subr.mxu0 0.0
    %2111 = vmatpush2.msra.mxu0 0.0
    %2112 = vmatprep.subr.mxu0 0.0
    %2113 = vmatpush2.msra.mxu0 0.0
    %2114 = vmatprep.subr.mxu0 0.0
    %2115 = vmatpush2.msra.mxu0 0.0
    %2116 = vmatprep.subr.mxu0 0.0
    %2117 = vmatpush2.msra.mxu0 0.0
    %2118 = vmatprep.mubr.f32.mxu0 0.0
    %2119 = vmatmul.mubr.f32.gmra.mxu0 %v1982
    %v2120 = vpop.f32.mrf.mxu0
    %v2121 = vadd.f32 0.0, %v2120
    %v2122 = vpop.f32.mrf.mxu0
    %2123 = vdwg.mxu0
    %2124 = vmatprep.subr.mxu0 0.0
    %2125 = vmatpush1.msra.mxu0 0.0
    %2126 = vmatprep.subr.mxu0 0.0
    %2127 = vmatpush1.msra.mxu0 0.0
    %2128 = vmatprep.subr.mxu0 0.0
    %2129 = vmatpush1.msra.mxu0 0.0
    %2130 = vmatprep.subr.mxu0 0.0
    %2131 = vmatpush1.msra.mxu0 0.0
    %2132 = vmatprep.subr.mxu0 0.0
    %2133 = vmatpush1.msra.mxu0 0.0
    %2134 = vmatprep.subr.mxu0 0.0
    %2135 = vmatpush1.msra.mxu0 0.0
    %2136 = vmatprep.subr.mxu0 0.0
    %2137 = vmatpush1.msra.mxu0 0.0
    %2138 = vmatprep.subr.mxu0 0.0
    %2139 = vmatpush1.msra.mxu0 0.0
    %2140 = vmatprep.subr.mxu0 0.0
    %2141 = vmatpush1.msra.mxu0 %v548
    %2142 = vmatprep.subr.mxu0 0.0
    %2143 = vmatpush1.msra.mxu0 %v547
    %2144 = vmatprep.subr.mxu0 0.0
    %2145 = vmatpush1.msra.mxu0 %v546
    %2146 = vmatprep.subr.mxu0 0.0
    %2147 = vmatpush1.msra.mxu0 %v545
    %2148 = vmatprep.subr.mxu0 0.0
    %2149 = vmatpush1.msra.mxu0 %v544
    %2150 = vmatprep.subr.mxu0 0.0
    %2151 = vmatpush1.msra.mxu0 %v543
    %2152 = vmatprep.subr.mxu0 0.0
    %2153 = vmatpush1.msra.mxu0 %v542
    %2154 = vmatprep.subr.mxu0 0.0
    %2155 = vmatpush1.msra.mxu0 %v541
    %2156 = vmatprep.subr.mxu0 0.0
    %2157 = vmatpush2.msra.mxu0 0.0
    %2158 = vmatprep.subr.mxu0 0.0
    %2159 = vmatpush2.msra.mxu0 0.0
    %2160 = vmatprep.subr.mxu0 0.0
    %2161 = vmatpush2.msra.mxu0 0.0
    %2162 = vmatprep.subr.mxu0 0.0
    %2163 = vmatpush2.msra.mxu0 0.0
    %2164 = vmatprep.subr.mxu0 0.0
    %2165 = vmatpush2.msra.mxu0 0.0
    %2166 = vmatprep.subr.mxu0 0.0
    %2167 = vmatpush2.msra.mxu0 0.0
    %2168 = vmatprep.subr.mxu0 0.0
    %2169 = vmatpush2.msra.mxu0 0.0
    %2170 = vmatprep.subr.mxu0 0.0
    %2171 = vmatpush2.msra.mxu0 0.0
    %2172 = vmatprep.subr.mxu0 0.0
    %2173 = vmatpush2.msra.mxu0 0.0
    %2174 = vmatprep.subr.mxu0 0.0
    %2175 = vmatpush2.msra.mxu0 0.0
    %2176 = vmatprep.subr.mxu0 0.0
    %2177 = vmatpush2.msra.mxu0 0.0
    %2178 = vmatprep.subr.mxu0 0.0
    %2179 = vmatpush2.msra.mxu0 0.0
    %2180 = vmatprep.subr.mxu0 0.0
    %2181 = vmatpush2.msra.mxu0 0.0
    %2182 = vmatprep.subr.mxu0 0.0
    %2183 = vmatpush2.msra.mxu0 0.0
    %2184 = vmatprep.subr.mxu0 0.0
    %2185 = vmatpush2.msra.mxu0 0.0
    %2186 = vmatprep.subr.mxu0 0.0
    %2187 = vmatpush2.msra.mxu0 0.0
    %2188 = vmatprep.mubr.f32.mxu0 0.0
    %2189 = vmatmul.mubr.f32.gmra.mxu0 %v1982
    %v2190 = vpop.f32.mrf.mxu0
    %v2191 = vadd.f32 %v554, %v2190
    %v2192 = vpop.f32.mrf.mxu0
    %2193 = vdwg.mxu0
    %v2194 = vadd.f32 %v1978, %v2051
    %v2195 = vxor.u32 %v2194, 2147483648
    %v2196 = vmul.f32 %v2195, 1.442695
    %v2197 = vpow.pop %v2196
    %v2198 = vadd.f32 %v2197, 1.0
    %v2199 = vrcp.pop %v2198
    %v2200 = vmul.f32 1.0, %v2199
    %v2201 = vadd.f32 %v1979, %v2121
    %v2202 = vxor.u32 %v2201, 2147483648
    %v2203 = vmul.f32 %v2202, 1.442695
    %v2204 = vpow.pop %v2203
    %v2205 = vadd.f32 %v2204, 1.0
    %v2206 = vrcp.pop %v2205
    %v2207 = vmul.f32 1.0, %v2206
    %v2208 = vmul.f32 %v2200, %v2191
    %v2209 = vadd.f32 %v1980, %v2208
    %v2210 = vtanh.pop %v2209
    %v2211 = vsub.f32 %v1976, %v2210
    %v2212 = vmul.f32 %v2207, %v2211
    %v2213 = vadd.f32 %v2210, %v2212
    %2214 = vst.msk [vmem:[#allocation3 + $0x30] sm:$0xff] %vm99, %v2213
    %v2215 = vld [vmem:[#allocation2 + $0x38] sm:$0xff]
    %v2216 = vld [vmem:[%s368 + $0x38] sm:$0xff]
    %v2217 = vld [vmem:[%s507 + $0x38] sm:$0xff]
    %v2219 = vsel %vm99, %v2213, 0
    %2221 = vmatprep.subr.mxu0 0.0
    %2222 = vmatpush1.msra.mxu0 0.0
    %2223 = vmatprep.subr.mxu0 0.0
    %2224 = vmatpush1.msra.mxu0 0.0
    %2225 = vmatprep.subr.mxu0 0.0
    %2226 = vmatpush1.msra.mxu0 0.0
    %2227 = vmatprep.subr.mxu0 0.0
    %2228 = vmatpush1.msra.mxu0 0.0
    %2229 = vmatprep.subr.mxu0 0.0
    %2230 = vmatpush1.msra.mxu0 0.0
    %2231 = vmatprep.subr.mxu0 0.0
    %2232 = vmatpush1.msra.mxu0 0.0
    %2233 = vmatprep.subr.mxu0 0.0
    %2234 = vmatpush1.msra.mxu0 0.0
    %2235 = vmatprep.subr.mxu0 0.0
    %2236 = vmatpush1.msra.mxu0 0.0
    %2237 = vmatprep.subr.mxu0 0.0
    %2238 = vmatpush1.msra.mxu0 %v530
    %2239 = vmatprep.subr.mxu0 0.0
    %2240 = vmatpush1.msra.mxu0 %v529
    %2241 = vmatprep.subr.mxu0 0.0
    %2242 = vmatpush1.msra.mxu0 %v528
    %2243 = vmatprep.subr.mxu0 0.0
    %2244 = vmatpush1.msra.mxu0 %v527
    %2245 = vmatprep.subr.mxu0 0.0
    %2246 = vmatpush1.msra.mxu0 %v526
    %2247 = vmatprep.subr.mxu0 0.0
    %2248 = vmatpush1.msra.mxu0 %v525
    %2249 = vmatprep.subr.mxu0 0.0
    %2250 = vmatpush1.msra.mxu0 %v524
    %2251 = vmatprep.subr.mxu0 0.0
    %2252 = vmatpush1.msra.mxu0 %v523
    %2253 = vmatprep.subr.mxu0 0.0
    %2254 = vmatpush2.msra.mxu0 0.0
    %2255 = vmatprep.subr.mxu0 0.0
    %2256 = vmatpush2.msra.mxu0 0.0
    %2257 = vmatprep.subr.mxu0 0.0
    %2258 = vmatpush2.msra.mxu0 0.0
    %2259 = vmatprep.subr.mxu0 0.0
    %2260 = vmatpush2.msra.mxu0 0.0
    %2261 = vmatprep.subr.mxu0 0.0
    %2262 = vmatpush2.msra.mxu0 0.0
    %2263 = vmatprep.subr.mxu0 0.0
    %2264 = vmatpush2.msra.mxu0 0.0
    %2265 = vmatprep.subr.mxu0 0.0
    %2266 = vmatpush2.msra.mxu0 0.0
    %2267 = vmatprep.subr.mxu0 0.0
    %2268 = vmatpush2.msra.mxu0 0.0
    %2269 = vmatprep.subr.mxu0 0.0
    %2270 = vmatpush2.msra.mxu0 0.0
    %2271 = vmatprep.subr.mxu0 0.0
    %2272 = vmatpush2.msra.mxu0 0.0
    %2273 = vmatprep.subr.mxu0 0.0
    %2274 = vmatpush2.msra.mxu0 0.0
    %2275 = vmatprep.subr.mxu0 0.0
    %2276 = vmatpush2.msra.mxu0 0.0
    %2277 = vmatprep.subr.mxu0 0.0
    %2278 = vmatpush2.msra.mxu0 0.0
    %2279 = vmatprep.subr.mxu0 0.0
    %2280 = vmatpush2.msra.mxu0 0.0
    %2281 = vmatprep.subr.mxu0 0.0
    %2282 = vmatpush2.msra.mxu0 0.0
    %2283 = vmatprep.subr.mxu0 0.0
    %2284 = vmatpush2.msra.mxu0 0.0
    %2285 = vmatprep.mubr.f32.mxu0 0.0
    %2286 = vmatmul.mubr.f32.gmra.mxu0 %v2219
    %v2287 = vpop.f32.mrf.mxu0
    %v2288 = vadd.f32 0.0, %v2287
    %v2289 = vpop.f32.mrf.mxu0
    %2290 = vdwg.mxu0
    %2291 = vmatprep.subr.mxu0 0.0
    %2292 = vmatpush1.msra.mxu0 0.0
    %2293 = vmatprep.subr.mxu0 0.0
    %2294 = vmatpush1.msra.mxu0 0.0
    %2295 = vmatprep.subr.mxu0 0.0
    %2296 = vmatpush1.msra.mxu0 0.0
    %2297 = vmatprep.subr.mxu0 0.0
    %2298 = vmatpush1.msra.mxu0 0.0
    %2299 = vmatprep.subr.mxu0 0.0
    %2300 = vmatpush1.msra.mxu0 0.0
    %2301 = vmatprep.subr.mxu0 0.0
    %2302 = vmatpush1.msra.mxu0 0.0
    %2303 = vmatprep.subr.mxu0 0.0
    %2304 = vmatpush1.msra.mxu0 0.0
    %2305 = vmatprep.subr.mxu0 0.0
    %2306 = vmatpush1.msra.mxu0 0.0
    %2307 = vmatprep.subr.mxu0 0.0
    %2308 = vmatpush1.msra.mxu0 %v539
    %2309 = vmatprep.subr.mxu0 0.0
    %2310 = vmatpush1.msra.mxu0 %v538
    %2311 = vmatprep.subr.mxu0 0.0
    %2312 = vmatpush1.msra.mxu0 %v537
    %2313 = vmatprep.subr.mxu0 0.0
    %2314 = vmatpush1.msra.mxu0 %v536
    %2315 = vmatprep.subr.mxu0 0.0
    %2316 = vmatpush1.msra.mxu0 %v535
    %2317 = vmatprep.subr.mxu0 0.0
    %2318 = vmatpush1.msra.mxu0 %v534
    %2319 = vmatprep.subr.mxu0 0.0
    %2320 = vmatpush1.msra.mxu0 %v533
    %2321 = vmatprep.subr.mxu0 0.0
    %2322 = vmatpush1.msra.mxu0 %v532
    %2323 = vmatprep.subr.mxu0 0.0
    %2324 = vmatpush2.msra.mxu0 0.0
    %2325 = vmatprep.subr.mxu0 0.0
    %2326 = vmatpush2.msra.mxu0 0.0
    %2327 = vmatprep.subr.mxu0 0.0
    %2328 = vmatpush2.msra.mxu0 0.0
    %2329 = vmatprep.subr.mxu0 0.0
    %2330 = vmatpush2.msra.mxu0 0.0
    %2331 = vmatprep.subr.mxu0 0.0
    %2332 = vmatpush2.msra.mxu0 0.0
    %2333 = vmatprep.subr.mxu0 0.0
    %2334 = vmatpush2.msra.mxu0 0.0
    %2335 = vmatprep.subr.mxu0 0.0
    %2336 = vmatpush2.msra.mxu0 0.0
    %2337 = vmatprep.subr.mxu0 0.0
    %2338 = vmatpush2.msra.mxu0 0.0
    %2339 = vmatprep.subr.mxu0 0.0
    %2340 = vmatpush2.msra.mxu0 0.0
    %2341 = vmatprep.subr.mxu0 0.0
    %2342 = vmatpush2.msra.mxu0 0.0
    %2343 = vmatprep.subr.mxu0 0.0
    %2344 = vmatpush2.msra.mxu0 0.0
    %2345 = vmatprep.subr.mxu0 0.0
    %2346 = vmatpush2.msra.mxu0 0.0
    %2347 = vmatprep.subr.mxu0 0.0
    %2348 = vmatpush2.msra.mxu0 0.0
    %2349 = vmatprep.subr.mxu0 0.0
    %2350 = vmatpush2.msra.mxu0 0.0
    %2351 = vmatprep.subr.mxu0 0.0
    %2352 = vmatpush2.msra.mxu0 0.0
    %2353 = vmatprep.subr.mxu0 0.0
    %2354 = vmatpush2.msra.mxu0 0.0
    %2355 = vmatprep.mubr.f32.mxu0 0.0
    %2356 = vmatmul.mubr.f32.gmra.mxu0 %v2219
    %v2357 = vpop.f32.mrf.mxu0
    %v2358 = vadd.f32 0.0, %v2357
    %v2359 = vpop.f32.mrf.mxu0
    %2360 = vdwg.mxu0
    %2361 = vmatprep.subr.mxu0 0.0
    %2362 = vmatpush1.msra.mxu0 0.0
    %2363 = vmatprep.subr.mxu0 0.0
    %2364 = vmatpush1.msra.mxu0 0.0
    %2365 = vmatprep.subr.mxu0 0.0
    %2366 = vmatpush1.msra.mxu0 0.0
    %2367 = vmatprep.subr.mxu0 0.0
    %2368 = vmatpush1.msra.mxu0 0.0
    %2369 = vmatprep.subr.mxu0 0.0
    %2370 = vmatpush1.msra.mxu0 0.0
    %2371 = vmatprep.subr.mxu0 0.0
    %2372 = vmatpush1.msra.mxu0 0.0
    %2373 = vmatprep.subr.mxu0 0.0
    %2374 = vmatpush1.msra.mxu0 0.0
    %2375 = vmatprep.subr.mxu0 0.0
    %2376 = vmatpush1.msra.mxu0 0.0
    %2377 = vmatprep.subr.mxu0 0.0
    %2378 = vmatpush1.msra.mxu0 %v548
    %2379 = vmatprep.subr.mxu0 0.0
    %2380 = vmatpush1.msra.mxu0 %v547
    %2381 = vmatprep.subr.mxu0 0.0
    %2382 = vmatpush1.msra.mxu0 %v546
    %2383 = vmatprep.subr.mxu0 0.0
    %2384 = vmatpush1.msra.mxu0 %v545
    %2385 = vmatprep.subr.mxu0 0.0
    %2386 = vmatpush1.msra.mxu0 %v544
    %2387 = vmatprep.subr.mxu0 0.0
    %2388 = vmatpush1.msra.mxu0 %v543
    %2389 = vmatprep.subr.mxu0 0.0
    %2390 = vmatpush1.msra.mxu0 %v542
    %2391 = vmatprep.subr.mxu0 0.0
    %2392 = vmatpush1.msra.mxu0 %v541
    %2393 = vmatprep.subr.mxu0 0.0
    %2394 = vmatpush2.msra.mxu0 0.0
    %2395 = vmatprep.subr.mxu0 0.0
    %2396 = vmatpush2.msra.mxu0 0.0
    %2397 = vmatprep.subr.mxu0 0.0
    %2398 = vmatpush2.msra.mxu0 0.0
    %2399 = vmatprep.subr.mxu0 0.0
    %2400 = vmatpush2.msra.mxu0 0.0
    %2401 = vmatprep.subr.mxu0 0.0
    %2402 = vmatpush2.msra.mxu0 0.0
    %2403 = vmatprep.subr.mxu0 0.0
    %2404 = vmatpush2.msra.mxu0 0.0
    %2405 = vmatprep.subr.mxu0 0.0
    %2406 = vmatpush2.msra.mxu0 0.0
    %2407 = vmatprep.subr.mxu0 0.0
    %2408 = vmatpush2.msra.mxu0 0.0
    %2409 = vmatprep.subr.mxu0 0.0
    %2410 = vmatpush2.msra.mxu0 0.0
    %2411 = vmatprep.subr.mxu0 0.0
    %2412 = vmatpush2.msra.mxu0 0.0
    %2413 = vmatprep.subr.mxu0 0.0
    %2414 = vmatpush2.msra.mxu0 0.0
    %2415 = vmatprep.subr.mxu0 0.0
    %2416 = vmatpush2.msra.mxu0 0.0
    %2417 = vmatprep.subr.mxu0 0.0
    %2418 = vmatpush2.msra.mxu0 0.0
    %2419 = vmatprep.subr.mxu0 0.0
    %2420 = vmatpush2.msra.mxu0 0.0
    %2421 = vmatprep.subr.mxu0 0.0
    %2422 = vmatpush2.msra.mxu0 0.0
    %2423 = vmatprep.subr.mxu0 0.0
    %2424 = vmatpush2.msra.mxu0 0.0
    %2425 = vmatprep.mubr.f32.mxu0 0.0
    %2426 = vmatmul.mubr.f32.gmra.mxu0 %v2219
    %v2427 = vpop.f32.mrf.mxu0
    %v2428 = vadd.f32 %v554, %v2427
    %v2429 = vpop.f32.mrf.mxu0
    %2430 = vdwg.mxu0
    %v2431 = vadd.f32 %v2215, %v2288
    %v2432 = vxor.u32 %v2431, 2147483648
    %v2433 = vmul.f32 %v2432, 1.442695
    %v2434 = vpow.pop %v2433
    %v2435 = vadd.f32 %v2434, 1.0
    %v2436 = vrcp.pop %v2435
    %v2437 = vmul.f32 1.0, %v2436
    %v2438 = vadd.f32 %v2216, %v2358
    %v2439 = vxor.u32 %v2438, 2147483648
    %v2440 = vmul.f32 %v2439, 1.442695
    %v2441 = vpow.pop %v2440
    %v2442 = vadd.f32 %v2441, 1.0
    %v2443 = vrcp.pop %v2442
    %v2444 = vmul.f32 1.0, %v2443
    %v2445 = vmul.f32 %v2437, %v2428
    %v2446 = vadd.f32 %v2217, %v2445
    %v2447 = vtanh.pop %v2446
    %v2448 = vsub.f32 %v2213, %v2447
    %v2449 = vmul.f32 %v2444, %v2448
    %v2450 = vadd.f32 %v2447, %v2449
    %2451 = vst.msk [vmem:[#allocation3 + $0x38] sm:$0xff] %vm99, %v2450
    %v2452 = vld [vmem:[#allocation3] sm:$0xff]
    %v2453 = vld [vmem:[#allocation3 + $0x38] sm:$0xff]
    %v2454 = vsel %vm75, %v2453, %v2452
    %2455 = vst.msk [vmem:[#allocation3] sm:$0xff] %vm99, %v2454
    %v2456 = vsel %vm75, %v2452, %v2453
    %2457 = vst.msk [vmem:[#allocation3 + $0x38] sm:$0xff] %vm99, %v2456
    %v2458 = vld [vmem:[#allocation3 + $0x8] sm:$0xff]
    %v2459 = vld [vmem:[#allocation3 + $0x30] sm:$0xff]
    %v2460 = vsel %vm75, %v2459, %v2458
    %2461 = vst.msk [vmem:[#allocation3 + $0x8] sm:$0xff] %vm99, %v2460
    %v2462 = vsel %vm75, %v2458, %v2459
    %2463 = vst.msk [vmem:[#allocation3 + $0x30] sm:$0xff] %vm99, %v2462
    %v2464 = vld [vmem:[#allocation3 + $0x10] sm:$0xff]
    %v2465 = vld [vmem:[#allocation3 + $0x28] sm:$0xff]
    %v2466 = vsel %vm75, %v2465, %v2464
    %2467 = vst.msk [vmem:[#allocation3 + $0x10] sm:$0xff] %vm99, %v2466
    %v2468 = vsel %vm75, %v2464, %v2465
    %2469 = vst.msk [vmem:[#allocation3 + $0x28] sm:$0xff] %vm99, %v2468
    %v2470 = vld [vmem:[#allocation3 + $0x18] sm:$0xff]
    %v2471 = vld [vmem:[#allocation3 + $0x20] sm:$0xff]
    %v2472 = vsel %vm75, %v2471, %v2470
    %2473 = vst.msk [vmem:[#allocation3 + $0x18] sm:$0xff] %vm99, %v2472
    %v2474 = vsel %vm75, %v2470, %v2471
    %2475 = vst.msk [vmem:[#allocation3 + $0x20] sm:$0xff] %vm99, %v2474
    %v2476 = vld [vmem:[#allocation3] sm:$0xff]
    %v2477 = vld [vmem:[#allocation3 + $0x8] sm:$0xff]
    %v2478 = vld [vmem:[#allocation3 + $0x10] sm:$0xff]
    %v2479 = vld [vmem:[#allocation3 + $0x18] sm:$0xff]
    %v2480 = vld [vmem:[#allocation3 + $0x20] sm:$0xff]
    %v2481 = vld [vmem:[#allocation3 + $0x28] sm:$0xff]
    %v2482 = vld [vmem:[#allocation3 + $0x30] sm:$0xff]
    %v2483 = vld [vmem:[#allocation3 + $0x38] sm:$0xff]
    %s2484 = scalar_lea.vmem [#allocation7], 192
    %v2485 = vld [vmem:[%s2484] sm:$0xff]
    %v2486 = vld [vmem:[%s2484 + $0x8] sm:$0xff]
    %v2487 = vld [vmem:[%s2484 + $0x10] sm:$0xff]
    %v2488 = vld [vmem:[%s2484 + $0x18] sm:$0xff]
    %v2489 = vld [vmem:[%s2484 + $0x20] sm:$0xff]
    %v2490 = vld [vmem:[%s2484 + $0x28] sm:$0xff]
    %v2491 = vld [vmem:[%s2484 + $0x30] sm:$0xff]
    %v2492 = vld [vmem:[%s2484 + $0x38] sm:$0xff]
    %s2493 = scalar_lea.vmem %s4, 3
    %v2494 = vld [vmem:[%s2493] sm:$0x1]
    %v2496 = vlaneseq
    %v2497 = vshrl.u32 %v2496, 7
    %v2498 = vsub.s32 0, %v2497
    %v2499 = vrot.slane %v2494, %v2498
    %v2502 = vsel %vm99, %v2476, 0
    %v2505 = vsel %vm99, %v2477, 0
    %v2508 = vsel %vm99, %v2478, 0
    %v2511 = vsel %vm99, %v2479, 0
    %v2514 = vsel %vm99, %v2480, 0
    %v2517 = vsel %vm99, %v2481, 0
    %v2520 = vsel %vm99, %v2482, 0
    %v2523 = vsel %vm99, %v2483, 0
    %2525 = vmatprep.subr.mxu0 0.0
    %2526 = vmatpush1.msra.mxu0 0.0
    %2527 = vmatprep.subr.mxu0 0.0
    %2528 = vmatpush1.msra.mxu0 0.0
    %2529 = vmatprep.subr.mxu0 0.0
    %2530 = vmatpush1.msra.mxu0 0.0
    %2531 = vmatprep.subr.mxu0 0.0
    %2532 = vmatpush1.msra.mxu0 0.0
    %2533 = vmatprep.subr.mxu0 0.0
    %2534 = vmatpush1.msra.mxu0 0.0
    %2535 = vmatprep.subr.mxu0 0.0
    %2536 = vmatpush1.msra.mxu0 0.0
    %2537 = vmatprep.subr.mxu0 0.0
    %2538 = vmatpush1.msra.mxu0 0.0
    %2539 = vmatprep.subr.mxu0 0.0
    %2540 = vmatpush1.msra.mxu0 0.0
    %2541 = vmatprep.subr.mxu0 0.0
    %2542 = vmatpush1.msra.mxu0 %v2492
    %2543 = vmatprep.subr.mxu0 0.0
    %2544 = vmatpush1.msra.mxu0 %v2491
    %2545 = vmatprep.subr.mxu0 0.0
    %2546 = vmatpush1.msra.mxu0 %v2490
    %2547 = vmatprep.subr.mxu0 0.0
    %2548 = vmatpush1.msra.mxu0 %v2489
    %2549 = vmatprep.subr.mxu0 0.0
    %2550 = vmatpush1.msra.mxu0 %v2488
    %2551 = vmatprep.subr.mxu0 0.0
    %2552 = vmatpush1.msra.mxu0 %v2487
    %2553 = vmatprep.subr.mxu0 0.0
    %2554 = vmatpush1.msra.mxu0 %v2486
    %2555 = vmatprep.subr.mxu0 0.0
    %2556 = vmatpush1.msra.mxu0 %v2485
    %2557 = vmatprep.subr.mxu0 0.0
    %2558 = vmatpush2.msra.mxu0 0.0
    %2559 = vmatprep.subr.mxu0 0.0
    %2560 = vmatpush2.msra.mxu0 0.0
    %2561 = vmatprep.subr.mxu0 0.0
    %2562 = vmatpush2.msra.mxu0 0.0
    %2563 = vmatprep.subr.mxu0 0.0
    %2564 = vmatpush2.msra.mxu0 0.0
    %2565 = vmatprep.subr.mxu0 0.0
    %2566 = vmatpush2.msra.mxu0 0.0
    %2567 = vmatprep.subr.mxu0 0.0
    %2568 = vmatpush2.msra.mxu0 0.0
    %2569 = vmatprep.subr.mxu0 0.0
    %2570 = vmatpush2.msra.mxu0 0.0
    %2571 = vmatprep.subr.mxu0 0.0
    %2572 = vmatpush2.msra.mxu0 0.0
    %2573 = vmatprep.subr.mxu0 0.0
    %2574 = vmatpush2.msra.mxu0 0.0
    %2575 = vmatprep.subr.mxu0 0.0
    %2576 = vmatpush2.msra.mxu0 0.0
    %2577 = vmatprep.subr.mxu0 0.0
    %2578 = vmatpush2.msra.mxu0 0.0
    %2579 = vmatprep.subr.mxu0 0.0
    %2580 = vmatpush2.msra.mxu0 0.0
    %2581 = vmatprep.subr.mxu0 0.0
    %2582 = vmatpush2.msra.mxu0 0.0
    %2583 = vmatprep.subr.mxu0 0.0
    %2584 = vmatpush2.msra.mxu0 0.0
    %2585 = vmatprep.subr.mxu0 0.0
    %2586 = vmatpush2.msra.mxu0 0.0
    %2587 = vmatprep.subr.mxu0 0.0
    %2588 = vmatpush2.msra.mxu0 0.0
    %2589 = vmatprep.mubr.f32.mxu0 0.0
    %2590 = vmatmul.mubr.f32.gmra.mxu0 %v2502
    %v2591 = vpop.f32.mrf.mxu0
    %v2592 = vadd.f32 %v2499, %v2591
    %v2593 = vpop.f32.mrf.mxu0
    %2594 = vmatprep.mubr.f32.mxu0 0.0
    %2595 = vmatmul.mubr.f32.gmra.mxu0 %v2505
    %v2596 = vpop.f32.mrf.mxu0
    %v2597 = vadd.f32 %v2499, %v2596
    %v2598 = vpop.f32.mrf.mxu0
    %2599 = vmatprep.mubr.f32.mxu0 0.0
    %2600 = vmatmul.mubr.f32.gmra.mxu0 %v2508
    %v2601 = vpop.f32.mrf.mxu0
    %v2602 = vadd.f32 %v2499, %v2601
    %v2603 = vpop.f32.mrf.mxu0
    %2604 = vmatprep.mubr.f32.mxu0 0.0
    %2605 = vmatmul.mubr.f32.gmra.mxu0 %v2511
    %v2606 = vpop.f32.mrf.mxu0
    %v2607 = vadd.f32 %v2499, %v2606
    %v2608 = vpop.f32.mrf.mxu0
    %2609 = vmatprep.mubr.f32.mxu0 0.0
    %2610 = vmatmul.mubr.f32.gmra.mxu0 %v2514
    %v2611 = vpop.f32.mrf.mxu0
    %v2612 = vadd.f32 %v2499, %v2611
    %v2613 = vpop.f32.mrf.mxu0
    %2614 = vmatprep.mubr.f32.mxu0 0.0
    %2615 = vmatmul.mubr.f32.gmra.mxu0 %v2517
    %v2616 = vpop.f32.mrf.mxu0
    %v2617 = vadd.f32 %v2499, %v2616
    %v2618 = vpop.f32.mrf.mxu0
    %2619 = vmatprep.mubr.f32.mxu0 0.0
    %2620 = vmatmul.mubr.f32.gmra.mxu0 %v2520
    %v2621 = vpop.f32.mrf.mxu0
    %v2622 = vadd.f32 %v2499, %v2621
    %v2623 = vpop.f32.mrf.mxu0
    %2624 = vmatprep.mubr.f32.mxu0 0.0
    %2625 = vmatmul.mubr.f32.gmra.mxu0 %v2523
    %v2626 = vpop.f32.mrf.mxu0
    %v2627 = vadd.f32 %v2499, %v2626
    %v2628 = vpop.f32.mrf.mxu0
    %2629 = vdwg.mxu0
    %v2630 = vsel %vm75, %v2627, %v2592
    %2631 = vst.msk [vmem:[#allocation2] sm:$0xff] %vm99, %v2630
    %v2632 = vsel %vm75, %v2622, %v2597
    %2633 = vst.msk [vmem:[#allocation2 + $0x8] sm:$0xff] %vm99, %v2632
    %v2634 = vsel %vm75, %v2617, %v2602
    %2635 = vst.msk [vmem:[#allocation2 + $0x10] sm:$0xff] %vm99, %v2634
    %v2636 = vsel %vm75, %v2612, %v2607
    %2637 = vst.msk [vmem:[#allocation2 + $0x18] sm:$0xff] %vm99, %v2636
    %v2638 = vsel %vm75, %v2607, %v2612
    %2639 = vst.msk [vmem:[#allocation2 + $0x20] sm:$0xff] %vm99, %v2638
    %v2640 = vsel %vm75, %v2602, %v2617
    %2641 = vst.msk [vmem:[#allocation2 + $0x28] sm:$0xff] %vm99, %v2640
    %v2642 = vsel %vm75, %v2597, %v2622
    %2643 = vst.msk [vmem:[#allocation2 + $0x30] sm:$0xff] %vm99, %v2642
    %v2644 = vsel %vm75, %v2592, %v2627
    %2645 = vst.msk [vmem:[#allocation2 + $0x38] sm:$0xff] %vm99, %v2644
    %s2646 = scalar_lea.vmem [#allocation7], 256
    %v2647 = vld [vmem:[%s2646] sm:$0xff]
    %v2648 = vld [vmem:[%s2646 + $0x8] sm:$0xff]
    %v2649 = vld [vmem:[%s2646 + $0x10] sm:$0xff]
    %v2650 = vld [vmem:[%s2646 + $0x18] sm:$0xff]
    %v2651 = vld [vmem:[%s2646 + $0x20] sm:$0xff]
    %v2652 = vld [vmem:[%s2646 + $0x28] sm:$0xff]
    %v2653 = vld [vmem:[%s2646 + $0x30] sm:$0xff]
    %v2654 = vld [vmem:[%s2646 + $0x38] sm:$0xff]
    %s2655 = scalar_lea.vmem %s4, 4
    %v2656 = vld [vmem:[%s2655] sm:$0x1]
    %v2658 = vlaneseq
    %v2659 = vshrl.u32 %v2658, 7
    %v2660 = vsub.s32 0, %v2659
    %v2661 = vrot.slane %v2656, %v2660
    %2663 = vmatprep.subr.mxu0 0.0
    %2664 = vmatpush1.msra.mxu0 0.0
    %2665 = vmatprep.subr.mxu0 0.0
    %2666 = vmatpush1.msra.mxu0 0.0
    %2667 = vmatprep.subr.mxu0 0.0
    %2668 = vmatpush1.msra.mxu0 0.0
    %2669 = vmatprep.subr.mxu0 0.0
    %2670 = vmatpush1.msra.mxu0 0.0
    %2671 = vmatprep.subr.mxu0 0.0
    %2672 = vmatpush1.msra.mxu0 0.0
    %2673 = vmatprep.subr.mxu0 0.0
    %2674 = vmatpush1.msra.mxu0 0.0
    %2675 = vmatprep.subr.mxu0 0.0
    %2676 = vmatpush1.msra.mxu0 0.0
    %2677 = vmatprep.subr.mxu0 0.0
    %2678 = vmatpush1.msra.mxu0 0.0
    %2679 = vmatprep.subr.mxu0 0.0
    %2680 = vmatpush1.msra.mxu0 %v2654
    %2681 = vmatprep.subr.mxu0 0.0
    %2682 = vmatpush1.msra.mxu0 %v2653
    %2683 = vmatprep.subr.mxu0 0.0
    %2684 = vmatpush1.msra.mxu0 %v2652
    %2685 = vmatprep.subr.mxu0 0.0
    %2686 = vmatpush1.msra.mxu0 %v2651
    %2687 = vmatprep.subr.mxu0 0.0
    %2688 = vmatpush1.msra.mxu0 %v2650
    %2689 = vmatprep.subr.mxu0 0.0
    %2690 = vmatpush1.msra.mxu0 %v2649
    %2691 = vmatprep.subr.mxu0 0.0
    %2692 = vmatpush1.msra.mxu0 %v2648
    %2693 = vmatprep.subr.mxu0 0.0
    %2694 = vmatpush1.msra.mxu0 %v2647
    %2695 = vmatprep.subr.mxu0 0.0
    %2696 = vmatpush2.msra.mxu0 0.0
    %2697 = vmatprep.subr.mxu0 0.0
    %2698 = vmatpush2.msra.mxu0 0.0
    %2699 = vmatprep.subr.mxu0 0.0
    %2700 = vmatpush2.msra.mxu0 0.0
    %2701 = vmatprep.subr.mxu0 0.0
    %2702 = vmatpush2.msra.mxu0 0.0
    %2703 = vmatprep.subr.mxu0 0.0
    %2704 = vmatpush2.msra.mxu0 0.0
    %2705 = vmatprep.subr.mxu0 0.0
    %2706 = vmatpush2.msra.mxu0 0.0
    %2707 = vmatprep.subr.mxu0 0.0
    %2708 = vmatpush2.msra.mxu0 0.0
    %2709 = vmatprep.subr.mxu0 0.0
    %2710 = vmatpush2.msra.mxu0 0.0
    %2711 = vmatprep.subr.mxu0 0.0
    %2712 = vmatpush2.msra.mxu0 0.0
    %2713 = vmatprep.subr.mxu0 0.0
    %2714 = vmatpush2.msra.mxu0 0.0
    %2715 = vmatprep.subr.mxu0 0.0
    %2716 = vmatpush2.msra.mxu0 0.0
    %2717 = vmatprep.subr.mxu0 0.0
    %2718 = vmatpush2.msra.mxu0 0.0
    %2719 = vmatprep.subr.mxu0 0.0
    %2720 = vmatpush2.msra.mxu0 0.0
    %2721 = vmatprep.subr.mxu0 0.0
    %2722 = vmatpush2.msra.mxu0 0.0
    %2723 = vmatprep.subr.mxu0 0.0
    %2724 = vmatpush2.msra.mxu0 0.0
    %2725 = vmatprep.subr.mxu0 0.0
    %2726 = vmatpush2.msra.mxu0 0.0
    %2727 = vmatprep.mubr.f32.mxu0 0.0
    %2728 = vmatmul.mubr.f32.gmra.mxu0 %v2502
    %v2729 = vpop.f32.mrf.mxu0
    %v2730 = vadd.f32 %v2661, %v2729
    %v2731 = vpop.f32.mrf.mxu0
    %2732 = vmatprep.mubr.f32.mxu0 0.0
    %2733 = vmatmul.mubr.f32.gmra.mxu0 %v2505
    %v2734 = vpop.f32.mrf.mxu0
    %v2735 = vadd.f32 %v2661, %v2734
    %v2736 = vpop.f32.mrf.mxu0
    %2737 = vmatprep.mubr.f32.mxu0 0.0
    %2738 = vmatmul.mubr.f32.gmra.mxu0 %v2508
    %v2739 = vpop.f32.mrf.mxu0
    %v2740 = vadd.f32 %v2661, %v2739
    %v2741 = vpop.f32.mrf.mxu0
    %2742 = vmatprep.mubr.f32.mxu0 0.0
    %2743 = vmatmul.mubr.f32.gmra.mxu0 %v2511
    %v2744 = vpop.f32.mrf.mxu0
    %v2745 = vadd.f32 %v2661, %v2744
    %v2746 = vpop.f32.mrf.mxu0
    %2747 = vmatprep.mubr.f32.mxu0 0.0
    %2748 = vmatmul.mubr.f32.gmra.mxu0 %v2514
    %v2749 = vpop.f32.mrf.mxu0
    %v2750 = vadd.f32 %v2661, %v2749
    %v2751 = vpop.f32.mrf.mxu0
    %2752 = vmatprep.mubr.f32.mxu0 0.0
    %2753 = vmatmul.mubr.f32.gmra.mxu0 %v2517
    %v2754 = vpop.f32.mrf.mxu0
    %v2755 = vadd.f32 %v2661, %v2754
    %v2756 = vpop.f32.mrf.mxu0
    %2757 = vmatprep.mubr.f32.mxu0 0.0
    %2758 = vmatmul.mubr.f32.gmra.mxu0 %v2520
    %v2759 = vpop.f32.mrf.mxu0
    %v2760 = vadd.f32 %v2661, %v2759
    %v2761 = vpop.f32.mrf.mxu0
    %2762 = vmatprep.mubr.f32.mxu0 0.0
    %2763 = vmatmul.mubr.f32.gmra.mxu0 %v2523
    %v2764 = vpop.f32.mrf.mxu0
    %v2765 = vadd.f32 %v2661, %v2764
    %v2766 = vpop.f32.mrf.mxu0
    %2767 = vdwg.mxu0
    %v2768 = vsel %vm75, %v2765, %v2730
    %2769 = vst.msk [vmem:[%s368] sm:$0xff] %vm99, %v2768
    %v2770 = vsel %vm75, %v2760, %v2735
    %2771 = vst.msk [vmem:[%s368 + $0x8] sm:$0xff] %vm99, %v2770
    %v2772 = vsel %vm75, %v2755, %v2740
    %2773 = vst.msk [vmem:[%s368 + $0x10] sm:$0xff] %vm99, %v2772
    %v2774 = vsel %vm75, %v2750, %v2745
    %2775 = vst.msk [vmem:[%s368 + $0x18] sm:$0xff] %vm99, %v2774
    %v2776 = vsel %vm75, %v2745, %v2750
    %2777 = vst.msk [vmem:[%s368 + $0x20] sm:$0xff] %vm99, %v2776
    %v2778 = vsel %vm75, %v2740, %v2755
    %2779 = vst.msk [vmem:[%s368 + $0x28] sm:$0xff] %vm99, %v2778
    %v2780 = vsel %vm75, %v2735, %v2760
    %2781 = vst.msk [vmem:[%s368 + $0x30] sm:$0xff] %vm99, %v2780
    %v2782 = vsel %vm75, %v2730, %v2765
    %2783 = vst.msk [vmem:[%s368 + $0x38] sm:$0xff] %vm99, %v2782
    %s2784 = scalar_lea.vmem [#allocation7], 320
    %v2785 = vld [vmem:[%s2784] sm:$0xff]
    %v2786 = vld [vmem:[%s2784 + $0x8] sm:$0xff]
    %v2787 = vld [vmem:[%s2784 + $0x10] sm:$0xff]
    %v2788 = vld [vmem:[%s2784 + $0x18] sm:$0xff]
    %v2789 = vld [vmem:[%s2784 + $0x20] sm:$0xff]
    %v2790 = vld [vmem:[%s2784 + $0x28] sm:$0xff]
    %v2791 = vld [vmem:[%s2784 + $0x30] sm:$0xff]
    %v2792 = vld [vmem:[%s2784 + $0x38] sm:$0xff]
    %s2793 = scalar_lea.vmem %s4, 5
    %v2794 = vld [vmem:[%s2793] sm:$0x1]
    %v2796 = vlaneseq
    %v2797 = vshrl.u32 %v2796, 7
    %v2798 = vsub.s32 0, %v2797
    %v2799 = vrot.slane %v2794, %v2798
    %2801 = vmatprep.subr.mxu0 0.0
    %2802 = vmatpush1.msra.mxu0 0.0
    %2803 = vmatprep.subr.mxu0 0.0
    %2804 = vmatpush1.msra.mxu0 0.0
    %2805 = vmatprep.subr.mxu0 0.0
    %2806 = vmatpush1.msra.mxu0 0.0
    %2807 = vmatprep.subr.mxu0 0.0
    %2808 = vmatpush1.msra.mxu0 0.0
    %2809 = vmatprep.subr.mxu0 0.0
    %2810 = vmatpush1.msra.mxu0 0.0
    %2811 = vmatprep.subr.mxu0 0.0
    %2812 = vmatpush1.msra.mxu0 0.0
    %2813 = vmatprep.subr.mxu0 0.0
    %2814 = vmatpush1.msra.mxu0 0.0
    %2815 = vmatprep.subr.mxu0 0.0
    %2816 = vmatpush1.msra.mxu0 0.0
    %2817 = vmatprep.subr.mxu0 0.0
    %2818 = vmatpush1.msra.mxu0 %v2792
    %2819 = vmatprep.subr.mxu0 0.0
    %2820 = vmatpush1.msra.mxu0 %v2791
    %2821 = vmatprep.subr.mxu0 0.0
    %2822 = vmatpush1.msra.mxu0 %v2790
    %2823 = vmatprep.subr.mxu0 0.0
    %2824 = vmatpush1.msra.mxu0 %v2789
    %2825 = vmatprep.subr.mxu0 0.0
    %2826 = vmatpush1.msra.mxu0 %v2788
    %2827 = vmatprep.subr.mxu0 0.0
    %2828 = vmatpush1.msra.mxu0 %v2787
    %2829 = vmatprep.subr.mxu0 0.0
    %2830 = vmatpush1.msra.mxu0 %v2786
    %2831 = vmatprep.subr.mxu0 0.0
    %2832 = vmatpush1.msra.mxu0 %v2785
    %2833 = vmatprep.subr.mxu0 0.0
    %2834 = vmatpush2.msra.mxu0 0.0
    %2835 = vmatprep.subr.mxu0 0.0
    %2836 = vmatpush2.msra.mxu0 0.0
    %2837 = vmatprep.subr.mxu0 0.0
    %2838 = vmatpush2.msra.mxu0 0.0
    %2839 = vmatprep.subr.mxu0 0.0
    %2840 = vmatpush2.msra.mxu0 0.0
    %2841 = vmatprep.subr.mxu0 0.0
    %2842 = vmatpush2.msra.mxu0 0.0
    %2843 = vmatprep.subr.mxu0 0.0
    %2844 = vmatpush2.msra.mxu0 0.0
    %2845 = vmatprep.subr.mxu0 0.0
    %2846 = vmatpush2.msra.mxu0 0.0
    %2847 = vmatprep.subr.mxu0 0.0
    %2848 = vmatpush2.msra.mxu0 0.0
    %2849 = vmatprep.subr.mxu0 0.0
    %2850 = vmatpush2.msra.mxu0 0.0
    %2851 = vmatprep.subr.mxu0 0.0
    %2852 = vmatpush2.msra.mxu0 0.0
    %2853 = vmatprep.subr.mxu0 0.0
    %2854 = vmatpush2.msra.mxu0 0.0
    %2855 = vmatprep.subr.mxu0 0.0
    %2856 = vmatpush2.msra.mxu0 0.0
    %2857 = vmatprep.subr.mxu0 0.0
    %2858 = vmatpush2.msra.mxu0 0.0
    %2859 = vmatprep.subr.mxu0 0.0
    %2860 = vmatpush2.msra.mxu0 0.0
    %2861 = vmatprep.subr.mxu0 0.0
    %2862 = vmatpush2.msra.mxu0 0.0
    %2863 = vmatprep.subr.mxu0 0.0
    %2864 = vmatpush2.msra.mxu0 0.0
    %2865 = vmatprep.mubr.f32.mxu0 0.0
    %2866 = vmatmul.mubr.f32.gmra.mxu0 %v2502
    %v2867 = vpop.f32.mrf.mxu0
    %v2868 = vadd.f32 %v2799, %v2867
    %v2869 = vpop.f32.mrf.mxu0
    %2870 = vmatprep.mubr.f32.mxu0 0.0
    %2871 = vmatmul.mubr.f32.gmra.mxu0 %v2505
    %v2872 = vpop.f32.mrf.mxu0
    %v2873 = vadd.f32 %v2799, %v2872
    %v2874 = vpop.f32.mrf.mxu0
    %2875 = vmatprep.mubr.f32.mxu0 0.0
    %2876 = vmatmul.mubr.f32.gmra.mxu0 %v2508
    %v2877 = vpop.f32.mrf.mxu0
    %v2878 = vadd.f32 %v2799, %v2877
    %v2879 = vpop.f32.mrf.mxu0
    %2880 = vmatprep.mubr.f32.mxu0 0.0
    %2881 = vmatmul.mubr.f32.gmra.mxu0 %v2511
    %v2882 = vpop.f32.mrf.mxu0
    %v2883 = vadd.f32 %v2799, %v2882
    %v2884 = vpop.f32.mrf.mxu0
    %2885 = vmatprep.mubr.f32.mxu0 0.0
    %2886 = vmatmul.mubr.f32.gmra.mxu0 %v2514
    %v2887 = vpop.f32.mrf.mxu0
    %v2888 = vadd.f32 %v2799, %v2887
    %v2889 = vpop.f32.mrf.mxu0
    %2890 = vmatprep.mubr.f32.mxu0 0.0
    %2891 = vmatmul.mubr.f32.gmra.mxu0 %v2517
    %v2892 = vpop.f32.mrf.mxu0
    %v2893 = vadd.f32 %v2799, %v2892
    %v2894 = vpop.f32.mrf.mxu0
    %2895 = vmatprep.mubr.f32.mxu0 0.0
    %2896 = vmatmul.mubr.f32.gmra.mxu0 %v2520
    %v2897 = vpop.f32.mrf.mxu0
    %v2898 = vadd.f32 %v2799, %v2897
    %v2899 = vpop.f32.mrf.mxu0
    %2900 = vmatprep.mubr.f32.mxu0 0.0
    %2901 = vmatmul.mubr.f32.gmra.mxu0 %v2523
    %v2902 = vpop.f32.mrf.mxu0
    %v2903 = vadd.f32 %v2799, %v2902
    %v2904 = vpop.f32.mrf.mxu0
    %2905 = vdwg.mxu0
    %v2906 = vsel %vm75, %v2903, %v2868
    %2907 = vst.msk [vmem:[%s507] sm:$0xff] %vm99, %v2906
    %v2908 = vsel %vm75, %v2898, %v2873
    %2909 = vst.msk [vmem:[%s507 + $0x8] sm:$0xff] %vm99, %v2908
    %v2910 = vsel %vm75, %v2893, %v2878
    %2911 = vst.msk [vmem:[%s507 + $0x10] sm:$0xff] %vm99, %v2910
    %v2912 = vsel %vm75, %v2888, %v2883
    %2913 = vst.msk [vmem:[%s507 + $0x18] sm:$0xff] %vm99, %v2912
    %v2914 = vsel %vm75, %v2883, %v2888
    %2915 = vst.msk [vmem:[%s507 + $0x20] sm:$0xff] %vm99, %v2914
    %v2916 = vsel %vm75, %v2878, %v2893
    %2917 = vst.msk [vmem:[%s507 + $0x28] sm:$0xff] %vm99, %v2916
    %v2918 = vsel %vm75, %v2873, %v2898
    %2919 = vst.msk [vmem:[%s507 + $0x30] sm:$0xff] %vm99, %v2918
    %v2920 = vsel %vm75, %v2868, %v2903
    %2921 = vst.msk [vmem:[%s507 + $0x38] sm:$0xff] %vm99, %v2920
    %s2922 = scalar_lea.vmem [#allocation9], 192
    %v2923 = vld [vmem:[%s2922] sm:$0xff]
    %v2924 = vld [vmem:[%s2922 + $0x8] sm:$0xff]
    %v2925 = vld [vmem:[%s2922 + $0x10] sm:$0xff]
    %v2926 = vld [vmem:[%s2922 + $0x18] sm:$0xff]
    %v2927 = vld [vmem:[%s2922 + $0x20] sm:$0xff]
    %v2928 = vld [vmem:[%s2922 + $0x28] sm:$0xff]
    %v2929 = vld [vmem:[%s2922 + $0x30] sm:$0xff]
    %v2930 = vld [vmem:[%s2922 + $0x38] sm:$0xff]
    %s2931 = scalar_lea.vmem [#allocation9], 256
    %v2932 = vld [vmem:[%s2931] sm:$0xff]
    %v2933 = vld [vmem:[%s2931 + $0x8] sm:$0xff]
    %v2934 = vld [vmem:[%s2931 + $0x10] sm:$0xff]
    %v2935 = vld [vmem:[%s2931 + $0x18] sm:$0xff]
    %v2936 = vld [vmem:[%s2931 + $0x20] sm:$0xff]
    %v2937 = vld [vmem:[%s2931 + $0x28] sm:$0xff]
    %v2938 = vld [vmem:[%s2931 + $0x30] sm:$0xff]
    %v2939 = vld [vmem:[%s2931 + $0x38] sm:$0xff]
    %s2940 = scalar_lea.vmem [#allocation9], 320
    %v2941 = vld [vmem:[%s2940] sm:$0xff]
    %v2942 = vld [vmem:[%s2940 + $0x8] sm:$0xff]
    %v2943 = vld [vmem:[%s2940 + $0x10] sm:$0xff]
    %v2944 = vld [vmem:[%s2940 + $0x18] sm:$0xff]
    %v2945 = vld [vmem:[%s2940 + $0x20] sm:$0xff]
    %v2946 = vld [vmem:[%s2940 + $0x28] sm:$0xff]
    %v2947 = vld [vmem:[%s2940 + $0x30] sm:$0xff]
    %v2948 = vld [vmem:[%s2940 + $0x38] sm:$0xff]
    %s2949 = scalar_lea.vmem %s5, 1
    %v2950 = vld [vmem:[%s2949] sm:$0x1]
    %v2952 = vlaneseq
    %v2953 = vshrl.u32 %v2952, 7
    %v2954 = vsub.s32 0, %v2953
    %v2955 = vrot.slane %v2950, %v2954
    %v2957 = vld [vmem:[#allocation2] sm:$0xff]
    %v2958 = vld [vmem:[%s368] sm:$0xff]
    %v2959 = vld [vmem:[%s507] sm:$0xff]
    %2960 = vmatprep.subr.mxu0 0.0
    %2961 = vmatpush1.msra.mxu0 0.0
    %2962 = vmatprep.subr.mxu0 0.0
    %2963 = vmatpush1.msra.mxu0 0.0
    %2964 = vmatprep.subr.mxu0 0.0
    %2965 = vmatpush1.msra.mxu0 0.0
    %2966 = vmatprep.subr.mxu0 0.0
    %2967 = vmatpush1.msra.mxu0 0.0
    %2968 = vmatprep.subr.mxu0 0.0
    %2969 = vmatpush1.msra.mxu0 0.0
    %2970 = vmatprep.subr.mxu0 0.0
    %2971 = vmatpush1.msra.mxu0 0.0
    %2972 = vmatprep.subr.mxu0 0.0
    %2973 = vmatpush1.msra.mxu0 0.0
    %2974 = vmatprep.subr.mxu0 0.0
    %2975 = vmatpush1.msra.mxu0 0.0
    %2976 = vmatprep.subr.mxu0 0.0
    %2977 = vmatpush1.msra.mxu0 %v2930
    %2978 = vmatprep.subr.mxu0 0.0
    %2979 = vmatpush1.msra.mxu0 %v2929
    %2980 = vmatprep.subr.mxu0 0.0
    %2981 = vmatpush1.msra.mxu0 %v2928
    %2982 = vmatprep.subr.mxu0 0.0
    %2983 = vmatpush1.msra.mxu0 %v2927
    %2984 = vmatprep.subr.mxu0 0.0
    %2985 = vmatpush1.msra.mxu0 %v2926
    %2986 = vmatprep.subr.mxu0 0.0
    %2987 = vmatpush1.msra.mxu0 %v2925
    %2988 = vmatprep.subr.mxu0 0.0
    %2989 = vmatpush1.msra.mxu0 %v2924
    %2990 = vmatprep.subr.mxu0 0.0
    %2991 = vmatpush1.msra.mxu0 %v2923
    %2992 = vmatprep.subr.mxu0 0.0
    %2993 = vmatpush2.msra.mxu0 0.0
    %2994 = vmatprep.subr.mxu0 0.0
    %2995 = vmatpush2.msra.mxu0 0.0
    %2996 = vmatprep.subr.mxu0 0.0
    %2997 = vmatpush2.msra.mxu0 0.0
    %2998 = vmatprep.subr.mxu0 0.0
    %2999 = vmatpush2.msra.mxu0 0.0
    %3000 = vmatprep.subr.mxu0 0.0
    %3001 = vmatpush2.msra.mxu0 0.0
    %3002 = vmatprep.subr.mxu0 0.0
    %3003 = vmatpush2.msra.mxu0 0.0
    %3004 = vmatprep.subr.mxu0 0.0
    %3005 = vmatpush2.msra.mxu0 0.0
    %3006 = vmatprep.subr.mxu0 0.0
    %3007 = vmatpush2.msra.mxu0 0.0
    %3008 = vmatprep.subr.mxu0 0.0
    %3009 = vmatpush2.msra.mxu0 0.0
    %3010 = vmatprep.subr.mxu0 0.0
    %3011 = vmatpush2.msra.mxu0 0.0
    %3012 = vmatprep.subr.mxu0 0.0
    %3013 = vmatpush2.msra.mxu0 0.0
    %3014 = vmatprep.subr.mxu0 0.0
    %3015 = vmatpush2.msra.mxu0 0.0
    %3016 = vmatprep.subr.mxu0 0.0
    %3017 = vmatpush2.msra.mxu0 0.0
    %3018 = vmatprep.subr.mxu0 0.0
    %3019 = vmatpush2.msra.mxu0 0.0
    %3020 = vmatprep.subr.mxu0 0.0
    %3021 = vmatpush2.msra.mxu0 0.0
    %3022 = vmatprep.subr.mxu0 0.0
    %3023 = vmatpush2.msra.mxu0 0.0
    %3024 = vmatprep.mubr.f32.mxu0 0.0
    %3025 = vmatmul.mubr.f32.gmra.mxu0 %v560
    %v3026 = vpop.f32.mrf.mxu0
    %v3027 = vadd.f32 0.0, %v3026
    %v3028 = vpop.f32.mrf.mxu0
    %3029 = vdwg.mxu0
    %3030 = vmatprep.subr.mxu0 0.0
    %3031 = vmatpush1.msra.mxu0 0.0
    %3032 = vmatprep.subr.mxu0 0.0
    %3033 = vmatpush1.msra.mxu0 0.0
    %3034 = vmatprep.subr.mxu0 0.0
    %3035 = vmatpush1.msra.mxu0 0.0
    %3036 = vmatprep.subr.mxu0 0.0
    %3037 = vmatpush1.msra.mxu0 0.0
    %3038 = vmatprep.subr.mxu0 0.0
    %3039 = vmatpush1.msra.mxu0 0.0
    %3040 = vmatprep.subr.mxu0 0.0
    %3041 = vmatpush1.msra.mxu0 0.0
    %3042 = vmatprep.subr.mxu0 0.0
    %3043 = vmatpush1.msra.mxu0 0.0
    %3044 = vmatprep.subr.mxu0 0.0
    %3045 = vmatpush1.msra.mxu0 0.0
    %3046 = vmatprep.subr.mxu0 0.0
    %3047 = vmatpush1.msra.mxu0 %v2939
    %3048 = vmatprep.subr.mxu0 0.0
    %3049 = vmatpush1.msra.mxu0 %v2938
    %3050 = vmatprep.subr.mxu0 0.0
    %3051 = vmatpush1.msra.mxu0 %v2937
    %3052 = vmatprep.subr.mxu0 0.0
    %3053 = vmatpush1.msra.mxu0 %v2936
    %3054 = vmatprep.subr.mxu0 0.0
    %3055 = vmatpush1.msra.mxu0 %v2935
    %3056 = vmatprep.subr.mxu0 0.0
    %3057 = vmatpush1.msra.mxu0 %v2934
    %3058 = vmatprep.subr.mxu0 0.0
    %3059 = vmatpush1.msra.mxu0 %v2933
    %3060 = vmatprep.subr.mxu0 0.0
    %3061 = vmatpush1.msra.mxu0 %v2932
    %3062 = vmatprep.subr.mxu0 0.0
    %3063 = vmatpush2.msra.mxu0 0.0
    %3064 = vmatprep.subr.mxu0 0.0
    %3065 = vmatpush2.msra.mxu0 0.0
    %3066 = vmatprep.subr.mxu0 0.0
    %3067 = vmatpush2.msra.mxu0 0.0
    %3068 = vmatprep.subr.mxu0 0.0
    %3069 = vmatpush2.msra.mxu0 0.0
    %3070 = vmatprep.subr.mxu0 0.0
    %3071 = vmatpush2.msra.mxu0 0.0
    %3072 = vmatprep.subr.mxu0 0.0
    %3073 = vmatpush2.msra.mxu0 0.0
    %3074 = vmatprep.subr.mxu0 0.0
    %3075 = vmatpush2.msra.mxu0 0.0
    %3076 = vmatprep.subr.mxu0 0.0
    %3077 = vmatpush2.msra.mxu0 0.0
    %3078 = vmatprep.subr.mxu0 0.0
    %3079 = vmatpush2.msra.mxu0 0.0
    %3080 = vmatprep.subr.mxu0 0.0
    %3081 = vmatpush2.msra.mxu0 0.0
    %3082 = vmatprep.subr.mxu0 0.0
    %3083 = vmatpush2.msra.mxu0 0.0
    %3084 = vmatprep.subr.mxu0 0.0
    %3085 = vmatpush2.msra.mxu0 0.0
    %3086 = vmatprep.subr.mxu0 0.0
    %3087 = vmatpush2.msra.mxu0 0.0
    %3088 = vmatprep.subr.mxu0 0.0
    %3089 = vmatpush2.msra.mxu0 0.0
    %3090 = vmatprep.subr.mxu0 0.0
    %3091 = vmatpush2.msra.mxu0 0.0
    %3092 = vmatprep.subr.mxu0 0.0
    %3093 = vmatpush2.msra.mxu0 0.0
    %3094 = vmatprep.mubr.f32.mxu0 0.0
    %3095 = vmatmul.mubr.f32.gmra.mxu0 %v560
    %v3096 = vpop.f32.mrf.mxu0
    %v3097 = vadd.f32 0.0, %v3096
    %v3098 = vpop.f32.mrf.mxu0
    %3099 = vdwg.mxu0
    %3100 = vmatprep.subr.mxu0 0.0
    %3101 = vmatpush1.msra.mxu0 0.0
    %3102 = vmatprep.subr.mxu0 0.0
    %3103 = vmatpush1.msra.mxu0 0.0
    %3104 = vmatprep.subr.mxu0 0.0
    %3105 = vmatpush1.msra.mxu0 0.0
    %3106 = vmatprep.subr.mxu0 0.0
    %3107 = vmatpush1.msra.mxu0 0.0
    %3108 = vmatprep.subr.mxu0 0.0
    %3109 = vmatpush1.msra.mxu0 0.0
    %3110 = vmatprep.subr.mxu0 0.0
    %3111 = vmatpush1.msra.mxu0 0.0
    %3112 = vmatprep.subr.mxu0 0.0
    %3113 = vmatpush1.msra.mxu0 0.0
    %3114 = vmatprep.subr.mxu0 0.0
    %3115 = vmatpush1.msra.mxu0 0.0
    %3116 = vmatprep.subr.mxu0 0.0
    %3117 = vmatpush1.msra.mxu0 %v2948
    %3118 = vmatprep.subr.mxu0 0.0
    %3119 = vmatpush1.msra.mxu0 %v2947
    %3120 = vmatprep.subr.mxu0 0.0
    %3121 = vmatpush1.msra.mxu0 %v2946
    %3122 = vmatprep.subr.mxu0 0.0
    %3123 = vmatpush1.msra.mxu0 %v2945
    %3124 = vmatprep.subr.mxu0 0.0
    %3125 = vmatpush1.msra.mxu0 %v2944
    %3126 = vmatprep.subr.mxu0 0.0
    %3127 = vmatpush1.msra.mxu0 %v2943
    %3128 = vmatprep.subr.mxu0 0.0
    %3129 = vmatpush1.msra.mxu0 %v2942
    %3130 = vmatprep.subr.mxu0 0.0
    %3131 = vmatpush1.msra.mxu0 %v2941
    %3132 = vmatprep.subr.mxu0 0.0
    %3133 = vmatpush2.msra.mxu0 0.0
    %3134 = vmatprep.subr.mxu0 0.0
    %3135 = vmatpush2.msra.mxu0 0.0
    %3136 = vmatprep.subr.mxu0 0.0
    %3137 = vmatpush2.msra.mxu0 0.0
    %3138 = vmatprep.subr.mxu0 0.0
    %3139 = vmatpush2.msra.mxu0 0.0
    %3140 = vmatprep.subr.mxu0 0.0
    %3141 = vmatpush2.msra.mxu0 0.0
    %3142 = vmatprep.subr.mxu0 0.0
    %3143 = vmatpush2.msra.mxu0 0.0
    %3144 = vmatprep.subr.mxu0 0.0
    %3145 = vmatpush2.msra.mxu0 0.0
    %3146 = vmatprep.subr.mxu0 0.0
    %3147 = vmatpush2.msra.mxu0 0.0
    %3148 = vmatprep.subr.mxu0 0.0
    %3149 = vmatpush2.msra.mxu0 0.0
    %3150 = vmatprep.subr.mxu0 0.0
    %3151 = vmatpush2.msra.mxu0 0.0
    %3152 = vmatprep.subr.mxu0 0.0
    %3153 = vmatpush2.msra.mxu0 0.0
    %3154 = vmatprep.subr.mxu0 0.0
    %3155 = vmatpush2.msra.mxu0 0.0
    %3156 = vmatprep.subr.mxu0 0.0
    %3157 = vmatpush2.msra.mxu0 0.0
    %3158 = vmatprep.subr.mxu0 0.0
    %3159 = vmatpush2.msra.mxu0 0.0
    %3160 = vmatprep.subr.mxu0 0.0
    %3161 = vmatpush2.msra.mxu0 0.0
    %3162 = vmatprep.subr.mxu0 0.0
    %3163 = vmatpush2.msra.mxu0 0.0
    %3164 = vmatprep.mubr.f32.mxu0 0.0
    %3165 = vmatmul.mubr.f32.gmra.mxu0 %v560
    %v3166 = vpop.f32.mrf.mxu0
    %v3167 = vadd.f32 %v2955, %v3166
    %v3168 = vpop.f32.mrf.mxu0
    %3169 = vdwg.mxu0
    %v3170 = vadd.f32 %v2957, %v3027
    %v3171 = vxor.u32 %v3170, 2147483648
    %v3172 = vmul.f32 %v3171, 1.442695
    %v3173 = vpow.pop %v3172
    %v3174 = vadd.f32 %v3173, 1.0
    %v3175 = vrcp.pop %v3174
    %v3176 = vmul.f32 1.0, %v3175
    %v3177 = vadd.f32 %v2958, %v3097
    %v3178 = vxor.u32 %v3177, 2147483648
    %v3179 = vmul.f32 %v3178, 1.442695
    %v3180 = vpow.pop %v3179
    %v3181 = vadd.f32 %v3180, 1.0
    %v3182 = vrcp.pop %v3181
    %v3183 = vmul.f32 1.0, %v3182
    %v3184 = vmul.f32 %v3176, %v3167
    %v3185 = vadd.f32 %v2959, %v3184
    %v3186 = vtanh.pop %v3185
    %v3187 = vsub.f32 0.0, %v3186
    %v3188 = vmul.f32 %v3183, %v3187
    %v3189 = vadd.f32 %v3186, %v3188
    %3190 = vst.msk [vmem:[#allocation3] sm:$0xff] %vm99, %v3189
    %v3191 = vld [vmem:[#allocation2 + $0x8] sm:$0xff]
    %v3192 = vld [vmem:[%s368 + $0x8] sm:$0xff]
    %v3193 = vld [vmem:[%s507 + $0x8] sm:$0xff]
    %v3195 = vsel %vm99, %v3189, 0
    %3197 = vmatprep.subr.mxu0 0.0
    %3198 = vmatpush1.msra.mxu0 0.0
    %3199 = vmatprep.subr.mxu0 0.0
    %3200 = vmatpush1.msra.mxu0 0.0
    %3201 = vmatprep.subr.mxu0 0.0
    %3202 = vmatpush1.msra.mxu0 0.0
    %3203 = vmatprep.subr.mxu0 0.0
    %3204 = vmatpush1.msra.mxu0 0.0
    %3205 = vmatprep.subr.mxu0 0.0
    %3206 = vmatpush1.msra.mxu0 0.0
    %3207 = vmatprep.subr.mxu0 0.0
    %3208 = vmatpush1.msra.mxu0 0.0
    %3209 = vmatprep.subr.mxu0 0.0
    %3210 = vmatpush1.msra.mxu0 0.0
    %3211 = vmatprep.subr.mxu0 0.0
    %3212 = vmatpush1.msra.mxu0 0.0
    %3213 = vmatprep.subr.mxu0 0.0
    %3214 = vmatpush1.msra.mxu0 %v2930
    %3215 = vmatprep.subr.mxu0 0.0
    %3216 = vmatpush1.msra.mxu0 %v2929
    %3217 = vmatprep.subr.mxu0 0.0
    %3218 = vmatpush1.msra.mxu0 %v2928
    %3219 = vmatprep.subr.mxu0 0.0
    %3220 = vmatpush1.msra.mxu0 %v2927
    %3221 = vmatprep.subr.mxu0 0.0
    %3222 = vmatpush1.msra.mxu0 %v2926
    %3223 = vmatprep.subr.mxu0 0.0
    %3224 = vmatpush1.msra.mxu0 %v2925
    %3225 = vmatprep.subr.mxu0 0.0
    %3226 = vmatpush1.msra.mxu0 %v2924
    %3227 = vmatprep.subr.mxu0 0.0
    %3228 = vmatpush1.msra.mxu0 %v2923
    %3229 = vmatprep.subr.mxu0 0.0
    %3230 = vmatpush2.msra.mxu0 0.0
    %3231 = vmatprep.subr.mxu0 0.0
    %3232 = vmatpush2.msra.mxu0 0.0
    %3233 = vmatprep.subr.mxu0 0.0
    %3234 = vmatpush2.msra.mxu0 0.0
    %3235 = vmatprep.subr.mxu0 0.0
    %3236 = vmatpush2.msra.mxu0 0.0
    %3237 = vmatprep.subr.mxu0 0.0
    %3238 = vmatpush2.msra.mxu0 0.0
    %3239 = vmatprep.subr.mxu0 0.0
    %3240 = vmatpush2.msra.mxu0 0.0
    %3241 = vmatprep.subr.mxu0 0.0
    %3242 = vmatpush2.msra.mxu0 0.0
    %3243 = vmatprep.subr.mxu0 0.0
    %3244 = vmatpush2.msra.mxu0 0.0
    %3245 = vmatprep.subr.mxu0 0.0
    %3246 = vmatpush2.msra.mxu0 0.0
    %3247 = vmatprep.subr.mxu0 0.0
    %3248 = vmatpush2.msra.mxu0 0.0
    %3249 = vmatprep.subr.mxu0 0.0
    %3250 = vmatpush2.msra.mxu0 0.0
    %3251 = vmatprep.subr.mxu0 0.0
    %3252 = vmatpush2.msra.mxu0 0.0
    %3253 = vmatprep.subr.mxu0 0.0
    %3254 = vmatpush2.msra.mxu0 0.0
    %3255 = vmatprep.subr.mxu0 0.0
    %3256 = vmatpush2.msra.mxu0 0.0
    %3257 = vmatprep.subr.mxu0 0.0
    %3258 = vmatpush2.msra.mxu0 0.0
    %3259 = vmatprep.subr.mxu0 0.0
    %3260 = vmatpush2.msra.mxu0 0.0
    %3261 = vmatprep.mubr.f32.mxu0 0.0
    %3262 = vmatmul.mubr.f32.gmra.mxu0 %v3195
    %v3263 = vpop.f32.mrf.mxu0
    %v3264 = vadd.f32 0.0, %v3263
    %v3265 = vpop.f32.mrf.mxu0
    %3266 = vdwg.mxu0
    %3267 = vmatprep.subr.mxu0 0.0
    %3268 = vmatpush1.msra.mxu0 0.0
    %3269 = vmatprep.subr.mxu0 0.0
    %3270 = vmatpush1.msra.mxu0 0.0
    %3271 = vmatprep.subr.mxu0 0.0
    %3272 = vmatpush1.msra.mxu0 0.0
    %3273 = vmatprep.subr.mxu0 0.0
    %3274 = vmatpush1.msra.mxu0 0.0
    %3275 = vmatprep.subr.mxu0 0.0
    %3276 = vmatpush1.msra.mxu0 0.0
    %3277 = vmatprep.subr.mxu0 0.0
    %3278 = vmatpush1.msra.mxu0 0.0
    %3279 = vmatprep.subr.mxu0 0.0
    %3280 = vmatpush1.msra.mxu0 0.0
    %3281 = vmatprep.subr.mxu0 0.0
    %3282 = vmatpush1.msra.mxu0 0.0
    %3283 = vmatprep.subr.mxu0 0.0
    %3284 = vmatpush1.msra.mxu0 %v2939
    %3285 = vmatprep.subr.mxu0 0.0
    %3286 = vmatpush1.msra.mxu0 %v2938
    %3287 = vmatprep.subr.mxu0 0.0
    %3288 = vmatpush1.msra.mxu0 %v2937
    %3289 = vmatprep.subr.mxu0 0.0
    %3290 = vmatpush1.msra.mxu0 %v2936
    %3291 = vmatprep.subr.mxu0 0.0
    %3292 = vmatpush1.msra.mxu0 %v2935
    %3293 = vmatprep.subr.mxu0 0.0
    %3294 = vmatpush1.msra.mxu0 %v2934
    %3295 = vmatprep.subr.mxu0 0.0
    %3296 = vmatpush1.msra.mxu0 %v2933
    %3297 = vmatprep.subr.mxu0 0.0
    %3298 = vmatpush1.msra.mxu0 %v2932
    %3299 = vmatprep.subr.mxu0 0.0
    %3300 = vmatpush2.msra.mxu0 0.0
    %3301 = vmatprep.subr.mxu0 0.0
    %3302 = vmatpush2.msra.mxu0 0.0
    %3303 = vmatprep.subr.mxu0 0.0
    %3304 = vmatpush2.msra.mxu0 0.0
    %3305 = vmatprep.subr.mxu0 0.0
    %3306 = vmatpush2.msra.mxu0 0.0
    %3307 = vmatprep.subr.mxu0 0.0
    %3308 = vmatpush2.msra.mxu0 0.0
    %3309 = vmatprep.subr.mxu0 0.0
    %3310 = vmatpush2.msra.mxu0 0.0
    %3311 = vmatprep.subr.mxu0 0.0
    %3312 = vmatpush2.msra.mxu0 0.0
    %3313 = vmatprep.subr.mxu0 0.0
    %3314 = vmatpush2.msra.mxu0 0.0
    %3315 = vmatprep.subr.mxu0 0.0
    %3316 = vmatpush2.msra.mxu0 0.0
    %3317 = vmatprep.subr.mxu0 0.0
    %3318 = vmatpush2.msra.mxu0 0.0
    %3319 = vmatprep.subr.mxu0 0.0
    %3320 = vmatpush2.msra.mxu0 0.0
    %3321 = vmatprep.subr.mxu0 0.0
    %3322 = vmatpush2.msra.mxu0 0.0
    %3323 = vmatprep.subr.mxu0 0.0
    %3324 = vmatpush2.msra.mxu0 0.0
    %3325 = vmatprep.subr.mxu0 0.0
    %3326 = vmatpush2.msra.mxu0 0.0
    %3327 = vmatprep.subr.mxu0 0.0
    %3328 = vmatpush2.msra.mxu0 0.0
    %3329 = vmatprep.subr.mxu0 0.0
    %3330 = vmatpush2.msra.mxu0 0.0
    %3331 = vmatprep.mubr.f32.mxu0 0.0
    %3332 = vmatmul.mubr.f32.gmra.mxu0 %v3195
    %v3333 = vpop.f32.mrf.mxu0
    %v3334 = vadd.f32 0.0, %v3333
    %v3335 = vpop.f32.mrf.mxu0
    %3336 = vdwg.mxu0
    %3337 = vmatprep.subr.mxu0 0.0
    %3338 = vmatpush1.msra.mxu0 0.0
    %3339 = vmatprep.subr.mxu0 0.0
    %3340 = vmatpush1.msra.mxu0 0.0
    %3341 = vmatprep.subr.mxu0 0.0
    %3342 = vmatpush1.msra.mxu0 0.0
    %3343 = vmatprep.subr.mxu0 0.0
    %3344 = vmatpush1.msra.mxu0 0.0
    %3345 = vmatprep.subr.mxu0 0.0
    %3346 = vmatpush1.msra.mxu0 0.0
    %3347 = vmatprep.subr.mxu0 0.0
    %3348 = vmatpush1.msra.mxu0 0.0
    %3349 = vmatprep.subr.mxu0 0.0
    %3350 = vmatpush1.msra.mxu0 0.0
    %3351 = vmatprep.subr.mxu0 0.0
    %3352 = vmatpush1.msra.mxu0 0.0
    %3353 = vmatprep.subr.mxu0 0.0
    %3354 = vmatpush1.msra.mxu0 %v2948
    %3355 = vmatprep.subr.mxu0 0.0
    %3356 = vmatpush1.msra.mxu0 %v2947
    %3357 = vmatprep.subr.mxu0 0.0
    %3358 = vmatpush1.msra.mxu0 %v2946
    %3359 = vmatprep.subr.mxu0 0.0
    %3360 = vmatpush1.msra.mxu0 %v2945
    %3361 = vmatprep.subr.mxu0 0.0
    %3362 = vmatpush1.msra.mxu0 %v2944
    %3363 = vmatprep.subr.mxu0 0.0
    %3364 = vmatpush1.msra.mxu0 %v2943
    %3365 = vmatprep.subr.mxu0 0.0
    %3366 = vmatpush1.msra.mxu0 %v2942
    %3367 = vmatprep.subr.mxu0 0.0
    %3368 = vmatpush1.msra.mxu0 %v2941
    %3369 = vmatprep.subr.mxu0 0.0
    %3370 = vmatpush2.msra.mxu0 0.0
    %3371 = vmatprep.subr.mxu0 0.0
    %3372 = vmatpush2.msra.mxu0 0.0
    %3373 = vmatprep.subr.mxu0 0.0
    %3374 = vmatpush2.msra.mxu0 0.0
    %3375 = vmatprep.subr.mxu0 0.0
    %3376 = vmatpush2.msra.mxu0 0.0
    %3377 = vmatprep.subr.mxu0 0.0
    %3378 = vmatpush2.msra.mxu0 0.0
    %3379 = vmatprep.subr.mxu0 0.0
    %3380 = vmatpush2.msra.mxu0 0.0
    %3381 = vmatprep.subr.mxu0 0.0
    %3382 = vmatpush2.msra.mxu0 0.0
    %3383 = vmatprep.subr.mxu0 0.0
    %3384 = vmatpush2.msra.mxu0 0.0
    %3385 = vmatprep.subr.mxu0 0.0
    %3386 = vmatpush2.msra.mxu0 0.0
    %3387 = vmatprep.subr.mxu0 0.0
    %3388 = vmatpush2.msra.mxu0 0.0
    %3389 = vmatprep.subr.mxu0 0.0
    %3390 = vmatpush2.msra.mxu0 0.0
    %3391 = vmatprep.subr.mxu0 0.0
    %3392 = vmatpush2.msra.mxu0 0.0
    %3393 = vmatprep.subr.mxu0 0.0
    %3394 = vmatpush2.msra.mxu0 0.0
    %3395 = vmatprep.subr.mxu0 0.0
    %3396 = vmatpush2.msra.mxu0 0.0
    %3397 = vmatprep.subr.mxu0 0.0
    %3398 = vmatpush2.msra.mxu0 0.0
    %3399 = vmatprep.subr.mxu0 0.0
    %3400 = vmatpush2.msra.mxu0 0.0
    %3401 = vmatprep.mubr.f32.mxu0 0.0
    %3402 = vmatmul.mubr.f32.gmra.mxu0 %v3195
    %v3403 = vpop.f32.mrf.mxu0
    %v3404 = vadd.f32 %v2955, %v3403
    %v3405 = vpop.f32.mrf.mxu0
    %3406 = vdwg.mxu0
    %v3407 = vadd.f32 %v3191, %v3264
    %v3408 = vxor.u32 %v3407, 2147483648
    %v3409 = vmul.f32 %v3408, 1.442695
    %v3410 = vpow.pop %v3409
    %v3411 = vadd.f32 %v3410, 1.0
    %v3412 = vrcp.pop %v3411
    %v3413 = vmul.f32 1.0, %v3412
    %v3414 = vadd.f32 %v3192, %v3334
    %v3415 = vxor.u32 %v3414, 2147483648
    %v3416 = vmul.f32 %v3415, 1.442695
    %v3417 = vpow.pop %v3416
    %v3418 = vadd.f32 %v3417, 1.0
    %v3419 = vrcp.pop %v3418
    %v3420 = vmul.f32 1.0, %v3419
    %v3421 = vmul.f32 %v3413, %v3404
    %v3422 = vadd.f32 %v3193, %v3421
    %v3423 = vtanh.pop %v3422
    %v3424 = vsub.f32 %v3189, %v3423
    %v3425 = vmul.f32 %v3420, %v3424
    %v3426 = vadd.f32 %v3423, %v3425
    %3427 = vst.msk [vmem:[#allocation3 + $0x8] sm:$0xff] %vm99, %v3426
    %v3428 = vld [vmem:[#allocation2 + $0x10] sm:$0xff]
    %v3429 = vld [vmem:[%s368 + $0x10] sm:$0xff]
    %v3430 = vld [vmem:[%s507 + $0x10] sm:$0xff]
    %v3432 = vsel %vm99, %v3426, 0
    %3434 = vmatprep.subr.mxu0 0.0
    %3435 = vmatpush1.msra.mxu0 0.0
    %3436 = vmatprep.subr.mxu0 0.0
    %3437 = vmatpush1.msra.mxu0 0.0
    %3438 = vmatprep.subr.mxu0 0.0
    %3439 = vmatpush1.msra.mxu0 0.0
    %3440 = vmatprep.subr.mxu0 0.0
    %3441 = vmatpush1.msra.mxu0 0.0
    %3442 = vmatprep.subr.mxu0 0.0
    %3443 = vmatpush1.msra.mxu0 0.0
    %3444 = vmatprep.subr.mxu0 0.0
    %3445 = vmatpush1.msra.mxu0 0.0
    %3446 = vmatprep.subr.mxu0 0.0
    %3447 = vmatpush1.msra.mxu0 0.0
    %3448 = vmatprep.subr.mxu0 0.0
    %3449 = vmatpush1.msra.mxu0 0.0
    %3450 = vmatprep.subr.mxu0 0.0
    %3451 = vmatpush1.msra.mxu0 %v2930
    %3452 = vmatprep.subr.mxu0 0.0
    %3453 = vmatpush1.msra.mxu0 %v2929
    %3454 = vmatprep.subr.mxu0 0.0
    %3455 = vmatpush1.msra.mxu0 %v2928
    %3456 = vmatprep.subr.mxu0 0.0
    %3457 = vmatpush1.msra.mxu0 %v2927
    %3458 = vmatprep.subr.mxu0 0.0
    %3459 = vmatpush1.msra.mxu0 %v2926
    %3460 = vmatprep.subr.mxu0 0.0
    %3461 = vmatpush1.msra.mxu0 %v2925
    %3462 = vmatprep.subr.mxu0 0.0
    %3463 = vmatpush1.msra.mxu0 %v2924
    %3464 = vmatprep.subr.mxu0 0.0
    %3465 = vmatpush1.msra.mxu0 %v2923
    %3466 = vmatprep.subr.mxu0 0.0
    %3467 = vmatpush2.msra.mxu0 0.0
    %3468 = vmatprep.subr.mxu0 0.0
    %3469 = vmatpush2.msra.mxu0 0.0
    %3470 = vmatprep.subr.mxu0 0.0
    %3471 = vmatpush2.msra.mxu0 0.0
    %3472 = vmatprep.subr.mxu0 0.0
    %3473 = vmatpush2.msra.mxu0 0.0
    %3474 = vmatprep.subr.mxu0 0.0
    %3475 = vmatpush2.msra.mxu0 0.0
    %3476 = vmatprep.subr.mxu0 0.0
    %3477 = vmatpush2.msra.mxu0 0.0
    %3478 = vmatprep.subr.mxu0 0.0
    %3479 = vmatpush2.msra.mxu0 0.0
    %3480 = vmatprep.subr.mxu0 0.0
    %3481 = vmatpush2.msra.mxu0 0.0
    %3482 = vmatprep.subr.mxu0 0.0
    %3483 = vmatpush2.msra.mxu0 0.0
    %3484 = vmatprep.subr.mxu0 0.0
    %3485 = vmatpush2.msra.mxu0 0.0
    %3486 = vmatprep.subr.mxu0 0.0
    %3487 = vmatpush2.msra.mxu0 0.0
    %3488 = vmatprep.subr.mxu0 0.0
    %3489 = vmatpush2.msra.mxu0 0.0
    %3490 = vmatprep.subr.mxu0 0.0
    %3491 = vmatpush2.msra.mxu0 0.0
    %3492 = vmatprep.subr.mxu0 0.0
    %3493 = vmatpush2.msra.mxu0 0.0
    %3494 = vmatprep.subr.mxu0 0.0
    %3495 = vmatpush2.msra.mxu0 0.0
    %3496 = vmatprep.subr.mxu0 0.0
    %3497 = vmatpush2.msra.mxu0 0.0
    %3498 = vmatprep.mubr.f32.mxu0 0.0
    %3499 = vmatmul.mubr.f32.gmra.mxu0 %v3432
    %v3500 = vpop.f32.mrf.mxu0
    %v3501 = vadd.f32 0.0, %v3500
    %v3502 = vpop.f32.mrf.mxu0
    %3503 = vdwg.mxu0
    %3504 = vmatprep.subr.mxu0 0.0
    %3505 = vmatpush1.msra.mxu0 0.0
    %3506 = vmatprep.subr.mxu0 0.0
    %3507 = vmatpush1.msra.mxu0 0.0
    %3508 = vmatprep.subr.mxu0 0.0
    %3509 = vmatpush1.msra.mxu0 0.0
    %3510 = vmatprep.subr.mxu0 0.0
    %3511 = vmatpush1.msra.mxu0 0.0
    %3512 = vmatprep.subr.mxu0 0.0
    %3513 = vmatpush1.msra.mxu0 0.0
    %3514 = vmatprep.subr.mxu0 0.0
    %3515 = vmatpush1.msra.mxu0 0.0
    %3516 = vmatprep.subr.mxu0 0.0
    %3517 = vmatpush1.msra.mxu0 0.0
    %3518 = vmatprep.subr.mxu0 0.0
    %3519 = vmatpush1.msra.mxu0 0.0
    %3520 = vmatprep.subr.mxu0 0.0
    %3521 = vmatpush1.msra.mxu0 %v2939
    %3522 = vmatprep.subr.mxu0 0.0
    %3523 = vmatpush1.msra.mxu0 %v2938
    %3524 = vmatprep.subr.mxu0 0.0
    %3525 = vmatpush1.msra.mxu0 %v2937
    %3526 = vmatprep.subr.mxu0 0.0
    %3527 = vmatpush1.msra.mxu0 %v2936
    %3528 = vmatprep.subr.mxu0 0.0
    %3529 = vmatpush1.msra.mxu0 %v2935
    %3530 = vmatprep.subr.mxu0 0.0
    %3531 = vmatpush1.msra.mxu0 %v2934
    %3532 = vmatprep.subr.mxu0 0.0
    %3533 = vmatpush1.msra.mxu0 %v2933
    %3534 = vmatprep.subr.mxu0 0.0
    %3535 = vmatpush1.msra.mxu0 %v2932
    %3536 = vmatprep.subr.mxu0 0.0
    %3537 = vmatpush2.msra.mxu0 0.0
    %3538 = vmatprep.subr.mxu0 0.0
    %3539 = vmatpush2.msra.mxu0 0.0
    %3540 = vmatprep.subr.mxu0 0.0
    %3541 = vmatpush2.msra.mxu0 0.0
    %3542 = vmatprep.subr.mxu0 0.0
    %3543 = vmatpush2.msra.mxu0 0.0
    %3544 = vmatprep.subr.mxu0 0.0
    %3545 = vmatpush2.msra.mxu0 0.0
    %3546 = vmatprep.subr.mxu0 0.0
    %3547 = vmatpush2.msra.mxu0 0.0
    %3548 = vmatprep.subr.mxu0 0.0
    %3549 = vmatpush2.msra.mxu0 0.0
    %3550 = vmatprep.subr.mxu0 0.0
    %3551 = vmatpush2.msra.mxu0 0.0
    %3552 = vmatprep.subr.mxu0 0.0
    %3553 = vmatpush2.msra.mxu0 0.0
    %3554 = vmatprep.subr.mxu0 0.0
    %3555 = vmatpush2.msra.mxu0 0.0
    %3556 = vmatprep.subr.mxu0 0.0
    %3557 = vmatpush2.msra.mxu0 0.0
    %3558 = vmatprep.subr.mxu0 0.0
    %3559 = vmatpush2.msra.mxu0 0.0
    %3560 = vmatprep.subr.mxu0 0.0
    %3561 = vmatpush2.msra.mxu0 0.0
    %3562 = vmatprep.subr.mxu0 0.0
    %3563 = vmatpush2.msra.mxu0 0.0
    %3564 = vmatprep.subr.mxu0 0.0
    %3565 = vmatpush2.msra.mxu0 0.0
    %3566 = vmatprep.subr.mxu0 0.0
    %3567 = vmatpush2.msra.mxu0 0.0
    %3568 = vmatprep.mubr.f32.mxu0 0.0
    %3569 = vmatmul.mubr.f32.gmra.mxu0 %v3432
    %v3570 = vpop.f32.mrf.mxu0
    %v3571 = vadd.f32 0.0, %v3570
    %v3572 = vpop.f32.mrf.mxu0
    %3573 = vdwg.mxu0
    %3574 = vmatprep.subr.mxu0 0.0
    %3575 = vmatpush1.msra.mxu0 0.0
    %3576 = vmatprep.subr.mxu0 0.0
    %3577 = vmatpush1.msra.mxu0 0.0
    %3578 = vmatprep.subr.mxu0 0.0
    %3579 = vmatpush1.msra.mxu0 0.0
    %3580 = vmatprep.subr.mxu0 0.0
    %3581 = vmatpush1.msra.mxu0 0.0
    %3582 = vmatprep.subr.mxu0 0.0
    %3583 = vmatpush1.msra.mxu0 0.0
    %3584 = vmatprep.subr.mxu0 0.0
    %3585 = vmatpush1.msra.mxu0 0.0
    %3586 = vmatprep.subr.mxu0 0.0
    %3587 = vmatpush1.msra.mxu0 0.0
    %3588 = vmatprep.subr.mxu0 0.0
    %3589 = vmatpush1.msra.mxu0 0.0
    %3590 = vmatprep.subr.mxu0 0.0
    %3591 = vmatpush1.msra.mxu0 %v2948
    %3592 = vmatprep.subr.mxu0 0.0
    %3593 = vmatpush1.msra.mxu0 %v2947
    %3594 = vmatprep.subr.mxu0 0.0
    %3595 = vmatpush1.msra.mxu0 %v2946
    %3596 = vmatprep.subr.mxu0 0.0
    %3597 = vmatpush1.msra.mxu0 %v2945
    %3598 = vmatprep.subr.mxu0 0.0
    %3599 = vmatpush1.msra.mxu0 %v2944
    %3600 = vmatprep.subr.mxu0 0.0
    %3601 = vmatpush1.msra.mxu0 %v2943
    %3602 = vmatprep.subr.mxu0 0.0
    %3603 = vmatpush1.msra.mxu0 %v2942
    %3604 = vmatprep.subr.mxu0 0.0
    %3605 = vmatpush1.msra.mxu0 %v2941
    %3606 = vmatprep.subr.mxu0 0.0
    %3607 = vmatpush2.msra.mxu0 0.0
    %3608 = vmatprep.subr.mxu0 0.0
    %3609 = vmatpush2.msra.mxu0 0.0
    %3610 = vmatprep.subr.mxu0 0.0
    %3611 = vmatpush2.msra.mxu0 0.0
    %3612 = vmatprep.subr.mxu0 0.0
    %3613 = vmatpush2.msra.mxu0 0.0
    %3614 = vmatprep.subr.mxu0 0.0
    %3615 = vmatpush2.msra.mxu0 0.0
    %3616 = vmatprep.subr.mxu0 0.0
    %3617 = vmatpush2.msra.mxu0 0.0
    %3618 = vmatprep.subr.mxu0 0.0
    %3619 = vmatpush2.msra.mxu0 0.0
    %3620 = vmatprep.subr.mxu0 0.0
    %3621 = vmatpush2.msra.mxu0 0.0
    %3622 = vmatprep.subr.mxu0 0.0
    %3623 = vmatpush2.msra.mxu0 0.0
    %3624 = vmatprep.subr.mxu0 0.0
    %3625 = vmatpush2.msra.mxu0 0.0
    %3626 = vmatprep.subr.mxu0 0.0
    %3627 = vmatpush2.msra.mxu0 0.0
    %3628 = vmatprep.subr.mxu0 0.0
    %3629 = vmatpush2.msra.mxu0 0.0
    %3630 = vmatprep.subr.mxu0 0.0
    %3631 = vmatpush2.msra.mxu0 0.0
    %3632 = vmatprep.subr.mxu0 0.0
    %3633 = vmatpush2.msra.mxu0 0.0
    %3634 = vmatprep.subr.mxu0 0.0
    %3635 = vmatpush2.msra.mxu0 0.0
    %3636 = vmatprep.subr.mxu0 0.0
    %3637 = vmatpush2.msra.mxu0 0.0
    %3638 = vmatprep.mubr.f32.mxu0 0.0
    %3639 = vmatmul.mubr.f32.gmra.mxu0 %v3432
    %v3640 = vpop.f32.mrf.mxu0
    %v3641 = vadd.f32 %v2955, %v3640
    %v3642 = vpop.f32.mrf.mxu0
    %3643 = vdwg.mxu0
    %v3644 = vadd.f32 %v3428, %v3501
    %v3645 = vxor.u32 %v3644, 2147483648
    %v3646 = vmul.f32 %v3645, 1.442695
    %v3647 = vpow.pop %v3646
    %v3648 = vadd.f32 %v3647, 1.0
    %v3649 = vrcp.pop %v3648
    %v3650 = vmul.f32 1.0, %v3649
    %v3651 = vadd.f32 %v3429, %v3571
    %v3652 = vxor.u32 %v3651, 2147483648
    %v3653 = vmul.f32 %v3652, 1.442695
    %v3654 = vpow.pop %v3653
    %v3655 = vadd.f32 %v3654, 1.0
    %v3656 = vrcp.pop %v3655
    %v3657 = vmul.f32 1.0, %v3656
    %v3658 = vmul.f32 %v3650, %v3641
    %v3659 = vadd.f32 %v3430, %v3658
    %v3660 = vtanh.pop %v3659
    %v3661 = vsub.f32 %v3426, %v3660
    %v3662 = vmul.f32 %v3657, %v3661
    %v3663 = vadd.f32 %v3660, %v3662
    %3664 = vst.msk [vmem:[#allocation3 + $0x10] sm:$0xff] %vm99, %v3663
    %v3665 = vld [vmem:[#allocation2 + $0x18] sm:$0xff]
    %v3666 = vld [vmem:[%s368 + $0x18] sm:$0xff]
    %v3667 = vld [vmem:[%s507 + $0x18] sm:$0xff]
    %v3669 = vsel %vm99, %v3663, 0
    %3671 = vmatprep.subr.mxu0 0.0
    %3672 = vmatpush1.msra.mxu0 0.0
    %3673 = vmatprep.subr.mxu0 0.0
    %3674 = vmatpush1.msra.mxu0 0.0
    %3675 = vmatprep.subr.mxu0 0.0
    %3676 = vmatpush1.msra.mxu0 0.0
    %3677 = vmatprep.subr.mxu0 0.0
    %3678 = vmatpush1.msra.mxu0 0.0
    %3679 = vmatprep.subr.mxu0 0.0
    %3680 = vmatpush1.msra.mxu0 0.0
    %3681 = vmatprep.subr.mxu0 0.0
    %3682 = vmatpush1.msra.mxu0 0.0
    %3683 = vmatprep.subr.mxu0 0.0
    %3684 = vmatpush1.msra.mxu0 0.0
    %3685 = vmatprep.subr.mxu0 0.0
    %3686 = vmatpush1.msra.mxu0 0.0
    %3687 = vmatprep.subr.mxu0 0.0
    %3688 = vmatpush1.msra.mxu0 %v2930
    %3689 = vmatprep.subr.mxu0 0.0
    %3690 = vmatpush1.msra.mxu0 %v2929
    %3691 = vmatprep.subr.mxu0 0.0
    %3692 = vmatpush1.msra.mxu0 %v2928
    %3693 = vmatprep.subr.mxu0 0.0
    %3694 = vmatpush1.msra.mxu0 %v2927
    %3695 = vmatprep.subr.mxu0 0.0
    %3696 = vmatpush1.msra.mxu0 %v2926
    %3697 = vmatprep.subr.mxu0 0.0
    %3698 = vmatpush1.msra.mxu0 %v2925
    %3699 = vmatprep.subr.mxu0 0.0
    %3700 = vmatpush1.msra.mxu0 %v2924
    %3701 = vmatprep.subr.mxu0 0.0
    %3702 = vmatpush1.msra.mxu0 %v2923
    %3703 = vmatprep.subr.mxu0 0.0
    %3704 = vmatpush2.msra.mxu0 0.0
    %3705 = vmatprep.subr.mxu0 0.0
    %3706 = vmatpush2.msra.mxu0 0.0
    %3707 = vmatprep.subr.mxu0 0.0
    %3708 = vmatpush2.msra.mxu0 0.0
    %3709 = vmatprep.subr.mxu0 0.0
    %3710 = vmatpush2.msra.mxu0 0.0
    %3711 = vmatprep.subr.mxu0 0.0
    %3712 = vmatpush2.msra.mxu0 0.0
    %3713 = vmatprep.subr.mxu0 0.0
    %3714 = vmatpush2.msra.mxu0 0.0
    %3715 = vmatprep.subr.mxu0 0.0
    %3716 = vmatpush2.msra.mxu0 0.0
    %3717 = vmatprep.subr.mxu0 0.0
    %3718 = vmatpush2.msra.mxu0 0.0
    %3719 = vmatprep.subr.mxu0 0.0
    %3720 = vmatpush2.msra.mxu0 0.0
    %3721 = vmatprep.subr.mxu0 0.0
    %3722 = vmatpush2.msra.mxu0 0.0
    %3723 = vmatprep.subr.mxu0 0.0
    %3724 = vmatpush2.msra.mxu0 0.0
    %3725 = vmatprep.subr.mxu0 0.0
    %3726 = vmatpush2.msra.mxu0 0.0
    %3727 = vmatprep.subr.mxu0 0.0
    %3728 = vmatpush2.msra.mxu0 0.0
    %3729 = vmatprep.subr.mxu0 0.0
    %3730 = vmatpush2.msra.mxu0 0.0
    %3731 = vmatprep.subr.mxu0 0.0
    %3732 = vmatpush2.msra.mxu0 0.0
    %3733 = vmatprep.subr.mxu0 0.0
    %3734 = vmatpush2.msra.mxu0 0.0
    %3735 = vmatprep.mubr.f32.mxu0 0.0
    %3736 = vmatmul.mubr.f32.gmra.mxu0 %v3669
    %v3737 = vpop.f32.mrf.mxu0
    %v3738 = vadd.f32 0.0, %v3737
    %v3739 = vpop.f32.mrf.mxu0
    %3740 = vdwg.mxu0
    %3741 = vmatprep.subr.mxu0 0.0
    %3742 = vmatpush1.msra.mxu0 0.0
    %3743 = vmatprep.subr.mxu0 0.0
    %3744 = vmatpush1.msra.mxu0 0.0
    %3745 = vmatprep.subr.mxu0 0.0
    %3746 = vmatpush1.msra.mxu0 0.0
    %3747 = vmatprep.subr.mxu0 0.0
    %3748 = vmatpush1.msra.mxu0 0.0
    %3749 = vmatprep.subr.mxu0 0.0
    %3750 = vmatpush1.msra.mxu0 0.0
    %3751 = vmatprep.subr.mxu0 0.0
    %3752 = vmatpush1.msra.mxu0 0.0
    %3753 = vmatprep.subr.mxu0 0.0
    %3754 = vmatpush1.msra.mxu0 0.0
    %3755 = vmatprep.subr.mxu0 0.0
    %3756 = vmatpush1.msra.mxu0 0.0
    %3757 = vmatprep.subr.mxu0 0.0
    %3758 = vmatpush1.msra.mxu0 %v2939
    %3759 = vmatprep.subr.mxu0 0.0
    %3760 = vmatpush1.msra.mxu0 %v2938
    %3761 = vmatprep.subr.mxu0 0.0
    %3762 = vmatpush1.msra.mxu0 %v2937
    %3763 = vmatprep.subr.mxu0 0.0
    %3764 = vmatpush1.msra.mxu0 %v2936
    %3765 = vmatprep.subr.mxu0 0.0
    %3766 = vmatpush1.msra.mxu0 %v2935
    %3767 = vmatprep.subr.mxu0 0.0
    %3768 = vmatpush1.msra.mxu0 %v2934
    %3769 = vmatprep.subr.mxu0 0.0
    %3770 = vmatpush1.msra.mxu0 %v2933
    %3771 = vmatprep.subr.mxu0 0.0
    %3772 = vmatpush1.msra.mxu0 %v2932
    %3773 = vmatprep.subr.mxu0 0.0
    %3774 = vmatpush2.msra.mxu0 0.0
    %3775 = vmatprep.subr.mxu0 0.0
    %3776 = vmatpush2.msra.mxu0 0.0
    %3777 = vmatprep.subr.mxu0 0.0
    %3778 = vmatpush2.msra.mxu0 0.0
    %3779 = vmatprep.subr.mxu0 0.0
    %3780 = vmatpush2.msra.mxu0 0.0
    %3781 = vmatprep.subr.mxu0 0.0
    %3782 = vmatpush2.msra.mxu0 0.0
    %3783 = vmatprep.subr.mxu0 0.0
    %3784 = vmatpush2.msra.mxu0 0.0
    %3785 = vmatprep.subr.mxu0 0.0
    %3786 = vmatpush2.msra.mxu0 0.0
    %3787 = vmatprep.subr.mxu0 0.0
    %3788 = vmatpush2.msra.mxu0 0.0
    %3789 = vmatprep.subr.mxu0 0.0
    %3790 = vmatpush2.msra.mxu0 0.0
    %3791 = vmatprep.subr.mxu0 0.0
    %3792 = vmatpush2.msra.mxu0 0.0
    %3793 = vmatprep.subr.mxu0 0.0
    %3794 = vmatpush2.msra.mxu0 0.0
    %3795 = vmatprep.subr.mxu0 0.0
    %3796 = vmatpush2.msra.mxu0 0.0
    %3797 = vmatprep.subr.mxu0 0.0
    %3798 = vmatpush2.msra.mxu0 0.0
    %3799 = vmatprep.subr.mxu0 0.0
    %3800 = vmatpush2.msra.mxu0 0.0
    %3801 = vmatprep.subr.mxu0 0.0
    %3802 = vmatpush2.msra.mxu0 0.0
    %3803 = vmatprep.subr.mxu0 0.0
    %3804 = vmatpush2.msra.mxu0 0.0
    %3805 = vmatprep.mubr.f32.mxu0 0.0
    %3806 = vmatmul.mubr.f32.gmra.mxu0 %v3669
    %v3807 = vpop.f32.mrf.mxu0
    %v3808 = vadd.f32 0.0, %v3807
    %v3809 = vpop.f32.mrf.mxu0
    %3810 = vdwg.mxu0
    %3811 = vmatprep.subr.mxu0 0.0
    %3812 = vmatpush1.msra.mxu0 0.0
    %3813 = vmatprep.subr.mxu0 0.0
    %3814 = vmatpush1.msra.mxu0 0.0
    %3815 = vmatprep.subr.mxu0 0.0
    %3816 = vmatpush1.msra.mxu0 0.0
    %3817 = vmatprep.subr.mxu0 0.0
    %3818 = vmatpush1.msra.mxu0 0.0
    %3819 = vmatprep.subr.mxu0 0.0
    %3820 = vmatpush1.msra.mxu0 0.0
    %3821 = vmatprep.subr.mxu0 0.0
    %3822 = vmatpush1.msra.mxu0 0.0
    %3823 = vmatprep.subr.mxu0 0.0
    %3824 = vmatpush1.msra.mxu0 0.0
    %3825 = vmatprep.subr.mxu0 0.0
    %3826 = vmatpush1.msra.mxu0 0.0
    %3827 = vmatprep.subr.mxu0 0.0
    %3828 = vmatpush1.msra.mxu0 %v2948
    %3829 = vmatprep.subr.mxu0 0.0
    %3830 = vmatpush1.msra.mxu0 %v2947
    %3831 = vmatprep.subr.mxu0 0.0
    %3832 = vmatpush1.msra.mxu0 %v2946
    %3833 = vmatprep.subr.mxu0 0.0
    %3834 = vmatpush1.msra.mxu0 %v2945
    %3835 = vmatprep.subr.mxu0 0.0
    %3836 = vmatpush1.msra.mxu0 %v2944
    %3837 = vmatprep.subr.mxu0 0.0
    %3838 = vmatpush1.msra.mxu0 %v2943
    %3839 = vmatprep.subr.mxu0 0.0
    %3840 = vmatpush1.msra.mxu0 %v2942
    %3841 = vmatprep.subr.mxu0 0.0
    %3842 = vmatpush1.msra.mxu0 %v2941
    %3843 = vmatprep.subr.mxu0 0.0
    %3844 = vmatpush2.msra.mxu0 0.0
    %3845 = vmatprep.subr.mxu0 0.0
    %3846 = vmatpush2.msra.mxu0 0.0
    %3847 = vmatprep.subr.mxu0 0.0
    %3848 = vmatpush2.msra.mxu0 0.0
    %3849 = vmatprep.subr.mxu0 0.0
    %3850 = vmatpush2.msra.mxu0 0.0
    %3851 = vmatprep.subr.mxu0 0.0
    %3852 = vmatpush2.msra.mxu0 0.0
    %3853 = vmatprep.subr.mxu0 0.0
    %3854 = vmatpush2.msra.mxu0 0.0
    %3855 = vmatprep.subr.mxu0 0.0
    %3856 = vmatpush2.msra.mxu0 0.0
    %3857 = vmatprep.subr.mxu0 0.0
    %3858 = vmatpush2.msra.mxu0 0.0
    %3859 = vmatprep.subr.mxu0 0.0
    %3860 = vmatpush2.msra.mxu0 0.0
    %3861 = vmatprep.subr.mxu0 0.0
    %3862 = vmatpush2.msra.mxu0 0.0
    %3863 = vmatprep.subr.mxu0 0.0
    %3864 = vmatpush2.msra.mxu0 0.0
    %3865 = vmatprep.subr.mxu0 0.0
    %3866 = vmatpush2.msra.mxu0 0.0
    %3867 = vmatprep.subr.mxu0 0.0
    %3868 = vmatpush2.msra.mxu0 0.0
    %3869 = vmatprep.subr.mxu0 0.0
    %3870 = vmatpush2.msra.mxu0 0.0
    %3871 = vmatprep.subr.mxu0 0.0
    %3872 = vmatpush2.msra.mxu0 0.0
    %3873 = vmatprep.subr.mxu0 0.0
    %3874 = vmatpush2.msra.mxu0 0.0
    %3875 = vmatprep.mubr.f32.mxu0 0.0
    %3876 = vmatmul.mubr.f32.gmra.mxu0 %v3669
    %v3877 = vpop.f32.mrf.mxu0
    %v3878 = vadd.f32 %v2955, %v3877
    %v3879 = vpop.f32.mrf.mxu0
    %3880 = vdwg.mxu0
    %v3881 = vadd.f32 %v3665, %v3738
    %v3882 = vxor.u32 %v3881, 2147483648
    %v3883 = vmul.f32 %v3882, 1.442695
    %v3884 = vpow.pop %v3883
    %v3885 = vadd.f32 %v3884, 1.0
    %v3886 = vrcp.pop %v3885
    %v3887 = vmul.f32 1.0, %v3886
    %v3888 = vadd.f32 %v3666, %v3808
    %v3889 = vxor.u32 %v3888, 2147483648
    %v3890 = vmul.f32 %v3889, 1.442695
    %v3891 = vpow.pop %v3890
    %v3892 = vadd.f32 %v3891, 1.0
    %v3893 = vrcp.pop %v3892
    %v3894 = vmul.f32 1.0, %v3893
    %v3895 = vmul.f32 %v3887, %v3878
    %v3896 = vadd.f32 %v3667, %v3895
    %v3897 = vtanh.pop %v3896
    %v3898 = vsub.f32 %v3663, %v3897
    %v3899 = vmul.f32 %v3894, %v3898
    %v3900 = vadd.f32 %v3897, %v3899
    %3901 = vst.msk [vmem:[#allocation3 + $0x18] sm:$0xff] %vm99, %v3900
    %v3902 = vld [vmem:[#allocation2 + $0x20] sm:$0xff]
    %v3903 = vld [vmem:[%s368 + $0x20] sm:$0xff]
    %v3904 = vld [vmem:[%s507 + $0x20] sm:$0xff]
    %v3906 = vsel %vm99, %v3900, 0
    %3908 = vmatprep.subr.mxu0 0.0
    %3909 = vmatpush1.msra.mxu0 0.0
    %3910 = vmatprep.subr.mxu0 0.0
    %3911 = vmatpush1.msra.mxu0 0.0
    %3912 = vmatprep.subr.mxu0 0.0
    %3913 = vmatpush1.msra.mxu0 0.0
    %3914 = vmatprep.subr.mxu0 0.0
    %3915 = vmatpush1.msra.mxu0 0.0
    %3916 = vmatprep.subr.mxu0 0.0
    %3917 = vmatpush1.msra.mxu0 0.0
    %3918 = vmatprep.subr.mxu0 0.0
    %3919 = vmatpush1.msra.mxu0 0.0
    %3920 = vmatprep.subr.mxu0 0.0
    %3921 = vmatpush1.msra.mxu0 0.0
    %3922 = vmatprep.subr.mxu0 0.0
    %3923 = vmatpush1.msra.mxu0 0.0
    %3924 = vmatprep.subr.mxu0 0.0
    %3925 = vmatpush1.msra.mxu0 %v2930
    %3926 = vmatprep.subr.mxu0 0.0
    %3927 = vmatpush1.msra.mxu0 %v2929
    %3928 = vmatprep.subr.mxu0 0.0
    %3929 = vmatpush1.msra.mxu0 %v2928
    %3930 = vmatprep.subr.mxu0 0.0
    %3931 = vmatpush1.msra.mxu0 %v2927
    %3932 = vmatprep.subr.mxu0 0.0
    %3933 = vmatpush1.msra.mxu0 %v2926
    %3934 = vmatprep.subr.mxu0 0.0
    %3935 = vmatpush1.msra.mxu0 %v2925
    %3936 = vmatprep.subr.mxu0 0.0
    %3937 = vmatpush1.msra.mxu0 %v2924
    %3938 = vmatprep.subr.mxu0 0.0
    %3939 = vmatpush1.msra.mxu0 %v2923
    %3940 = vmatprep.subr.mxu0 0.0
    %3941 = vmatpush2.msra.mxu0 0.0
    %3942 = vmatprep.subr.mxu0 0.0
    %3943 = vmatpush2.msra.mxu0 0.0
    %3944 = vmatprep.subr.mxu0 0.0
    %3945 = vmatpush2.msra.mxu0 0.0
    %3946 = vmatprep.subr.mxu0 0.0
    %3947 = vmatpush2.msra.mxu0 0.0
    %3948 = vmatprep.subr.mxu0 0.0
    %3949 = vmatpush2.msra.mxu0 0.0
    %3950 = vmatprep.subr.mxu0 0.0
    %3951 = vmatpush2.msra.mxu0 0.0
    %3952 = vmatprep.subr.mxu0 0.0
    %3953 = vmatpush2.msra.mxu0 0.0
    %3954 = vmatprep.subr.mxu0 0.0
    %3955 = vmatpush2.msra.mxu0 0.0
    %3956 = vmatprep.subr.mxu0 0.0
    %3957 = vmatpush2.msra.mxu0 0.0
    %3958 = vmatprep.subr.mxu0 0.0
    %3959 = vmatpush2.msra.mxu0 0.0
    %3960 = vmatprep.subr.mxu0 0.0
    %3961 = vmatpush2.msra.mxu0 0.0
    %3962 = vmatprep.subr.mxu0 0.0
    %3963 = vmatpush2.msra.mxu0 0.0
    %3964 = vmatprep.subr.mxu0 0.0
    %3965 = vmatpush2.msra.mxu0 0.0
    %3966 = vmatprep.subr.mxu0 0.0
    %3967 = vmatpush2.msra.mxu0 0.0
    %3968 = vmatprep.subr.mxu0 0.0
    %3969 = vmatpush2.msra.mxu0 0.0
    %3970 = vmatprep.subr.mxu0 0.0
    %3971 = vmatpush2.msra.mxu0 0.0
    %3972 = vmatprep.mubr.f32.mxu0 0.0
    %3973 = vmatmul.mubr.f32.gmra.mxu0 %v3906
    %v3974 = vpop.f32.mrf.mxu0
    %v3975 = vadd.f32 0.0, %v3974
    %v3976 = vpop.f32.mrf.mxu0
    %3977 = vdwg.mxu0
    %3978 = vmatprep.subr.mxu0 0.0
    %3979 = vmatpush1.msra.mxu0 0.0
    %3980 = vmatprep.subr.mxu0 0.0
    %3981 = vmatpush1.msra.mxu0 0.0
    %3982 = vmatprep.subr.mxu0 0.0
    %3983 = vmatpush1.msra.mxu0 0.0
    %3984 = vmatprep.subr.mxu0 0.0
    %3985 = vmatpush1.msra.mxu0 0.0
    %3986 = vmatprep.subr.mxu0 0.0
    %3987 = vmatpush1.msra.mxu0 0.0
    %3988 = vmatprep.subr.mxu0 0.0
    %3989 = vmatpush1.msra.mxu0 0.0
    %3990 = vmatprep.subr.mxu0 0.0
    %3991 = vmatpush1.msra.mxu0 0.0
    %3992 = vmatprep.subr.mxu0 0.0
    %3993 = vmatpush1.msra.mxu0 0.0
    %3994 = vmatprep.subr.mxu0 0.0
    %3995 = vmatpush1.msra.mxu0 %v2939
    %3996 = vmatprep.subr.mxu0 0.0
    %3997 = vmatpush1.msra.mxu0 %v2938
    %3998 = vmatprep.subr.mxu0 0.0
    %3999 = vmatpush1.msra.mxu0 %v2937
    %4000 = vmatprep.subr.mxu0 0.0
    %4001 = vmatpush1.msra.mxu0 %v2936
    %4002 = vmatprep.subr.mxu0 0.0
    %4003 = vmatpush1.msra.mxu0 %v2935
    %4004 = vmatprep.subr.mxu0 0.0
    %4005 = vmatpush1.msra.mxu0 %v2934
    %4006 = vmatprep.subr.mxu0 0.0
    %4007 = vmatpush1.msra.mxu0 %v2933
    %4008 = vmatprep.subr.mxu0 0.0
    %4009 = vmatpush1.msra.mxu0 %v2932
    %4010 = vmatprep.subr.mxu0 0.0
    %4011 = vmatpush2.msra.mxu0 0.0
    %4012 = vmatprep.subr.mxu0 0.0
    %4013 = vmatpush2.msra.mxu0 0.0
    %4014 = vmatprep.subr.mxu0 0.0
    %4015 = vmatpush2.msra.mxu0 0.0
    %4016 = vmatprep.subr.mxu0 0.0
    %4017 = vmatpush2.msra.mxu0 0.0
    %4018 = vmatprep.subr.mxu0 0.0
    %4019 = vmatpush2.msra.mxu0 0.0
    %4020 = vmatprep.subr.mxu0 0.0
    %4021 = vmatpush2.msra.mxu0 0.0
    %4022 = vmatprep.subr.mxu0 0.0
    %4023 = vmatpush2.msra.mxu0 0.0
    %4024 = vmatprep.subr.mxu0 0.0
    %4025 = vmatpush2.msra.mxu0 0.0
    %4026 = vmatprep.subr.mxu0 0.0
    %4027 = vmatpush2.msra.mxu0 0.0
    %4028 = vmatprep.subr.mxu0 0.0
    %4029 = vmatpush2.msra.mxu0 0.0
    %4030 = vmatprep.subr.mxu0 0.0
    %4031 = vmatpush2.msra.mxu0 0.0
    %4032 = vmatprep.subr.mxu0 0.0
    %4033 = vmatpush2.msra.mxu0 0.0
    %4034 = vmatprep.subr.mxu0 0.0
    %4035 = vmatpush2.msra.mxu0 0.0
    %4036 = vmatprep.subr.mxu0 0.0
    %4037 = vmatpush2.msra.mxu0 0.0
    %4038 = vmatprep.subr.mxu0 0.0
    %4039 = vmatpush2.msra.mxu0 0.0
    %4040 = vmatprep.subr.mxu0 0.0
    %4041 = vmatpush2.msra.mxu0 0.0
    %4042 = vmatprep.mubr.f32.mxu0 0.0
    %4043 = vmatmul.mubr.f32.gmra.mxu0 %v3906
    %v4044 = vpop.f32.mrf.mxu0
    %v4045 = vadd.f32 0.0, %v4044
    %v4046 = vpop.f32.mrf.mxu0
    %4047 = vdwg.mxu0
    %4048 = vmatprep.subr.mxu0 0.0
    %4049 = vmatpush1.msra.mxu0 0.0
    %4050 = vmatprep.subr.mxu0 0.0
    %4051 = vmatpush1.msra.mxu0 0.0
    %4052 = vmatprep.subr.mxu0 0.0
    %4053 = vmatpush1.msra.mxu0 0.0
    %4054 = vmatprep.subr.mxu0 0.0
    %4055 = vmatpush1.msra.mxu0 0.0
    %4056 = vmatprep.subr.mxu0 0.0
    %4057 = vmatpush1.msra.mxu0 0.0
    %4058 = vmatprep.subr.mxu0 0.0
    %4059 = vmatpush1.msra.mxu0 0.0
    %4060 = vmatprep.subr.mxu0 0.0
    %4061 = vmatpush1.msra.mxu0 0.0
    %4062 = vmatprep.subr.mxu0 0.0
    %4063 = vmatpush1.msra.mxu0 0.0
    %4064 = vmatprep.subr.mxu0 0.0
    %4065 = vmatpush1.msra.mxu0 %v2948
    %4066 = vmatprep.subr.mxu0 0.0
    %4067 = vmatpush1.msra.mxu0 %v2947
    %4068 = vmatprep.subr.mxu0 0.0
    %4069 = vmatpush1.msra.mxu0 %v2946
    %4070 = vmatprep.subr.mxu0 0.0
    %4071 = vmatpush1.msra.mxu0 %v2945
    %4072 = vmatprep.subr.mxu0 0.0
    %4073 = vmatpush1.msra.mxu0 %v2944
    %4074 = vmatprep.subr.mxu0 0.0
    %4075 = vmatpush1.msra.mxu0 %v2943
    %4076 = vmatprep.subr.mxu0 0.0
    %4077 = vmatpush1.msra.mxu0 %v2942
    %4078 = vmatprep.subr.mxu0 0.0
    %4079 = vmatpush1.msra.mxu0 %v2941
    %4080 = vmatprep.subr.mxu0 0.0
    %4081 = vmatpush2.msra.mxu0 0.0
    %4082 = vmatprep.subr.mxu0 0.0
    %4083 = vmatpush2.msra.mxu0 0.0
    %4084 = vmatprep.subr.mxu0 0.0
    %4085 = vmatpush2.msra.mxu0 0.0
    %4086 = vmatprep.subr.mxu0 0.0
    %4087 = vmatpush2.msra.mxu0 0.0
    %4088 = vmatprep.subr.mxu0 0.0
    %4089 = vmatpush2.msra.mxu0 0.0
    %4090 = vmatprep.subr.mxu0 0.0
    %4091 = vmatpush2.msra.mxu0 0.0
    %4092 = vmatprep.subr.mxu0 0.0
    %4093 = vmatpush2.msra.mxu0 0.0
    %4094 = vmatprep.subr.mxu0 0.0
    %4095 = vmatpush2.msra.mxu0 0.0
    %4096 = vmatprep.subr.mxu0 0.0
    %4097 = vmatpush2.msra.mxu0 0.0
    %4098 = vmatprep.subr.mxu0 0.0
    %4099 = vmatpush2.msra.mxu0 0.0
    %4100 = vmatprep.subr.mxu0 0.0
    %4101 = vmatpush2.msra.mxu0 0.0
    %4102 = vmatprep.subr.mxu0 0.0
    %4103 = vmatpush2.msra.mxu0 0.0
    %4104 = vmatprep.subr.mxu0 0.0
    %4105 = vmatpush2.msra.mxu0 0.0
    %4106 = vmatprep.subr.mxu0 0.0
    %4107 = vmatpush2.msra.mxu0 0.0
    %4108 = vmatprep.subr.mxu0 0.0
    %4109 = vmatpush2.msra.mxu0 0.0
    %4110 = vmatprep.subr.mxu0 0.0
    %4111 = vmatpush2.msra.mxu0 0.0
    %4112 = vmatprep.mubr.f32.mxu0 0.0
    %4113 = vmatmul.mubr.f32.gmra.mxu0 %v3906
    %v4114 = vpop.f32.mrf.mxu0
    %v4115 = vadd.f32 %v2955, %v4114
    %v4116 = vpop.f32.mrf.mxu0
    %4117 = vdwg.mxu0
    %v4118 = vadd.f32 %v3902, %v3975
    %v4119 = vxor.u32 %v4118, 2147483648
    %v4120 = vmul.f32 %v4119, 1.442695
    %v4121 = vpow.pop %v4120
    %v4122 = vadd.f32 %v4121, 1.0
    %v4123 = vrcp.pop %v4122
    %v4124 = vmul.f32 1.0, %v4123
    %v4125 = vadd.f32 %v3903, %v4045
    %v4126 = vxor.u32 %v4125, 2147483648
    %v4127 = vmul.f32 %v4126, 1.442695
    %v4128 = vpow.pop %v4127
    %v4129 = vadd.f32 %v4128, 1.0
    %v4130 = vrcp.pop %v4129
    %v4131 = vmul.f32 1.0, %v4130
    %v4132 = vmul.f32 %v4124, %v4115
    %v4133 = vadd.f32 %v3904, %v4132
    %v4134 = vtanh.pop %v4133
    %v4135 = vsub.f32 %v3900, %v4134
    %v4136 = vmul.f32 %v4131, %v4135
    %v4137 = vadd.f32 %v4134, %v4136
    %4138 = vst.msk [vmem:[#allocation3 + $0x20] sm:$0xff] %vm99, %v4137
    %v4139 = vld [vmem:[#allocation2 + $0x28] sm:$0xff]
    %v4140 = vld [vmem:[%s368 + $0x28] sm:$0xff]
    %v4141 = vld [vmem:[%s507 + $0x28] sm:$0xff]
    %v4143 = vsel %vm99, %v4137, 0
    %4145 = vmatprep.subr.mxu0 0.0
    %4146 = vmatpush1.msra.mxu0 0.0
    %4147 = vmatprep.subr.mxu0 0.0
    %4148 = vmatpush1.msra.mxu0 0.0
    %4149 = vmatprep.subr.mxu0 0.0
    %4150 = vmatpush1.msra.mxu0 0.0
    %4151 = vmatprep.subr.mxu0 0.0
    %4152 = vmatpush1.msra.mxu0 0.0
    %4153 = vmatprep.subr.mxu0 0.0
    %4154 = vmatpush1.msra.mxu0 0.0
    %4155 = vmatprep.subr.mxu0 0.0
    %4156 = vmatpush1.msra.mxu0 0.0
    %4157 = vmatprep.subr.mxu0 0.0
    %4158 = vmatpush1.msra.mxu0 0.0
    %4159 = vmatprep.subr.mxu0 0.0
    %4160 = vmatpush1.msra.mxu0 0.0
    %4161 = vmatprep.subr.mxu0 0.0
    %4162 = vmatpush1.msra.mxu0 %v2930
    %4163 = vmatprep.subr.mxu0 0.0
    %4164 = vmatpush1.msra.mxu0 %v2929
    %4165 = vmatprep.subr.mxu0 0.0
    %4166 = vmatpush1.msra.mxu0 %v2928
    %4167 = vmatprep.subr.mxu0 0.0
    %4168 = vmatpush1.msra.mxu0 %v2927
    %4169 = vmatprep.subr.mxu0 0.0
    %4170 = vmatpush1.msra.mxu0 %v2926
    %4171 = vmatprep.subr.mxu0 0.0
    %4172 = vmatpush1.msra.mxu0 %v2925
    %4173 = vmatprep.subr.mxu0 0.0
    %4174 = vmatpush1.msra.mxu0 %v2924
    %4175 = vmatprep.subr.mxu0 0.0
    %4176 = vmatpush1.msra.mxu0 %v2923
    %4177 = vmatprep.subr.mxu0 0.0
    %4178 = vmatpush2.msra.mxu0 0.0
    %4179 = vmatprep.subr.mxu0 0.0
    %4180 = vmatpush2.msra.mxu0 0.0
    %4181 = vmatprep.subr.mxu0 0.0
    %4182 = vmatpush2.msra.mxu0 0.0
    %4183 = vmatprep.subr.mxu0 0.0
    %4184 = vmatpush2.msra.mxu0 0.0
    %4185 = vmatprep.subr.mxu0 0.0
    %4186 = vmatpush2.msra.mxu0 0.0
    %4187 = vmatprep.subr.mxu0 0.0
    %4188 = vmatpush2.msra.mxu0 0.0
    %4189 = vmatprep.subr.mxu0 0.0
    %4190 = vmatpush2.msra.mxu0 0.0
    %4191 = vmatprep.subr.mxu0 0.0
    %4192 = vmatpush2.msra.mxu0 0.0
    %4193 = vmatprep.subr.mxu0 0.0
    %4194 = vmatpush2.msra.mxu0 0.0
    %4195 = vmatprep.subr.mxu0 0.0
    %4196 = vmatpush2.msra.mxu0 0.0
    %4197 = vmatprep.subr.mxu0 0.0
    %4198 = vmatpush2.msra.mxu0 0.0
    %4199 = vmatprep.subr.mxu0 0.0
    %4200 = vmatpush2.msra.mxu0 0.0
    %4201 = vmatprep.subr.mxu0 0.0
    %4202 = vmatpush2.msra.mxu0 0.0
    %4203 = vmatprep.subr.mxu0 0.0
    %4204 = vmatpush2.msra.mxu0 0.0
    %4205 = vmatprep.subr.mxu0 0.0
    %4206 = vmatpush2.msra.mxu0 0.0
    %4207 = vmatprep.subr.mxu0 0.0
    %4208 = vmatpush2.msra.mxu0 0.0
    %4209 = vmatprep.mubr.f32.mxu0 0.0
    %4210 = vmatmul.mubr.f32.gmra.mxu0 %v4143
    %v4211 = vpop.f32.mrf.mxu0
    %v4212 = vadd.f32 0.0, %v4211
    %v4213 = vpop.f32.mrf.mxu0
    %4214 = vdwg.mxu0
    %4215 = vmatprep.subr.mxu0 0.0
    %4216 = vmatpush1.msra.mxu0 0.0
    %4217 = vmatprep.subr.mxu0 0.0
    %4218 = vmatpush1.msra.mxu0 0.0
    %4219 = vmatprep.subr.mxu0 0.0
    %4220 = vmatpush1.msra.mxu0 0.0
    %4221 = vmatprep.subr.mxu0 0.0
    %4222 = vmatpush1.msra.mxu0 0.0
    %4223 = vmatprep.subr.mxu0 0.0
    %4224 = vmatpush1.msra.mxu0 0.0
    %4225 = vmatprep.subr.mxu0 0.0
    %4226 = vmatpush1.msra.mxu0 0.0
    %4227 = vmatprep.subr.mxu0 0.0
    %4228 = vmatpush1.msra.mxu0 0.0
    %4229 = vmatprep.subr.mxu0 0.0
    %4230 = vmatpush1.msra.mxu0 0.0
    %4231 = vmatprep.subr.mxu0 0.0
    %4232 = vmatpush1.msra.mxu0 %v2939
    %4233 = vmatprep.subr.mxu0 0.0
    %4234 = vmatpush1.msra.mxu0 %v2938
    %4235 = vmatprep.subr.mxu0 0.0
    %4236 = vmatpush1.msra.mxu0 %v2937
    %4237 = vmatprep.subr.mxu0 0.0
    %4238 = vmatpush1.msra.mxu0 %v2936
    %4239 = vmatprep.subr.mxu0 0.0
    %4240 = vmatpush1.msra.mxu0 %v2935
    %4241 = vmatprep.subr.mxu0 0.0
    %4242 = vmatpush1.msra.mxu0 %v2934
    %4243 = vmatprep.subr.mxu0 0.0
    %4244 = vmatpush1.msra.mxu0 %v2933
    %4245 = vmatprep.subr.mxu0 0.0
    %4246 = vmatpush1.msra.mxu0 %v2932
    %4247 = vmatprep.subr.mxu0 0.0
    %4248 = vmatpush2.msra.mxu0 0.0
    %4249 = vmatprep.subr.mxu0 0.0
    %4250 = vmatpush2.msra.mxu0 0.0
    %4251 = vmatprep.subr.mxu0 0.0
    %4252 = vmatpush2.msra.mxu0 0.0
    %4253 = vmatprep.subr.mxu0 0.0
    %4254 = vmatpush2.msra.mxu0 0.0
    %4255 = vmatprep.subr.mxu0 0.0
    %4256 = vmatpush2.msra.mxu0 0.0
    %4257 = vmatprep.subr.mxu0 0.0
    %4258 = vmatpush2.msra.mxu0 0.0
    %4259 = vmatprep.subr.mxu0 0.0
    %4260 = vmatpush2.msra.mxu0 0.0
    %4261 = vmatprep.subr.mxu0 0.0
    %4262 = vmatpush2.msra.mxu0 0.0
    %4263 = vmatprep.subr.mxu0 0.0
    %4264 = vmatpush2.msra.mxu0 0.0
    %4265 = vmatprep.subr.mxu0 0.0
    %4266 = vmatpush2.msra.mxu0 0.0
    %4267 = vmatprep.subr.mxu0 0.0
    %4268 = vmatpush2.msra.mxu0 0.0
    %4269 = vmatprep.subr.mxu0 0.0
    %4270 = vmatpush2.msra.mxu0 0.0
    %4271 = vmatprep.subr.mxu0 0.0
    %4272 = vmatpush2.msra.mxu0 0.0
    %4273 = vmatprep.subr.mxu0 0.0
    %4274 = vmatpush2.msra.mxu0 0.0
    %4275 = vmatprep.subr.mxu0 0.0
    %4276 = vmatpush2.msra.mxu0 0.0
    %4277 = vmatprep.subr.mxu0 0.0
    %4278 = vmatpush2.msra.mxu0 0.0
    %4279 = vmatprep.mubr.f32.mxu0 0.0
    %4280 = vmatmul.mubr.f32.gmra.mxu0 %v4143
    %v4281 = vpop.f32.mrf.mxu0
    %v4282 = vadd.f32 0.0, %v4281
    %v4283 = vpop.f32.mrf.mxu0
    %4284 = vdwg.mxu0
    %4285 = vmatprep.subr.mxu0 0.0
    %4286 = vmatpush1.msra.mxu0 0.0
    %4287 = vmatprep.subr.mxu0 0.0
    %4288 = vmatpush1.msra.mxu0 0.0
    %4289 = vmatprep.subr.mxu0 0.0
    %4290 = vmatpush1.msra.mxu0 0.0
    %4291 = vmatprep.subr.mxu0 0.0
    %4292 = vmatpush1.msra.mxu0 0.0
    %4293 = vmatprep.subr.mxu0 0.0
    %4294 = vmatpush1.msra.mxu0 0.0
    %4295 = vmatprep.subr.mxu0 0.0
    %4296 = vmatpush1.msra.mxu0 0.0
    %4297 = vmatprep.subr.mxu0 0.0
    %4298 = vmatpush1.msra.mxu0 0.0
    %4299 = vmatprep.subr.mxu0 0.0
    %4300 = vmatpush1.msra.mxu0 0.0
    %4301 = vmatprep.subr.mxu0 0.0
    %4302 = vmatpush1.msra.mxu0 %v2948
    %4303 = vmatprep.subr.mxu0 0.0
    %4304 = vmatpush1.msra.mxu0 %v2947
    %4305 = vmatprep.subr.mxu0 0.0
    %4306 = vmatpush1.msra.mxu0 %v2946
    %4307 = vmatprep.subr.mxu0 0.0
    %4308 = vmatpush1.msra.mxu0 %v2945
    %4309 = vmatprep.subr.mxu0 0.0
    %4310 = vmatpush1.msra.mxu0 %v2944
    %4311 = vmatprep.subr.mxu0 0.0
    %4312 = vmatpush1.msra.mxu0 %v2943
    %4313 = vmatprep.subr.mxu0 0.0
    %4314 = vmatpush1.msra.mxu0 %v2942
    %4315 = vmatprep.subr.mxu0 0.0
    %4316 = vmatpush1.msra.mxu0 %v2941
    %4317 = vmatprep.subr.mxu0 0.0
    %4318 = vmatpush2.msra.mxu0 0.0
    %4319 = vmatprep.subr.mxu0 0.0
    %4320 = vmatpush2.msra.mxu0 0.0
    %4321 = vmatprep.subr.mxu0 0.0
    %4322 = vmatpush2.msra.mxu0 0.0
    %4323 = vmatprep.subr.mxu0 0.0
    %4324 = vmatpush2.msra.mxu0 0.0
    %4325 = vmatprep.subr.mxu0 0.0
    %4326 = vmatpush2.msra.mxu0 0.0
    %4327 = vmatprep.subr.mxu0 0.0
    %4328 = vmatpush2.msra.mxu0 0.0
    %4329 = vmatprep.subr.mxu0 0.0
    %4330 = vmatpush2.msra.mxu0 0.0
    %4331 = vmatprep.subr.mxu0 0.0
    %4332 = vmatpush2.msra.mxu0 0.0
    %4333 = vmatprep.subr.mxu0 0.0
    %4334 = vmatpush2.msra.mxu0 0.0
    %4335 = vmatprep.subr.mxu0 0.0
    %4336 = vmatpush2.msra.mxu0 0.0
    %4337 = vmatprep.subr.mxu0 0.0
    %4338 = vmatpush2.msra.mxu0 0.0
    %4339 = vmatprep.subr.mxu0 0.0
    %4340 = vmatpush2.msra.mxu0 0.0
    %4341 = vmatprep.subr.mxu0 0.0
    %4342 = vmatpush2.msra.mxu0 0.0
    %4343 = vmatprep.subr.mxu0 0.0
    %4344 = vmatpush2.msra.mxu0 0.0
    %4345 = vmatprep.subr.mxu0 0.0
    %4346 = vmatpush2.msra.mxu0 0.0
    %4347 = vmatprep.subr.mxu0 0.0
    %4348 = vmatpush2.msra.mxu0 0.0
    %4349 = vmatprep.mubr.f32.mxu0 0.0
    %4350 = vmatmul.mubr.f32.gmra.mxu0 %v4143
    %v4351 = vpop.f32.mrf.mxu0
    %v4352 = vadd.f32 %v2955, %v4351
    %v4353 = vpop.f32.mrf.mxu0
    %4354 = vdwg.mxu0
    %v4355 = vadd.f32 %v4139, %v4212
    %v4356 = vxor.u32 %v4355, 2147483648
    %v4357 = vmul.f32 %v4356, 1.442695
    %v4358 = vpow.pop %v4357
    %v4359 = vadd.f32 %v4358, 1.0
    %v4360 = vrcp.pop %v4359
    %v4361 = vmul.f32 1.0, %v4360
    %v4362 = vadd.f32 %v4140, %v4282
    %v4363 = vxor.u32 %v4362, 2147483648
    %v4364 = vmul.f32 %v4363, 1.442695
    %v4365 = vpow.pop %v4364
    %v4366 = vadd.f32 %v4365, 1.0
    %v4367 = vrcp.pop %v4366
    %v4368 = vmul.f32 1.0, %v4367
    %v4369 = vmul.f32 %v4361, %v4352
    %v4370 = vadd.f32 %v4141, %v4369
    %v4371 = vtanh.pop %v4370
    %v4372 = vsub.f32 %v4137, %v4371
    %v4373 = vmul.f32 %v4368, %v4372
    %v4374 = vadd.f32 %v4371, %v4373
    %4375 = vst.msk [vmem:[#allocation3 + $0x28] sm:$0xff] %vm99, %v4374
    %v4376 = vld [vmem:[#allocation2 + $0x30] sm:$0xff]
    %v4377 = vld [vmem:[%s368 + $0x30] sm:$0xff]
    %v4378 = vld [vmem:[%s507 + $0x30] sm:$0xff]
    %v4380 = vsel %vm99, %v4374, 0
    %4382 = vmatprep.subr.mxu0 0.0
    %4383 = vmatpush1.msra.mxu0 0.0
    %4384 = vmatprep.subr.mxu0 0.0
    %4385 = vmatpush1.msra.mxu0 0.0
    %4386 = vmatprep.subr.mxu0 0.0
    %4387 = vmatpush1.msra.mxu0 0.0
    %4388 = vmatprep.subr.mxu0 0.0
    %4389 = vmatpush1.msra.mxu0 0.0
    %4390 = vmatprep.subr.mxu0 0.0
    %4391 = vmatpush1.msra.mxu0 0.0
    %4392 = vmatprep.subr.mxu0 0.0
    %4393 = vmatpush1.msra.mxu0 0.0
    %4394 = vmatprep.subr.mxu0 0.0
    %4395 = vmatpush1.msra.mxu0 0.0
    %4396 = vmatprep.subr.mxu0 0.0
    %4397 = vmatpush1.msra.mxu0 0.0
    %4398 = vmatprep.subr.mxu0 0.0
    %4399 = vmatpush1.msra.mxu0 %v2930
    %4400 = vmatprep.subr.mxu0 0.0
    %4401 = vmatpush1.msra.mxu0 %v2929
    %4402 = vmatprep.subr.mxu0 0.0
    %4403 = vmatpush1.msra.mxu0 %v2928
    %4404 = vmatprep.subr.mxu0 0.0
    %4405 = vmatpush1.msra.mxu0 %v2927
    %4406 = vmatprep.subr.mxu0 0.0
    %4407 = vmatpush1.msra.mxu0 %v2926
    %4408 = vmatprep.subr.mxu0 0.0
    %4409 = vmatpush1.msra.mxu0 %v2925
    %4410 = vmatprep.subr.mxu0 0.0
    %4411 = vmatpush1.msra.mxu0 %v2924
    %4412 = vmatprep.subr.mxu0 0.0
    %4413 = vmatpush1.msra.mxu0 %v2923
    %4414 = vmatprep.subr.mxu0 0.0
    %4415 = vmatpush2.msra.mxu0 0.0
    %4416 = vmatprep.subr.mxu0 0.0
    %4417 = vmatpush2.msra.mxu0 0.0
    %4418 = vmatprep.subr.mxu0 0.0
    %4419 = vmatpush2.msra.mxu0 0.0
    %4420 = vmatprep.subr.mxu0 0.0
    %4421 = vmatpush2.msra.mxu0 0.0
    %4422 = vmatprep.subr.mxu0 0.0
    %4423 = vmatpush2.msra.mxu0 0.0
    %4424 = vmatprep.subr.mxu0 0.0
    %4425 = vmatpush2.msra.mxu0 0.0
    %4426 = vmatprep.subr.mxu0 0.0
    %4427 = vmatpush2.msra.mxu0 0.0
    %4428 = vmatprep.subr.mxu0 0.0
    %4429 = vmatpush2.msra.mxu0 0.0
    %4430 = vmatprep.subr.mxu0 0.0
    %4431 = vmatpush2.msra.mxu0 0.0
    %4432 = vmatprep.subr.mxu0 0.0
    %4433 = vmatpush2.msra.mxu0 0.0
    %4434 = vmatprep.subr.mxu0 0.0
    %4435 = vmatpush2.msra.mxu0 0.0
    %4436 = vmatprep.subr.mxu0 0.0
    %4437 = vmatpush2.msra.mxu0 0.0
    %4438 = vmatprep.subr.mxu0 0.0
    %4439 = vmatpush2.msra.mxu0 0.0
    %4440 = vmatprep.subr.mxu0 0.0
    %4441 = vmatpush2.msra.mxu0 0.0
    %4442 = vmatprep.subr.mxu0 0.0
    %4443 = vmatpush2.msra.mxu0 0.0
    %4444 = vmatprep.subr.mxu0 0.0
    %4445 = vmatpush2.msra.mxu0 0.0
    %4446 = vmatprep.mubr.f32.mxu0 0.0
    %4447 = vmatmul.mubr.f32.gmra.mxu0 %v4380
    %v4448 = vpop.f32.mrf.mxu0
    %v4449 = vadd.f32 0.0, %v4448
    %v4450 = vpop.f32.mrf.mxu0
    %4451 = vdwg.mxu0
    %4452 = vmatprep.subr.mxu0 0.0
    %4453 = vmatpush1.msra.mxu0 0.0
    %4454 = vmatprep.subr.mxu0 0.0
    %4455 = vmatpush1.msra.mxu0 0.0
    %4456 = vmatprep.subr.mxu0 0.0
    %4457 = vmatpush1.msra.mxu0 0.0
    %4458 = vmatprep.subr.mxu0 0.0
    %4459 = vmatpush1.msra.mxu0 0.0
    %4460 = vmatprep.subr.mxu0 0.0
    %4461 = vmatpush1.msra.mxu0 0.0
    %4462 = vmatprep.subr.mxu0 0.0
    %4463 = vmatpush1.msra.mxu0 0.0
    %4464 = vmatprep.subr.mxu0 0.0
    %4465 = vmatpush1.msra.mxu0 0.0
    %4466 = vmatprep.subr.mxu0 0.0
    %4467 = vmatpush1.msra.mxu0 0.0
    %4468 = vmatprep.subr.mxu0 0.0
    %4469 = vmatpush1.msra.mxu0 %v2939
    %4470 = vmatprep.subr.mxu0 0.0
    %4471 = vmatpush1.msra.mxu0 %v2938
    %4472 = vmatprep.subr.mxu0 0.0
    %4473 = vmatpush1.msra.mxu0 %v2937
    %4474 = vmatprep.subr.mxu0 0.0
    %4475 = vmatpush1.msra.mxu0 %v2936
    %4476 = vmatprep.subr.mxu0 0.0
    %4477 = vmatpush1.msra.mxu0 %v2935
    %4478 = vmatprep.subr.mxu0 0.0
    %4479 = vmatpush1.msra.mxu0 %v2934
    %4480 = vmatprep.subr.mxu0 0.0
    %4481 = vmatpush1.msra.mxu0 %v2933
    %4482 = vmatprep.subr.mxu0 0.0
    %4483 = vmatpush1.msra.mxu0 %v2932
    %4484 = vmatprep.subr.mxu0 0.0
    %4485 = vmatpush2.msra.mxu0 0.0
    %4486 = vmatprep.subr.mxu0 0.0
    %4487 = vmatpush2.msra.mxu0 0.0
    %4488 = vmatprep.subr.mxu0 0.0
    %4489 = vmatpush2.msra.mxu0 0.0
    %4490 = vmatprep.subr.mxu0 0.0
    %4491 = vmatpush2.msra.mxu0 0.0
    %4492 = vmatprep.subr.mxu0 0.0
    %4493 = vmatpush2.msra.mxu0 0.0
    %4494 = vmatprep.subr.mxu0 0.0
    %4495 = vmatpush2.msra.mxu0 0.0
    %4496 = vmatprep.subr.mxu0 0.0
    %4497 = vmatpush2.msra.mxu0 0.0
    %4498 = vmatprep.subr.mxu0 0.0
    %4499 = vmatpush2.msra.mxu0 0.0
    %4500 = vmatprep.subr.mxu0 0.0
    %4501 = vmatpush2.msra.mxu0 0.0
    %4502 = vmatprep.subr.mxu0 0.0
    %4503 = vmatpush2.msra.mxu0 0.0
    %4504 = vmatprep.subr.mxu0 0.0
    %4505 = vmatpush2.msra.mxu0 0.0
    %4506 = vmatprep.subr.mxu0 0.0
    %4507 = vmatpush2.msra.mxu0 0.0
    %4508 = vmatprep.subr.mxu0 0.0
    %4509 = vmatpush2.msra.mxu0 0.0
    %4510 = vmatprep.subr.mxu0 0.0
    %4511 = vmatpush2.msra.mxu0 0.0
    %4512 = vmatprep.subr.mxu0 0.0
    %4513 = vmatpush2.msra.mxu0 0.0
    %4514 = vmatprep.subr.mxu0 0.0
    %4515 = vmatpush2.msra.mxu0 0.0
    %4516 = vmatprep.mubr.f32.mxu0 0.0
    %4517 = vmatmul.mubr.f32.gmra.mxu0 %v4380
    %v4518 = vpop.f32.mrf.mxu0
    %v4519 = vadd.f32 0.0, %v4518
    %v4520 = vpop.f32.mrf.mxu0
    %4521 = vdwg.mxu0
    %4522 = vmatprep.subr.mxu0 0.0
    %4523 = vmatpush1.msra.mxu0 0.0
    %4524 = vmatprep.subr.mxu0 0.0
    %4525 = vmatpush1.msra.mxu0 0.0
    %4526 = vmatprep.subr.mxu0 0.0
    %4527 = vmatpush1.msra.mxu0 0.0
    %4528 = vmatprep.subr.mxu0 0.0
    %4529 = vmatpush1.msra.mxu0 0.0
    %4530 = vmatprep.subr.mxu0 0.0
    %4531 = vmatpush1.msra.mxu0 0.0
    %4532 = vmatprep.subr.mxu0 0.0
    %4533 = vmatpush1.msra.mxu0 0.0
    %4534 = vmatprep.subr.mxu0 0.0
    %4535 = vmatpush1.msra.mxu0 0.0
    %4536 = vmatprep.subr.mxu0 0.0
    %4537 = vmatpush1.msra.mxu0 0.0
    %4538 = vmatprep.subr.mxu0 0.0
    %4539 = vmatpush1.msra.mxu0 %v2948
    %4540 = vmatprep.subr.mxu0 0.0
    %4541 = vmatpush1.msra.mxu0 %v2947
    %4542 = vmatprep.subr.mxu0 0.0
    %4543 = vmatpush1.msra.mxu0 %v2946
    %4544 = vmatprep.subr.mxu0 0.0
    %4545 = vmatpush1.msra.mxu0 %v2945
    %4546 = vmatprep.subr.mxu0 0.0
    %4547 = vmatpush1.msra.mxu0 %v2944
    %4548 = vmatprep.subr.mxu0 0.0
    %4549 = vmatpush1.msra.mxu0 %v2943
    %4550 = vmatprep.subr.mxu0 0.0
    %4551 = vmatpush1.msra.mxu0 %v2942
    %4552 = vmatprep.subr.mxu0 0.0
    %4553 = vmatpush1.msra.mxu0 %v2941
    %4554 = vmatprep.subr.mxu0 0.0
    %4555 = vmatpush2.msra.mxu0 0.0
    %4556 = vmatprep.subr.mxu0 0.0
    %4557 = vmatpush2.msra.mxu0 0.0
    %4558 = vmatprep.subr.mxu0 0.0
    %4559 = vmatpush2.msra.mxu0 0.0
    %4560 = vmatprep.subr.mxu0 0.0
    %4561 = vmatpush2.msra.mxu0 0.0
    %4562 = vmatprep.subr.mxu0 0.0
    %4563 = vmatpush2.msra.mxu0 0.0
    %4564 = vmatprep.subr.mxu0 0.0
    %4565 = vmatpush2.msra.mxu0 0.0
    %4566 = vmatprep.subr.mxu0 0.0
    %4567 = vmatpush2.msra.mxu0 0.0
    %4568 = vmatprep.subr.mxu0 0.0
    %4569 = vmatpush2.msra.mxu0 0.0
    %4570 = vmatprep.subr.mxu0 0.0
    %4571 = vmatpush2.msra.mxu0 0.0
    %4572 = vmatprep.subr.mxu0 0.0
    %4573 = vmatpush2.msra.mxu0 0.0
    %4574 = vmatprep.subr.mxu0 0.0
    %4575 = vmatpush2.msra.mxu0 0.0
    %4576 = vmatprep.subr.mxu0 0.0
    %4577 = vmatpush2.msra.mxu0 0.0
    %4578 = vmatprep.subr.mxu0 0.0
    %4579 = vmatpush2.msra.mxu0 0.0
    %4580 = vmatprep.subr.mxu0 0.0
    %4581 = vmatpush2.msra.mxu0 0.0
    %4582 = vmatprep.subr.mxu0 0.0
    %4583 = vmatpush2.msra.mxu0 0.0
    %4584 = vmatprep.subr.mxu0 0.0
    %4585 = vmatpush2.msra.mxu0 0.0
    %4586 = vmatprep.mubr.f32.mxu0 0.0
    %4587 = vmatmul.mubr.f32.gmra.mxu0 %v4380
    %v4588 = vpop.f32.mrf.mxu0
    %v4589 = vadd.f32 %v2955, %v4588
    %v4590 = vpop.f32.mrf.mxu0
    %4591 = vdwg.mxu0
    %v4592 = vadd.f32 %v4376, %v4449
    %v4593 = vxor.u32 %v4592, 2147483648
    %v4594 = vmul.f32 %v4593, 1.442695
    %v4595 = vpow.pop %v4594
    %v4596 = vadd.f32 %v4595, 1.0
    %v4597 = vrcp.pop %v4596
    %v4598 = vmul.f32 1.0, %v4597
    %v4599 = vadd.f32 %v4377, %v4519
    %v4600 = vxor.u32 %v4599, 2147483648
    %v4601 = vmul.f32 %v4600, 1.442695
    %v4602 = vpow.pop %v4601
    %v4603 = vadd.f32 %v4602, 1.0
    %v4604 = vrcp.pop %v4603
    %v4605 = vmul.f32 1.0, %v4604
    %v4606 = vmul.f32 %v4598, %v4589
    %v4607 = vadd.f32 %v4378, %v4606
    %v4608 = vtanh.pop %v4607
    %v4609 = vsub.f32 %v4374, %v4608
    %v4610 = vmul.f32 %v4605, %v4609
    %v4611 = vadd.f32 %v4608, %v4610
    %4612 = vst.msk [vmem:[#allocation3 + $0x30] sm:$0xff] %vm99, %v4611
    %v4613 = vld [vmem:[#allocation2 + $0x38] sm:$0xff]
    %v4614 = vld [vmem:[%s368 + $0x38] sm:$0xff]
    %v4615 = vld [vmem:[%s507 + $0x38] sm:$0xff]
    %v4617 = vsel %vm99, %v4611, 0
    %4619 = vmatprep.subr.mxu0 0.0
    %4620 = vmatpush1.msra.mxu0 0.0
    %4621 = vmatprep.subr.mxu0 0.0
    %4622 = vmatpush1.msra.mxu0 0.0
    %4623 = vmatprep.subr.mxu0 0.0
    %4624 = vmatpush1.msra.mxu0 0.0
    %4625 = vmatprep.subr.mxu0 0.0
    %4626 = vmatpush1.msra.mxu0 0.0
    %4627 = vmatprep.subr.mxu0 0.0
    %4628 = vmatpush1.msra.mxu0 0.0
    %4629 = vmatprep.subr.mxu0 0.0
    %4630 = vmatpush1.msra.mxu0 0.0
    %4631 = vmatprep.subr.mxu0 0.0
    %4632 = vmatpush1.msra.mxu0 0.0
    %4633 = vmatprep.subr.mxu0 0.0
    %4634 = vmatpush1.msra.mxu0 0.0
    %4635 = vmatprep.subr.mxu0 0.0
    %4636 = vmatpush1.msra.mxu0 %v2930
    %4637 = vmatprep.subr.mxu0 0.0
    %4638 = vmatpush1.msra.mxu0 %v2929
    %4639 = vmatprep.subr.mxu0 0.0
    %4640 = vmatpush1.msra.mxu0 %v2928
    %4641 = vmatprep.subr.mxu0 0.0
    %4642 = vmatpush1.msra.mxu0 %v2927
    %4643 = vmatprep.subr.mxu0 0.0
    %4644 = vmatpush1.msra.mxu0 %v2926
    %4645 = vmatprep.subr.mxu0 0.0
    %4646 = vmatpush1.msra.mxu0 %v2925
    %4647 = vmatprep.subr.mxu0 0.0
    %4648 = vmatpush1.msra.mxu0 %v2924
    %4649 = vmatprep.subr.mxu0 0.0
    %4650 = vmatpush1.msra.mxu0 %v2923
    %4651 = vmatprep.subr.mxu0 0.0
    %4652 = vmatpush2.msra.mxu0 0.0
    %4653 = vmatprep.subr.mxu0 0.0
    %4654 = vmatpush2.msra.mxu0 0.0
    %4655 = vmatprep.subr.mxu0 0.0
    %4656 = vmatpush2.msra.mxu0 0.0
    %4657 = vmatprep.subr.mxu0 0.0
    %4658 = vmatpush2.msra.mxu0 0.0
    %4659 = vmatprep.subr.mxu0 0.0
    %4660 = vmatpush2.msra.mxu0 0.0
    %4661 = vmatprep.subr.mxu0 0.0
    %4662 = vmatpush2.msra.mxu0 0.0
    %4663 = vmatprep.subr.mxu0 0.0
    %4664 = vmatpush2.msra.mxu0 0.0
    %4665 = vmatprep.subr.mxu0 0.0
    %4666 = vmatpush2.msra.mxu0 0.0
    %4667 = vmatprep.subr.mxu0 0.0
    %4668 = vmatpush2.msra.mxu0 0.0
    %4669 = vmatprep.subr.mxu0 0.0
    %4670 = vmatpush2.msra.mxu0 0.0
    %4671 = vmatprep.subr.mxu0 0.0
    %4672 = vmatpush2.msra.mxu0 0.0
    %4673 = vmatprep.subr.mxu0 0.0
    %4674 = vmatpush2.msra.mxu0 0.0
    %4675 = vmatprep.subr.mxu0 0.0
    %4676 = vmatpush2.msra.mxu0 0.0
    %4677 = vmatprep.subr.mxu0 0.0
    %4678 = vmatpush2.msra.mxu0 0.0
    %4679 = vmatprep.subr.mxu0 0.0
    %4680 = vmatpush2.msra.mxu0 0.0
    %4681 = vmatprep.subr.mxu0 0.0
    %4682 = vmatpush2.msra.mxu0 0.0
    %4683 = vmatprep.mubr.f32.mxu0 0.0
    %4684 = vmatmul.mubr.f32.gmra.mxu0 %v4617
    %v4685 = vpop.f32.mrf.mxu0
    %v4686 = vadd.f32 0.0, %v4685
    %v4687 = vpop.f32.mrf.mxu0
    %4688 = vdwg.mxu0
    %4689 = vmatprep.subr.mxu0 0.0
    %4690 = vmatpush1.msra.mxu0 0.0
    %4691 = vmatprep.subr.mxu0 0.0
    %4692 = vmatpush1.msra.mxu0 0.0
    %4693 = vmatprep.subr.mxu0 0.0
    %4694 = vmatpush1.msra.mxu0 0.0
    %4695 = vmatprep.subr.mxu0 0.0
    %4696 = vmatpush1.msra.mxu0 0.0
    %4697 = vmatprep.subr.mxu0 0.0
    %4698 = vmatpush1.msra.mxu0 0.0
    %4699 = vmatprep.subr.mxu0 0.0
    %4700 = vmatpush1.msra.mxu0 0.0
    %4701 = vmatprep.subr.mxu0 0.0
    %4702 = vmatpush1.msra.mxu0 0.0
    %4703 = vmatprep.subr.mxu0 0.0
    %4704 = vmatpush1.msra.mxu0 0.0
    %4705 = vmatprep.subr.mxu0 0.0
    %4706 = vmatpush1.msra.mxu0 %v2939
    %4707 = vmatprep.subr.mxu0 0.0
    %4708 = vmatpush1.msra.mxu0 %v2938
    %4709 = vmatprep.subr.mxu0 0.0
    %4710 = vmatpush1.msra.mxu0 %v2937
    %4711 = vmatprep.subr.mxu0 0.0
    %4712 = vmatpush1.msra.mxu0 %v2936
    %4713 = vmatprep.subr.mxu0 0.0
    %4714 = vmatpush1.msra.mxu0 %v2935
    %4715 = vmatprep.subr.mxu0 0.0
    %4716 = vmatpush1.msra.mxu0 %v2934
    %4717 = vmatprep.subr.mxu0 0.0
    %4718 = vmatpush1.msra.mxu0 %v2933
    %4719 = vmatprep.subr.mxu0 0.0
    %4720 = vmatpush1.msra.mxu0 %v2932
    %4721 = vmatprep.subr.mxu0 0.0
    %4722 = vmatpush2.msra.mxu0 0.0
    %4723 = vmatprep.subr.mxu0 0.0
    %4724 = vmatpush2.msra.mxu0 0.0
    %4725 = vmatprep.subr.mxu0 0.0
    %4726 = vmatpush2.msra.mxu0 0.0
    %4727 = vmatprep.subr.mxu0 0.0
    %4728 = vmatpush2.msra.mxu0 0.0
    %4729 = vmatprep.subr.mxu0 0.0
    %4730 = vmatpush2.msra.mxu0 0.0
    %4731 = vmatprep.subr.mxu0 0.0
    %4732 = vmatpush2.msra.mxu0 0.0
    %4733 = vmatprep.subr.mxu0 0.0
    %4734 = vmatpush2.msra.mxu0 0.0
    %4735 = vmatprep.subr.mxu0 0.0
    %4736 = vmatpush2.msra.mxu0 0.0
    %4737 = vmatprep.subr.mxu0 0.0
    %4738 = vmatpush2.msra.mxu0 0.0
    %4739 = vmatprep.subr.mxu0 0.0
    %4740 = vmatpush2.msra.mxu0 0.0
    %4741 = vmatprep.subr.mxu0 0.0
    %4742 = vmatpush2.msra.mxu0 0.0
    %4743 = vmatprep.subr.mxu0 0.0
    %4744 = vmatpush2.msra.mxu0 0.0
    %4745 = vmatprep.subr.mxu0 0.0
    %4746 = vmatpush2.msra.mxu0 0.0
    %4747 = vmatprep.subr.mxu0 0.0
    %4748 = vmatpush2.msra.mxu0 0.0
    %4749 = vmatprep.subr.mxu0 0.0
    %4750 = vmatpush2.msra.mxu0 0.0
    %4751 = vmatprep.subr.mxu0 0.0
    %4752 = vmatpush2.msra.mxu0 0.0
    %4753 = vmatprep.mubr.f32.mxu0 0.0
    %4754 = vmatmul.mubr.f32.gmra.mxu0 %v4617
    %v4755 = vpop.f32.mrf.mxu0
    %v4756 = vadd.f32 0.0, %v4755
    %v4757 = vpop.f32.mrf.mxu0
    %4758 = vdwg.mxu0
    %4759 = vmatprep.subr.mxu0 0.0
    %4760 = vmatpush1.msra.mxu0 0.0
    %4761 = vmatprep.subr.mxu0 0.0
    %4762 = vmatpush1.msra.mxu0 0.0
    %4763 = vmatprep.subr.mxu0 0.0
    %4764 = vmatpush1.msra.mxu0 0.0
    %4765 = vmatprep.subr.mxu0 0.0
    %4766 = vmatpush1.msra.mxu0 0.0
    %4767 = vmatprep.subr.mxu0 0.0
    %4768 = vmatpush1.msra.mxu0 0.0
    %4769 = vmatprep.subr.mxu0 0.0
    %4770 = vmatpush1.msra.mxu0 0.0
    %4771 = vmatprep.subr.mxu0 0.0
    %4772 = vmatpush1.msra.mxu0 0.0
    %4773 = vmatprep.subr.mxu0 0.0
    %4774 = vmatpush1.msra.mxu0 0.0
    %4775 = vmatprep.subr.mxu0 0.0
    %4776 = vmatpush1.msra.mxu0 %v2948
    %4777 = vmatprep.subr.mxu0 0.0
    %4778 = vmatpush1.msra.mxu0 %v2947
    %4779 = vmatprep.subr.mxu0 0.0
    %4780 = vmatpush1.msra.mxu0 %v2946
    %4781 = vmatprep.subr.mxu0 0.0
    %4782 = vmatpush1.msra.mxu0 %v2945
    %4783 = vmatprep.subr.mxu0 0.0
    %4784 = vmatpush1.msra.mxu0 %v2944
    %4785 = vmatprep.subr.mxu0 0.0
    %4786 = vmatpush1.msra.mxu0 %v2943
    %4787 = vmatprep.subr.mxu0 0.0
    %4788 = vmatpush1.msra.mxu0 %v2942
    %4789 = vmatprep.subr.mxu0 0.0
    %4790 = vmatpush1.msra.mxu0 %v2941
    %4791 = vmatprep.subr.mxu0 0.0
    %4792 = vmatpush2.msra.mxu0 0.0
    %4793 = vmatprep.subr.mxu0 0.0
    %4794 = vmatpush2.msra.mxu0 0.0
    %4795 = vmatprep.subr.mxu0 0.0
    %4796 = vmatpush2.msra.mxu0 0.0
    %4797 = vmatprep.subr.mxu0 0.0
    %4798 = vmatpush2.msra.mxu0 0.0
    %4799 = vmatprep.subr.mxu0 0.0
    %4800 = vmatpush2.msra.mxu0 0.0
    %4801 = vmatprep.subr.mxu0 0.0
    %4802 = vmatpush2.msra.mxu0 0.0
    %4803 = vmatprep.subr.mxu0 0.0
    %4804 = vmatpush2.msra.mxu0 0.0
    %4805 = vmatprep.subr.mxu0 0.0
    %4806 = vmatpush2.msra.mxu0 0.0
    %4807 = vmatprep.subr.mxu0 0.0
    %4808 = vmatpush2.msra.mxu0 0.0
    %4809 = vmatprep.subr.mxu0 0.0
    %4810 = vmatpush2.msra.mxu0 0.0
    %4811 = vmatprep.subr.mxu0 0.0
    %4812 = vmatpush2.msra.mxu0 0.0
    %4813 = vmatprep.subr.mxu0 0.0
    %4814 = vmatpush2.msra.mxu0 0.0
    %4815 = vmatprep.subr.mxu0 0.0
    %4816 = vmatpush2.msra.mxu0 0.0
    %4817 = vmatprep.subr.mxu0 0.0
    %4818 = vmatpush2.msra.mxu0 0.0
    %4819 = vmatprep.subr.mxu0 0.0
    %4820 = vmatpush2.msra.mxu0 0.0
    %4821 = vmatprep.subr.mxu0 0.0
    %4822 = vmatpush2.msra.mxu0 0.0
    %4823 = vmatprep.mubr.f32.mxu0 0.0
    %4824 = vmatmul.mubr.f32.gmra.mxu0 %v4617
    %v4825 = vpop.f32.mrf.mxu0
    %v4826 = vadd.f32 %v2955, %v4825
    %v4827 = vpop.f32.mrf.mxu0
    %4828 = vdwg.mxu0
    %v4829 = vadd.f32 %v4613, %v4686
    %v4830 = vxor.u32 %v4829, 2147483648
    %v4831 = vmul.f32 %v4830, 1.442695
    %v4832 = vpow.pop %v4831
    %v4833 = vadd.f32 %v4832, 1.0
    %v4834 = vrcp.pop %v4833
    %v4835 = vmul.f32 1.0, %v4834
    %v4836 = vadd.f32 %v4614, %v4756
    %v4837 = vxor.u32 %v4836, 2147483648
    %v4838 = vmul.f32 %v4837, 1.442695
    %v4839 = vpow.pop %v4838
    %v4840 = vadd.f32 %v4839, 1.0
    %v4841 = vrcp.pop %v4840
    %v4842 = vmul.f32 1.0, %v4841
    %v4843 = vmul.f32 %v4835, %v4826
    %v4844 = vadd.f32 %v4615, %v4843
    %v4845 = vtanh.pop %v4844
    %v4846 = vsub.f32 %v4611, %v4845
    %v4847 = vmul.f32 %v4842, %v4846
    %v4848 = vadd.f32 %v4845, %v4847
    %4849 = vst.msk [vmem:[#allocation3 + $0x38] sm:$0xff] %vm99, %v4848
    %v4850 = vld [vmem:[#allocation3] sm:$0xff]
    %v4851 = vld [vmem:[#allocation3 + $0x38] sm:$0xff]
    %v4852 = vsel %vm75, %v4851, %v4850
    %4853 = vst.msk [vmem:[#allocation3] sm:$0xff] %vm99, %v4852
    %v4854 = vsel %vm75, %v4850, %v4851
    %4855 = vst.msk [vmem:[#allocation3 + $0x38] sm:$0xff] %vm99, %v4854
    %v4856 = vld [vmem:[#allocation3 + $0x8] sm:$0xff]
    %v4857 = vld [vmem:[#allocation3 + $0x30] sm:$0xff]
    %v4858 = vsel %vm75, %v4857, %v4856
    %4859 = vst.msk [vmem:[#allocation3 + $0x8] sm:$0xff] %vm99, %v4858
    %v4860 = vsel %vm75, %v4856, %v4857
    %4861 = vst.msk [vmem:[#allocation3 + $0x30] sm:$0xff] %vm99, %v4860
    %v4862 = vld [vmem:[#allocation3 + $0x10] sm:$0xff]
    %v4863 = vld [vmem:[#allocation3 + $0x28] sm:$0xff]
    %v4864 = vsel %vm75, %v4863, %v4862
    %4865 = vst.msk [vmem:[#allocation3 + $0x10] sm:$0xff] %vm99, %v4864
    %v4866 = vsel %vm75, %v4862, %v4863
    %4867 = vst.msk [vmem:[#allocation3 + $0x28] sm:$0xff] %vm99, %v4866
    %v4868 = vld [vmem:[#allocation3 + $0x18] sm:$0xff]
    %v4869 = vld [vmem:[#allocation3 + $0x20] sm:$0xff]
    %v4870 = vsel %vm75, %v4869, %v4868
    %4871 = vst.msk [vmem:[#allocation3 + $0x18] sm:$0xff] %vm99, %v4870
    %v4872 = vsel %vm75, %v4868, %v4869
    %4873 = vst.msk [vmem:[#allocation3 + $0x20] sm:$0xff] %vm99, %v4872
    %v4874 = vld [vmem:[#allocation3] sm:$0xff]
    %v4875 = vld [vmem:[#allocation3 + $0x8] sm:$0xff]
    %v4876 = vld [vmem:[#allocation3 + $0x10] sm:$0xff]
    %v4877 = vld [vmem:[#allocation3 + $0x18] sm:$0xff]
    %v4878 = vld [vmem:[#allocation3 + $0x20] sm:$0xff]
    %v4879 = vld [vmem:[#allocation3 + $0x28] sm:$0xff]
    %v4880 = vld [vmem:[#allocation3 + $0x30] sm:$0xff]
    %v4881 = vld [vmem:[#allocation3 + $0x38] sm:$0xff]
    %s4882 = scalar_lea.vmem [#allocation7], 384
    %v4883 = vld [vmem:[%s4882] sm:$0xff]
    %v4884 = vld [vmem:[%s4882 + $0x8] sm:$0xff]
    %v4885 = vld [vmem:[%s4882 + $0x10] sm:$0xff]
    %v4886 = vld [vmem:[%s4882 + $0x18] sm:$0xff]
    %v4887 = vld [vmem:[%s4882 + $0x20] sm:$0xff]
    %v4888 = vld [vmem:[%s4882 + $0x28] sm:$0xff]
    %v4889 = vld [vmem:[%s4882 + $0x30] sm:$0xff]
    %v4890 = vld [vmem:[%s4882 + $0x38] sm:$0xff]
    %s4891 = scalar_lea.vmem %s4, 6
    %v4892 = vld [vmem:[%s4891] sm:$0x1]
    %v4894 = vlaneseq
    %v4895 = vshrl.u32 %v4894, 7
    %v4896 = vsub.s32 0, %v4895
    %v4897 = vrot.slane %v4892, %v4896
    %v4900 = vsel %vm99, %v4874, 0
    %v4903 = vsel %vm99, %v4875, 0
    %v4906 = vsel %vm99, %v4876, 0
    %v4909 = vsel %vm99, %v4877, 0
    %v4912 = vsel %vm99, %v4878, 0
    %v4915 = vsel %vm99, %v4879, 0
    %v4918 = vsel %vm99, %v4880, 0
    %v4921 = vsel %vm99, %v4881, 0
    %4923 = vmatprep.subr.mxu0 0.0
    %4924 = vmatpush1.msra.mxu0 0.0
    %4925 = vmatprep.subr.mxu0 0.0
    %4926 = vmatpush1.msra.mxu0 0.0
    %4927 = vmatprep.subr.mxu0 0.0
    %4928 = vmatpush1.msra.mxu0 0.0
    %4929 = vmatprep.subr.mxu0 0.0
    %4930 = vmatpush1.msra.mxu0 0.0
    %4931 = vmatprep.subr.mxu0 0.0
    %4932 = vmatpush1.msra.mxu0 0.0
    %4933 = vmatprep.subr.mxu0 0.0
    %4934 = vmatpush1.msra.mxu0 0.0
    %4935 = vmatprep.subr.mxu0 0.0
    %4936 = vmatpush1.msra.mxu0 0.0
    %4937 = vmatprep.subr.mxu0 0.0
    %4938 = vmatpush1.msra.mxu0 0.0
    %4939 = vmatprep.subr.mxu0 0.0
    %4940 = vmatpush1.msra.mxu0 %v4890
    %4941 = vmatprep.subr.mxu0 0.0
    %4942 = vmatpush1.msra.mxu0 %v4889
    %4943 = vmatprep.subr.mxu0 0.0
    %4944 = vmatpush1.msra.mxu0 %v4888
    %4945 = vmatprep.subr.mxu0 0.0
    %4946 = vmatpush1.msra.mxu0 %v4887
    %4947 = vmatprep.subr.mxu0 0.0
    %4948 = vmatpush1.msra.mxu0 %v4886
    %4949 = vmatprep.subr.mxu0 0.0
    %4950 = vmatpush1.msra.mxu0 %v4885
    %4951 = vmatprep.subr.mxu0 0.0
    %4952 = vmatpush1.msra.mxu0 %v4884
    %4953 = vmatprep.subr.mxu0 0.0
    %4954 = vmatpush1.msra.mxu0 %v4883
    %4955 = vmatprep.subr.mxu0 0.0
    %4956 = vmatpush2.msra.mxu0 0.0
    %4957 = vmatprep.subr.mxu0 0.0
    %4958 = vmatpush2.msra.mxu0 0.0
    %4959 = vmatprep.subr.mxu0 0.0
    %4960 = vmatpush2.msra.mxu0 0.0
    %4961 = vmatprep.subr.mxu0 0.0
    %4962 = vmatpush2.msra.mxu0 0.0
    %4963 = vmatprep.subr.mxu0 0.0
    %4964 = vmatpush2.msra.mxu0 0.0
    %4965 = vmatprep.subr.mxu0 0.0
    %4966 = vmatpush2.msra.mxu0 0.0
    %4967 = vmatprep.subr.mxu0 0.0
    %4968 = vmatpush2.msra.mxu0 0.0
    %4969 = vmatprep.subr.mxu0 0.0
    %4970 = vmatpush2.msra.mxu0 0.0
    %4971 = vmatprep.subr.mxu0 0.0
    %4972 = vmatpush2.msra.mxu0 0.0
    %4973 = vmatprep.subr.mxu0 0.0
    %4974 = vmatpush2.msra.mxu0 0.0
    %4975 = vmatprep.subr.mxu0 0.0
    %4976 = vmatpush2.msra.mxu0 0.0
    %4977 = vmatprep.subr.mxu0 0.0
    %4978 = vmatpush2.msra.mxu0 0.0
    %4979 = vmatprep.subr.mxu0 0.0
    %4980 = vmatpush2.msra.mxu0 0.0
    %4981 = vmatprep.subr.mxu0 0.0
    %4982 = vmatpush2.msra.mxu0 0.0
    %4983 = vmatprep.subr.mxu0 0.0
    %4984 = vmatpush2.msra.mxu0 0.0
    %4985 = vmatprep.subr.mxu0 0.0
    %4986 = vmatpush2.msra.mxu0 0.0
    %4987 = vmatprep.mubr.f32.mxu0 0.0
    %4988 = vmatmul.mubr.f32.gmra.mxu0 %v4900
    %v4989 = vpop.f32.mrf.mxu0
    %v4990 = vadd.f32 %v4897, %v4989
    %v4991 = vpop.f32.mrf.mxu0
    %4992 = vmatprep.mubr.f32.mxu0 0.0
    %4993 = vmatmul.mubr.f32.gmra.mxu0 %v4903
    %v4994 = vpop.f32.mrf.mxu0
    %v4995 = vadd.f32 %v4897, %v4994
    %v4996 = vpop.f32.mrf.mxu0
    %4997 = vmatprep.mubr.f32.mxu0 0.0
    %4998 = vmatmul.mubr.f32.gmra.mxu0 %v4906
    %v4999 = vpop.f32.mrf.mxu0
    %v5000 = vadd.f32 %v4897, %v4999
    %v5001 = vpop.f32.mrf.mxu0
    %5002 = vmatprep.mubr.f32.mxu0 0.0
    %5003 = vmatmul.mubr.f32.gmra.mxu0 %v4909
    %v5004 = vpop.f32.mrf.mxu0
    %v5005 = vadd.f32 %v4897, %v5004
    %v5006 = vpop.f32.mrf.mxu0
    %5007 = vmatprep.mubr.f32.mxu0 0.0
    %5008 = vmatmul.mubr.f32.gmra.mxu0 %v4912
    %v5009 = vpop.f32.mrf.mxu0
    %v5010 = vadd.f32 %v4897, %v5009
    %v5011 = vpop.f32.mrf.mxu0
    %5012 = vmatprep.mubr.f32.mxu0 0.0
    %5013 = vmatmul.mubr.f32.gmra.mxu0 %v4915
    %v5014 = vpop.f32.mrf.mxu0
    %v5015 = vadd.f32 %v4897, %v5014
    %v5016 = vpop.f32.mrf.mxu0
    %5017 = vmatprep.mubr.f32.mxu0 0.0
    %5018 = vmatmul.mubr.f32.gmra.mxu0 %v4918
    %v5019 = vpop.f32.mrf.mxu0
    %v5020 = vadd.f32 %v4897, %v5019
    %v5021 = vpop.f32.mrf.mxu0
    %5022 = vmatprep.mubr.f32.mxu0 0.0
    %5023 = vmatmul.mubr.f32.gmra.mxu0 %v4921
    %v5024 = vpop.f32.mrf.mxu0
    %v5025 = vadd.f32 %v4897, %v5024
    %v5026 = vpop.f32.mrf.mxu0
    %5027 = vdwg.mxu0
    %v5028 = vsel %vm75, %v5025, %v4990
    %5029 = vst.msk [vmem:[#allocation2] sm:$0xff] %vm99, %v5028
    %v5030 = vsel %vm75, %v5020, %v4995
    %5031 = vst.msk [vmem:[#allocation2 + $0x8] sm:$0xff] %vm99, %v5030
    %v5032 = vsel %vm75, %v5015, %v5000
    %5033 = vst.msk [vmem:[#allocation2 + $0x10] sm:$0xff] %vm99, %v5032
    %v5034 = vsel %vm75, %v5010, %v5005
    %5035 = vst.msk [vmem:[#allocation2 + $0x18] sm:$0xff] %vm99, %v5034
    %v5036 = vsel %vm75, %v5005, %v5010
    %5037 = vst.msk [vmem:[#allocation2 + $0x20] sm:$0xff] %vm99, %v5036
    %v5038 = vsel %vm75, %v5000, %v5015
    %5039 = vst.msk [vmem:[#allocation2 + $0x28] sm:$0xff] %vm99, %v5038
    %v5040 = vsel %vm75, %v4995, %v5020
    %5041 = vst.msk [vmem:[#allocation2 + $0x30] sm:$0xff] %vm99, %v5040
    %v5042 = vsel %vm75, %v4990, %v5025
    %5043 = vst.msk [vmem:[#allocation2 + $0x38] sm:$0xff] %vm99, %v5042
    %s5044 = scalar_lea.vmem [#allocation7], 448
    %v5045 = vld [vmem:[%s5044] sm:$0xff]
    %v5046 = vld [vmem:[%s5044 + $0x8] sm:$0xff]
    %v5047 = vld [vmem:[%s5044 + $0x10] sm:$0xff]
    %v5048 = vld [vmem:[%s5044 + $0x18] sm:$0xff]
    %v5049 = vld [vmem:[%s5044 + $0x20] sm:$0xff]
    %v5050 = vld [vmem:[%s5044 + $0x28] sm:$0xff]
    %v5051 = vld [vmem:[%s5044 + $0x30] sm:$0xff]
    %v5052 = vld [vmem:[%s5044 + $0x38] sm:$0xff]
    %s5053 = scalar_lea.vmem %s4, 7
    %v5054 = vld [vmem:[%s5053] sm:$0x1]
    %v5056 = vlaneseq
    %v5057 = vshrl.u32 %v5056, 7
    %v5058 = vsub.s32 0, %v5057
    %v5059 = vrot.slane %v5054, %v5058
    %5061 = vmatprep.subr.mxu0 0.0
    %5062 = vmatpush1.msra.mxu0 0.0
    %5063 = vmatprep.subr.mxu0 0.0
    %5064 = vmatpush1.msra.mxu0 0.0
    %5065 = vmatprep.subr.mxu0 0.0
    %5066 = vmatpush1.msra.mxu0 0.0
    %5067 = vmatprep.subr.mxu0 0.0
    %5068 = vmatpush1.msra.mxu0 0.0
    %5069 = vmatprep.subr.mxu0 0.0
    %5070 = vmatpush1.msra.mxu0 0.0
    %5071 = vmatprep.subr.mxu0 0.0
    %5072 = vmatpush1.msra.mxu0 0.0
    %5073 = vmatprep.subr.mxu0 0.0
    %5074 = vmatpush1.msra.mxu0 0.0
    %5075 = vmatprep.subr.mxu0 0.0
    %5076 = vmatpush1.msra.mxu0 0.0
    %5077 = vmatprep.subr.mxu0 0.0
    %5078 = vmatpush1.msra.mxu0 %v5052
    %5079 = vmatprep.subr.mxu0 0.0
    %5080 = vmatpush1.msra.mxu0 %v5051
    %5081 = vmatprep.subr.mxu0 0.0
    %5082 = vmatpush1.msra.mxu0 %v5050
    %5083 = vmatprep.subr.mxu0 0.0
    %5084 = vmatpush1.msra.mxu0 %v5049
    %5085 = vmatprep.subr.mxu0 0.0
    %5086 = vmatpush1.msra.mxu0 %v5048
    %5087 = vmatprep.subr.mxu0 0.0
    %5088 = vmatpush1.msra.mxu0 %v5047
    %5089 = vmatprep.subr.mxu0 0.0
    %5090 = vmatpush1.msra.mxu0 %v5046
    %5091 = vmatprep.subr.mxu0 0.0
    %5092 = vmatpush1.msra.mxu0 %v5045
    %5093 = vmatprep.subr.mxu0 0.0
    %5094 = vmatpush2.msra.mxu0 0.0
    %5095 = vmatprep.subr.mxu0 0.0
    %5096 = vmatpush2.msra.mxu0 0.0
    %5097 = vmatprep.subr.mxu0 0.0
    %5098 = vmatpush2.msra.mxu0 0.0
    %5099 = vmatprep.subr.mxu0 0.0
    %5100 = vmatpush2.msra.mxu0 0.0
    %5101 = vmatprep.subr.mxu0 0.0
    %5102 = vmatpush2.msra.mxu0 0.0
    %5103 = vmatprep.subr.mxu0 0.0
    %5104 = vmatpush2.msra.mxu0 0.0
    %5105 = vmatprep.subr.mxu0 0.0
    %5106 = vmatpush2.msra.mxu0 0.0
    %5107 = vmatprep.subr.mxu0 0.0
    %5108 = vmatpush2.msra.mxu0 0.0
    %5109 = vmatprep.subr.mxu0 0.0
    %5110 = vmatpush2.msra.mxu0 0.0
    %5111 = vmatprep.subr.mxu0 0.0
    %5112 = vmatpush2.msra.mxu0 0.0
    %5113 = vmatprep.subr.mxu0 0.0
    %5114 = vmatpush2.msra.mxu0 0.0
    %5115 = vmatprep.subr.mxu0 0.0
    %5116 = vmatpush2.msra.mxu0 0.0
    %5117 = vmatprep.subr.mxu0 0.0
    %5118 = vmatpush2.msra.mxu0 0.0
    %5119 = vmatprep.subr.mxu0 0.0
    %5120 = vmatpush2.msra.mxu0 0.0
    %5121 = vmatprep.subr.mxu0 0.0
    %5122 = vmatpush2.msra.mxu0 0.0
    %5123 = vmatprep.subr.mxu0 0.0
    %5124 = vmatpush2.msra.mxu0 0.0
    %5125 = vmatprep.mubr.f32.mxu0 0.0
    %5126 = vmatmul.mubr.f32.gmra.mxu0 %v4900
    %v5127 = vpop.f32.mrf.mxu0
    %v5128 = vadd.f32 %v5059, %v5127
    %v5129 = vpop.f32.mrf.mxu0
    %5130 = vmatprep.mubr.f32.mxu0 0.0
    %5131 = vmatmul.mubr.f32.gmra.mxu0 %v4903
    %v5132 = vpop.f32.mrf.mxu0
    %v5133 = vadd.f32 %v5059, %v5132
    %v5134 = vpop.f32.mrf.mxu0
    %5135 = vmatprep.mubr.f32.mxu0 0.0
    %5136 = vmatmul.mubr.f32.gmra.mxu0 %v4906
    %v5137 = vpop.f32.mrf.mxu0
    %v5138 = vadd.f32 %v5059, %v5137
    %v5139 = vpop.f32.mrf.mxu0
    %5140 = vmatprep.mubr.f32.mxu0 0.0
    %5141 = vmatmul.mubr.f32.gmra.mxu0 %v4909
    %v5142 = vpop.f32.mrf.mxu0
    %v5143 = vadd.f32 %v5059, %v5142
    %v5144 = vpop.f32.mrf.mxu0
    %5145 = vmatprep.mubr.f32.mxu0 0.0
    %5146 = vmatmul.mubr.f32.gmra.mxu0 %v4912
    %v5147 = vpop.f32.mrf.mxu0
    %v5148 = vadd.f32 %v5059, %v5147
    %v5149 = vpop.f32.mrf.mxu0
    %5150 = vmatprep.mubr.f32.mxu0 0.0
    %5151 = vmatmul.mubr.f32.gmra.mxu0 %v4915
    %v5152 = vpop.f32.mrf.mxu0
    %v5153 = vadd.f32 %v5059, %v5152
    %v5154 = vpop.f32.mrf.mxu0
    %5155 = vmatprep.mubr.f32.mxu0 0.0
    %5156 = vmatmul.mubr.f32.gmra.mxu0 %v4918
    %v5157 = vpop.f32.mrf.mxu0
    %v5158 = vadd.f32 %v5059, %v5157
    %v5159 = vpop.f32.mrf.mxu0
    %5160 = vmatprep.mubr.f32.mxu0 0.0
    %5161 = vmatmul.mubr.f32.gmra.mxu0 %v4921
    %v5162 = vpop.f32.mrf.mxu0
    %v5163 = vadd.f32 %v5059, %v5162
    %v5164 = vpop.f32.mrf.mxu0
    %5165 = vdwg.mxu0
    %v5166 = vsel %vm75, %v5163, %v5128
    %5167 = vst.msk [vmem:[%s368] sm:$0xff] %vm99, %v5166
    %v5168 = vsel %vm75, %v5158, %v5133
    %5169 = vst.msk [vmem:[%s368 + $0x8] sm:$0xff] %vm99, %v5168
    %v5170 = vsel %vm75, %v5153, %v5138
    %5171 = vst.msk [vmem:[%s368 + $0x10] sm:$0xff] %vm99, %v5170
    %v5172 = vsel %vm75, %v5148, %v5143
    %5173 = vst.msk [vmem:[%s368 + $0x18] sm:$0xff] %vm99, %v5172
    %v5174 = vsel %vm75, %v5143, %v5148
    %5175 = vst.msk [vmem:[%s368 + $0x20] sm:$0xff] %vm99, %v5174
    %v5176 = vsel %vm75, %v5138, %v5153
    %5177 = vst.msk [vmem:[%s368 + $0x28] sm:$0xff] %vm99, %v5176
    %v5178 = vsel %vm75, %v5133, %v5158
    %5179 = vst.msk [vmem:[%s368 + $0x30] sm:$0xff] %vm99, %v5178
    %v5180 = vsel %vm75, %v5128, %v5163
    %5181 = vst.msk [vmem:[%s368 + $0x38] sm:$0xff] %vm99, %v5180
    %s5182 = scalar_lea.vmem [#allocation7], 512
    %v5183 = vld [vmem:[%s5182] sm:$0xff]
    %v5184 = vld [vmem:[%s5182 + $0x8] sm:$0xff]
    %v5185 = vld [vmem:[%s5182 + $0x10] sm:$0xff]
    %v5186 = vld [vmem:[%s5182 + $0x18] sm:$0xff]
    %v5187 = vld [vmem:[%s5182 + $0x20] sm:$0xff]
    %v5188 = vld [vmem:[%s5182 + $0x28] sm:$0xff]
    %v5189 = vld [vmem:[%s5182 + $0x30] sm:$0xff]
    %v5190 = vld [vmem:[%s5182 + $0x38] sm:$0xff]
    %s5191 = scalar_lea.vmem %s4, 8
    %v5192 = vld [vmem:[%s5191] sm:$0x1]
    %v5194 = vlaneseq
    %v5195 = vshrl.u32 %v5194, 7
    %v5196 = vsub.s32 0, %v5195
    %v5197 = vrot.slane %v5192, %v5196
    %5199 = vmatprep.subr.mxu0 0.0
    %5200 = vmatpush1.msra.mxu0 0.0
    %5201 = vmatprep.subr.mxu0 0.0
    %5202 = vmatpush1.msra.mxu0 0.0
    %5203 = vmatprep.subr.mxu0 0.0
    %5204 = vmatpush1.msra.mxu0 0.0
    %5205 = vmatprep.subr.mxu0 0.0
    %5206 = vmatpush1.msra.mxu0 0.0
    %5207 = vmatprep.subr.mxu0 0.0
    %5208 = vmatpush1.msra.mxu0 0.0
    %5209 = vmatprep.subr.mxu0 0.0
    %5210 = vmatpush1.msra.mxu0 0.0
    %5211 = vmatprep.subr.mxu0 0.0
    %5212 = vmatpush1.msra.mxu0 0.0
    %5213 = vmatprep.subr.mxu0 0.0
    %5214 = vmatpush1.msra.mxu0 0.0
    %5215 = vmatprep.subr.mxu0 0.0
    %5216 = vmatpush1.msra.mxu0 %v5190
    %5217 = vmatprep.subr.mxu0 0.0
    %5218 = vmatpush1.msra.mxu0 %v5189
    %5219 = vmatprep.subr.mxu0 0.0
    %5220 = vmatpush1.msra.mxu0 %v5188
    %5221 = vmatprep.subr.mxu0 0.0
    %5222 = vmatpush1.msra.mxu0 %v5187
    %5223 = vmatprep.subr.mxu0 0.0
    %5224 = vmatpush1.msra.mxu0 %v5186
    %5225 = vmatprep.subr.mxu0 0.0
    %5226 = vmatpush1.msra.mxu0 %v5185
    %5227 = vmatprep.subr.mxu0 0.0
    %5228 = vmatpush1.msra.mxu0 %v5184
    %5229 = vmatprep.subr.mxu0 0.0
    %5230 = vmatpush1.msra.mxu0 %v5183
    %5231 = vmatprep.subr.mxu0 0.0
    %5232 = vmatpush2.msra.mxu0 0.0
    %5233 = vmatprep.subr.mxu0 0.0
    %5234 = vmatpush2.msra.mxu0 0.0
    %5235 = vmatprep.subr.mxu0 0.0
    %5236 = vmatpush2.msra.mxu0 0.0
    %5237 = vmatprep.subr.mxu0 0.0
    %5238 = vmatpush2.msra.mxu0 0.0
    %5239 = vmatprep.subr.mxu0 0.0
    %5240 = vmatpush2.msra.mxu0 0.0
    %5241 = vmatprep.subr.mxu0 0.0
    %5242 = vmatpush2.msra.mxu0 0.0
    %5243 = vmatprep.subr.mxu0 0.0
    %5244 = vmatpush2.msra.mxu0 0.0
    %5245 = vmatprep.subr.mxu0 0.0
    %5246 = vmatpush2.msra.mxu0 0.0
    %5247 = vmatprep.subr.mxu0 0.0
    %5248 = vmatpush2.msra.mxu0 0.0
    %5249 = vmatprep.subr.mxu0 0.0
    %5250 = vmatpush2.msra.mxu0 0.0
    %5251 = vmatprep.subr.mxu0 0.0
    %5252 = vmatpush2.msra.mxu0 0.0
    %5253 = vmatprep.subr.mxu0 0.0
    %5254 = vmatpush2.msra.mxu0 0.0
    %5255 = vmatprep.subr.mxu0 0.0
    %5256 = vmatpush2.msra.mxu0 0.0
    %5257 = vmatprep.subr.mxu0 0.0
    %5258 = vmatpush2.msra.mxu0 0.0
    %5259 = vmatprep.subr.mxu0 0.0
    %5260 = vmatpush2.msra.mxu0 0.0
    %5261 = vmatprep.subr.mxu0 0.0
    %5262 = vmatpush2.msra.mxu0 0.0
    %5263 = vmatprep.mubr.f32.mxu0 0.0
    %5264 = vmatmul.mubr.f32.gmra.mxu0 %v4900
    %v5265 = vpop.f32.mrf.mxu0
    %v5266 = vadd.f32 %v5197, %v5265
    %v5267 = vpop.f32.mrf.mxu0
    %5268 = vmatprep.mubr.f32.mxu0 0.0
    %5269 = vmatmul.mubr.f32.gmra.mxu0 %v4903
    %v5270 = vpop.f32.mrf.mxu0
    %v5271 = vadd.f32 %v5197, %v5270
    %v5272 = vpop.f32.mrf.mxu0
    %5273 = vmatprep.mubr.f32.mxu0 0.0
    %5274 = vmatmul.mubr.f32.gmra.mxu0 %v4906
    %v5275 = vpop.f32.mrf.mxu0
    %v5276 = vadd.f32 %v5197, %v5275
    %v5277 = vpop.f32.mrf.mxu0
    %5278 = vmatprep.mubr.f32.mxu0 0.0
    %5279 = vmatmul.mubr.f32.gmra.mxu0 %v4909
    %v5280 = vpop.f32.mrf.mxu0
    %v5281 = vadd.f32 %v5197, %v5280
    %v5282 = vpop.f32.mrf.mxu0
    %5283 = vmatprep.mubr.f32.mxu0 0.0
    %5284 = vmatmul.mubr.f32.gmra.mxu0 %v4912
    %v5285 = vpop.f32.mrf.mxu0
    %v5286 = vadd.f32 %v5197, %v5285
    %v5287 = vpop.f32.mrf.mxu0
    %5288 = vmatprep.mubr.f32.mxu0 0.0
    %5289 = vmatmul.mubr.f32.gmra.mxu0 %v4915
    %v5290 = vpop.f32.mrf.mxu0
    %v5291 = vadd.f32 %v5197, %v5290
    %v5292 = vpop.f32.mrf.mxu0
    %5293 = vmatprep.mubr.f32.mxu0 0.0
    %5294 = vmatmul.mubr.f32.gmra.mxu0 %v4918
    %v5295 = vpop.f32.mrf.mxu0
    %v5296 = vadd.f32 %v5197, %v5295
    %v5297 = vpop.f32.mrf.mxu0
    %5298 = vmatprep.mubr.f32.mxu0 0.0
    %5299 = vmatmul.mubr.f32.gmra.mxu0 %v4921
    %v5300 = vpop.f32.mrf.mxu0
    %v5301 = vadd.f32 %v5197, %v5300
    %v5302 = vpop.f32.mrf.mxu0
    %5303 = vdwg.mxu0
    %v5304 = vsel %vm75, %v5301, %v5266
    %5305 = vst.msk [vmem:[%s507] sm:$0xff] %vm99, %v5304
    %v5306 = vsel %vm75, %v5296, %v5271
    %5307 = vst.msk [vmem:[%s507 + $0x8] sm:$0xff] %vm99, %v5306
    %v5308 = vsel %vm75, %v5291, %v5276
    %5309 = vst.msk [vmem:[%s507 + $0x10] sm:$0xff] %vm99, %v5308
    %v5310 = vsel %vm75, %v5286, %v5281
    %5311 = vst.msk [vmem:[%s507 + $0x18] sm:$0xff] %vm99, %v5310
    %v5312 = vsel %vm75, %v5281, %v5286
    %5313 = vst.msk [vmem:[%s507 + $0x20] sm:$0xff] %vm99, %v5312
    %v5314 = vsel %vm75, %v5276, %v5291
    %5315 = vst.msk [vmem:[%s507 + $0x28] sm:$0xff] %vm99, %v5314
    %v5316 = vsel %vm75, %v5271, %v5296
    %5317 = vst.msk [vmem:[%s507 + $0x30] sm:$0xff] %vm99, %v5316
    %v5318 = vsel %vm75, %v5266, %v5301
    %5319 = vst.msk [vmem:[%s507 + $0x38] sm:$0xff] %vm99, %v5318
    %s5320 = scalar_lea.vmem [#allocation9], 384
    %v5321 = vld [vmem:[%s5320] sm:$0xff]
    %v5322 = vld [vmem:[%s5320 + $0x8] sm:$0xff]
    %v5323 = vld [vmem:[%s5320 + $0x10] sm:$0xff]
    %v5324 = vld [vmem:[%s5320 + $0x18] sm:$0xff]
    %v5325 = vld [vmem:[%s5320 + $0x20] sm:$0xff]
    %v5326 = vld [vmem:[%s5320 + $0x28] sm:$0xff]
    %v5327 = vld [vmem:[%s5320 + $0x30] sm:$0xff]
    %v5328 = vld [vmem:[%s5320 + $0x38] sm:$0xff]
    %s5329 = scalar_lea.vmem [#allocation9], 448
    %v5330 = vld [vmem:[%s5329] sm:$0xff]
    %v5331 = vld [vmem:[%s5329 + $0x8] sm:$0xff]
    %v5332 = vld [vmem:[%s5329 + $0x10] sm:$0xff]
    %v5333 = vld [vmem:[%s5329 + $0x18] sm:$0xff]
    %v5334 = vld [vmem:[%s5329 + $0x20] sm:$0xff]
    %v5335 = vld [vmem:[%s5329 + $0x28] sm:$0xff]
    %v5336 = vld [vmem:[%s5329 + $0x30] sm:$0xff]
    %v5337 = vld [vmem:[%s5329 + $0x38] sm:$0xff]
    %s5338 = scalar_lea.vmem [#allocation9], 512
    %v5339 = vld [vmem:[%s5338] sm:$0xff]
    %v5340 = vld [vmem:[%s5338 + $0x8] sm:$0xff]
    %v5341 = vld [vmem:[%s5338 + $0x10] sm:$0xff]
    %v5342 = vld [vmem:[%s5338 + $0x18] sm:$0xff]
    %v5343 = vld [vmem:[%s5338 + $0x20] sm:$0xff]
    %v5344 = vld [vmem:[%s5338 + $0x28] sm:$0xff]
    %v5345 = vld [vmem:[%s5338 + $0x30] sm:$0xff]
    %v5346 = vld [vmem:[%s5338 + $0x38] sm:$0xff]
    %s5347 = scalar_lea.vmem %s5, 2
    %v5348 = vld [vmem:[%s5347] sm:$0x1]
    %v5350 = vlaneseq
    %v5351 = vshrl.u32 %v5350, 7
    %v5352 = vsub.s32 0, %v5351
    %v5353 = vrot.slane %v5348, %v5352
    %v5355 = vld [vmem:[#allocation2] sm:$0xff]
    %v5356 = vld [vmem:[%s368] sm:$0xff]
    %v5357 = vld [vmem:[%s507] sm:$0xff]
    %5358 = vmatprep.subr.mxu0 0.0
    %5359 = vmatpush1.msra.mxu0 0.0
    %5360 = vmatprep.subr.mxu0 0.0
    %5361 = vmatpush1.msra.mxu0 0.0
    %5362 = vmatprep.subr.mxu0 0.0
    %5363 = vmatpush1.msra.mxu0 0.0
    %5364 = vmatprep.subr.mxu0 0.0
    %5365 = vmatpush1.msra.mxu0 0.0
    %5366 = vmatprep.subr.mxu0 0.0
    %5367 = vmatpush1.msra.mxu0 0.0
    %5368 = vmatprep.subr.mxu0 0.0
    %5369 = vmatpush1.msra.mxu0 0.0
    %5370 = vmatprep.subr.mxu0 0.0
    %5371 = vmatpush1.msra.mxu0 0.0
    %5372 = vmatprep.subr.mxu0 0.0
    %5373 = vmatpush1.msra.mxu0 0.0
    %5374 = vmatprep.subr.mxu0 0.0
    %5375 = vmatpush1.msra.mxu0 %v5328
    %5376 = vmatprep.subr.mxu0 0.0
    %5377 = vmatpush1.msra.mxu0 %v5327
    %5378 = vmatprep.subr.mxu0 0.0
    %5379 = vmatpush1.msra.mxu0 %v5326
    %5380 = vmatprep.subr.mxu0 0.0
    %5381 = vmatpush1.msra.mxu0 %v5325
    %5382 = vmatprep.subr.mxu0 0.0
    %5383 = vmatpush1.msra.mxu0 %v5324
    %5384 = vmatprep.subr.mxu0 0.0
    %5385 = vmatpush1.msra.mxu0 %v5323
    %5386 = vmatprep.subr.mxu0 0.0
    %5387 = vmatpush1.msra.mxu0 %v5322
    %5388 = vmatprep.subr.mxu0 0.0
    %5389 = vmatpush1.msra.mxu0 %v5321
    %5390 = vmatprep.subr.mxu0 0.0
    %5391 = vmatpush2.msra.mxu0 0.0
    %5392 = vmatprep.subr.mxu0 0.0
    %5393 = vmatpush2.msra.mxu0 0.0
    %5394 = vmatprep.subr.mxu0 0.0
    %5395 = vmatpush2.msra.mxu0 0.0
    %5396 = vmatprep.subr.mxu0 0.0
    %5397 = vmatpush2.msra.mxu0 0.0
    %5398 = vmatprep.subr.mxu0 0.0
    %5399 = vmatpush2.msra.mxu0 0.0
    %5400 = vmatprep.subr.mxu0 0.0
    %5401 = vmatpush2.msra.mxu0 0.0
    %5402 = vmatprep.subr.mxu0 0.0
    %5403 = vmatpush2.msra.mxu0 0.0
    %5404 = vmatprep.subr.mxu0 0.0
    %5405 = vmatpush2.msra.mxu0 0.0
    %5406 = vmatprep.subr.mxu0 0.0
    %5407 = vmatpush2.msra.mxu0 0.0
    %5408 = vmatprep.subr.mxu0 0.0
    %5409 = vmatpush2.msra.mxu0 0.0
    %5410 = vmatprep.subr.mxu0 0.0
    %5411 = vmatpush2.msra.mxu0 0.0
    %5412 = vmatprep.subr.mxu0 0.0
    %5413 = vmatpush2.msra.mxu0 0.0
    %5414 = vmatprep.subr.mxu0 0.0
    %5415 = vmatpush2.msra.mxu0 0.0
    %5416 = vmatprep.subr.mxu0 0.0
    %5417 = vmatpush2.msra.mxu0 0.0
    %5418 = vmatprep.subr.mxu0 0.0
    %5419 = vmatpush2.msra.mxu0 0.0
    %5420 = vmatprep.subr.mxu0 0.0
    %5421 = vmatpush2.msra.mxu0 0.0
    %5422 = vmatprep.mubr.f32.mxu0 0.0
    %5423 = vmatmul.mubr.f32.gmra.mxu0 %v560
    %v5424 = vpop.f32.mrf.mxu0
    %v5425 = vadd.f32 0.0, %v5424
    %v5426 = vpop.f32.mrf.mxu0
    %5427 = vdwg.mxu0
    %5428 = vmatprep.subr.mxu0 0.0
    %5429 = vmatpush1.msra.mxu0 0.0
    %5430 = vmatprep.subr.mxu0 0.0
    %5431 = vmatpush1.msra.mxu0 0.0
    %5432 = vmatprep.subr.mxu0 0.0
    %5433 = vmatpush1.msra.mxu0 0.0
    %5434 = vmatprep.subr.mxu0 0.0
    %5435 = vmatpush1.msra.mxu0 0.0
    %5436 = vmatprep.subr.mxu0 0.0
    %5437 = vmatpush1.msra.mxu0 0.0
    %5438 = vmatprep.subr.mxu0 0.0
    %5439 = vmatpush1.msra.mxu0 0.0
    %5440 = vmatprep.subr.mxu0 0.0
    %5441 = vmatpush1.msra.mxu0 0.0
    %5442 = vmatprep.subr.mxu0 0.0
    %5443 = vmatpush1.msra.mxu0 0.0
    %5444 = vmatprep.subr.mxu0 0.0
    %5445 = vmatpush1.msra.mxu0 %v5337
    %5446 = vmatprep.subr.mxu0 0.0
    %5447 = vmatpush1.msra.mxu0 %v5336
    %5448 = vmatprep.subr.mxu0 0.0
    %5449 = vmatpush1.msra.mxu0 %v5335
    %5450 = vmatprep.subr.mxu0 0.0
    %5451 = vmatpush1.msra.mxu0 %v5334
    %5452 = vmatprep.subr.mxu0 0.0
    %5453 = vmatpush1.msra.mxu0 %v5333
    %5454 = vmatprep.subr.mxu0 0.0
    %5455 = vmatpush1.msra.mxu0 %v5332
    %5456 = vmatprep.subr.mxu0 0.0
    %5457 = vmatpush1.msra.mxu0 %v5331
    %5458 = vmatprep.subr.mxu0 0.0
    %5459 = vmatpush1.msra.mxu0 %v5330
    %5460 = vmatprep.subr.mxu0 0.0
    %5461 = vmatpush2.msra.mxu0 0.0
    %5462 = vmatprep.subr.mxu0 0.0
    %5463 = vmatpush2.msra.mxu0 0.0
    %5464 = vmatprep.subr.mxu0 0.0
    %5465 = vmatpush2.msra.mxu0 0.0
    %5466 = vmatprep.subr.mxu0 0.0
    %5467 = vmatpush2.msra.mxu0 0.0
    %5468 = vmatprep.subr.mxu0 0.0
    %5469 = vmatpush2.msra.mxu0 0.0
    %5470 = vmatprep.subr.mxu0 0.0
    %5471 = vmatpush2.msra.mxu0 0.0
    %5472 = vmatprep.subr.mxu0 0.0
    %5473 = vmatpush2.msra.mxu0 0.0
    %5474 = vmatprep.subr.mxu0 0.0
    %5475 = vmatpush2.msra.mxu0 0.0
    %5476 = vmatprep.subr.mxu0 0.0
    %5477 = vmatpush2.msra.mxu0 0.0
    %5478 = vmatprep.subr.mxu0 0.0
    %5479 = vmatpush2.msra.mxu0 0.0
    %5480 = vmatprep.subr.mxu0 0.0
    %5481 = vmatpush2.msra.mxu0 0.0
    %5482 = vmatprep.subr.mxu0 0.0
    %5483 = vmatpush2.msra.mxu0 0.0
    %5484 = vmatprep.subr.mxu0 0.0
    %5485 = vmatpush2.msra.mxu0 0.0
    %5486 = vmatprep.subr.mxu0 0.0
    %5487 = vmatpush2.msra.mxu0 0.0
    %5488 = vmatprep.subr.mxu0 0.0
    %5489 = vmatpush2.msra.mxu0 0.0
    %5490 = vmatprep.subr.mxu0 0.0
    %5491 = vmatpush2.msra.mxu0 0.0
    %5492 = vmatprep.mubr.f32.mxu0 0.0
    %5493 = vmatmul.mubr.f32.gmra.mxu0 %v560
    %v5494 = vpop.f32.mrf.mxu0
    %v5495 = vadd.f32 0.0, %v5494
    %v5496 = vpop.f32.mrf.mxu0
    %5497 = vdwg.mxu0
    %5498 = vmatprep.subr.mxu0 0.0
    %5499 = vmatpush1.msra.mxu0 0.0
    %5500 = vmatprep.subr.mxu0 0.0
    %5501 = vmatpush1.msra.mxu0 0.0
    %5502 = vmatprep.subr.mxu0 0.0
    %5503 = vmatpush1.msra.mxu0 0.0
    %5504 = vmatprep.subr.mxu0 0.0
    %5505 = vmatpush1.msra.mxu0 0.0
    %5506 = vmatprep.subr.mxu0 0.0
    %5507 = vmatpush1.msra.mxu0 0.0
    %5508 = vmatprep.subr.mxu0 0.0
    %5509 = vmatpush1.msra.mxu0 0.0
    %5510 = vmatprep.subr.mxu0 0.0
    %5511 = vmatpush1.msra.mxu0 0.0
    %5512 = vmatprep.subr.mxu0 0.0
    %5513 = vmatpush1.msra.mxu0 0.0
    %5514 = vmatprep.subr.mxu0 0.0
    %5515 = vmatpush1.msra.mxu0 %v5346
    %5516 = vmatprep.subr.mxu0 0.0
    %5517 = vmatpush1.msra.mxu0 %v5345
    %5518 = vmatprep.subr.mxu0 0.0
    %5519 = vmatpush1.msra.mxu0 %v5344
    %5520 = vmatprep.subr.mxu0 0.0
    %5521 = vmatpush1.msra.mxu0 %v5343
    %5522 = vmatprep.subr.mxu0 0.0
    %5523 = vmatpush1.msra.mxu0 %v5342
    %5524 = vmatprep.subr.mxu0 0.0
    %5525 = vmatpush1.msra.mxu0 %v5341
    %5526 = vmatprep.subr.mxu0 0.0
    %5527 = vmatpush1.msra.mxu0 %v5340
    %5528 = vmatprep.subr.mxu0 0.0
    %5529 = vmatpush1.msra.mxu0 %v5339
    %5530 = vmatprep.subr.mxu0 0.0
    %5531 = vmatpush2.msra.mxu0 0.0
    %5532 = vmatprep.subr.mxu0 0.0
    %5533 = vmatpush2.msra.mxu0 0.0
    %5534 = vmatprep.subr.mxu0 0.0
    %5535 = vmatpush2.msra.mxu0 0.0
    %5536 = vmatprep.subr.mxu0 0.0
    %5537 = vmatpush2.msra.mxu0 0.0
    %5538 = vmatprep.subr.mxu0 0.0
    %5539 = vmatpush2.msra.mxu0 0.0
    %5540 = vmatprep.subr.mxu0 0.0
    %5541 = vmatpush2.msra.mxu0 0.0
    %5542 = vmatprep.subr.mxu0 0.0
    %5543 = vmatpush2.msra.mxu0 0.0
    %5544 = vmatprep.subr.mxu0 0.0
    %5545 = vmatpush2.msra.mxu0 0.0
    %5546 = vmatprep.subr.mxu0 0.0
    %5547 = vmatpush2.msra.mxu0 0.0
    %5548 = vmatprep.subr.mxu0 0.0
    %5549 = vmatpush2.msra.mxu0 0.0
    %5550 = vmatprep.subr.mxu0 0.0
    %5551 = vmatpush2.msra.mxu0 0.0
    %5552 = vmatprep.subr.mxu0 0.0
    %5553 = vmatpush2.msra.mxu0 0.0
    %5554 = vmatprep.subr.mxu0 0.0
    %5555 = vmatpush2.msra.mxu0 0.0
    %5556 = vmatprep.subr.mxu0 0.0
    %5557 = vmatpush2.msra.mxu0 0.0
    %5558 = vmatprep.subr.mxu0 0.0
    %5559 = vmatpush2.msra.mxu0 0.0
    %5560 = vmatprep.subr.mxu0 0.0
    %5561 = vmatpush2.msra.mxu0 0.0
    %5562 = vmatprep.mubr.f32.mxu0 0.0
    %5563 = vmatmul.mubr.f32.gmra.mxu0 %v560
    %v5564 = vpop.f32.mrf.mxu0
    %v5565 = vadd.f32 %v5353, %v5564
    %v5566 = vpop.f32.mrf.mxu0
    %5567 = vdwg.mxu0
    %v5568 = vadd.f32 %v5355, %v5425
    %v5569 = vxor.u32 %v5568, 2147483648
    %v5570 = vmul.f32 %v5569, 1.442695
    %v5571 = vpow.pop %v5570
    %v5572 = vadd.f32 %v5571, 1.0
    %v5573 = vrcp.pop %v5572
    %v5574 = vmul.f32 1.0, %v5573
    %v5575 = vadd.f32 %v5356, %v5495
    %v5576 = vxor.u32 %v5575, 2147483648
    %v5577 = vmul.f32 %v5576, 1.442695
    %v5578 = vpow.pop %v5577
    %v5579 = vadd.f32 %v5578, 1.0
    %v5580 = vrcp.pop %v5579
    %v5581 = vmul.f32 1.0, %v5580
    %v5582 = vmul.f32 %v5574, %v5565
    %v5583 = vadd.f32 %v5357, %v5582
    %v5584 = vtanh.pop %v5583
    %v5585 = vsub.f32 0.0, %v5584
    %v5586 = vmul.f32 %v5581, %v5585
    %v5587 = vadd.f32 %v5584, %v5586
    %5588 = vst.msk [vmem:[#allocation3] sm:$0xff] %vm99, %v5587
    %v5589 = vld [vmem:[#allocation2 + $0x8] sm:$0xff]
    %v5590 = vld [vmem:[%s368 + $0x8] sm:$0xff]
    %v5591 = vld [vmem:[%s507 + $0x8] sm:$0xff]
    %v5593 = vsel %vm99, %v5587, 0
    %5595 = vmatprep.subr.mxu0 0.0
    %5596 = vmatpush1.msra.mxu0 0.0
    %5597 = vmatprep.subr.mxu0 0.0
    %5598 = vmatpush1.msra.mxu0 0.0
    %5599 = vmatprep.subr.mxu0 0.0
    %5600 = vmatpush1.msra.mxu0 0.0
    %5601 = vmatprep.subr.mxu0 0.0
    %5602 = vmatpush1.msra.mxu0 0.0
    %5603 = vmatprep.subr.mxu0 0.0
    %5604 = vmatpush1.msra.mxu0 0.0
    %5605 = vmatprep.subr.mxu0 0.0
    %5606 = vmatpush1.msra.mxu0 0.0
    %5607 = vmatprep.subr.mxu0 0.0
    %5608 = vmatpush1.msra.mxu0 0.0
    %5609 = vmatprep.subr.mxu0 0.0
    %5610 = vmatpush1.msra.mxu0 0.0
    %5611 = vmatprep.subr.mxu0 0.0
    %5612 = vmatpush1.msra.mxu0 %v5328
    %5613 = vmatprep.subr.mxu0 0.0
    %5614 = vmatpush1.msra.mxu0 %v5327
    %5615 = vmatprep.subr.mxu0 0.0
    %5616 = vmatpush1.msra.mxu0 %v5326
    %5617 = vmatprep.subr.mxu0 0.0
    %5618 = vmatpush1.msra.mxu0 %v5325
    %5619 = vmatprep.subr.mxu0 0.0
    %5620 = vmatpush1.msra.mxu0 %v5324
    %5621 = vmatprep.subr.mxu0 0.0
    %5622 = vmatpush1.msra.mxu0 %v5323
    %5623 = vmatprep.subr.mxu0 0.0
    %5624 = vmatpush1.msra.mxu0 %v5322
    %5625 = vmatprep.subr.mxu0 0.0
    %5626 = vmatpush1.msra.mxu0 %v5321
    %5627 = vmatprep.subr.mxu0 0.0
    %5628 = vmatpush2.msra.mxu0 0.0
    %5629 = vmatprep.subr.mxu0 0.0
    %5630 = vmatpush2.msra.mxu0 0.0
    %5631 = vmatprep.subr.mxu0 0.0
    %5632 = vmatpush2.msra.mxu0 0.0
    %5633 = vmatprep.subr.mxu0 0.0
    %5634 = vmatpush2.msra.mxu0 0.0
    %5635 = vmatprep.subr.mxu0 0.0
    %5636 = vmatpush2.msra.mxu0 0.0
    %5637 = vmatprep.subr.mxu0 0.0
    %5638 = vmatpush2.msra.mxu0 0.0
    %5639 = vmatprep.subr.mxu0 0.0
    %5640 = vmatpush2.msra.mxu0 0.0
    %5641 = vmatprep.subr.mxu0 0.0
    %5642 = vmatpush2.msra.mxu0 0.0
    %5643 = vmatprep.subr.mxu0 0.0
    %5644 = vmatpush2.msra.mxu0 0.0
    %5645 = vmatprep.subr.mxu0 0.0
    %5646 = vmatpush2.msra.mxu0 0.0
    %5647 = vmatprep.subr.mxu0 0.0
    %5648 = vmatpush2.msra.mxu0 0.0
    %5649 = vmatprep.subr.mxu0 0.0
    %5650 = vmatpush2.msra.mxu0 0.0
    %5651 = vmatprep.subr.mxu0 0.0
    %5652 = vmatpush2.msra.mxu0 0.0
    %5653 = vmatprep.subr.mxu0 0.0
    %5654 = vmatpush2.msra.mxu0 0.0
    %5655 = vmatprep.subr.mxu0 0.0
    %5656 = vmatpush2.msra.mxu0 0.0
    %5657 = vmatprep.subr.mxu0 0.0
    %5658 = vmatpush2.msra.mxu0 0.0
    %5659 = vmatprep.mubr.f32.mxu0 0.0
    %5660 = vmatmul.mubr.f32.gmra.mxu0 %v5593
    %v5661 = vpop.f32.mrf.mxu0
    %v5662 = vadd.f32 0.0, %v5661
    %v5663 = vpop.f32.mrf.mxu0
    %5664 = vdwg.mxu0
    %5665 = vmatprep.subr.mxu0 0.0
    %5666 = vmatpush1.msra.mxu0 0.0
    %5667 = vmatprep.subr.mxu0 0.0
    %5668 = vmatpush1.msra.mxu0 0.0
    %5669 = vmatprep.subr.mxu0 0.0
    %5670 = vmatpush1.msra.mxu0 0.0
    %5671 = vmatprep.subr.mxu0 0.0
    %5672 = vmatpush1.msra.mxu0 0.0
    %5673 = vmatprep.subr.mxu0 0.0
    %5674 = vmatpush1.msra.mxu0 0.0
    %5675 = vmatprep.subr.mxu0 0.0
    %5676 = vmatpush1.msra.mxu0 0.0
    %5677 = vmatprep.subr.mxu0 0.0
    %5678 = vmatpush1.msra.mxu0 0.0
    %5679 = vmatprep.subr.mxu0 0.0
    %5680 = vmatpush1.msra.mxu0 0.0
    %5681 = vmatprep.subr.mxu0 0.0
    %5682 = vmatpush1.msra.mxu0 %v5337
    %5683 = vmatprep.subr.mxu0 0.0
    %5684 = vmatpush1.msra.mxu0 %v5336
    %5685 = vmatprep.subr.mxu0 0.0
    %5686 = vmatpush1.msra.mxu0 %v5335
    %5687 = vmatprep.subr.mxu0 0.0
    %5688 = vmatpush1.msra.mxu0 %v5334
    %5689 = vmatprep.subr.mxu0 0.0
    %5690 = vmatpush1.msra.mxu0 %v5333
    %5691 = vmatprep.subr.mxu0 0.0
    %5692 = vmatpush1.msra.mxu0 %v5332
    %5693 = vmatprep.subr.mxu0 0.0
    %5694 = vmatpush1.msra.mxu0 %v5331
    %5695 = vmatprep.subr.mxu0 0.0
    %5696 = vmatpush1.msra.mxu0 %v5330
    %5697 = vmatprep.subr.mxu0 0.0
    %5698 = vmatpush2.msra.mxu0 0.0
    %5699 = vmatprep.subr.mxu0 0.0
    %5700 = vmatpush2.msra.mxu0 0.0
    %5701 = vmatprep.subr.mxu0 0.0
    %5702 = vmatpush2.msra.mxu0 0.0
    %5703 = vmatprep.subr.mxu0 0.0
    %5704 = vmatpush2.msra.mxu0 0.0
    %5705 = vmatprep.subr.mxu0 0.0
    %5706 = vmatpush2.msra.mxu0 0.0
    %5707 = vmatprep.subr.mxu0 0.0
    %5708 = vmatpush2.msra.mxu0 0.0
    %5709 = vmatprep.subr.mxu0 0.0
    %5710 = vmatpush2.msra.mxu0 0.0
    %5711 = vmatprep.subr.mxu0 0.0
    %5712 = vmatpush2.msra.mxu0 0.0
    %5713 = vmatprep.subr.mxu0 0.0
    %5714 = vmatpush2.msra.mxu0 0.0
    %5715 = vmatprep.subr.mxu0 0.0
    %5716 = vmatpush2.msra.mxu0 0.0
    %5717 = vmatprep.subr.mxu0 0.0
    %5718 = vmatpush2.msra.mxu0 0.0
    %5719 = vmatprep.subr.mxu0 0.0
    %5720 = vmatpush2.msra.mxu0 0.0
    %5721 = vmatprep.subr.mxu0 0.0
    %5722 = vmatpush2.msra.mxu0 0.0
    %5723 = vmatprep.subr.mxu0 0.0
    %5724 = vmatpush2.msra.mxu0 0.0
    %5725 = vmatprep.subr.mxu0 0.0
    %5726 = vmatpush2.msra.mxu0 0.0
    %5727 = vmatprep.subr.mxu0 0.0
    %5728 = vmatpush2.msra.mxu0 0.0
    %5729 = vmatprep.mubr.f32.mxu0 0.0
    %5730 = vmatmul.mubr.f32.gmra.mxu0 %v5593
    %v5731 = vpop.f32.mrf.mxu0
    %v5732 = vadd.f32 0.0, %v5731
    %v5733 = vpop.f32.mrf.mxu0
    %5734 = vdwg.mxu0
    %5735 = vmatprep.subr.mxu0 0.0
    %5736 = vmatpush1.msra.mxu0 0.0
    %5737 = vmatprep.subr.mxu0 0.0
    %5738 = vmatpush1.msra.mxu0 0.0
    %5739 = vmatprep.subr.mxu0 0.0
    %5740 = vmatpush1.msra.mxu0 0.0
    %5741 = vmatprep.subr.mxu0 0.0
    %5742 = vmatpush1.msra.mxu0 0.0
    %5743 = vmatprep.subr.mxu0 0.0
    %5744 = vmatpush1.msra.mxu0 0.0
    %5745 = vmatprep.subr.mxu0 0.0
    %5746 = vmatpush1.msra.mxu0 0.0
    %5747 = vmatprep.subr.mxu0 0.0
    %5748 = vmatpush1.msra.mxu0 0.0
    %5749 = vmatprep.subr.mxu0 0.0
    %5750 = vmatpush1.msra.mxu0 0.0
    %5751 = vmatprep.subr.mxu0 0.0
    %5752 = vmatpush1.msra.mxu0 %v5346
    %5753 = vmatprep.subr.mxu0 0.0
    %5754 = vmatpush1.msra.mxu0 %v5345
    %5755 = vmatprep.subr.mxu0 0.0
    %5756 = vmatpush1.msra.mxu0 %v5344
    %5757 = vmatprep.subr.mxu0 0.0
    %5758 = vmatpush1.msra.mxu0 %v5343
    %5759 = vmatprep.subr.mxu0 0.0
    %5760 = vmatpush1.msra.mxu0 %v5342
    %5761 = vmatprep.subr.mxu0 0.0
    %5762 = vmatpush1.msra.mxu0 %v5341
    %5763 = vmatprep.subr.mxu0 0.0
    %5764 = vmatpush1.msra.mxu0 %v5340
    %5765 = vmatprep.subr.mxu0 0.0
    %5766 = vmatpush1.msra.mxu0 %v5339
    %5767 = vmatprep.subr.mxu0 0.0
    %5768 = vmatpush2.msra.mxu0 0.0
    %5769 = vmatprep.subr.mxu0 0.0
    %5770 = vmatpush2.msra.mxu0 0.0
    %5771 = vmatprep.subr.mxu0 0.0
    %5772 = vmatpush2.msra.mxu0 0.0
    %5773 = vmatprep.subr.mxu0 0.0
    %5774 = vmatpush2.msra.mxu0 0.0
    %5775 = vmatprep.subr.mxu0 0.0
    %5776 = vmatpush2.msra.mxu0 0.0
    %5777 = vmatprep.subr.mxu0 0.0
    %5778 = vmatpush2.msra.mxu0 0.0
    %5779 = vmatprep.subr.mxu0 0.0
    %5780 = vmatpush2.msra.mxu0 0.0
    %5781 = vmatprep.subr.mxu0 0.0
    %5782 = vmatpush2.msra.mxu0 0.0
    %5783 = vmatprep.subr.mxu0 0.0
    %5784 = vmatpush2.msra.mxu0 0.0
    %5785 = vmatprep.subr.mxu0 0.0
    %5786 = vmatpush2.msra.mxu0 0.0
    %5787 = vmatprep.subr.mxu0 0.0
    %5788 = vmatpush2.msra.mxu0 0.0
    %5789 = vmatprep.subr.mxu0 0.0
    %5790 = vmatpush2.msra.mxu0 0.0
    %5791 = vmatprep.subr.mxu0 0.0
    %5792 = vmatpush2.msra.mxu0 0.0
    %5793 = vmatprep.subr.mxu0 0.0
    %5794 = vmatpush2.msra.mxu0 0.0
    %5795 = vmatprep.subr.mxu0 0.0
    %5796 = vmatpush2.msra.mxu0 0.0
    %5797 = vmatprep.subr.mxu0 0.0
    %5798 = vmatpush2.msra.mxu0 0.0
    %5799 = vmatprep.mubr.f32.mxu0 0.0
    %5800 = vmatmul.mubr.f32.gmra.mxu0 %v5593
    %v5801 = vpop.f32.mrf.mxu0
    %v5802 = vadd.f32 %v5353, %v5801
    %v5803 = vpop.f32.mrf.mxu0
    %5804 = vdwg.mxu0
    %v5805 = vadd.f32 %v5589, %v5662
    %v5806 = vxor.u32 %v5805, 2147483648
    %v5807 = vmul.f32 %v5806, 1.442695
    %v5808 = vpow.pop %v5807
    %v5809 = vadd.f32 %v5808, 1.0
    %v5810 = vrcp.pop %v5809
    %v5811 = vmul.f32 1.0, %v5810
    %v5812 = vadd.f32 %v5590, %v5732
    %v5813 = vxor.u32 %v5812, 2147483648
    %v5814 = vmul.f32 %v5813, 1.442695
    %v5815 = vpow.pop %v5814
    %v5816 = vadd.f32 %v5815, 1.0
    %v5817 = vrcp.pop %v5816
    %v5818 = vmul.f32 1.0, %v5817
    %v5819 = vmul.f32 %v5811, %v5802
    %v5820 = vadd.f32 %v5591, %v5819
    %v5821 = vtanh.pop %v5820
    %v5822 = vsub.f32 %v5587, %v5821
    %v5823 = vmul.f32 %v5818, %v5822
    %v5824 = vadd.f32 %v5821, %v5823
    %5825 = vst.msk [vmem:[#allocation3 + $0x8] sm:$0xff] %vm99, %v5824
    %v5826 = vld [vmem:[#allocation2 + $0x10] sm:$0xff]
    %v5827 = vld [vmem:[%s368 + $0x10] sm:$0xff]
    %v5828 = vld [vmem:[%s507 + $0x10] sm:$0xff]
    %v5830 = vsel %vm99, %v5824, 0
    %5832 = vmatprep.subr.mxu0 0.0
    %5833 = vmatpush1.msra.mxu0 0.0
    %5834 = vmatprep.subr.mxu0 0.0
    %5835 = vmatpush1.msra.mxu0 0.0
    %5836 = vmatprep.subr.mxu0 0.0
    %5837 = vmatpush1.msra.mxu0 0.0
    %5838 = vmatprep.subr.mxu0 0.0
    %5839 = vmatpush1.msra.mxu0 0.0
    %5840 = vmatprep.subr.mxu0 0.0
    %5841 = vmatpush1.msra.mxu0 0.0
    %5842 = vmatprep.subr.mxu0 0.0
    %5843 = vmatpush1.msra.mxu0 0.0
    %5844 = vmatprep.subr.mxu0 0.0
    %5845 = vmatpush1.msra.mxu0 0.0
    %5846 = vmatprep.subr.mxu0 0.0
    %5847 = vmatpush1.msra.mxu0 0.0
    %5848 = vmatprep.subr.mxu0 0.0
    %5849 = vmatpush1.msra.mxu0 %v5328
    %5850 = vmatprep.subr.mxu0 0.0
    %5851 = vmatpush1.msra.mxu0 %v5327
    %5852 = vmatprep.subr.mxu0 0.0
    %5853 = vmatpush1.msra.mxu0 %v5326
    %5854 = vmatprep.subr.mxu0 0.0
    %5855 = vmatpush1.msra.mxu0 %v5325
    %5856 = vmatprep.subr.mxu0 0.0
    %5857 = vmatpush1.msra.mxu0 %v5324
    %5858 = vmatprep.subr.mxu0 0.0
    %5859 = vmatpush1.msra.mxu0 %v5323
    %5860 = vmatprep.subr.mxu0 0.0
    %5861 = vmatpush1.msra.mxu0 %v5322
    %5862 = vmatprep.subr.mxu0 0.0
    %5863 = vmatpush1.msra.mxu0 %v5321
    %5864 = vmatprep.subr.mxu0 0.0
    %5865 = vmatpush2.msra.mxu0 0.0
    %5866 = vmatprep.subr.mxu0 0.0
    %5867 = vmatpush2.msra.mxu0 0.0
    %5868 = vmatprep.subr.mxu0 0.0
    %5869 = vmatpush2.msra.mxu0 0.0
    %5870 = vmatprep.subr.mxu0 0.0
    %5871 = vmatpush2.msra.mxu0 0.0
    %5872 = vmatprep.subr.mxu0 0.0
    %5873 = vmatpush2.msra.mxu0 0.0
    %5874 = vmatprep.subr.mxu0 0.0
    %5875 = vmatpush2.msra.mxu0 0.0
    %5876 = vmatprep.subr.mxu0 0.0
    %5877 = vmatpush2.msra.mxu0 0.0
    %5878 = vmatprep.subr.mxu0 0.0
    %5879 = vmatpush2.msra.mxu0 0.0
    %5880 = vmatprep.subr.mxu0 0.0
    %5881 = vmatpush2.msra.mxu0 0.0
    %5882 = vmatprep.subr.mxu0 0.0
    %5883 = vmatpush2.msra.mxu0 0.0
    %5884 = vmatprep.subr.mxu0 0.0
    %5885 = vmatpush2.msra.mxu0 0.0
    %5886 = vmatprep.subr.mxu0 0.0
    %5887 = vmatpush2.msra.mxu0 0.0
    %5888 = vmatprep.subr.mxu0 0.0
    %5889 = vmatpush2.msra.mxu0 0.0
    %5890 = vmatprep.subr.mxu0 0.0
    %5891 = vmatpush2.msra.mxu0 0.0
    %5892 = vmatprep.subr.mxu0 0.0
    %5893 = vmatpush2.msra.mxu0 0.0
    %5894 = vmatprep.subr.mxu0 0.0
    %5895 = vmatpush2.msra.mxu0 0.0
    %5896 = vmatprep.mubr.f32.mxu0 0.0
    %5897 = vmatmul.mubr.f32.gmra.mxu0 %v5830
    %v5898 = vpop.f32.mrf.mxu0
    %v5899 = vadd.f32 0.0, %v5898
    %v5900 = vpop.f32.mrf.mxu0
    %5901 = vdwg.mxu0
    %5902 = vmatprep.subr.mxu0 0.0
    %5903 = vmatpush1.msra.mxu0 0.0
    %5904 = vmatprep.subr.mxu0 0.0
    %5905 = vmatpush1.msra.mxu0 0.0
    %5906 = vmatprep.subr.mxu0 0.0
    %5907 = vmatpush1.msra.mxu0 0.0
    %5908 = vmatprep.subr.mxu0 0.0
    %5909 = vmatpush1.msra.mxu0 0.0
    %5910 = vmatprep.subr.mxu0 0.0
    %5911 = vmatpush1.msra.mxu0 0.0
    %5912 = vmatprep.subr.mxu0 0.0
    %5913 = vmatpush1.msra.mxu0 0.0
    %5914 = vmatprep.subr.mxu0 0.0
    %5915 = vmatpush1.msra.mxu0 0.0
    %5916 = vmatprep.subr.mxu0 0.0
    %5917 = vmatpush1.msra.mxu0 0.0
    %5918 = vmatprep.subr.mxu0 0.0
    %5919 = vmatpush1.msra.mxu0 %v5337
    %5920 = vmatprep.subr.mxu0 0.0
    %5921 = vmatpush1.msra.mxu0 %v5336
    %5922 = vmatprep.subr.mxu0 0.0
    %5923 = vmatpush1.msra.mxu0 %v5335
    %5924 = vmatprep.subr.mxu0 0.0
    %5925 = vmatpush1.msra.mxu0 %v5334
    %5926 = vmatprep.subr.mxu0 0.0
    %5927 = vmatpush1.msra.mxu0 %v5333
    %5928 = vmatprep.subr.mxu0 0.0
    %5929 = vmatpush1.msra.mxu0 %v5332
    %5930 = vmatprep.subr.mxu0 0.0
    %5931 = vmatpush1.msra.mxu0 %v5331
    %5932 = vmatprep.subr.mxu0 0.0
    %5933 = vmatpush1.msra.mxu0 %v5330
    %5934 = vmatprep.subr.mxu0 0.0
    %5935 = vmatpush2.msra.mxu0 0.0
    %5936 = vmatprep.subr.mxu0 0.0
    %5937 = vmatpush2.msra.mxu0 0.0
    %5938 = vmatprep.subr.mxu0 0.0
    %5939 = vmatpush2.msra.mxu0 0.0
    %5940 = vmatprep.subr.mxu0 0.0
    %5941 = vmatpush2.msra.mxu0 0.0
    %5942 = vmatprep.subr.mxu0 0.0
    %5943 = vmatpush2.msra.mxu0 0.0
    %5944 = vmatprep.subr.mxu0 0.0
    %5945 = vmatpush2.msra.mxu0 0.0
    %5946 = vmatprep.subr.mxu0 0.0
    %5947 = vmatpush2.msra.mxu0 0.0
    %5948 = vmatprep.subr.mxu0 0.0
    %5949 = vmatpush2.msra.mxu0 0.0
    %5950 = vmatprep.subr.mxu0 0.0
    %5951 = vmatpush2.msra.mxu0 0.0
    %5952 = vmatprep.subr.mxu0 0.0
    %5953 = vmatpush2.msra.mxu0 0.0
    %5954 = vmatprep.subr.mxu0 0.0
    %5955 = vmatpush2.msra.mxu0 0.0
    %5956 = vmatprep.subr.mxu0 0.0
    %5957 = vmatpush2.msra.mxu0 0.0
    %5958 = vmatprep.subr.mxu0 0.0
    %5959 = vmatpush2.msra.mxu0 0.0
    %5960 = vmatprep.subr.mxu0 0.0
    %5961 = vmatpush2.msra.mxu0 0.0
    %5962 = vmatprep.subr.mxu0 0.0
    %5963 = vmatpush2.msra.mxu0 0.0
    %5964 = vmatprep.subr.mxu0 0.0
    %5965 = vmatpush2.msra.mxu0 0.0
    %5966 = vmatprep.mubr.f32.mxu0 0.0
    %5967 = vmatmul.mubr.f32.gmra.mxu0 %v5830
    %v5968 = vpop.f32.mrf.mxu0
    %v5969 = vadd.f32 0.0, %v5968
    %v5970 = vpop.f32.mrf.mxu0
    %5971 = vdwg.mxu0
    %5972 = vmatprep.subr.mxu0 0.0
    %5973 = vmatpush1.msra.mxu0 0.0
    %5974 = vmatprep.subr.mxu0 0.0
    %5975 = vmatpush1.msra.mxu0 0.0
    %5976 = vmatprep.subr.mxu0 0.0
    %5977 = vmatpush1.msra.mxu0 0.0
    %5978 = vmatprep.subr.mxu0 0.0
    %5979 = vmatpush1.msra.mxu0 0.0
    %5980 = vmatprep.subr.mxu0 0.0
    %5981 = vmatpush1.msra.mxu0 0.0
    %5982 = vmatprep.subr.mxu0 0.0
    %5983 = vmatpush1.msra.mxu0 0.0
    %5984 = vmatprep.subr.mxu0 0.0
    %5985 = vmatpush1.msra.mxu0 0.0
    %5986 = vmatprep.subr.mxu0 0.0
    %5987 = vmatpush1.msra.mxu0 0.0
    %5988 = vmatprep.subr.mxu0 0.0
    %5989 = vmatpush1.msra.mxu0 %v5346
    %5990 = vmatprep.subr.mxu0 0.0
    %5991 = vmatpush1.msra.mxu0 %v5345
    %5992 = vmatprep.subr.mxu0 0.0
    %5993 = vmatpush1.msra.mxu0 %v5344
    %5994 = vmatprep.subr.mxu0 0.0
    %5995 = vmatpush1.msra.mxu0 %v5343
    %5996 = vmatprep.subr.mxu0 0.0
    %5997 = vmatpush1.msra.mxu0 %v5342
    %5998 = vmatprep.subr.mxu0 0.0
    %5999 = vmatpush1.msra.mxu0 %v5341
    %6000 = vmatprep.subr.mxu0 0.0
    %6001 = vmatpush1.msra.mxu0 %v5340
    %6002 = vmatprep.subr.mxu0 0.0
    %6003 = vmatpush1.msra.mxu0 %v5339
    %6004 = vmatprep.subr.mxu0 0.0
    %6005 = vmatpush2.msra.mxu0 0.0
    %6006 = vmatprep.subr.mxu0 0.0
    %6007 = vmatpush2.msra.mxu0 0.0
    %6008 = vmatprep.subr.mxu0 0.0
    %6009 = vmatpush2.msra.mxu0 0.0
    %6010 = vmatprep.subr.mxu0 0.0
    %6011 = vmatpush2.msra.mxu0 0.0
    %6012 = vmatprep.subr.mxu0 0.0
    %6013 = vmatpush2.msra.mxu0 0.0
    %6014 = vmatprep.subr.mxu0 0.0
    %6015 = vmatpush2.msra.mxu0 0.0
    %6016 = vmatprep.subr.mxu0 0.0
    %6017 = vmatpush2.msra.mxu0 0.0
    %6018 = vmatprep.subr.mxu0 0.0
    %6019 = vmatpush2.msra.mxu0 0.0
    %6020 = vmatprep.subr.mxu0 0.0
    %6021 = vmatpush2.msra.mxu0 0.0
    %6022 = vmatprep.subr.mxu0 0.0
    %6023 = vmatpush2.msra.mxu0 0.0
    %6024 = vmatprep.subr.mxu0 0.0
    %6025 = vmatpush2.msra.mxu0 0.0
    %6026 = vmatprep.subr.mxu0 0.0
    %6027 = vmatpush2.msra.mxu0 0.0
    %6028 = vmatprep.subr.mxu0 0.0
    %6029 = vmatpush2.msra.mxu0 0.0
    %6030 = vmatprep.subr.mxu0 0.0
    %6031 = vmatpush2.msra.mxu0 0.0
    %6032 = vmatprep.subr.mxu0 0.0
    %6033 = vmatpush2.msra.mxu0 0.0
    %6034 = vmatprep.subr.mxu0 0.0
    %6035 = vmatpush2.msra.mxu0 0.0
    %6036 = vmatprep.mubr.f32.mxu0 0.0
    %6037 = vmatmul.mubr.f32.gmra.mxu0 %v5830
    %v6038 = vpop.f32.mrf.mxu0
    %v6039 = vadd.f32 %v5353, %v6038
    %v6040 = vpop.f32.mrf.mxu0
    %6041 = vdwg.mxu0
    %v6042 = vadd.f32 %v5826, %v5899
    %v6043 = vxor.u32 %v6042, 2147483648
    %v6044 = vmul.f32 %v6043, 1.442695
    %v6045 = vpow.pop %v6044
    %v6046 = vadd.f32 %v6045, 1.0
    %v6047 = vrcp.pop %v6046
    %v6048 = vmul.f32 1.0, %v6047
    %v6049 = vadd.f32 %v5827, %v5969
    %v6050 = vxor.u32 %v6049, 2147483648
    %v6051 = vmul.f32 %v6050, 1.442695
    %v6052 = vpow.pop %v6051
    %v6053 = vadd.f32 %v6052, 1.0
    %v6054 = vrcp.pop %v6053
    %v6055 = vmul.f32 1.0, %v6054
    %v6056 = vmul.f32 %v6048, %v6039
    %v6057 = vadd.f32 %v5828, %v6056
    %v6058 = vtanh.pop %v6057
    %v6059 = vsub.f32 %v5824, %v6058
    %v6060 = vmul.f32 %v6055, %v6059
    %v6061 = vadd.f32 %v6058, %v6060
    %6062 = vst.msk [vmem:[#allocation3 + $0x10] sm:$0xff] %vm99, %v6061
    %v6063 = vld [vmem:[#allocation2 + $0x18] sm:$0xff]
    %v6064 = vld [vmem:[%s368 + $0x18] sm:$0xff]
    %v6065 = vld [vmem:[%s507 + $0x18] sm:$0xff]
    %v6067 = vsel %vm99, %v6061, 0
    %6069 = vmatprep.subr.mxu0 0.0
    %6070 = vmatpush1.msra.mxu0 0.0
    %6071 = vmatprep.subr.mxu0 0.0
    %6072 = vmatpush1.msra.mxu0 0.0
    %6073 = vmatprep.subr.mxu0 0.0
    %6074 = vmatpush1.msra.mxu0 0.0
    %6075 = vmatprep.subr.mxu0 0.0
    %6076 = vmatpush1.msra.mxu0 0.0
    %6077 = vmatprep.subr.mxu0 0.0
    %6078 = vmatpush1.msra.mxu0 0.0
    %6079 = vmatprep.subr.mxu0 0.0
    %6080 = vmatpush1.msra.mxu0 0.0
    %6081 = vmatprep.subr.mxu0 0.0
    %6082 = vmatpush1.msra.mxu0 0.0
    %6083 = vmatprep.subr.mxu0 0.0
    %6084 = vmatpush1.msra.mxu0 0.0
    %6085 = vmatprep.subr.mxu0 0.0
    %6086 = vmatpush1.msra.mxu0 %v5328
    %6087 = vmatprep.subr.mxu0 0.0
    %6088 = vmatpush1.msra.mxu0 %v5327
    %6089 = vmatprep.subr.mxu0 0.0
    %6090 = vmatpush1.msra.mxu0 %v5326
    %6091 = vmatprep.subr.mxu0 0.0
    %6092 = vmatpush1.msra.mxu0 %v5325
    %6093 = vmatprep.subr.mxu0 0.0
    %6094 = vmatpush1.msra.mxu0 %v5324
    %6095 = vmatprep.subr.mxu0 0.0
    %6096 = vmatpush1.msra.mxu0 %v5323
    %6097 = vmatprep.subr.mxu0 0.0
    %6098 = vmatpush1.msra.mxu0 %v5322
    %6099 = vmatprep.subr.mxu0 0.0
    %6100 = vmatpush1.msra.mxu0 %v5321
    %6101 = vmatprep.subr.mxu0 0.0
    %6102 = vmatpush2.msra.mxu0 0.0
    %6103 = vmatprep.subr.mxu0 0.0
    %6104 = vmatpush2.msra.mxu0 0.0
    %6105 = vmatprep.subr.mxu0 0.0
    %6106 = vmatpush2.msra.mxu0 0.0
    %6107 = vmatprep.subr.mxu0 0.0
    %6108 = vmatpush2.msra.mxu0 0.0
    %6109 = vmatprep.subr.mxu0 0.0
    %6110 = vmatpush2.msra.mxu0 0.0
    %6111 = vmatprep.subr.mxu0 0.0
    %6112 = vmatpush2.msra.mxu0 0.0
    %6113 = vmatprep.subr.mxu0 0.0
    %6114 = vmatpush2.msra.mxu0 0.0
    %6115 = vmatprep.subr.mxu0 0.0
    %6116 = vmatpush2.msra.mxu0 0.0
    %6117 = vmatprep.subr.mxu0 0.0
    %6118 = vmatpush2.msra.mxu0 0.0
    %6119 = vmatprep.subr.mxu0 0.0
    %6120 = vmatpush2.msra.mxu0 0.0
    %6121 = vmatprep.subr.mxu0 0.0
    %6122 = vmatpush2.msra.mxu0 0.0
    %6123 = vmatprep.subr.mxu0 0.0
    %6124 = vmatpush2.msra.mxu0 0.0
    %6125 = vmatprep.subr.mxu0 0.0
    %6126 = vmatpush2.msra.mxu0 0.0
    %6127 = vmatprep.subr.mxu0 0.0
    %6128 = vmatpush2.msra.mxu0 0.0
    %6129 = vmatprep.subr.mxu0 0.0
    %6130 = vmatpush2.msra.mxu0 0.0
    %6131 = vmatprep.subr.mxu0 0.0
    %6132 = vmatpush2.msra.mxu0 0.0
    %6133 = vmatprep.mubr.f32.mxu0 0.0
    %6134 = vmatmul.mubr.f32.gmra.mxu0 %v6067
    %v6135 = vpop.f32.mrf.mxu0
    %v6136 = vadd.f32 0.0, %v6135
    %v6137 = vpop.f32.mrf.mxu0
    %6138 = vdwg.mxu0
    %6139 = vmatprep.subr.mxu0 0.0
    %6140 = vmatpush1.msra.mxu0 0.0
    %6141 = vmatprep.subr.mxu0 0.0
    %6142 = vmatpush1.msra.mxu0 0.0
    %6143 = vmatprep.subr.mxu0 0.0
    %6144 = vmatpush1.msra.mxu0 0.0
    %6145 = vmatprep.subr.mxu0 0.0
    %6146 = vmatpush1.msra.mxu0 0.0
    %6147 = vmatprep.subr.mxu0 0.0
    %6148 = vmatpush1.msra.mxu0 0.0
    %6149 = vmatprep.subr.mxu0 0.0
    %6150 = vmatpush1.msra.mxu0 0.0
    %6151 = vmatprep.subr.mxu0 0.0
    %6152 = vmatpush1.msra.mxu0 0.0
    %6153 = vmatprep.subr.mxu0 0.0
    %6154 = vmatpush1.msra.mxu0 0.0
    %6155 = vmatprep.subr.mxu0 0.0
    %6156 = vmatpush1.msra.mxu0 %v5337
    %6157 = vmatprep.subr.mxu0 0.0
    %6158 = vmatpush1.msra.mxu0 %v5336
    %6159 = vmatprep.subr.mxu0 0.0
    %6160 = vmatpush1.msra.mxu0 %v5335
    %6161 = vmatprep.subr.mxu0 0.0
    %6162 = vmatpush1.msra.mxu0 %v5334
    %6163 = vmatprep.subr.mxu0 0.0
    %6164 = vmatpush1.msra.mxu0 %v5333
    %6165 = vmatprep.subr.mxu0 0.0
    %6166 = vmatpush1.msra.mxu0 %v5332
    %6167 = vmatprep.subr.mxu0 0.0
    %6168 = vmatpush1.msra.mxu0 %v5331
    %6169 = vmatprep.subr.mxu0 0.0
    %6170 = vmatpush1.msra.mxu0 %v5330
    %6171 = vmatprep.subr.mxu0 0.0
    %6172 = vmatpush2.msra.mxu0 0.0
    %6173 = vmatprep.subr.mxu0 0.0
    %6174 = vmatpush2.msra.mxu0 0.0
    %6175 = vmatprep.subr.mxu0 0.0
    %6176 = vmatpush2.msra.mxu0 0.0
    %6177 = vmatprep.subr.mxu0 0.0
    %6178 = vmatpush2.msra.mxu0 0.0
    %6179 = vmatprep.subr.mxu0 0.0
    %6180 = vmatpush2.msra.mxu0 0.0
    %6181 = vmatprep.subr.mxu0 0.0
    %6182 = vmatpush2.msra.mxu0 0.0
    %6183 = vmatprep.subr.mxu0 0.0
    %6184 = vmatpush2.msra.mxu0 0.0
    %6185 = vmatprep.subr.mxu0 0.0
    %6186 = vmatpush2.msra.mxu0 0.0
    %6187 = vmatprep.subr.mxu0 0.0
    %6188 = vmatpush2.msra.mxu0 0.0
    %6189 = vmatprep.subr.mxu0 0.0
    %6190 = vmatpush2.msra.mxu0 0.0
    %6191 = vmatprep.subr.mxu0 0.0
    %6192 = vmatpush2.msra.mxu0 0.0
    %6193 = vmatprep.subr.mxu0 0.0
    %6194 = vmatpush2.msra.mxu0 0.0
    %6195 = vmatprep.subr.mxu0 0.0
    %6196 = vmatpush2.msra.mxu0 0.0
    %6197 = vmatprep.subr.mxu0 0.0
    %6198 = vmatpush2.msra.mxu0 0.0
    %6199 = vmatprep.subr.mxu0 0.0
    %6200 = vmatpush2.msra.mxu0 0.0
    %6201 = vmatprep.subr.mxu0 0.0
    %6202 = vmatpush2.msra.mxu0 0.0
    %6203 = vmatprep.mubr.f32.mxu0 0.0
    %6204 = vmatmul.mubr.f32.gmra.mxu0 %v6067
    %v6205 = vpop.f32.mrf.mxu0
    %v6206 = vadd.f32 0.0, %v6205
    %v6207 = vpop.f32.mrf.mxu0
    %6208 = vdwg.mxu0
    %6209 = vmatprep.subr.mxu0 0.0
    %6210 = vmatpush1.msra.mxu0 0.0
    %6211 = vmatprep.subr.mxu0 0.0
    %6212 = vmatpush1.msra.mxu0 0.0
    %6213 = vmatprep.subr.mxu0 0.0
    %6214 = vmatpush1.msra.mxu0 0.0
    %6215 = vmatprep.subr.mxu0 0.0
    %6216 = vmatpush1.msra.mxu0 0.0
    %6217 = vmatprep.subr.mxu0 0.0
    %6218 = vmatpush1.msra.mxu0 0.0
    %6219 = vmatprep.subr.mxu0 0.0
    %6220 = vmatpush1.msra.mxu0 0.0
    %6221 = vmatprep.subr.mxu0 0.0
    %6222 = vmatpush1.msra.mxu0 0.0
    %6223 = vmatprep.subr.mxu0 0.0
    %6224 = vmatpush1.msra.mxu0 0.0
    %6225 = vmatprep.subr.mxu0 0.0
    %6226 = vmatpush1.msra.mxu0 %v5346
    %6227 = vmatprep.subr.mxu0 0.0
    %6228 = vmatpush1.msra.mxu0 %v5345
    %6229 = vmatprep.subr.mxu0 0.0
    %6230 = vmatpush1.msra.mxu0 %v5344
    %6231 = vmatprep.subr.mxu0 0.0
    %6232 = vmatpush1.msra.mxu0 %v5343
    %6233 = vmatprep.subr.mxu0 0.0
    %6234 = vmatpush1.msra.mxu0 %v5342
    %6235 = vmatprep.subr.mxu0 0.0
    %6236 = vmatpush1.msra.mxu0 %v5341
    %6237 = vmatprep.subr.mxu0 0.0
    %6238 = vmatpush1.msra.mxu0 %v5340
    %6239 = vmatprep.subr.mxu0 0.0
    %6240 = vmatpush1.msra.mxu0 %v5339
    %6241 = vmatprep.subr.mxu0 0.0
    %6242 = vmatpush2.msra.mxu0 0.0
    %6243 = vmatprep.subr.mxu0 0.0
    %6244 = vmatpush2.msra.mxu0 0.0
    %6245 = vmatprep.subr.mxu0 0.0
    %6246 = vmatpush2.msra.mxu0 0.0
    %6247 = vmatprep.subr.mxu0 0.0
    %6248 = vmatpush2.msra.mxu0 0.0
    %6249 = vmatprep.subr.mxu0 0.0
    %6250 = vmatpush2.msra.mxu0 0.0
    %6251 = vmatprep.subr.mxu0 0.0
    %6252 = vmatpush2.msra.mxu0 0.0
    %6253 = vmatprep.subr.mxu0 0.0
    %6254 = vmatpush2.msra.mxu0 0.0
    %6255 = vmatprep.subr.mxu0 0.0
    %6256 = vmatpush2.msra.mxu0 0.0
    %6257 = vmatprep.subr.mxu0 0.0
    %6258 = vmatpush2.msra.mxu0 0.0
    %6259 = vmatprep.subr.mxu0 0.0
    %6260 = vmatpush2.msra.mxu0 0.0
    %6261 = vmatprep.subr.mxu0 0.0
    %6262 = vmatpush2.msra.mxu0 0.0
    %6263 = vmatprep.subr.mxu0 0.0
    %6264 = vmatpush2.msra.mxu0 0.0
    %6265 = vmatprep.subr.mxu0 0.0
    %6266 = vmatpush2.msra.mxu0 0.0
    %6267 = vmatprep.subr.mxu0 0.0
    %6268 = vmatpush2.msra.mxu0 0.0
    %6269 = vmatprep.subr.mxu0 0.0
    %6270 = vmatpush2.msra.mxu0 0.0
    %6271 = vmatprep.subr.mxu0 0.0
    %6272 = vmatpush2.msra.mxu0 0.0
    %6273 = vmatprep.mubr.f32.mxu0 0.0
    %6274 = vmatmul.mubr.f32.gmra.mxu0 %v6067
    %v6275 = vpop.f32.mrf.mxu0
    %v6276 = vadd.f32 %v5353, %v6275
    %v6277 = vpop.f32.mrf.mxu0
    %6278 = vdwg.mxu0
    %v6279 = vadd.f32 %v6063, %v6136
    %v6280 = vxor.u32 %v6279, 2147483648
    %v6281 = vmul.f32 %v6280, 1.442695
    %v6282 = vpow.pop %v6281
    %v6283 = vadd.f32 %v6282, 1.0
    %v6284 = vrcp.pop %v6283
    %v6285 = vmul.f32 1.0, %v6284
    %v6286 = vadd.f32 %v6064, %v6206
    %v6287 = vxor.u32 %v6286, 2147483648
    %v6288 = vmul.f32 %v6287, 1.442695
    %v6289 = vpow.pop %v6288
    %v6290 = vadd.f32 %v6289, 1.0
    %v6291 = vrcp.pop %v6290
    %v6292 = vmul.f32 1.0, %v6291
    %v6293 = vmul.f32 %v6285, %v6276
    %v6294 = vadd.f32 %v6065, %v6293
    %v6295 = vtanh.pop %v6294
    %v6296 = vsub.f32 %v6061, %v6295
    %v6297 = vmul.f32 %v6292, %v6296
    %v6298 = vadd.f32 %v6295, %v6297
    %6299 = vst.msk [vmem:[#allocation3 + $0x18] sm:$0xff] %vm99, %v6298
    %v6300 = vld [vmem:[#allocation2 + $0x20] sm:$0xff]
    %v6301 = vld [vmem:[%s368 + $0x20] sm:$0xff]
    %v6302 = vld [vmem:[%s507 + $0x20] sm:$0xff]
    %v6304 = vsel %vm99, %v6298, 0
    %6306 = vmatprep.subr.mxu0 0.0
    %6307 = vmatpush1.msra.mxu0 0.0
    %6308 = vmatprep.subr.mxu0 0.0
    %6309 = vmatpush1.msra.mxu0 0.0
    %6310 = vmatprep.subr.mxu0 0.0
    %6311 = vmatpush1.msra.mxu0 0.0
    %6312 = vmatprep.subr.mxu0 0.0
    %6313 = vmatpush1.msra.mxu0 0.0
    %6314 = vmatprep.subr.mxu0 0.0
    %6315 = vmatpush1.msra.mxu0 0.0
    %6316 = vmatprep.subr.mxu0 0.0
    %6317 = vmatpush1.msra.mxu0 0.0
    %6318 = vmatprep.subr.mxu0 0.0
    %6319 = vmatpush1.msra.mxu0 0.0
    %6320 = vmatprep.subr.mxu0 0.0
    %6321 = vmatpush1.msra.mxu0 0.0
    %6322 = vmatprep.subr.mxu0 0.0
    %6323 = vmatpush1.msra.mxu0 %v5328
    %6324 = vmatprep.subr.mxu0 0.0
    %6325 = vmatpush1.msra.mxu0 %v5327
    %6326 = vmatprep.subr.mxu0 0.0
    %6327 = vmatpush1.msra.mxu0 %v5326
    %6328 = vmatprep.subr.mxu0 0.0
    %6329 = vmatpush1.msra.mxu0 %v5325
    %6330 = vmatprep.subr.mxu0 0.0
    %6331 = vmatpush1.msra.mxu0 %v5324
    %6332 = vmatprep.subr.mxu0 0.0
    %6333 = vmatpush1.msra.mxu0 %v5323
    %6334 = vmatprep.subr.mxu0 0.0
    %6335 = vmatpush1.msra.mxu0 %v5322
    %6336 = vmatprep.subr.mxu0 0.0
    %6337 = vmatpush1.msra.mxu0 %v5321
    %6338 = vmatprep.subr.mxu0 0.0
    %6339 = vmatpush2.msra.mxu0 0.0
    %6340 = vmatprep.subr.mxu0 0.0
    %6341 = vmatpush2.msra.mxu0 0.0
    %6342 = vmatprep.subr.mxu0 0.0
    %6343 = vmatpush2.msra.mxu0 0.0
    %6344 = vmatprep.subr.mxu0 0.0
    %6345 = vmatpush2.msra.mxu0 0.0
    %6346 = vmatprep.subr.mxu0 0.0
    %6347 = vmatpush2.msra.mxu0 0.0
    %6348 = vmatprep.subr.mxu0 0.0
    %6349 = vmatpush2.msra.mxu0 0.0
    %6350 = vmatprep.subr.mxu0 0.0
    %6351 = vmatpush2.msra.mxu0 0.0
    %6352 = vmatprep.subr.mxu0 0.0
    %6353 = vmatpush2.msra.mxu0 0.0
    %6354 = vmatprep.subr.mxu0 0.0
    %6355 = vmatpush2.msra.mxu0 0.0
    %6356 = vmatprep.subr.mxu0 0.0
    %6357 = vmatpush2.msra.mxu0 0.0
    %6358 = vmatprep.subr.mxu0 0.0
    %6359 = vmatpush2.msra.mxu0 0.0
    %6360 = vmatprep.subr.mxu0 0.0
    %6361 = vmatpush2.msra.mxu0 0.0
    %6362 = vmatprep.subr.mxu0 0.0
    %6363 = vmatpush2.msra.mxu0 0.0
    %6364 = vmatprep.subr.mxu0 0.0
    %6365 = vmatpush2.msra.mxu0 0.0
    %6366 = vmatprep.subr.mxu0 0.0
    %6367 = vmatpush2.msra.mxu0 0.0
    %6368 = vmatprep.subr.mxu0 0.0
    %6369 = vmatpush2.msra.mxu0 0.0
    %6370 = vmatprep.mubr.f32.mxu0 0.0
    %6371 = vmatmul.mubr.f32.gmra.mxu0 %v6304
    %v6372 = vpop.f32.mrf.mxu0
    %v6373 = vadd.f32 0.0, %v6372
    %v6374 = vpop.f32.mrf.mxu0
    %6375 = vdwg.mxu0
    %6376 = vmatprep.subr.mxu0 0.0
    %6377 = vmatpush1.msra.mxu0 0.0
    %6378 = vmatprep.subr.mxu0 0.0
    %6379 = vmatpush1.msra.mxu0 0.0
    %6380 = vmatprep.subr.mxu0 0.0
    %6381 = vmatpush1.msra.mxu0 0.0
    %6382 = vmatprep.subr.mxu0 0.0
    %6383 = vmatpush1.msra.mxu0 0.0
    %6384 = vmatprep.subr.mxu0 0.0
    %6385 = vmatpush1.msra.mxu0 0.0
    %6386 = vmatprep.subr.mxu0 0.0
    %6387 = vmatpush1.msra.mxu0 0.0
    %6388 = vmatprep.subr.mxu0 0.0
    %6389 = vmatpush1.msra.mxu0 0.0
    %6390 = vmatprep.subr.mxu0 0.0
    %6391 = vmatpush1.msra.mxu0 0.0
    %6392 = vmatprep.subr.mxu0 0.0
    %6393 = vmatpush1.msra.mxu0 %v5337
    %6394 = vmatprep.subr.mxu0 0.0
    %6395 = vmatpush1.msra.mxu0 %v5336
    %6396 = vmatprep.subr.mxu0 0.0
    %6397 = vmatpush1.msra.mxu0 %v5335
    %6398 = vmatprep.subr.mxu0 0.0
    %6399 = vmatpush1.msra.mxu0 %v5334
    %6400 = vmatprep.subr.mxu0 0.0
    %6401 = vmatpush1.msra.mxu0 %v5333
    %6402 = vmatprep.subr.mxu0 0.0
    %6403 = vmatpush1.msra.mxu0 %v5332
    %6404 = vmatprep.subr.mxu0 0.0
    %6405 = vmatpush1.msra.mxu0 %v5331
    %6406 = vmatprep.subr.mxu0 0.0
    %6407 = vmatpush1.msra.mxu0 %v5330
    %6408 = vmatprep.subr.mxu0 0.0
    %6409 = vmatpush2.msra.mxu0 0.0
    %6410 = vmatprep.subr.mxu0 0.0
    %6411 = vmatpush2.msra.mxu0 0.0
    %6412 = vmatprep.subr.mxu0 0.0
    %6413 = vmatpush2.msra.mxu0 0.0
    %6414 = vmatprep.subr.mxu0 0.0
    %6415 = vmatpush2.msra.mxu0 0.0
    %6416 = vmatprep.subr.mxu0 0.0
    %6417 = vmatpush2.msra.mxu0 0.0
    %6418 = vmatprep.subr.mxu0 0.0
    %6419 = vmatpush2.msra.mxu0 0.0
    %6420 = vmatprep.subr.mxu0 0.0
    %6421 = vmatpush2.msra.mxu0 0.0
    %6422 = vmatprep.subr.mxu0 0.0
    %6423 = vmatpush2.msra.mxu0 0.0
    %6424 = vmatprep.subr.mxu0 0.0
    %6425 = vmatpush2.msra.mxu0 0.0
    %6426 = vmatprep.subr.mxu0 0.0
    %6427 = vmatpush2.msra.mxu0 0.0
    %6428 = vmatprep.subr.mxu0 0.0
    %6429 = vmatpush2.msra.mxu0 0.0
    %6430 = vmatprep.subr.mxu0 0.0
    %6431 = vmatpush2.msra.mxu0 0.0
    %6432 = vmatprep.subr.mxu0 0.0
    %6433 = vmatpush2.msra.mxu0 0.0
    %6434 = vmatprep.subr.mxu0 0.0
    %6435 = vmatpush2.msra.mxu0 0.0
    %6436 = vmatprep.subr.mxu0 0.0
    %6437 = vmatpush2.msra.mxu0 0.0
    %6438 = vmatprep.subr.mxu0 0.0
    %6439 = vmatpush2.msra.mxu0 0.0
    %6440 = vmatprep.mubr.f32.mxu0 0.0
    %6441 = vmatmul.mubr.f32.gmra.mxu0 %v6304
    %v6442 = vpop.f32.mrf.mxu0
    %v6443 = vadd.f32 0.0, %v6442
    %v6444 = vpop.f32.mrf.mxu0
    %6445 = vdwg.mxu0
    %6446 = vmatprep.subr.mxu0 0.0
    %6447 = vmatpush1.msra.mxu0 0.0
    %6448 = vmatprep.subr.mxu0 0.0
    %6449 = vmatpush1.msra.mxu0 0.0
    %6450 = vmatprep.subr.mxu0 0.0
    %6451 = vmatpush1.msra.mxu0 0.0
    %6452 = vmatprep.subr.mxu0 0.0
    %6453 = vmatpush1.msra.mxu0 0.0
    %6454 = vmatprep.subr.mxu0 0.0
    %6455 = vmatpush1.msra.mxu0 0.0
    %6456 = vmatprep.subr.mxu0 0.0
    %6457 = vmatpush1.msra.mxu0 0.0
    %6458 = vmatprep.subr.mxu0 0.0
    %6459 = vmatpush1.msra.mxu0 0.0
    %6460 = vmatprep.subr.mxu0 0.0
    %6461 = vmatpush1.msra.mxu0 0.0
    %6462 = vmatprep.subr.mxu0 0.0
    %6463 = vmatpush1.msra.mxu0 %v5346
    %6464 = vmatprep.subr.mxu0 0.0
    %6465 = vmatpush1.msra.mxu0 %v5345
    %6466 = vmatprep.subr.mxu0 0.0
    %6467 = vmatpush1.msra.mxu0 %v5344
    %6468 = vmatprep.subr.mxu0 0.0
    %6469 = vmatpush1.msra.mxu0 %v5343
    %6470 = vmatprep.subr.mxu0 0.0
    %6471 = vmatpush1.msra.mxu0 %v5342
    %6472 = vmatprep.subr.mxu0 0.0
    %6473 = vmatpush1.msra.mxu0 %v5341
    %6474 = vmatprep.subr.mxu0 0.0
    %6475 = vmatpush1.msra.mxu0 %v5340
    %6476 = vmatprep.subr.mxu0 0.0
    %6477 = vmatpush1.msra.mxu0 %v5339
    %6478 = vmatprep.subr.mxu0 0.0
    %6479 = vmatpush2.msra.mxu0 0.0
    %6480 = vmatprep.subr.mxu0 0.0
    %6481 = vmatpush2.msra.mxu0 0.0
    %6482 = vmatprep.subr.mxu0 0.0
    %6483 = vmatpush2.msra.mxu0 0.0
    %6484 = vmatprep.subr.mxu0 0.0
    %6485 = vmatpush2.msra.mxu0 0.0
    %6486 = vmatprep.subr.mxu0 0.0
    %6487 = vmatpush2.msra.mxu0 0.0
    %6488 = vmatprep.subr.mxu0 0.0
    %6489 = vmatpush2.msra.mxu0 0.0
    %6490 = vmatprep.subr.mxu0 0.0
    %6491 = vmatpush2.msra.mxu0 0.0
    %6492 = vmatprep.subr.mxu0 0.0
    %6493 = vmatpush2.msra.mxu0 0.0
    %6494 = vmatprep.subr.mxu0 0.0
    %6495 = vmatpush2.msra.mxu0 0.0
    %6496 = vmatprep.subr.mxu0 0.0
    %6497 = vmatpush2.msra.mxu0 0.0
    %6498 = vmatprep.subr.mxu0 0.0
    %6499 = vmatpush2.msra.mxu0 0.0
    %6500 = vmatprep.subr.mxu0 0.0
    %6501 = vmatpush2.msra.mxu0 0.0
    %6502 = vmatprep.subr.mxu0 0.0
    %6503 = vmatpush2.msra.mxu0 0.0
    %6504 = vmatprep.subr.mxu0 0.0
    %6505 = vmatpush2.msra.mxu0 0.0
    %6506 = vmatprep.subr.mxu0 0.0
    %6507 = vmatpush2.msra.mxu0 0.0
    %6508 = vmatprep.subr.mxu0 0.0
    %6509 = vmatpush2.msra.mxu0 0.0
    %6510 = vmatprep.mubr.f32.mxu0 0.0
    %6511 = vmatmul.mubr.f32.gmra.mxu0 %v6304
    %v6512 = vpop.f32.mrf.mxu0
    %v6513 = vadd.f32 %v5353, %v6512
    %v6514 = vpop.f32.mrf.mxu0
    %6515 = vdwg.mxu0
    %v6516 = vadd.f32 %v6300, %v6373
    %v6517 = vxor.u32 %v6516, 2147483648
    %v6518 = vmul.f32 %v6517, 1.442695
    %v6519 = vpow.pop %v6518
    %v6520 = vadd.f32 %v6519, 1.0
    %v6521 = vrcp.pop %v6520
    %v6522 = vmul.f32 1.0, %v6521
    %v6523 = vadd.f32 %v6301, %v6443
    %v6524 = vxor.u32 %v6523, 2147483648
    %v6525 = vmul.f32 %v6524, 1.442695
    %v6526 = vpow.pop %v6525
    %v6527 = vadd.f32 %v6526, 1.0
    %v6528 = vrcp.pop %v6527
    %v6529 = vmul.f32 1.0, %v6528
    %v6530 = vmul.f32 %v6522, %v6513
    %v6531 = vadd.f32 %v6302, %v6530
    %v6532 = vtanh.pop %v6531
    %v6533 = vsub.f32 %v6298, %v6532
    %v6534 = vmul.f32 %v6529, %v6533
    %v6535 = vadd.f32 %v6532, %v6534
    %6536 = vst.msk [vmem:[#allocation3 + $0x20] sm:$0xff] %vm99, %v6535
    %v6537 = vld [vmem:[#allocation2 + $0x28] sm:$0xff]
    %v6538 = vld [vmem:[%s368 + $0x28] sm:$0xff]
    %v6539 = vld [vmem:[%s507 + $0x28] sm:$0xff]
    %v6541 = vsel %vm99, %v6535, 0
    %6543 = vmatprep.subr.mxu0 0.0
    %6544 = vmatpush1.msra.mxu0 0.0
    %6545 = vmatprep.subr.mxu0 0.0
    %6546 = vmatpush1.msra.mxu0 0.0
    %6547 = vmatprep.subr.mxu0 0.0
    %6548 = vmatpush1.msra.mxu0 0.0
    %6549 = vmatprep.subr.mxu0 0.0
    %6550 = vmatpush1.msra.mxu0 0.0
    %6551 = vmatprep.subr.mxu0 0.0
    %6552 = vmatpush1.msra.mxu0 0.0
    %6553 = vmatprep.subr.mxu0 0.0
    %6554 = vmatpush1.msra.mxu0 0.0
    %6555 = vmatprep.subr.mxu0 0.0
    %6556 = vmatpush1.msra.mxu0 0.0
    %6557 = vmatprep.subr.mxu0 0.0
    %6558 = vmatpush1.msra.mxu0 0.0
    %6559 = vmatprep.subr.mxu0 0.0
    %6560 = vmatpush1.msra.mxu0 %v5328
    %6561 = vmatprep.subr.mxu0 0.0
    %6562 = vmatpush1.msra.mxu0 %v5327
    %6563 = vmatprep.subr.mxu0 0.0
    %6564 = vmatpush1.msra.mxu0 %v5326
    %6565 = vmatprep.subr.mxu0 0.0
    %6566 = vmatpush1.msra.mxu0 %v5325
    %6567 = vmatprep.subr.mxu0 0.0
    %6568 = vmatpush1.msra.mxu0 %v5324
    %6569 = vmatprep.subr.mxu0 0.0
    %6570 = vmatpush1.msra.mxu0 %v5323
    %6571 = vmatprep.subr.mxu0 0.0
    %6572 = vmatpush1.msra.mxu0 %v5322
    %6573 = vmatprep.subr.mxu0 0.0
    %6574 = vmatpush1.msra.mxu0 %v5321
    %6575 = vmatprep.subr.mxu0 0.0
    %6576 = vmatpush2.msra.mxu0 0.0
    %6577 = vmatprep.subr.mxu0 0.0
    %6578 = vmatpush2.msra.mxu0 0.0
    %6579 = vmatprep.subr.mxu0 0.0
    %6580 = vmatpush2.msra.mxu0 0.0
    %6581 = vmatprep.subr.mxu0 0.0
    %6582 = vmatpush2.msra.mxu0 0.0
    %6583 = vmatprep.subr.mxu0 0.0
    %6584 = vmatpush2.msra.mxu0 0.0
    %6585 = vmatprep.subr.mxu0 0.0
    %6586 = vmatpush2.msra.mxu0 0.0
    %6587 = vmatprep.subr.mxu0 0.0
    %6588 = vmatpush2.msra.mxu0 0.0
    %6589 = vmatprep.subr.mxu0 0.0
    %6590 = vmatpush2.msra.mxu0 0.0
    %6591 = vmatprep.subr.mxu0 0.0
    %6592 = vmatpush2.msra.mxu0 0.0
    %6593 = vmatprep.subr.mxu0 0.0
    %6594 = vmatpush2.msra.mxu0 0.0
    %6595 = vmatprep.subr.mxu0 0.0
    %6596 = vmatpush2.msra.mxu0 0.0
    %6597 = vmatprep.subr.mxu0 0.0
    %6598 = vmatpush2.msra.mxu0 0.0
    %6599 = vmatprep.subr.mxu0 0.0
    %6600 = vmatpush2.msra.mxu0 0.0
    %6601 = vmatprep.subr.mxu0 0.0
    %6602 = vmatpush2.msra.mxu0 0.0
    %6603 = vmatprep.subr.mxu0 0.0
    %6604 = vmatpush2.msra.mxu0 0.0
    %6605 = vmatprep.subr.mxu0 0.0
    %6606 = vmatpush2.msra.mxu0 0.0
    %6607 = vmatprep.mubr.f32.mxu0 0.0
    %6608 = vmatmul.mubr.f32.gmra.mxu0 %v6541
    %v6609 = vpop.f32.mrf.mxu0
    %v6610 = vadd.f32 0.0, %v6609
    %v6611 = vpop.f32.mrf.mxu0
    %6612 = vdwg.mxu0
    %6613 = vmatprep.subr.mxu0 0.0
    %6614 = vmatpush1.msra.mxu0 0.0
    %6615 = vmatprep.subr.mxu0 0.0
    %6616 = vmatpush1.msra.mxu0 0.0
    %6617 = vmatprep.subr.mxu0 0.0
    %6618 = vmatpush1.msra.mxu0 0.0
    %6619 = vmatprep.subr.mxu0 0.0
    %6620 = vmatpush1.msra.mxu0 0.0
    %6621 = vmatprep.subr.mxu0 0.0
    %6622 = vmatpush1.msra.mxu0 0.0
    %6623 = vmatprep.subr.mxu0 0.0
    %6624 = vmatpush1.msra.mxu0 0.0
    %6625 = vmatprep.subr.mxu0 0.0
    %6626 = vmatpush1.msra.mxu0 0.0
    %6627 = vmatprep.subr.mxu0 0.0
    %6628 = vmatpush1.msra.mxu0 0.0
    %6629 = vmatprep.subr.mxu0 0.0
    %6630 = vmatpush1.msra.mxu0 %v5337
    %6631 = vmatprep.subr.mxu0 0.0
    %6632 = vmatpush1.msra.mxu0 %v5336
    %6633 = vmatprep.subr.mxu0 0.0
    %6634 = vmatpush1.msra.mxu0 %v5335
    %6635 = vmatprep.subr.mxu0 0.0
    %6636 = vmatpush1.msra.mxu0 %v5334
    %6637 = vmatprep.subr.mxu0 0.0
    %6638 = vmatpush1.msra.mxu0 %v5333
    %6639 = vmatprep.subr.mxu0 0.0
    %6640 = vmatpush1.msra.mxu0 %v5332
    %6641 = vmatprep.subr.mxu0 0.0
    %6642 = vmatpush1.msra.mxu0 %v5331
    %6643 = vmatprep.subr.mxu0 0.0
    %6644 = vmatpush1.msra.mxu0 %v5330
    %6645 = vmatprep.subr.mxu0 0.0
    %6646 = vmatpush2.msra.mxu0 0.0
    %6647 = vmatprep.subr.mxu0 0.0
    %6648 = vmatpush2.msra.mxu0 0.0
    %6649 = vmatprep.subr.mxu0 0.0
    %6650 = vmatpush2.msra.mxu0 0.0
    %6651 = vmatprep.subr.mxu0 0.0
    %6652 = vmatpush2.msra.mxu0 0.0
    %6653 = vmatprep.subr.mxu0 0.0
    %6654 = vmatpush2.msra.mxu0 0.0
    %6655 = vmatprep.subr.mxu0 0.0
    %6656 = vmatpush2.msra.mxu0 0.0
    %6657 = vmatprep.subr.mxu0 0.0
    %6658 = vmatpush2.msra.mxu0 0.0
    %6659 = vmatprep.subr.mxu0 0.0
    %6660 = vmatpush2.msra.mxu0 0.0
    %6661 = vmatprep.subr.mxu0 0.0
    %6662 = vmatpush2.msra.mxu0 0.0
    %6663 = vmatprep.subr.mxu0 0.0
    %6664 = vmatpush2.msra.mxu0 0.0
    %6665 = vmatprep.subr.mxu0 0.0
    %6666 = vmatpush2.msra.mxu0 0.0
    %6667 = vmatprep.subr.mxu0 0.0
    %6668 = vmatpush2.msra.mxu0 0.0
    %6669 = vmatprep.subr.mxu0 0.0
    %6670 = vmatpush2.msra.mxu0 0.0
    %6671 = vmatprep.subr.mxu0 0.0
    %6672 = vmatpush2.msra.mxu0 0.0
    %6673 = vmatprep.subr.mxu0 0.0
    %6674 = vmatpush2.msra.mxu0 0.0
    %6675 = vmatprep.subr.mxu0 0.0
    %6676 = vmatpush2.msra.mxu0 0.0
    %6677 = vmatprep.mubr.f32.mxu0 0.0
    %6678 = vmatmul.mubr.f32.gmra.mxu0 %v6541
    %v6679 = vpop.f32.mrf.mxu0
    %v6680 = vadd.f32 0.0, %v6679
    %v6681 = vpop.f32.mrf.mxu0
    %6682 = vdwg.mxu0
    %6683 = vmatprep.subr.mxu0 0.0
    %6684 = vmatpush1.msra.mxu0 0.0
    %6685 = vmatprep.subr.mxu0 0.0
    %6686 = vmatpush1.msra.mxu0 0.0
    %6687 = vmatprep.subr.mxu0 0.0
    %6688 = vmatpush1.msra.mxu0 0.0
    %6689 = vmatprep.subr.mxu0 0.0
    %6690 = vmatpush1.msra.mxu0 0.0
    %6691 = vmatprep.subr.mxu0 0.0
    %6692 = vmatpush1.msra.mxu0 0.0
    %6693 = vmatprep.subr.mxu0 0.0
    %6694 = vmatpush1.msra.mxu0 0.0
    %6695 = vmatprep.subr.mxu0 0.0
    %6696 = vmatpush1.msra.mxu0 0.0
    %6697 = vmatprep.subr.mxu0 0.0
    %6698 = vmatpush1.msra.mxu0 0.0
    %6699 = vmatprep.subr.mxu0 0.0
    %6700 = vmatpush1.msra.mxu0 %v5346
    %6701 = vmatprep.subr.mxu0 0.0
    %6702 = vmatpush1.msra.mxu0 %v5345
    %6703 = vmatprep.subr.mxu0 0.0
    %6704 = vmatpush1.msra.mxu0 %v5344
    %6705 = vmatprep.subr.mxu0 0.0
    %6706 = vmatpush1.msra.mxu0 %v5343
    %6707 = vmatprep.subr.mxu0 0.0
    %6708 = vmatpush1.msra.mxu0 %v5342
    %6709 = vmatprep.subr.mxu0 0.0
    %6710 = vmatpush1.msra.mxu0 %v5341
    %6711 = vmatprep.subr.mxu0 0.0
    %6712 = vmatpush1.msra.mxu0 %v5340
    %6713 = vmatprep.subr.mxu0 0.0
    %6714 = vmatpush1.msra.mxu0 %v5339
    %6715 = vmatprep.subr.mxu0 0.0
    %6716 = vmatpush2.msra.mxu0 0.0
    %6717 = vmatprep.subr.mxu0 0.0
    %6718 = vmatpush2.msra.mxu0 0.0
    %6719 = vmatprep.subr.mxu0 0.0
    %6720 = vmatpush2.msra.mxu0 0.0
    %6721 = vmatprep.subr.mxu0 0.0
    %6722 = vmatpush2.msra.mxu0 0.0
    %6723 = vmatprep.subr.mxu0 0.0
    %6724 = vmatpush2.msra.mxu0 0.0
    %6725 = vmatprep.subr.mxu0 0.0
    %6726 = vmatpush2.msra.mxu0 0.0
    %6727 = vmatprep.subr.mxu0 0.0
    %6728 = vmatpush2.msra.mxu0 0.0
    %6729 = vmatprep.subr.mxu0 0.0
    %6730 = vmatpush2.msra.mxu0 0.0
    %6731 = vmatprep.subr.mxu0 0.0
    %6732 = vmatpush2.msra.mxu0 0.0
    %6733 = vmatprep.subr.mxu0 0.0
    %6734 = vmatpush2.msra.mxu0 0.0
    %6735 = vmatprep.subr.mxu0 0.0
    %6736 = vmatpush2.msra.mxu0 0.0
    %6737 = vmatprep.subr.mxu0 0.0
    %6738 = vmatpush2.msra.mxu0 0.0
    %6739 = vmatprep.subr.mxu0 0.0
    %6740 = vmatpush2.msra.mxu0 0.0
    %6741 = vmatprep.subr.mxu0 0.0
    %6742 = vmatpush2.msra.mxu0 0.0
    %6743 = vmatprep.subr.mxu0 0.0
    %6744 = vmatpush2.msra.mxu0 0.0
    %6745 = vmatprep.subr.mxu0 0.0
    %6746 = vmatpush2.msra.mxu0 0.0
    %6747 = vmatprep.mubr.f32.mxu0 0.0
    %6748 = vmatmul.mubr.f32.gmra.mxu0 %v6541
    %v6749 = vpop.f32.mrf.mxu0
    %v6750 = vadd.f32 %v5353, %v6749
    %v6751 = vpop.f32.mrf.mxu0
    %6752 = vdwg.mxu0
    %v6753 = vadd.f32 %v6537, %v6610
    %v6754 = vxor.u32 %v6753, 2147483648
    %v6755 = vmul.f32 %v6754, 1.442695
    %v6756 = vpow.pop %v6755
    %v6757 = vadd.f32 %v6756, 1.0
    %v6758 = vrcp.pop %v6757
    %v6759 = vmul.f32 1.0, %v6758
    %v6760 = vadd.f32 %v6538, %v6680
    %v6761 = vxor.u32 %v6760, 2147483648
    %v6762 = vmul.f32 %v6761, 1.442695
    %v6763 = vpow.pop %v6762
    %v6764 = vadd.f32 %v6763, 1.0
    %v6765 = vrcp.pop %v6764
    %v6766 = vmul.f32 1.0, %v6765
    %v6767 = vmul.f32 %v6759, %v6750
    %v6768 = vadd.f32 %v6539, %v6767
    %v6769 = vtanh.pop %v6768
    %v6770 = vsub.f32 %v6535, %v6769
    %v6771 = vmul.f32 %v6766, %v6770
    %v6772 = vadd.f32 %v6769, %v6771
    %6773 = vst.msk [vmem:[#allocation3 + $0x28] sm:$0xff] %vm99, %v6772
    %v6774 = vld [vmem:[#allocation2 + $0x30] sm:$0xff]
    %v6775 = vld [vmem:[%s368 + $0x30] sm:$0xff]
    %v6776 = vld [vmem:[%s507 + $0x30] sm:$0xff]
    %v6778 = vsel %vm99, %v6772, 0
    %6780 = vmatprep.subr.mxu0 0.0
    %6781 = vmatpush1.msra.mxu0 0.0
    %6782 = vmatprep.subr.mxu0 0.0
    %6783 = vmatpush1.msra.mxu0 0.0
    %6784 = vmatprep.subr.mxu0 0.0
    %6785 = vmatpush1.msra.mxu0 0.0
    %6786 = vmatprep.subr.mxu0 0.0
    %6787 = vmatpush1.msra.mxu0 0.0
    %6788 = vmatprep.subr.mxu0 0.0
    %6789 = vmatpush1.msra.mxu0 0.0
    %6790 = vmatprep.subr.mxu0 0.0
    %6791 = vmatpush1.msra.mxu0 0.0
    %6792 = vmatprep.subr.mxu0 0.0
    %6793 = vmatpush1.msra.mxu0 0.0
    %6794 = vmatprep.subr.mxu0 0.0
    %6795 = vmatpush1.msra.mxu0 0.0
    %6796 = vmatprep.subr.mxu0 0.0
    %6797 = vmatpush1.msra.mxu0 %v5328
    %6798 = vmatprep.subr.mxu0 0.0
    %6799 = vmatpush1.msra.mxu0 %v5327
    %6800 = vmatprep.subr.mxu0 0.0
    %6801 = vmatpush1.msra.mxu0 %v5326
    %6802 = vmatprep.subr.mxu0 0.0
    %6803 = vmatpush1.msra.mxu0 %v5325
    %6804 = vmatprep.subr.mxu0 0.0
    %6805 = vmatpush1.msra.mxu0 %v5324
    %6806 = vmatprep.subr.mxu0 0.0
    %6807 = vmatpush1.msra.mxu0 %v5323
    %6808 = vmatprep.subr.mxu0 0.0
    %6809 = vmatpush1.msra.mxu0 %v5322
    %6810 = vmatprep.subr.mxu0 0.0
    %6811 = vmatpush1.msra.mxu0 %v5321
    %6812 = vmatprep.subr.mxu0 0.0
    %6813 = vmatpush2.msra.mxu0 0.0
    %6814 = vmatprep.subr.mxu0 0.0
    %6815 = vmatpush2.msra.mxu0 0.0
    %6816 = vmatprep.subr.mxu0 0.0
    %6817 = vmatpush2.msra.mxu0 0.0
    %6818 = vmatprep.subr.mxu0 0.0
    %6819 = vmatpush2.msra.mxu0 0.0
    %6820 = vmatprep.subr.mxu0 0.0
    %6821 = vmatpush2.msra.mxu0 0.0
    %6822 = vmatprep.subr.mxu0 0.0
    %6823 = vmatpush2.msra.mxu0 0.0
    %6824 = vmatprep.subr.mxu0 0.0
    %6825 = vmatpush2.msra.mxu0 0.0
    %6826 = vmatprep.subr.mxu0 0.0
    %6827 = vmatpush2.msra.mxu0 0.0
    %6828 = vmatprep.subr.mxu0 0.0
    %6829 = vmatpush2.msra.mxu0 0.0
    %6830 = vmatprep.subr.mxu0 0.0
    %6831 = vmatpush2.msra.mxu0 0.0
    %6832 = vmatprep.subr.mxu0 0.0
    %6833 = vmatpush2.msra.mxu0 0.0
    %6834 = vmatprep.subr.mxu0 0.0
    %6835 = vmatpush2.msra.mxu0 0.0
    %6836 = vmatprep.subr.mxu0 0.0
    %6837 = vmatpush2.msra.mxu0 0.0
    %6838 = vmatprep.subr.mxu0 0.0
    %6839 = vmatpush2.msra.mxu0 0.0
    %6840 = vmatprep.subr.mxu0 0.0
    %6841 = vmatpush2.msra.mxu0 0.0
    %6842 = vmatprep.subr.mxu0 0.0
    %6843 = vmatpush2.msra.mxu0 0.0
    %6844 = vmatprep.mubr.f32.mxu0 0.0
    %6845 = vmatmul.mubr.f32.gmra.mxu0 %v6778
    %v6846 = vpop.f32.mrf.mxu0
    %v6847 = vadd.f32 0.0, %v6846
    %v6848 = vpop.f32.mrf.mxu0
    %6849 = vdwg.mxu0
    %6850 = vmatprep.subr.mxu0 0.0
    %6851 = vmatpush1.msra.mxu0 0.0
    %6852 = vmatprep.subr.mxu0 0.0
    %6853 = vmatpush1.msra.mxu0 0.0
    %6854 = vmatprep.subr.mxu0 0.0
    %6855 = vmatpush1.msra.mxu0 0.0
    %6856 = vmatprep.subr.mxu0 0.0
    %6857 = vmatpush1.msra.mxu0 0.0
    %6858 = vmatprep.subr.mxu0 0.0
    %6859 = vmatpush1.msra.mxu0 0.0
    %6860 = vmatprep.subr.mxu0 0.0
    %6861 = vmatpush1.msra.mxu0 0.0
    %6862 = vmatprep.subr.mxu0 0.0
    %6863 = vmatpush1.msra.mxu0 0.0
    %6864 = vmatprep.subr.mxu0 0.0
    %6865 = vmatpush1.msra.mxu0 0.0
    %6866 = vmatprep.subr.mxu0 0.0
    %6867 = vmatpush1.msra.mxu0 %v5337
    %6868 = vmatprep.subr.mxu0 0.0
    %6869 = vmatpush1.msra.mxu0 %v5336
    %6870 = vmatprep.subr.mxu0 0.0
    %6871 = vmatpush1.msra.mxu0 %v5335
    %6872 = vmatprep.subr.mxu0 0.0
    %6873 = vmatpush1.msra.mxu0 %v5334
    %6874 = vmatprep.subr.mxu0 0.0
    %6875 = vmatpush1.msra.mxu0 %v5333
    %6876 = vmatprep.subr.mxu0 0.0
    %6877 = vmatpush1.msra.mxu0 %v5332
    %6878 = vmatprep.subr.mxu0 0.0
    %6879 = vmatpush1.msra.mxu0 %v5331
    %6880 = vmatprep.subr.mxu0 0.0
    %6881 = vmatpush1.msra.mxu0 %v5330
    %6882 = vmatprep.subr.mxu0 0.0
    %6883 = vmatpush2.msra.mxu0 0.0
    %6884 = vmatprep.subr.mxu0 0.0
    %6885 = vmatpush2.msra.mxu0 0.0
    %6886 = vmatprep.subr.mxu0 0.0
    %6887 = vmatpush2.msra.mxu0 0.0
    %6888 = vmatprep.subr.mxu0 0.0
    %6889 = vmatpush2.msra.mxu0 0.0
    %6890 = vmatprep.subr.mxu0 0.0
    %6891 = vmatpush2.msra.mxu0 0.0
    %6892 = vmatprep.subr.mxu0 0.0
    %6893 = vmatpush2.msra.mxu0 0.0
    %6894 = vmatprep.subr.mxu0 0.0
    %6895 = vmatpush2.msra.mxu0 0.0
    %6896 = vmatprep.subr.mxu0 0.0
    %6897 = vmatpush2.msra.mxu0 0.0
    %6898 = vmatprep.subr.mxu0 0.0
    %6899 = vmatpush2.msra.mxu0 0.0
    %6900 = vmatprep.subr.mxu0 0.0
    %6901 = vmatpush2.msra.mxu0 0.0
    %6902 = vmatprep.subr.mxu0 0.0
    %6903 = vmatpush2.msra.mxu0 0.0
    %6904 = vmatprep.subr.mxu0 0.0
    %6905 = vmatpush2.msra.mxu0 0.0
    %6906 = vmatprep.subr.mxu0 0.0
    %6907 = vmatpush2.msra.mxu0 0.0
    %6908 = vmatprep.subr.mxu0 0.0
    %6909 = vmatpush2.msra.mxu0 0.0
    %6910 = vmatprep.subr.mxu0 0.0
    %6911 = vmatpush2.msra.mxu0 0.0
    %6912 = vmatprep.subr.mxu0 0.0
    %6913 = vmatpush2.msra.mxu0 0.0
    %6914 = vmatprep.mubr.f32.mxu0 0.0
    %6915 = vmatmul.mubr.f32.gmra.mxu0 %v6778
    %v6916 = vpop.f32.mrf.mxu0
    %v6917 = vadd.f32 0.0, %v6916
    %v6918 = vpop.f32.mrf.mxu0
    %6919 = vdwg.mxu0
    %6920 = vmatprep.subr.mxu0 0.0
    %6921 = vmatpush1.msra.mxu0 0.0
    %6922 = vmatprep.subr.mxu0 0.0
    %6923 = vmatpush1.msra.mxu0 0.0
    %6924 = vmatprep.subr.mxu0 0.0
    %6925 = vmatpush1.msra.mxu0 0.0
    %6926 = vmatprep.subr.mxu0 0.0
    %6927 = vmatpush1.msra.mxu0 0.0
    %6928 = vmatprep.subr.mxu0 0.0
    %6929 = vmatpush1.msra.mxu0 0.0
    %6930 = vmatprep.subr.mxu0 0.0
    %6931 = vmatpush1.msra.mxu0 0.0
    %6932 = vmatprep.subr.mxu0 0.0
    %6933 = vmatpush1.msra.mxu0 0.0
    %6934 = vmatprep.subr.mxu0 0.0
    %6935 = vmatpush1.msra.mxu0 0.0
    %6936 = vmatprep.subr.mxu0 0.0
    %6937 = vmatpush1.msra.mxu0 %v5346
    %6938 = vmatprep.subr.mxu0 0.0
    %6939 = vmatpush1.msra.mxu0 %v5345
    %6940 = vmatprep.subr.mxu0 0.0
    %6941 = vmatpush1.msra.mxu0 %v5344
    %6942 = vmatprep.subr.mxu0 0.0
    %6943 = vmatpush1.msra.mxu0 %v5343
    %6944 = vmatprep.subr.mxu0 0.0
    %6945 = vmatpush1.msra.mxu0 %v5342
    %6946 = vmatprep.subr.mxu0 0.0
    %6947 = vmatpush1.msra.mxu0 %v5341
    %6948 = vmatprep.subr.mxu0 0.0
    %6949 = vmatpush1.msra.mxu0 %v5340
    %6950 = vmatprep.subr.mxu0 0.0
    %6951 = vmatpush1.msra.mxu0 %v5339
    %6952 = vmatprep.subr.mxu0 0.0
    %6953 = vmatpush2.msra.mxu0 0.0
    %6954 = vmatprep.subr.mxu0 0.0
    %6955 = vmatpush2.msra.mxu0 0.0
    %6956 = vmatprep.subr.mxu0 0.0
    %6957 = vmatpush2.msra.mxu0 0.0
    %6958 = vmatprep.subr.mxu0 0.0
    %6959 = vmatpush2.msra.mxu0 0.0
    %6960 = vmatprep.subr.mxu0 0.0
    %6961 = vmatpush2.msra.mxu0 0.0
    %6962 = vmatprep.subr.mxu0 0.0
    %6963 = vmatpush2.msra.mxu0 0.0
    %6964 = vmatprep.subr.mxu0 0.0
    %6965 = vmatpush2.msra.mxu0 0.0
    %6966 = vmatprep.subr.mxu0 0.0
    %6967 = vmatpush2.msra.mxu0 0.0
    %6968 = vmatprep.subr.mxu0 0.0
    %6969 = vmatpush2.msra.mxu0 0.0
    %6970 = vmatprep.subr.mxu0 0.0
    %6971 = vmatpush2.msra.mxu0 0.0
    %6972 = vmatprep.subr.mxu0 0.0
    %6973 = vmatpush2.msra.mxu0 0.0
    %6974 = vmatprep.subr.mxu0 0.0
    %6975 = vmatpush2.msra.mxu0 0.0
    %6976 = vmatprep.subr.mxu0 0.0
    %6977 = vmatpush2.msra.mxu0 0.0
    %6978 = vmatprep.subr.mxu0 0.0
    %6979 = vmatpush2.msra.mxu0 0.0
    %6980 = vmatprep.subr.mxu0 0.0
    %6981 = vmatpush2.msra.mxu0 0.0
    %6982 = vmatprep.subr.mxu0 0.0
    %6983 = vmatpush2.msra.mxu0 0.0
    %6984 = vmatprep.mubr.f32.mxu0 0.0
    %6985 = vmatmul.mubr.f32.gmra.mxu0 %v6778
    %v6986 = vpop.f32.mrf.mxu0
    %v6987 = vadd.f32 %v5353, %v6986
    %v6988 = vpop.f32.mrf.mxu0
    %6989 = vdwg.mxu0
    %v6990 = vadd.f32 %v6774, %v6847
    %v6991 = vxor.u32 %v6990, 2147483648
    %v6992 = vmul.f32 %v6991, 1.442695
    %v6993 = vpow.pop %v6992
    %v6994 = vadd.f32 %v6993, 1.0
    %v6995 = vrcp.pop %v6994
    %v6996 = vmul.f32 1.0, %v6995
    %v6997 = vadd.f32 %v6775, %v6917
    %v6998 = vxor.u32 %v6997, 2147483648
    %v6999 = vmul.f32 %v6998, 1.442695
    %v7000 = vpow.pop %v6999
    %v7001 = vadd.f32 %v7000, 1.0
    %v7002 = vrcp.pop %v7001
    %v7003 = vmul.f32 1.0, %v7002
    %v7004 = vmul.f32 %v6996, %v6987
    %v7005 = vadd.f32 %v6776, %v7004
    %v7006 = vtanh.pop %v7005
    %v7007 = vsub.f32 %v6772, %v7006
    %v7008 = vmul.f32 %v7003, %v7007
    %v7009 = vadd.f32 %v7006, %v7008
    %7010 = vst.msk [vmem:[#allocation3 + $0x30] sm:$0xff] %vm99, %v7009
    %v7011 = vld [vmem:[#allocation2 + $0x38] sm:$0xff]
    %v7012 = vld [vmem:[%s368 + $0x38] sm:$0xff]
    %v7013 = vld [vmem:[%s507 + $0x38] sm:$0xff]
    %v7015 = vsel %vm99, %v7009, 0
    %7017 = vmatprep.subr.mxu0 0.0
    %7018 = vmatpush1.msra.mxu0 0.0
    %7019 = vmatprep.subr.mxu0 0.0
    %7020 = vmatpush1.msra.mxu0 0.0
    %7021 = vmatprep.subr.mxu0 0.0
    %7022 = vmatpush1.msra.mxu0 0.0
    %7023 = vmatprep.subr.mxu0 0.0
    %7024 = vmatpush1.msra.mxu0 0.0
    %7025 = vmatprep.subr.mxu0 0.0
    %7026 = vmatpush1.msra.mxu0 0.0
    %7027 = vmatprep.subr.mxu0 0.0
    %7028 = vmatpush1.msra.mxu0 0.0
    %7029 = vmatprep.subr.mxu0 0.0
    %7030 = vmatpush1.msra.mxu0 0.0
    %7031 = vmatprep.subr.mxu0 0.0
    %7032 = vmatpush1.msra.mxu0 0.0
    %7033 = vmatprep.subr.mxu0 0.0
    %7034 = vmatpush1.msra.mxu0 %v5328
    %7035 = vmatprep.subr.mxu0 0.0
    %7036 = vmatpush1.msra.mxu0 %v5327
    %7037 = vmatprep.subr.mxu0 0.0
    %7038 = vmatpush1.msra.mxu0 %v5326
    %7039 = vmatprep.subr.mxu0 0.0
    %7040 = vmatpush1.msra.mxu0 %v5325
    %7041 = vmatprep.subr.mxu0 0.0
    %7042 = vmatpush1.msra.mxu0 %v5324
    %7043 = vmatprep.subr.mxu0 0.0
    %7044 = vmatpush1.msra.mxu0 %v5323
    %7045 = vmatprep.subr.mxu0 0.0
    %7046 = vmatpush1.msra.mxu0 %v5322
    %7047 = vmatprep.subr.mxu0 0.0
    %7048 = vmatpush1.msra.mxu0 %v5321
    %7049 = vmatprep.subr.mxu0 0.0
    %7050 = vmatpush2.msra.mxu0 0.0
    %7051 = vmatprep.subr.mxu0 0.0
    %7052 = vmatpush2.msra.mxu0 0.0
    %7053 = vmatprep.subr.mxu0 0.0
    %7054 = vmatpush2.msra.mxu0 0.0
    %7055 = vmatprep.subr.mxu0 0.0
    %7056 = vmatpush2.msra.mxu0 0.0
    %7057 = vmatprep.subr.mxu0 0.0
    %7058 = vmatpush2.msra.mxu0 0.0
    %7059 = vmatprep.subr.mxu0 0.0
    %7060 = vmatpush2.msra.mxu0 0.0
    %7061 = vmatprep.subr.mxu0 0.0
    %7062 = vmatpush2.msra.mxu0 0.0
    %7063 = vmatprep.subr.mxu0 0.0
    %7064 = vmatpush2.msra.mxu0 0.0
    %7065 = vmatprep.subr.mxu0 0.0
    %7066 = vmatpush2.msra.mxu0 0.0
    %7067 = vmatprep.subr.mxu0 0.0
    %7068 = vmatpush2.msra.mxu0 0.0
    %7069 = vmatprep.subr.mxu0 0.0
    %7070 = vmatpush2.msra.mxu0 0.0
    %7071 = vmatprep.subr.mxu0 0.0
    %7072 = vmatpush2.msra.mxu0 0.0
    %7073 = vmatprep.subr.mxu0 0.0
    %7074 = vmatpush2.msra.mxu0 0.0
    %7075 = vmatprep.subr.mxu0 0.0
    %7076 = vmatpush2.msra.mxu0 0.0
    %7077 = vmatprep.subr.mxu0 0.0
    %7078 = vmatpush2.msra.mxu0 0.0
    %7079 = vmatprep.subr.mxu0 0.0
    %7080 = vmatpush2.msra.mxu0 0.0
    %7081 = vmatprep.mubr.f32.mxu0 0.0
    %7082 = vmatmul.mubr.f32.gmra.mxu0 %v7015
    %v7083 = vpop.f32.mrf.mxu0
    %v7084 = vadd.f32 0.0, %v7083
    %v7085 = vpop.f32.mrf.mxu0
    %7086 = vdwg.mxu0
    %7087 = vmatprep.subr.mxu0 0.0
    %7088 = vmatpush1.msra.mxu0 0.0
    %7089 = vmatprep.subr.mxu0 0.0
    %7090 = vmatpush1.msra.mxu0 0.0
    %7091 = vmatprep.subr.mxu0 0.0
    %7092 = vmatpush1.msra.mxu0 0.0
    %7093 = vmatprep.subr.mxu0 0.0
    %7094 = vmatpush1.msra.mxu0 0.0
    %7095 = vmatprep.subr.mxu0 0.0
    %7096 = vmatpush1.msra.mxu0 0.0
    %7097 = vmatprep.subr.mxu0 0.0
    %7098 = vmatpush1.msra.mxu0 0.0
    %7099 = vmatprep.subr.mxu0 0.0
    %7100 = vmatpush1.msra.mxu0 0.0
    %7101 = vmatprep.subr.mxu0 0.0
    %7102 = vmatpush1.msra.mxu0 0.0
    %7103 = vmatprep.subr.mxu0 0.0
    %7104 = vmatpush1.msra.mxu0 %v5337
    %7105 = vmatprep.subr.mxu0 0.0
    %7106 = vmatpush1.msra.mxu0 %v5336
    %7107 = vmatprep.subr.mxu0 0.0
    %7108 = vmatpush1.msra.mxu0 %v5335
    %7109 = vmatprep.subr.mxu0 0.0
    %7110 = vmatpush1.msra.mxu0 %v5334
    %7111 = vmatprep.subr.mxu0 0.0
    %7112 = vmatpush1.msra.mxu0 %v5333
    %7113 = vmatprep.subr.mxu0 0.0
    %7114 = vmatpush1.msra.mxu0 %v5332
    %7115 = vmatprep.subr.mxu0 0.0
    %7116 = vmatpush1.msra.mxu0 %v5331
    %7117 = vmatprep.subr.mxu0 0.0
    %7118 = vmatpush1.msra.mxu0 %v5330
    %7119 = vmatprep.subr.mxu0 0.0
    %7120 = vmatpush2.msra.mxu0 0.0
    %7121 = vmatprep.subr.mxu0 0.0
    %7122 = vmatpush2.msra.mxu0 0.0
    %7123 = vmatprep.subr.mxu0 0.0
    %7124 = vmatpush2.msra.mxu0 0.0
    %7125 = vmatprep.subr.mxu0 0.0
    %7126 = vmatpush2.msra.mxu0 0.0
    %7127 = vmatprep.subr.mxu0 0.0
    %7128 = vmatpush2.msra.mxu0 0.0
    %7129 = vmatprep.subr.mxu0 0.0
    %7130 = vmatpush2.msra.mxu0 0.0
    %7131 = vmatprep.subr.mxu0 0.0
    %7132 = vmatpush2.msra.mxu0 0.0
    %7133 = vmatprep.subr.mxu0 0.0
    %7134 = vmatpush2.msra.mxu0 0.0
    %7135 = vmatprep.subr.mxu0 0.0
    %7136 = vmatpush2.msra.mxu0 0.0
    %7137 = vmatprep.subr.mxu0 0.0
    %7138 = vmatpush2.msra.mxu0 0.0
    %7139 = vmatprep.subr.mxu0 0.0
    %7140 = vmatpush2.msra.mxu0 0.0
    %7141 = vmatprep.subr.mxu0 0.0
    %7142 = vmatpush2.msra.mxu0 0.0
    %7143 = vmatprep.subr.mxu0 0.0
    %7144 = vmatpush2.msra.mxu0 0.0
    %7145 = vmatprep.subr.mxu0 0.0
    %7146 = vmatpush2.msra.mxu0 0.0
    %7147 = vmatprep.subr.mxu0 0.0
    %7148 = vmatpush2.msra.mxu0 0.0
    %7149 = vmatprep.subr.mxu0 0.0
    %7150 = vmatpush2.msra.mxu0 0.0
    %7151 = vmatprep.mubr.f32.mxu0 0.0
    %7152 = vmatmul.mubr.f32.gmra.mxu0 %v7015
    %v7153 = vpop.f32.mrf.mxu0
    %v7154 = vadd.f32 0.0, %v7153
    %v7155 = vpop.f32.mrf.mxu0
    %7156 = vdwg.mxu0
    %7157 = vmatprep.subr.mxu0 0.0
    %7158 = vmatpush1.msra.mxu0 0.0
    %7159 = vmatprep.subr.mxu0 0.0
    %7160 = vmatpush1.msra.mxu0 0.0
    %7161 = vmatprep.subr.mxu0 0.0
    %7162 = vmatpush1.msra.mxu0 0.0
    %7163 = vmatprep.subr.mxu0 0.0
    %7164 = vmatpush1.msra.mxu0 0.0
    %7165 = vmatprep.subr.mxu0 0.0
    %7166 = vmatpush1.msra.mxu0 0.0
    %7167 = vmatprep.subr.mxu0 0.0
    %7168 = vmatpush1.msra.mxu0 0.0
    %7169 = vmatprep.subr.mxu0 0.0
    %7170 = vmatpush1.msra.mxu0 0.0
    %7171 = vmatprep.subr.mxu0 0.0
    %7172 = vmatpush1.msra.mxu0 0.0
    %7173 = vmatprep.subr.mxu0 0.0
    %7174 = vmatpush1.msra.mxu0 %v5346
    %7175 = vmatprep.subr.mxu0 0.0
    %7176 = vmatpush1.msra.mxu0 %v5345
    %7177 = vmatprep.subr.mxu0 0.0
    %7178 = vmatpush1.msra.mxu0 %v5344
    %7179 = vmatprep.subr.mxu0 0.0
    %7180 = vmatpush1.msra.mxu0 %v5343
    %7181 = vmatprep.subr.mxu0 0.0
    %7182 = vmatpush1.msra.mxu0 %v5342
    %7183 = vmatprep.subr.mxu0 0.0
    %7184 = vmatpush1.msra.mxu0 %v5341
    %7185 = vmatprep.subr.mxu0 0.0
    %7186 = vmatpush1.msra.mxu0 %v5340
    %7187 = vmatprep.subr.mxu0 0.0
    %7188 = vmatpush1.msra.mxu0 %v5339
    %7189 = vmatprep.subr.mxu0 0.0
    %7190 = vmatpush2.msra.mxu0 0.0
    %7191 = vmatprep.subr.mxu0 0.0
    %7192 = vmatpush2.msra.mxu0 0.0
    %7193 = vmatprep.subr.mxu0 0.0
    %7194 = vmatpush2.msra.mxu0 0.0
    %7195 = vmatprep.subr.mxu0 0.0
    %7196 = vmatpush2.msra.mxu0 0.0
    %7197 = vmatprep.subr.mxu0 0.0
    %7198 = vmatpush2.msra.mxu0 0.0
    %7199 = vmatprep.subr.mxu0 0.0
    %7200 = vmatpush2.msra.mxu0 0.0
    %7201 = vmatprep.subr.mxu0 0.0
    %7202 = vmatpush2.msra.mxu0 0.0
    %7203 = vmatprep.subr.mxu0 0.0
    %7204 = vmatpush2.msra.mxu0 0.0
    %7205 = vmatprep.subr.mxu0 0.0
    %7206 = vmatpush2.msra.mxu0 0.0
    %7207 = vmatprep.subr.mxu0 0.0
    %7208 = vmatpush2.msra.mxu0 0.0
    %7209 = vmatprep.subr.mxu0 0.0
    %7210 = vmatpush2.msra.mxu0 0.0
    %7211 = vmatprep.subr.mxu0 0.0
    %7212 = vmatpush2.msra.mxu0 0.0
    %7213 = vmatprep.subr.mxu0 0.0
    %7214 = vmatpush2.msra.mxu0 0.0
    %7215 = vmatprep.subr.mxu0 0.0
    %7216 = vmatpush2.msra.mxu0 0.0
    %7217 = vmatprep.subr.mxu0 0.0
    %7218 = vmatpush2.msra.mxu0 0.0
    %7219 = vmatprep.subr.mxu0 0.0
    %7220 = vmatpush2.msra.mxu0 0.0
    %7221 = vmatprep.mubr.f32.mxu0 0.0
    %7222 = vmatmul.mubr.f32.gmra.mxu0 %v7015
    %v7223 = vpop.f32.mrf.mxu0
    %v7224 = vadd.f32 %v5353, %v7223
    %v7225 = vpop.f32.mrf.mxu0
    %7226 = vdwg.mxu0
    %v7227 = vadd.f32 %v7011, %v7084
    %v7228 = vxor.u32 %v7227, 2147483648
    %v7229 = vmul.f32 %v7228, 1.442695
    %v7230 = vpow.pop %v7229
    %v7231 = vadd.f32 %v7230, 1.0
    %v7232 = vrcp.pop %v7231
    %v7233 = vmul.f32 1.0, %v7232
    %v7234 = vadd.f32 %v7012, %v7154
    %v7235 = vxor.u32 %v7234, 2147483648
    %v7236 = vmul.f32 %v7235, 1.442695
    %v7237 = vpow.pop %v7236
    %v7238 = vadd.f32 %v7237, 1.0
    %v7239 = vrcp.pop %v7238
    %v7240 = vmul.f32 1.0, %v7239
    %v7241 = vmul.f32 %v7233, %v7224
    %v7242 = vadd.f32 %v7013, %v7241
    %v7243 = vtanh.pop %v7242
    %v7244 = vsub.f32 %v7009, %v7243
    %v7245 = vmul.f32 %v7240, %v7244
    %v7246 = vadd.f32 %v7243, %v7245
    %7247 = vst.msk [vmem:[#allocation3 + $0x38] sm:$0xff] %vm99, %v7246
    %v7248 = vld [vmem:[#allocation3] sm:$0xff]
    %v7249 = vld [vmem:[#allocation3 + $0x38] sm:$0xff]
    %v7250 = vsel %vm75, %v7249, %v7248
    %7251 = vst.msk [vmem:[#allocation3] sm:$0xff] %vm99, %v7250
    %v7252 = vsel %vm75, %v7248, %v7249
    %7253 = vst.msk [vmem:[#allocation3 + $0x38] sm:$0xff] %vm99, %v7252
    %v7254 = vld [vmem:[#allocation3 + $0x8] sm:$0xff]
    %v7255 = vld [vmem:[#allocation3 + $0x30] sm:$0xff]
    %v7256 = vsel %vm75, %v7255, %v7254
    %7257 = vst.msk [vmem:[#allocation3 + $0x8] sm:$0xff] %vm99, %v7256
    %v7258 = vsel %vm75, %v7254, %v7255
    %7259 = vst.msk [vmem:[#allocation3 + $0x30] sm:$0xff] %vm99, %v7258
    %v7260 = vld [vmem:[#allocation3 + $0x10] sm:$0xff]
    %v7261 = vld [vmem:[#allocation3 + $0x28] sm:$0xff]
    %v7262 = vsel %vm75, %v7261, %v7260
    %7263 = vst.msk [vmem:[#allocation3 + $0x10] sm:$0xff] %vm99, %v7262
    %v7264 = vsel %vm75, %v7260, %v7261
    %7265 = vst.msk [vmem:[#allocation3 + $0x28] sm:$0xff] %vm99, %v7264
    %v7266 = vld [vmem:[#allocation3 + $0x18] sm:$0xff]
    %v7267 = vld [vmem:[#allocation3 + $0x20] sm:$0xff]
    %v7268 = vsel %vm75, %v7267, %v7266
    %7269 = vst.msk [vmem:[#allocation3 + $0x18] sm:$0xff] %vm99, %v7268
    %v7270 = vsel %vm75, %v7266, %v7267
    %7271 = vst.msk [vmem:[#allocation3 + $0x20] sm:$0xff] %vm99, %v7270
    %v7272 = vld [vmem:[#allocation3 + $0x38] sm:$0xff]
    %v7273 = vld [vmem:[%s6] sm:$0xff]
    %v7274 = vld [vmem:[%s6 + $0x8] sm:$0xff]
    %v7275 = vld [vmem:[%s6 + $0x10] sm:$0xff]
    %v7276 = vld [vmem:[%s6 + $0x18] sm:$0xff]
    %v7277 = vld [vmem:[%s6 + $0x20] sm:$0xff]
    %v7278 = vld [vmem:[%s6 + $0x28] sm:$0xff]
    %v7279 = vld [vmem:[%s6 + $0x30] sm:$0xff]
    %v7280 = vld [vmem:[%s6 + $0x38] sm:$0xff]
    %v7281 = vld [vmem:[#allocation5] sm:$0xff]
    %v7282 = vld [vmem:[%s7] sm:$0x3f]
    %vm7283 = vcmask 48128
    %v7285 = vsel %vm7283, %v7281, 0
    %vm7287 = vcmask 1045504
    %v7289 = vsel %vm7287, %v7282, 0
    %7291 = vmatprep.subr.mxu0 0.0
    %7292 = vmatpush1.msra.mxu0 0.0
    %7293 = vmatprep.subr.mxu0 0.0
    %7294 = vmatpush1.msra.mxu0 0.0
    %7295 = vmatprep.subr.mxu0 0.0
    %7296 = vmatpush1.msra.mxu0 0.0
    %7297 = vmatprep.subr.mxu0 0.0
    %7298 = vmatpush1.msra.mxu0 0.0
    %7299 = vmatprep.subr.mxu0 0.0
    %7300 = vmatpush1.msra.mxu0 0.0
    %7301 = vmatprep.subr.mxu0 0.0
    %7302 = vmatpush1.msra.mxu0 0.0
    %7303 = vmatprep.subr.mxu0 0.0
    %7304 = vmatpush1.msra.mxu0 0.0
    %7305 = vmatprep.subr.mxu0 0.0
    %7306 = vmatpush1.msra.mxu0 0.0
    %7307 = vmatprep.subr.mxu0 0.0
    %7308 = vmatpush1.msra.mxu0 0.0
    %7309 = vmatprep.subr.mxu0 0.0
    %7310 = vmatpush1.msra.mxu0 0.0
    %7311 = vmatprep.subr.mxu0 0.0
    %7312 = vmatpush1.msra.mxu0 0.0
    %7313 = vmatprep.subr.mxu0 0.0
    %7314 = vmatpush1.msra.mxu0 0.0
    %7315 = vmatprep.subr.mxu0 0.0
    %7316 = vmatpush1.msra.mxu0 0.0
    %7317 = vmatprep.subr.mxu0 0.0
    %7318 = vmatpush1.msra.mxu0 0.0
    %7319 = vmatprep.subr.mxu0 0.0
    %7320 = vmatpush1.msra.mxu0 0.0
    %7321 = vmatprep.subr.mxu0 0.0
    %7322 = vmatpush1.msra.mxu0 %v7289
    %7323 = vmatprep.subr.mxu0 0.0
    %7324 = vmatpush2.msra.mxu0 0.0
    %7325 = vmatprep.subr.mxu0 0.0
    %7326 = vmatpush2.msra.mxu0 0.0
    %7327 = vmatprep.subr.mxu0 0.0
    %7328 = vmatpush2.msra.mxu0 0.0
    %7329 = vmatprep.subr.mxu0 0.0
    %7330 = vmatpush2.msra.mxu0 0.0
    %7331 = vmatprep.subr.mxu0 0.0
    %7332 = vmatpush2.msra.mxu0 0.0
    %7333 = vmatprep.subr.mxu0 0.0
    %7334 = vmatpush2.msra.mxu0 0.0
    %7335 = vmatprep.subr.mxu0 0.0
    %7336 = vmatpush2.msra.mxu0 0.0
    %7337 = vmatprep.subr.mxu0 0.0
    %7338 = vmatpush2.msra.mxu0 0.0
    %7339 = vmatprep.subr.mxu0 0.0
    %7340 = vmatpush2.msra.mxu0 0.0
    %7341 = vmatprep.subr.mxu0 0.0
    %7342 = vmatpush2.msra.mxu0 0.0
    %7343 = vmatprep.subr.mxu0 0.0
    %7344 = vmatpush2.msra.mxu0 0.0
    %7345 = vmatprep.subr.mxu0 0.0
    %7346 = vmatpush2.msra.mxu0 0.0
    %7347 = vmatprep.subr.mxu0 0.0
    %7348 = vmatpush2.msra.mxu0 0.0
    %7349 = vmatprep.subr.mxu0 0.0
    %7350 = vmatpush2.msra.mxu0 0.0
    %7351 = vmatprep.subr.mxu0 0.0
    %7352 = vmatpush2.msra.mxu0 0.0
    %7353 = vmatprep.subr.mxu0 0.0
    %7354 = vmatpush2.msra.mxu0 0.0
    %7355 = vmatprep.mubr.f32.mxu0 0.0
    %7356 = vmatmul.mubr.f32.gmra.mxu0 %v7285
    %v7357 = vpop.f32.mrf.mxu0
    %v7358 = vadd.f32 0.0, %v7357
    %v7359 = vpop.f32.mrf.mxu0
    %7360 = vdwg.mxu0
    %v7362 = vsel %vm99, %v7272, 0
    %7364 = vmatprep.subr.mxu0 0.0
    %7365 = vmatpush1.msra.mxu0 0.0
    %7366 = vmatprep.subr.mxu0 0.0
    %7367 = vmatpush1.msra.mxu0 0.0
    %7368 = vmatprep.subr.mxu0 0.0
    %7369 = vmatpush1.msra.mxu0 0.0
    %7370 = vmatprep.subr.mxu0 0.0
    %7371 = vmatpush1.msra.mxu0 0.0
    %7372 = vmatprep.subr.mxu0 0.0
    %7373 = vmatpush1.msra.mxu0 0.0
    %7374 = vmatprep.subr.mxu0 0.0
    %7375 = vmatpush1.msra.mxu0 0.0
    %7376 = vmatprep.subr.mxu0 0.0
    %7377 = vmatpush1.msra.mxu0 0.0
    %7378 = vmatprep.subr.mxu0 0.0
    %7379 = vmatpush1.msra.mxu0 0.0
    %7380 = vmatprep.subr.mxu0 0.0
    %7381 = vmatpush1.msra.mxu0 %v7280
    %7382 = vmatprep.subr.mxu0 0.0
    %7383 = vmatpush1.msra.mxu0 %v7279
    %7384 = vmatprep.subr.mxu0 0.0
    %7385 = vmatpush1.msra.mxu0 %v7278
    %7386 = vmatprep.subr.mxu0 0.0
    %7387 = vmatpush1.msra.mxu0 %v7277
    %7388 = vmatprep.subr.mxu0 0.0
    %7389 = vmatpush1.msra.mxu0 %v7276
    %7390 = vmatprep.subr.mxu0 0.0
    %7391 = vmatpush1.msra.mxu0 %v7275
    %7392 = vmatprep.subr.mxu0 0.0
    %7393 = vmatpush1.msra.mxu0 %v7274
    %7394 = vmatprep.subr.mxu0 0.0
    %7395 = vmatpush1.msra.mxu0 %v7273
    %7396 = vmatprep.subr.mxu0 0.0
    %7397 = vmatpush2.msra.mxu0 0.0
    %7398 = vmatprep.subr.mxu0 0.0
    %7399 = vmatpush2.msra.mxu0 0.0
    %7400 = vmatprep.subr.mxu0 0.0
    %7401 = vmatpush2.msra.mxu0 0.0
    %7402 = vmatprep.subr.mxu0 0.0
    %7403 = vmatpush2.msra.mxu0 0.0
    %7404 = vmatprep.subr.mxu0 0.0
    %7405 = vmatpush2.msra.mxu0 0.0
    %7406 = vmatprep.subr.mxu0 0.0
    %7407 = vmatpush2.msra.mxu0 0.0
    %7408 = vmatprep.subr.mxu0 0.0
    %7409 = vmatpush2.msra.mxu0 0.0
    %7410 = vmatprep.subr.mxu0 0.0
    %7411 = vmatpush2.msra.mxu0 0.0
    %7412 = vmatprep.subr.mxu0 0.0
    %7413 = vmatpush2.msra.mxu0 0.0
    %7414 = vmatprep.subr.mxu0 0.0
    %7415 = vmatpush2.msra.mxu0 0.0
    %7416 = vmatprep.subr.mxu0 0.0
    %7417 = vmatpush2.msra.mxu0 0.0
    %7418 = vmatprep.subr.mxu0 0.0
    %7419 = vmatpush2.msra.mxu0 0.0
    %7420 = vmatprep.subr.mxu0 0.0
    %7421 = vmatpush2.msra.mxu0 0.0
    %7422 = vmatprep.subr.mxu0 0.0
    %7423 = vmatpush2.msra.mxu0 0.0
    %7424 = vmatprep.subr.mxu0 0.0
    %7425 = vmatpush2.msra.mxu0 0.0
    %7426 = vmatprep.subr.mxu0 0.0
    %7427 = vmatpush2.msra.mxu0 0.0
    %7428 = vmatprep.mubr.f32.mxu0 0.0
    %7429 = vmatmul.mubr.f32.gmra.mxu0 %v7362
    %v7430 = vpop.f32.mrf.mxu0
    %v7431 = vadd.f32 %v7358, %v7430
    %v7432 = vpop.f32.mrf.mxu0
    %7433 = vdwg.mxu0
    %v7434 = vld [vmem:[#allocation4] sm:$0x1]
    %v7436 = vlaneseq
    %v7437 = vshrl.u32 %v7436, 7
    %v7438 = vsub.s32 0, %v7437
    %v7439 = vrot.slane %v7434, %v7438
    %v7441 = vadd.f32 %v7431, %v7439
    %vm7442 = vcmask 7168
    %7443 = vst.msk [vmem:[%s9] sm:$0xff] %vm7442, %v7441
    // Predicated region
    $region50: #{tpu_custom_call.1} parent=1 // pred_check
      _
    $region51: #{tpu_custom_call.1} parent=1 // pred_check_branch
      %7445 = sbr.rel (0) target = $region53
    $region52: #{tpu_custom_call.1} parent=1 // pred_region
      _
    $region53: #{tpu_custom_call.1} parent=1 // pred_fallthru
      _
    // Predicated region
    $region54: #{tpu_custom_call.1} parent=1 // pred_check
      _
    $region55: #{tpu_custom_call.1} parent=1 // pred_check_branch
      %7447 = sbr.rel (0) target = $region57
    $region56: #{tpu_custom_call.1} parent=1 // pred_region
      _
    $region57: #{tpu_custom_call.1} parent=1 // pred_fallthru
      _
    %7448 = vsyncpa [#allocation6], 1
    %7449 = vsyncpa [#allocation8], 1

</llo_original>
